<compile_context>
chip_gen: v6e
topology: v6e:2x2x1
jax: 0.10.0
libtpu: 0.0.40
codegen_flags: <defaults>
</compile_context>

<pallas_src>
import jax
import jax.numpy as jnp
from jax import lax
from jax.experimental import pallas as pl
from jax.experimental.pallas import tpu as pltpu

W_IN = 553                          # input temporal length (implied by Linear(6720, 4))
W_CONV = W_IN + 1                   # width after Conv3d(kernel 12, padding 6) = 554
W_POOL = (W_CONV - 62) // 12 + 1    # = 42 (AvgPool3d window 62, stride 12)
SEG = W_IN + 12                     # per-sample padded segment in the lane slab = 565
N_PAIR = 4
C1 = 22                             # conv1 channels / electrode rows
C2 = 20                             # conv2 channels
KW = 12                             # conv2 temporal taps
N_STREAM = 4                        # conv1+BN1 streams per pair: (A, B, C, D)
ROWS1 = N_STREAM * C1               # 88 stacked conv1 output rows
N_CLS = 4
BN_EPS = 1e-5


def _pair_kernel(x_ref, w1_ref, w2t_ref, cbias_ref, bn_a_ref, bn_b_ref, bn_c_ref,
                 wc_ref, poolm_ref, out_ref, pad_ref):
    p = pl.program_id(1)                       # pair axis (innermost, "arbitrary")
    tb = out_ref.shape[2]                      # batch tile (static)
    n_lanes = pad_ref.shape[1]                 # TB * SEG (static)
    q_len = n_lanes - (KW - 1)                 # valid conv2 output columns

    # Logits accumulate in the resident output block across the pair axis.
    @pl.when(p == 0)
    def _():
        out_ref[...] = jnp.zeros_like(out_ref)

    # conv1 + BN1 scale for all 4 streams and all TB samples in ONE bf16 matmul.
    # The input slab is host-pre-padded with the 6-zero conv2 borders, so this
    # full aligned store already contains the correct zero gaps between samples
    # (bias/BN-shift columns are re-added after conv2 via the cbias pattern).
    xs = x_ref[0, 0]                                               # [44, TB*SEG] bf16
    h1 = jnp.dot(w1_ref[p], xs, preferred_element_type=jnp.float32)
    pad_ref[...] = h1.astype(pad_ref.dtype)

    # conv2 (both electrode-pair sides) as 12 accumulated tap matmuls over the
    # whole batched slab; no im2col buffer, no extra stores.
    acc = jnp.dot(w2t_ref[p, 0], pad_ref[:, 0:q_len],
                  preferred_element_type=jnp.float32)
    for k in range(1, KW):
        acc = acc + jnp.dot(w2t_ref[p, k], pad_ref[:, k:k + q_len],
                            preferred_element_type=jnp.float32)

    # Resident per-pair tail parameters (read once per grid step).
    cbias = cbias_ref[p]                       # [40, 554] conv1-bias pattern + b2
    poolm = poolm_ref[...]                     # [554, 42] pool matrix (1/124 folded)
    bn_a = bn_a_ref[p]                         # [2, 20, 1]  s^2
    bn_b = bn_b_ref[p]                         # [2, 20, 1]  2*s*t
    bn_c = bn_c_ref[p]                         # [2, 20, 1]  t^2
    wc_p = wc_ref[p]                           # [4, 40, 42] fused classifier weight
    wc_l = wc_p[:, 0:C2, :]
    wc_r = wc_p[:, C2:, :]

    # Per-sample tail (small, unrolled): BN2/square/pool/log/classifier in f32.
    cols = []
    for b in range(tb):
        off = b * SEG
        y = acc[:, off:off + W_CONV] + cbias                       # [40, 554]
        l2 = y[0:C2, :]
        r2 = y[C2:, :]
        # BN2 + square + depth part of AvgPool, expanded so no l/r concat/swap.
        p1 = jnp.dot(l2 * l2 + r2 * r2, poolm,
                     preferred_element_type=jnp.float32)            # [20, 42]
        p2 = jnp.dot(l2 + r2, poolm, preferred_element_type=jnp.float32)
        logf_l = jnp.log(bn_a[0] * p1 + bn_b[0] * p2 + bn_c[0])
        logf_r = jnp.log(bn_a[1] * p1 + bn_b[1] * p2 + bn_c[1])
        contrib = (jnp.sum(jnp.sum(wc_l * logf_l[None], axis=2), axis=1, keepdims=True)
                   + jnp.sum(jnp.sum(wc_r * logf_r[None], axis=2), axis=1, keepdims=True))
        cols.append(contrib)                                        # [4, 1]

    out_ref[0, :, :] = out_ref[0, :, :] + jnp.concatenate(cols, axis=1)


def init_params(key):
    ks = jax.random.split(key, 14)
    f32 = jnp.float32
    return {
        "w1": 0.1 * jax.random.normal(ks[0], (8, C1, C1), f32),          # Conv2d w[o,0,h,0]
        "b1": 0.1 * jax.random.normal(ks[1], (8, C1), f32),
        "g1": 1.0 + 0.1 * jax.random.normal(ks[2], (8, C1), f32),        # BN1 gamma
        "be1": 0.1 * jax.random.normal(ks[3], (8, C1), f32),             # BN1 beta
        "rm1": 0.1 * jax.random.normal(ks[4], (8, C1), f32),             # BN1 running mean
        "rv1": 1.0 + 0.2 * jax.random.uniform(ks[5], (8, C1), dtype=f32),  # BN1 running var
        "w2": 0.1 * jax.random.normal(ks[6], (8, C2, C1, 2, KW), f32),   # Conv3d w[o,c,d,0,k]
        "b2": 0.1 * jax.random.normal(ks[7], (8, C2), f32),
        "g2": 1.0 + 0.1 * jax.random.normal(ks[8], (8, C2), f32),
        "be2": 0.1 * jax.random.normal(ks[9], (8, C2), f32),
        "rm2": 0.1 * jax.random.normal(ks[10], (8, C2), f32),
        "rv2": 1.0 + 0.2 * jax.random.uniform(ks[11], (8, C2), dtype=f32),
        "wc": 0.01 * jax.random.normal(ks[12], (N_CLS, N_PAIR * 2 * C2 * W_POOL), f32),
        "bc": 0.01 * jax.random.normal(ks[13], (N_CLS,), f32),
    }


def prepare_params(params):
    """One-time host-side folding of BatchNorm + layout prep for the kernel."""
    f32 = jnp.float32
    bf16 = jnp.bfloat16
    s1 = params["g1"] / jnp.sqrt(params["rv1"] + BN_EPS)       # [8, 22]
    t1 = params["be1"] - s1 * params["rm1"]
    s2 = params["g2"] / jnp.sqrt(params["rv2"] + BN_EPS)       # [8, 20]
    t2 = params["be2"] - s2 * params["rm2"]

    w1, b1 = params["w1"], params["b1"]
    w1_e, w1_o = w1[0::2], w1[1::2]          # module i / i+1 per pair: [4,22,22]
    b1_e, b1_o = b1[0::2], b1[1::2]
    s1_e, s1_o = s1[0::2], s1[1::2]
    t1_e, t1_o = t1[0::2], t1[1::2]

    # 4 BN1-folded conv1 streams per pair: A=BN_i(conv_i xl), B=BN_i(conv_{i+1} xr),
    # C=BN_{i+1}(conv_{i+1} xr), D=BN_{i+1}(conv_i xl).
    wA = s1_e[:, :, None] * w1_e
    wB = s1_e[:, :, None] * w1_o
    wC = s1_o[:, :, None] * w1_o
    wD = s1_o[:, :, None] * w1_e
    bA = s1_e * b1_e + t1_e
    bB = s1_e * b1_o + t1_e
    bC = s1_o * b1_o + t1_o
    bD = s1_o * b1_e + t1_o
    z = jnp.zeros_like(wA)
    # Stacked rows act on the input tile [xl(22); xr(22)]: [A|0],[0|B],[0|C],[D|0].
    w1s = jnp.concatenate([
        jnp.concatenate([wA, z], axis=2),
        jnp.concatenate([z, wB], axis=2),
        jnp.concatenate([z, wC], axis=2),
        jnp.concatenate([wD, z], axis=2)], axis=1)                         # [4, 88, 44]
    b1s = jnp.concatenate([bA, bB, bC, bD], axis=1)                        # [4, 88]

    # conv2 per-tap weights: [pair, tap, 40 outputs (l rows 0:20, r rows 20:40),
    # 88 input rows ordered stream*22 + chan].
    w2 = params["w2"]                                        # [8, 20, 22, 2, 12]
    w2_e, w2_o = w2[0::2], w2[1::2]
    w2tap = jnp.zeros((N_PAIR, KW, 2 * C2, ROWS1), f32)
    w2tap = w2tap.at[:, :, 0:C2, 0 * C1:1 * C1].set(
        jnp.transpose(w2_e[:, :, :, 0, :], (0, 3, 1, 2)))
    w2tap = w2tap.at[:, :, 0:C2, 1 * C1:2 * C1].set(
        jnp.transpose(w2_e[:, :, :, 1, :], (0, 3, 1, 2)))
    w2tap = w2tap.at[:, :, C2:, 2 * C1:3 * C1].set(
        jnp.transpose(w2_o[:, :, :, 0, :], (0, 3, 1, 2)))
    w2tap = w2tap.at[:, :, C2:, 3 * C1:4 * C1].set(
        jnp.transpose(w2_o[:, :, :, 1, :], (0, 3, 1, 2)))

    # conv2 applied to the (conv1 bias + BN1 shift) constant interior columns of
    # the padded conv1 output (the kernel's zero-padded-input matmul drops them),
    # plus conv2's own bias: a per-pair [40, 554] additive pattern.
    b2p = params["b2"].reshape(N_PAIR, 2 * C2)
    tap_bias = jnp.einsum('pkor,pr->pok', w2tap, b1s)        # [4, 40, 12]
    qk = jnp.arange(W_CONV)[:, None] + jnp.arange(KW)[None, :]
    inner = ((qk >= 6) & (qk < 6 + W_IN)).astype(f32)        # [554, 12]
    cbias = jnp.einsum('pok,qk->poq', tap_bias, inner) + b2p[:, :, None]   # [4, 40, 554]

    # BN2 (eval) folded through square + depth-sum + pool:
    #   pooled_side = s^2 * P1 + 2*s*t * P2 + t^2,
    #   P1 = (l2^2 + r2^2) @ poolm, P2 = (l2 + r2) @ poolm.
    s2p = s2.reshape(N_PAIR, 2, C2)                          # [:,0]=l side, [:,1]=r side
    t2p = t2.reshape(N_PAIR, 2, C2)
    bn_a = (s2p ** 2)[..., None]                             # [4, 2, 20, 1]
    bn_b = (2.0 * s2p * t2p)[..., None]
    bn_c = (t2p ** 2)[..., None]

    # Width part of AvgPool3d((2,1,62), stride (1,1,12)) as a 0/1 matrix, 1/124 folded.
    w_idx = jnp.arange(W_CONV)[:, None]
    j_idx = jnp.arange(W_POOL)[None, :]
    poolm = (((w_idx >= 12 * j_idx) & (w_idx < 12 * j_idx + 62)).astype(f32) / 124.0)

    # Classifier weight pre-permuted to (pair, class, side*20 + chan, width).
    wc = params["wc"].reshape(N_CLS, N_PAIR, C2, 2, W_POOL)  # [cls, pair, o, side, w]
    wc4 = jnp.transpose(wc, (1, 0, 3, 2, 4)).reshape(N_PAIR, N_CLS, 2 * C2, W_POOL)

    return {"w1s": w1s.astype(bf16), "w2tap": w2tap.astype(bf16),
            "cbias": cbias.astype(f32),
            "bn_a": bn_a.astype(f32), "bn_b": bn_b.astype(f32), "bn_c": bn_c.astype(f32),
            "wc4": wc4.astype(f32), "poolm": poolm.astype(f32),
            "bc": params["bc"].astype(f32)}


def _pick_batch_tile(batch):
    # Keep >= 2 steps on the leading "parallel" axis (megacore / v7x 2-TC sharding);
    # cap the tile at 8 samples so the bf16 slabs stay small on every generation.
    if batch <= 1:
        return 1
    return max(1, min(8, batch // 2))


@jax.jit
def forward(x, prep):
    B = x.shape[0]
    TB = _pick_batch_tile(B)
    B_pad = ((B + TB - 1) // TB) * TB
    num_bt = B_pad // TB

    # [B, 8, 1, 22, W] -> [B, 4, 44, W], zero-pad the conv2 borders on the host and
    # fold TB samples into the lane axis: [num_bt, pair, 44, TB*SEG] (bf16).
    xk = x[:, :, 0].reshape(B, N_PAIR, 2 * C1, W_IN)
    if B_pad != B:
        xk = jnp.concatenate(
            [xk, jnp.zeros((B_pad - B, N_PAIR, 2 * C1, W_IN), xk.dtype)], axis=0)
    xk = jnp.pad(xk, ((0, 0), (0, 0), (0, 0), (6, 6)))
    xk = xk.reshape(num_bt, TB, N_PAIR, 2 * C1, SEG)
    xk = jnp.transpose(xk, (0, 2, 3, 1, 4)).reshape(num_bt, N_PAIR, 2 * C1, TB * SEG)
    xk = xk.astype(jnp.bfloat16)

    const4 = lambda bt, p: (0, 0, 0, 0)
    const3 = lambda bt, p: (0, 0, 0)
    grid_spec = pltpu.PrefetchScalarGridSpec(
        num_scalar_prefetch=0,
        grid=(num_bt, N_PAIR),
        in_specs=[
            pl.BlockSpec((1, 1, 2 * C1, TB * SEG), lambda bt, p: (bt, p, 0, 0)),
            # Parameter blocks: full arrays + constant index_map -> fetched once,
            # resident in VMEM for the whole grid (~1 MB total).
            pl.BlockSpec((N_PAIR, ROWS1, 2 * C1), const3),            # w1s (bf16)
            pl.BlockSpec((N_PAIR, KW, 2 * C2, ROWS1), const4),        # w2tap (bf16)
            pl.BlockSpec((N_PAIR, 2 * C2, W_CONV), const3),           # cbias
            pl.BlockSpec((N_PAIR, 2, C2, 1), const4),                 # bn_a
            pl.BlockSpec((N_PAIR, 2, C2, 1), const4),                 # bn_b
            pl.BlockSpec((N_PAIR, 2, C2, 1), const4),                 # bn_c
            pl.BlockSpec((N_PAIR, N_CLS, 2 * C2, W_POOL), const4),    # wc4
            pl.BlockSpec((W_CONV, W_POOL), lambda bt, p: (0, 0)),     # poolm
        ],
        out_specs=pl.BlockSpec((1, N_CLS, TB), lambda bt, p: (bt, 0, 0)),
        scratch_shapes=[
            pltpu.VMEM((ROWS1, TB * SEG), jnp.bfloat16),   # padded conv1 slab
        ],
    )
    out3 = pl.pallas_call(
        _pair_kernel,
        out_shape=jax.ShapeDtypeStruct((num_bt, N_CLS, TB), jnp.float32),
        grid_spec=grid_spec,
        compiler_params=pltpu.CompilerParams(
            dimension_semantics=("parallel", "arbitrary"),
            vmem_limit_bytes=32 * 1024 * 1024),
    )(xk, prep["w1s"], prep["w2tap"], prep["cbias"], prep["bn_a"], prep["bn_b"],
      prep["bn_c"], prep["wc4"], prep["poolm"])

    logits = jnp.transpose(out3, (0, 2, 1)).reshape(B_pad, N_CLS)[:B]
    return logits + prep["bc"][None, :]


def reference_forward(x, params):
    """Plain-JAX reference mirroring the PyTorch forward (eval-mode BN/Dropout)."""
    s1 = params["g1"] / jnp.sqrt(params["rv1"] + BN_EPS)
    t1 = params["be1"] - s1 * params["rm1"]
    s2 = params["g2"] / jnp.sqrt(params["rv2"] + BN_EPS)
    t2 = params["be2"] - s2 * params["rm2"]
    B = x.shape[0]
    outs = []
    for g in range(N_PAIR):
        i = 2 * g
        xl = x[:, i, 0]
        xr = x[:, i + 1, 0]
        l1 = jnp.einsum('oh,bhw->bow', params["w1"][i], xl) + params["b1"][i][None, :, None]
        r1 = jnp.einsum('oh,bhw->bow', params["w1"][i + 1], xr) + params["b1"][i + 1][None, :, None]

        def bn1(a, j): return a * s1[j][None, :, None] + t1[j][None, :, None]
        def bn2(a, j): return a * s2[j][None, :, None] + t2[j][None, :, None]

        def conv2(d0, d1, j):
            inp = jnp.stack([d0, d1], axis=2)            # [B, 22, 2, W]
            w = params["w2"][j]                          # [20, 22, 2, 12]
            y = lax.conv_general_dilated(
                inp, w, window_strides=(1, 1), padding=((0, 0), (6, 6)),
                dimension_numbers=('NCHW', 'OIHW', 'NCHW'))
            return y[:, :, 0, :] + params["b2"][j][None, :, None]

        l2 = conv2(bn1(l1, i), bn1(r1, i), i)
        r2 = conv2(bn1(r1, i + 1), bn1(l1, i + 1), i + 1)

        sql = bn2(l2, i) ** 2 + bn2(r2, i) ** 2
        sqr = bn2(r2, i + 1) ** 2 + bn2(l2, i + 1) ** 2

        def pool(a):
            cols = [a[..., 12 * j:12 * j + 62].mean(-1) for j in range(W_POOL)]
            return jnp.stack(cols, axis=-1) / 2.0

        fl = jnp.log(pool(sql))
        fr = jnp.log(pool(sqr))
        outs.append(jnp.stack([fl, fr], axis=2).reshape(B, -1))
    feats = jnp.concatenate(outs, axis=1)
    return feats @ params["wc"].T + params["bc"][None, :]


if __name__ == "__main__":
    key = jax.random.PRNGKey(0)
    pkey, xkey = jax.random.split(key)
    params = init_params(pkey)
    prep = prepare_params(params)          # host-side BN fold / weight layout, done once

    B = 2
    x = jax.random.normal(xkey, (B, 8, 1, C1, W_IN), jnp.float32)

    out = forward(x, prep)
    out = jax.block_until_ready(out)

    ref = reference_forward(x, params)
    err = float(jnp.max(jnp.abs(out - ref)))
    assert out.shape == (B, N_CLS), out.shape
    # bf16 conv matmuls loosen the f32 tolerance slightly (log amplifies rel error).
    assert err < 3e-2, f"mismatch vs reference: {err}"
    # TODO(synk): training-mode Dropout RNG / batch-statistics BatchNorm not modeled (eval semantics).
    print("KERNEL_OK")
</pallas_src>

<mosaic_0001>
module attributes {stable_mosaic.version = 11 : i64} {
  func.func @_pair_kernel(%arg0: i32, %arg1: i32, %arg2: memref<1x1x44x565xbf16, #tpu.memory_space<vmem>>, %arg3: memref<4x88x44xbf16, #tpu.memory_space<vmem>>, %arg4: memref<4x12x40x88xbf16, #tpu.memory_space<vmem>>, %arg5: memref<4x40x554xf32, #tpu.memory_space<vmem>>, %arg6: memref<4x2x20x1xf32, #tpu.memory_space<vmem>>, %arg7: memref<4x2x20x1xf32, #tpu.memory_space<vmem>>, %arg8: memref<4x2x20x1xf32, #tpu.memory_space<vmem>>, %arg9: memref<4x4x40x42xf32, #tpu.memory_space<vmem>>, %arg10: memref<554x42xf32, #tpu.memory_space<vmem>>, %arg11: memref<1x4x1xf32, #tpu.memory_space<vmem>>, %arg12: memref<88x565xbf16, #tpu.memory_space<vmem>>) attributes {dimension_semantics = [#tpu.dimension_semantics<parallel>, #tpu.dimension_semantics<arbitrary>], iteration_bounds = array<i64: 2, 4>, scalar_prefetch = 0 : i64, scratch_operands = 1 : i64, tpu.core_type = #tpu.core_type<tc>, window_params = [{transform_indices = @transform_0, window_bounds = array<i64: 1, 1, 44, 565>}, {pipeline_mode = #tpu.pipeline_mode<synchronous>, transform_indices = @transform_1, window_bounds = array<i64: 4, 88, 44>}, {pipeline_mode = #tpu.pipeline_mode<synchronous>, transform_indices = @transform_2, window_bounds = array<i64: 4, 12, 40, 88>}, {pipeline_mode = #tpu.pipeline_mode<synchronous>, transform_indices = @transform_3, window_bounds = array<i64: 4, 40, 554>}, {pipeline_mode = #tpu.pipeline_mode<synchronous>, transform_indices = @transform_4, window_bounds = array<i64: 4, 2, 20, 1>}, {pipeline_mode = #tpu.pipeline_mode<synchronous>, transform_indices = @transform_5, window_bounds = array<i64: 4, 2, 20, 1>}, {pipeline_mode = #tpu.pipeline_mode<synchronous>, transform_indices = @transform_6, window_bounds = array<i64: 4, 2, 20, 1>}, {pipeline_mode = #tpu.pipeline_mode<synchronous>, transform_indices = @transform_7, window_bounds = array<i64: 4, 4, 40, 42>}, {pipeline_mode = #tpu.pipeline_mode<synchronous>, transform_indices = @transform_8, window_bounds = array<i64: 554, 42>}, {transform_indices = @transform_9, window_bounds = array<i64: 1, 4, 1>}]} {
    %c0_i32 = arith.constant 0 : i32
    %0 = arith.cmpi eq, %arg1, %c0_i32 : i32
    %1 = arith.extui %0 : i1 to i32
    %c0_i32_0 = arith.constant 0 : i32
    %2 = arith.cmpi ne, %1, %c0_i32_0 : i32
    scf.if %2 {
      %cst_97 = arith.constant 0.000000e+00 : f32
      %156 = vector.broadcast %cst_97 : f32 to vector<1x4x1xf32>
      %c0_98 = arith.constant 0 : index
      %c0_99 = arith.constant 0 : index
      %c0_100 = arith.constant 0 : index
      %157 = vector.load %arg11[%c0_98, %c0_99, %c0_100] : memref<1x4x1xf32, #tpu.memory_space<vmem>>, vector<1x4x1xf32>
      tpu.vector_store %arg11[%c0_98, %c0_99, %c0_100], %156 {strides = array<i32>} : memref<1x4x1xf32, #tpu.memory_space<vmem>>, vector<1x4x1xf32>,
    } else {
    }
    %c0 = arith.constant 0 : index
    %c0_1 = arith.constant 0 : index
    %c0_2 = arith.constant 0 : index
    %c0_3 = arith.constant 0 : index
    %3 = vector.load %arg2[%c0, %c0_1, %c0_2, %c0_3] : memref<1x1x44x565xbf16, #tpu.memory_space<vmem>>, vector<1x1x44x565xbf16>
    %4 = vector.shape_cast %3 : vector<1x1x44x565xbf16> to vector<44x565xbf16>
    %5 = arith.index_cast %arg1 : i32 to index
    %c0_4 = arith.constant 0 : index
    %c0_5 = arith.constant 0 : index
    %6 = vector.load %arg3[%5, %c0_4, %c0_5] : memref<4x88x44xbf16, #tpu.memory_space<vmem>>, vector<1x88x44xbf16>
    %7 = vector.shape_cast %6 : vector<1x88x44xbf16> to vector<88x44xbf16>
    %cst = arith.constant dense<0.000000e+00> : vector<88x565xf32>
    %8 = tpu.matmul %7, %4, %cst {dimension_numbers = #tpu.dot_dimension_numbers<[1], [0], [0], [1], [0, 0, 1, 1], [], []>} : vector<88x44xbf16>, vector<44x565xbf16>, vector<88x565xf32> -> vector<88x565xf32>
    %9 = arith.truncf %8 : vector<88x565xf32> to vector<88x565xbf16>
    %c0_6 = arith.constant 0 : index
    %c0_7 = arith.constant 0 : index
    %10 = vector.load %arg12[%c0_6, %c0_7] : memref<88x565xbf16, #tpu.memory_space<vmem>>, vector<88x565xbf16>
    tpu.vector_store %arg12[%c0_6, %c0_7], %9 {strides = array<i32>} : memref<88x565xbf16, #tpu.memory_space<vmem>>, vector<88x565xbf16>,
    %11 = arith.index_cast %arg1 : i32 to index
    %c0_8 = arith.constant 0 : index
    %c0_9 = arith.constant 0 : index
    %c0_10 = arith.constant 0 : index
    %12 = vector.load %arg4[%11, %c0_8, %c0_9, %c0_10] : memref<4x12x40x88xbf16, #tpu.memory_space<vmem>>, vector<1x1x40x88xbf16>
    %13 = vector.shape_cast %12 : vector<1x1x40x88xbf16> to vector<40x88xbf16>
    %c0_11 = arith.constant 0 : index
    %c0_12 = arith.constant 0 : index
    %14 = vector.load %arg12[%c0_11, %c0_12] : memref<88x565xbf16, #tpu.memory_space<vmem>>, vector<88x554xbf16>
    %cst_13 = arith.constant dense<0.000000e+00> : vector<40x554xf32>
    %15 = tpu.matmul %13, %14, %cst_13 {dimension_numbers = #tpu.dot_dimension_numbers<[1], [0], [0], [1], [0, 0, 1, 1], [], []>} : vector<40x88xbf16>, vector<88x554xbf16>, vector<40x554xf32> -> vector<40x554xf32>
    %16 = arith.index_cast %arg1 : i32 to index
    %c1 = arith.constant 1 : index
    %c0_14 = arith.constant 0 : index
    %c0_15 = arith.constant 0 : index
    %17 = vector.load %arg4[%16, %c1, %c0_14, %c0_15] : memref<4x12x40x88xbf16, #tpu.memory_space<vmem>>, vector<1x1x40x88xbf16>
    %18 = vector.shape_cast %17 : vector<1x1x40x88xbf16> to vector<40x88xbf16>
    %c0_16 = arith.constant 0 : index
    %c1_17 = arith.constant 1 : index
    %19 = vector.load %arg12[%c0_16, %c1_17] : memref<88x565xbf16, #tpu.memory_space<vmem>>, vector<88x554xbf16>
    %cst_18 = arith.constant dense<0.000000e+00> : vector<40x554xf32>
    %20 = tpu.matmul %18, %19, %cst_18 {dimension_numbers = #tpu.dot_dimension_numbers<[1], [0], [0], [1], [0, 0, 1, 1], [], []>} : vector<40x88xbf16>, vector<88x554xbf16>, vector<40x554xf32> -> vector<40x554xf32>
    %21 = arith.addf %15, %20 : vector<40x554xf32>
    %22 = arith.index_cast %arg1 : i32 to index
    %c2 = arith.constant 2 : index
    %c0_19 = arith.constant 0 : index
    %c0_20 = arith.constant 0 : index
    %23 = vector.load %arg4[%22, %c2, %c0_19, %c0_20] : memref<4x12x40x88xbf16, #tpu.memory_space<vmem>>, vector<1x1x40x88xbf16>
    %24 = vector.shape_cast %23 : vector<1x1x40x88xbf16> to vector<40x88xbf16>
    %c0_21 = arith.constant 0 : index
    %c2_22 = arith.constant 2 : index
    %25 = vector.load %arg12[%c0_21, %c2_22] : memref<88x565xbf16, #tpu.memory_space<vmem>>, vector<88x554xbf16>
    %cst_23 = arith.constant dense<0.000000e+00> : vector<40x554xf32>
    %26 = tpu.matmul %24, %25, %cst_23 {dimension_numbers = #tpu.dot_dimension_numbers<[1], [0], [0], [1], [0, 0, 1, 1], [], []>} : vector<40x88xbf16>, vector<88x554xbf16>, vector<40x554xf32> -> vector<40x554xf32>
    %27 = arith.addf %21, %26 : vector<40x554xf32>
    %28 = arith.index_cast %arg1 : i32 to index
    %c3 = arith.constant 3 : index
    %c0_24 = arith.constant 0 : index
    %c0_25 = arith.constant 0 : index
    %29 = vector.load %arg4[%28, %c3, %c0_24, %c0_25] : memref<4x12x40x88xbf16, #tpu.memory_space<vmem>>, vector<1x1x40x88xbf16>
    %30 = vector.shape_cast %29 : vector<1x1x40x88xbf16> to vector<40x88xbf16>
    %c0_26 = arith.constant 0 : index
    %c3_27 = arith.constant 3 : index
    %31 = vector.load %arg12[%c0_26, %c3_27] : memref<88x565xbf16, #tpu.memory_space<vmem>>, vector<88x554xbf16>
    %cst_28 = arith.constant dense<0.000000e+00> : vector<40x554xf32>
    %32 = tpu.matmul %30, %31, %cst_28 {dimension_numbers = #tpu.dot_dimension_numbers<[1], [0], [0], [1], [0, 0, 1, 1], [], []>} : vector<40x88xbf16>, vector<88x554xbf16>, vector<40x554xf32> -> vector<40x554xf32>
    %33 = arith.addf %27, %32 : vector<40x554xf32>
    %34 = arith.index_cast %arg1 : i32 to index
    %c4 = arith.constant 4 : index
    %c0_29 = arith.constant 0 : index
    %c0_30 = arith.constant 0 : index
    %35 = vector.load %arg4[%34, %c4, %c0_29, %c0_30] : memref<4x12x40x88xbf16, #tpu.memory_space<vmem>>, vector<1x1x40x88xbf16>
    %36 = vector.shape_cast %35 : vector<1x1x40x88xbf16> to vector<40x88xbf16>
    %c0_31 = arith.constant 0 : index
    %c4_32 = arith.constant 4 : index
    %37 = vector.load %arg12[%c0_31, %c4_32] : memref<88x565xbf16, #tpu.memory_space<vmem>>, vector<88x554xbf16>
    %cst_33 = arith.constant dense<0.000000e+00> : vector<40x554xf32>
    %38 = tpu.matmul %36, %37, %cst_33 {dimension_numbers = #tpu.dot_dimension_numbers<[1], [0], [0], [1], [0, 0, 1, 1], [], []>} : vector<40x88xbf16>, vector<88x554xbf16>, vector<40x554xf32> -> vector<40x554xf32>
    %39 = arith.addf %33, %38 : vector<40x554xf32>
    %40 = arith.index_cast %arg1 : i32 to index
    %c5 = arith.constant 5 : index
    %c0_34 = arith.constant 0 : index
    %c0_35 = arith.constant 0 : index
    %41 = vector.load %arg4[%40, %c5, %c0_34, %c0_35] : memref<4x12x40x88xbf16, #tpu.memory_space<vmem>>, vector<1x1x40x88xbf16>
    %42 = vector.shape_cast %41 : vector<1x1x40x88xbf16> to vector<40x88xbf16>
    %c0_36 = arith.constant 0 : index
    %c5_37 = arith.constant 5 : index
    %43 = vector.load %arg12[%c0_36, %c5_37] : memref<88x565xbf16, #tpu.memory_space<vmem>>, vector<88x554xbf16>
    %cst_38 = arith.constant dense<0.000000e+00> : vector<40x554xf32>
    %44 = tpu.matmul %42, %43, %cst_38 {dimension_numbers = #tpu.dot_dimension_numbers<[1], [0], [0], [1], [0, 0, 1, 1], [], []>} : vector<40x88xbf16>, vector<88x554xbf16>, vector<40x554xf32> -> vector<40x554xf32>
    %45 = arith.addf %39, %44 : vector<40x554xf32>
    %46 = arith.index_cast %arg1 : i32 to index
    %c6 = arith.constant 6 : index
    %c0_39 = arith.constant 0 : index
    %c0_40 = arith.constant 0 : index
    %47 = vector.load %arg4[%46, %c6, %c0_39, %c0_40] : memref<4x12x40x88xbf16, #tpu.memory_space<vmem>>, vector<1x1x40x88xbf16>
    %48 = vector.shape_cast %47 : vector<1x1x40x88xbf16> to vector<40x88xbf16>
    %c0_41 = arith.constant 0 : index
    %c6_42 = arith.constant 6 : index
    %49 = vector.load %arg12[%c0_41, %c6_42] : memref<88x565xbf16, #tpu.memory_space<vmem>>, vector<88x554xbf16>
    %cst_43 = arith.constant dense<0.000000e+00> : vector<40x554xf32>
    %50 = tpu.matmul %48, %49, %cst_43 {dimension_numbers = #tpu.dot_dimension_numbers<[1], [0], [0], [1], [0, 0, 1, 1], [], []>} : vector<40x88xbf16>, vector<88x554xbf16>, vector<40x554xf32> -> vector<40x554xf32>
    %51 = arith.addf %45, %50 : vector<40x554xf32>
    %52 = arith.index_cast %arg1 : i32 to index
    %c7 = arith.constant 7 : index
    %c0_44 = arith.constant 0 : index
    %c0_45 = arith.constant 0 : index
    %53 = vector.load %arg4[%52, %c7, %c0_44, %c0_45] : memref<4x12x40x88xbf16, #tpu.memory_space<vmem>>, vector<1x1x40x88xbf16>
    %54 = vector.shape_cast %53 : vector<1x1x40x88xbf16> to vector<40x88xbf16>
    %c0_46 = arith.constant 0 : index
    %c7_47 = arith.constant 7 : index
    %55 = vector.load %arg12[%c0_46, %c7_47] : memref<88x565xbf16, #tpu.memory_space<vmem>>, vector<88x554xbf16>
    %cst_48 = arith.constant dense<0.000000e+00> : vector<40x554xf32>
    %56 = tpu.matmul %54, %55, %cst_48 {dimension_numbers = #tpu.dot_dimension_numbers<[1], [0], [0], [1], [0, 0, 1, 1], [], []>} : vector<40x88xbf16>, vector<88x554xbf16>, vector<40x554xf32> -> vector<40x554xf32>
    %57 = arith.addf %51, %56 : vector<40x554xf32>
    %58 = arith.index_cast %arg1 : i32 to index
    %c8 = arith.constant 8 : index
    %c0_49 = arith.constant 0 : index
    %c0_50 = arith.constant 0 : index
    %59 = vector.load %arg4[%58, %c8, %c0_49, %c0_50] : memref<4x12x40x88xbf16, #tpu.memory_space<vmem>>, vector<1x1x40x88xbf16>
    %60 = vector.shape_cast %59 : vector<1x1x40x88xbf16> to vector<40x88xbf16>
    %c0_51 = arith.constant 0 : index
    %c8_52 = arith.constant 8 : index
    %61 = vector.load %arg12[%c0_51, %c8_52] : memref<88x565xbf16, #tpu.memory_space<vmem>>, vector<88x554xbf16>
    %cst_53 = arith.constant dense<0.000000e+00> : vector<40x554xf32>
    %62 = tpu.matmul %60, %61, %cst_53 {dimension_numbers = #tpu.dot_dimension_numbers<[1], [0], [0], [1], [0, 0, 1, 1], [], []>} : vector<40x88xbf16>, vector<88x554xbf16>, vector<40x554xf32> -> vector<40x554xf32>
    %63 = arith.addf %57, %62 : vector<40x554xf32>
    %64 = arith.index_cast %arg1 : i32 to index
    %c9 = arith.constant 9 : index
    %c0_54 = arith.constant 0 : index
    %c0_55 = arith.constant 0 : index
    %65 = vector.load %arg4[%64, %c9, %c0_54, %c0_55] : memref<4x12x40x88xbf16, #tpu.memory_space<vmem>>, vector<1x1x40x88xbf16>
    %66 = vector.shape_cast %65 : vector<1x1x40x88xbf16> to vector<40x88xbf16>
    %c0_56 = arith.constant 0 : index
    %c9_57 = arith.constant 9 : index
    %67 = vector.load %arg12[%c0_56, %c9_57] : memref<88x565xbf16, #tpu.memory_space<vmem>>, vector<88x554xbf16>
    %cst_58 = arith.constant dense<0.000000e+00> : vector<40x554xf32>
    %68 = tpu.matmul %66, %67, %cst_58 {dimension_numbers = #tpu.dot_dimension_numbers<[1], [0], [0], [1], [0, 0, 1, 1], [], []>} : vector<40x88xbf16>, vector<88x554xbf16>, vector<40x554xf32> -> vector<40x554xf32>
    %69 = arith.addf %63, %68 : vector<40x554xf32>
    %70 = arith.index_cast %arg1 : i32 to index
    %c10 = arith.constant 10 : index
    %c0_59 = arith.constant 0 : index
    %c0_60 = arith.constant 0 : index
    %71 = vector.load %arg4[%70, %c10, %c0_59, %c0_60] : memref<4x12x40x88xbf16, #tpu.memory_space<vmem>>, vector<1x1x40x88xbf16>
    %72 = vector.shape_cast %71 : vector<1x1x40x88xbf16> to vector<40x88xbf16>
    %c0_61 = arith.constant 0 : index
    %c10_62 = arith.constant 10 : index
    %73 = vector.load %arg12[%c0_61, %c10_62] : memref<88x565xbf16, #tpu.memory_space<vmem>>, vector<88x554xbf16>
    %cst_63 = arith.constant dense<0.000000e+00> : vector<40x554xf32>
    %74 = tpu.matmul %72, %73, %cst_63 {dimension_numbers = #tpu.dot_dimension_numbers<[1], [0], [0], [1], [0, 0, 1, 1], [], []>} : vector<40x88xbf16>, vector<88x554xbf16>, vector<40x554xf32> -> vector<40x554xf32>
    %75 = arith.addf %69, %74 : vector<40x554xf32>
    %76 = arith.index_cast %arg1 : i32 to index
    %c11 = arith.constant 11 : index
    %c0_64 = arith.constant 0 : index
    %c0_65 = arith.constant 0 : index
    %77 = vector.load %arg4[%76, %c11, %c0_64, %c0_65] : memref<4x12x40x88xbf16, #tpu.memory_space<vmem>>, vector<1x1x40x88xbf16>
    %78 = vector.shape_cast %77 : vector<1x1x40x88xbf16> to vector<40x88xbf16>
    %c0_66 = arith.constant 0 : index
    %c11_67 = arith.constant 11 : index
    %79 = vector.load %arg12[%c0_66, %c11_67] : memref<88x565xbf16, #tpu.memory_space<vmem>>, vector<88x554xbf16>
    %cst_68 = arith.constant dense<0.000000e+00> : vector<40x554xf32>
    %80 = tpu.matmul %78, %79, %cst_68 {dimension_numbers = #tpu.dot_dimension_numbers<[1], [0], [0], [1], [0, 0, 1, 1], [], []>} : vector<40x88xbf16>, vector<88x554xbf16>, vector<40x554xf32> -> vector<40x554xf32>
    %81 = arith.addf %75, %80 : vector<40x554xf32>
    %82 = arith.index_cast %arg1 : i32 to index
    %c0_69 = arith.constant 0 : index
    %c0_70 = arith.constant 0 : index
    %83 = vector.load %arg5[%82, %c0_69, %c0_70] : memref<4x40x554xf32, #tpu.memory_space<vmem>>, vector<1x40x554xf32>
    %84 = vector.shape_cast %83 : vector<1x40x554xf32> to vector<40x554xf32>
    %c0_71 = arith.constant 0 : index
    %c0_72 = arith.constant 0 : index
    %85 = vector.load %arg10[%c0_71, %c0_72] : memref<554x42xf32, #tpu.memory_space<vmem>>, vector<554x42xf32>
    %86 = arith.index_cast %arg1 : i32 to index
    %c0_73 = arith.constant 0 : index
    %c0_74 = arith.constant 0 : index
    %c0_75 = arith.constant 0 : index
    %87 = vector.load %arg6[%86, %c0_73, %c0_74, %c0_75] : memref<4x2x20x1xf32, #tpu.memory_space<vmem>>, vector<1x2x20x1xf32>
    %88 = vector.shape_cast %87 : vector<1x2x20x1xf32> to vector<2x20x1xf32>
    %89 = arith.index_cast %arg1 : i32 to index
    %c0_76 = arith.constant 0 : index
    %c0_77 = arith.constant 0 : index
    %c0_78 = arith.constant 0 : index
    %90 = vector.load %arg7[%89, %c0_76, %c0_77, %c0_78] : memref<4x2x20x1xf32, #tpu.memory_space<vmem>>, vector<1x2x20x1xf32>
    %91 = vector.shape_cast %90 : vector<1x2x20x1xf32> to vector<2x20x1xf32>
    %92 = arith.index_cast %arg1 : i32 to index
    %c0_79 = arith.constant 0 : index
    %c0_80 = arith.constant 0 : index
    %c0_81 = arith.constant 0 : index
    %93 = vector.load %arg8[%92, %c0_79, %c0_80, %c0_81] : memref<4x2x20x1xf32, #tpu.memory_space<vmem>>, vector<1x2x20x1xf32>
    %94 = vector.shape_cast %93 : vector<1x2x20x1xf32> to vector<2x20x1xf32>
    %95 = arith.index_cast %arg1 : i32 to index
    %c0_82 = arith.constant 0 : index
    %c0_83 = arith.constant 0 : index
    %c0_84 = arith.constant 0 : index
    %96 = vector.load %arg9[%95, %c0_82, %c0_83, %c0_84] : memref<4x4x40x42xf32, #tpu.memory_space<vmem>>, vector<1x4x40x42xf32>
    %97 = vector.shape_cast %96 : vector<1x4x40x42xf32> to vector<4x40x42xf32>
    %98 = vector.extract_strided_slice %97 {offsets = [0, 0, 0], sizes = [4, 20, 42], strides = [1, 1, 1]} : vector<4x40x42xf32> to vector<4x20x42xf32>
    %99 = vector.extract_strided_slice %97 {offsets = [0, 20, 0], sizes = [4, 20, 42], strides = [1, 1, 1]} : vector<4x40x42xf32> to vector<4x20x42xf32>
    %100 = arith.addf %81, %84 : vector<40x554xf32>
    %101 = vector.extract_strided_slice %100 {offsets = [0, 0], sizes = [20, 554], strides = [1, 1]} : vector<40x554xf32> to vector<20x554xf32>
    %102 = vector.extract_strided_slice %100 {offsets = [20, 0], sizes = [20, 554], strides = [1, 1]} : vector<40x554xf32> to vector<20x554xf32>
    %103 = arith.mulf %101, %101 : vector<20x554xf32>
    %104 = arith.mulf %102, %102 : vector<20x554xf32>
    %105 = arith.addf %103, %104 : vector<20x554xf32>
    %cst_85 = arith.constant dense<0.000000e+00> : vector<20x42xf32>
    %106 = tpu.matmul %105, %85, %cst_85 {dimension_numbers = #tpu.dot_dimension_numbers<[1], [0], [0], [1], [0, 0, 1, 1], [], []>} : vector<20x554xf32>, vector<554x42xf32>, vector<20x42xf32> -> vector<20x42xf32>
    %107 = arith.addf %101, %102 : vector<20x554xf32>
    %cst_86 = arith.constant dense<0.000000e+00> : vector<20x42xf32>
    %108 = tpu.matmul %107, %85, %cst_86 {dimension_numbers = #tpu.dot_dimension_numbers<[1], [0], [0], [1], [0, 0, 1, 1], [], []>} : vector<20x554xf32>, vector<554x42xf32>, vector<20x42xf32> -> vector<20x42xf32>
    %109 = vector.extract_strided_slice %88 {offsets = [0, 0, 0], sizes = [1, 20, 1], strides = [1, 1, 1]} : vector<2x20x1xf32> to vector<1x20x1xf32>
    %110 = vector.shape_cast %109 : vector<1x20x1xf32> to vector<20x1xf32>
    %111 = vector.broadcast %110 : vector<20x1xf32> to vector<20x42xf32>
    %112 = arith.mulf %111, %106 : vector<20x42xf32>
    %113 = vector.extract_strided_slice %91 {offsets = [0, 0, 0], sizes = [1, 20, 1], strides = [1, 1, 1]} : vector<2x20x1xf32> to vector<1x20x1xf32>
    %114 = vector.shape_cast %113 : vector<1x20x1xf32> to vector<20x1xf32>
    %115 = vector.broadcast %114 : vector<20x1xf32> to vector<20x42xf32>
    %116 = arith.mulf %115, %108 : vector<20x42xf32>
    %117 = arith.addf %112, %116 : vector<20x42xf32>
    %118 = vector.extract_strided_slice %94 {offsets = [0, 0, 0], sizes = [1, 20, 1], strides = [1, 1, 1]} : vector<2x20x1xf32> to vector<1x20x1xf32>
    %119 = vector.shape_cast %118 : vector<1x20x1xf32> to vector<20x1xf32>
    %120 = vector.broadcast %119 : vector<20x1xf32> to vector<20x42xf32>
    %121 = arith.addf %117, %120 : vector<20x42xf32>
    %122 = math.log %121 : vector<20x42xf32>
    %123 = vector.extract_strided_slice %88 {offsets = [1, 0, 0], sizes = [1, 20, 1], strides = [1, 1, 1]} : vector<2x20x1xf32> to vector<1x20x1xf32>
    %124 = vector.shape_cast %123 : vector<1x20x1xf32> to vector<20x1xf32>
    %125 = vector.broadcast %124 : vector<20x1xf32> to vector<20x42xf32>
    %126 = arith.mulf %125, %106 : vector<20x42xf32>
    %127 = vector.extract_strided_slice %91 {offsets = [1, 0, 0], sizes = [1, 20, 1], strides = [1, 1, 1]} : vector<2x20x1xf32> to vector<1x20x1xf32>
    %128 = vector.shape_cast %127 : vector<1x20x1xf32> to vector<20x1xf32>
    %129 = vector.broadcast %128 : vector<20x1xf32> to vector<20x42xf32>
    %130 = arith.mulf %129, %108 : vector<20x42xf32>
    %131 = arith.addf %126, %130 : vector<20x42xf32>
    %132 = vector.extract_strided_slice %94 {offsets = [1, 0, 0], sizes = [1, 20, 1], strides = [1, 1, 1]} : vector<2x20x1xf32> to vector<1x20x1xf32>
    %133 = vector.shape_cast %132 : vector<1x20x1xf32> to vector<20x1xf32>
    %134 = vector.broadcast %133 : vector<20x1xf32> to vector<20x42xf32>
    %135 = arith.addf %131, %134 : vector<20x42xf32>
    %136 = math.log %135 : vector<20x42xf32>
    %137 = vector.shape_cast %122 : vector<20x42xf32> to vector<1x20x42xf32>
    %138 = vector.broadcast %137 : vector<1x20x42xf32> to vector<4x20x42xf32>
    %139 = arith.mulf %98, %138 : vector<4x20x42xf32>
    %cst_87 = arith.constant dense<0.000000e+00> : vector<4x20xf32>
    %140 = vector.multi_reduction <add>, %139, %cst_87 [2] : vector<4x20x42xf32> to vector<4x20xf32>
    %cst_88 = arith.constant dense<0.000000e+00> : vector<4xf32>
    %141 = vector.multi_reduction <add>, %140, %cst_88 [1] : vector<4x20xf32> to vector<4xf32>
    %142 = vector.shape_cast %141 : vector<4xf32> to vector<4x1xf32>
    %143 = vector.shape_cast %136 : vector<20x42xf32> to vector<1x20x42xf32>
    %144 = vector.broadcast %143 : vector<1x20x42xf32> to vector<4x20x42xf32>
    %145 = arith.mulf %99, %144 : vector<4x20x42xf32>
    %cst_89 = arith.constant dense<0.000000e+00> : vector<4x20xf32>
    %146 = vector.multi_reduction <add>, %145, %cst_89 [2] : vector<4x20x42xf32> to vector<4x20xf32>
    %cst_90 = arith.constant dense<0.000000e+00> : vector<4xf32>
    %147 = vector.multi_reduction <add>, %146, %cst_90 [1] : vector<4x20xf32> to vector<4xf32>
    %148 = vector.shape_cast %147 : vector<4xf32> to vector<4x1xf32>
    %149 = arith.addf %142, %148 : vector<4x1xf32>
    %c0_91 = arith.constant 0 : index
    %c0_92 = arith.constant 0 : index
    %c0_93 = arith.constant 0 : index
    %150 = vector.load %arg11[%c0_91, %c0_92, %c0_93] : memref<1x4x1xf32, #tpu.memory_space<vmem>>, vector<1x4x1xf32>
    %151 = vector.shape_cast %150 : vector<1x4x1xf32> to vector<4x1xf32>
    %152 = arith.addf %151, %149 : vector<4x1xf32>
    %c0_94 = arith.constant 0 : index
    %c0_95 = arith.constant 0 : index
    %c0_96 = arith.constant 0 : index
    %153 = vector.load %arg11[%c0_94, %c0_95, %c0_96] : memref<1x4x1xf32, #tpu.memory_space<vmem>>, vector<1x4x1xf32>
    %154 = vector.shape_cast %153 : vector<1x4x1xf32> to vector<4x1xf32>
    %155 = vector.shape_cast %152 : vector<4x1xf32> to vector<1x4x1xf32>
    tpu.vector_store %arg11[%c0_94, %c0_95, %c0_96], %155 {strides = array<i32>} : memref<1x4x1xf32, #tpu.memory_space<vmem>>, vector<1x4x1xf32>,
    return
  }
  func.func @transform_0(%arg0: i32, %arg1: i32) -> (i32, i32, i32, i32) {
    %c0_i32 = arith.constant 0 : i32
    %c0_i32_0 = arith.constant 0 : i32
    %c0_i32_1 = arith.constant 0 : i32
    return %arg0, %arg1, %c0_i32, %c0_i32_0 : i32, i32, i32, i32
  }
  func.func @transform_1(%arg0: i32, %arg1: i32) -> (i32, i32, i32) {
    %c0_i32 = arith.constant 0 : i32
    %c0_i32_0 = arith.constant 0 : i32
    %c0_i32_1 = arith.constant 0 : i32
    %c0_i32_2 = arith.constant 0 : i32
    return %c0_i32, %c0_i32_0, %c0_i32_1 : i32, i32, i32
  }
  func.func @transform_2(%arg0: i32, %arg1: i32) -> (i32, i32, i32, i32) {
    %c0_i32 = arith.constant 0 : i32
    %c0_i32_0 = arith.constant 0 : i32
    %c0_i32_1 = arith.constant 0 : i32
    %c0_i32_2 = arith.constant 0 : i32
    %c0_i32_3 = arith.constant 0 : i32
    return %c0_i32, %c0_i32_0, %c0_i32_1, %c0_i32_2 : i32, i32, i32, i32
  }
  func.func @transform_3(%arg0: i32, %arg1: i32) -> (i32, i32, i32) {
    %c0_i32 = arith.constant 0 : i32
    %c0_i32_0 = arith.constant 0 : i32
    %c0_i32_1 = arith.constant 0 : i32
    %c0_i32_2 = arith.constant 0 : i32
    return %c0_i32, %c0_i32_0, %c0_i32_1 : i32, i32, i32
  }
  func.func @transform_4(%arg0: i32, %arg1: i32) -> (i32, i32, i32, i32) {
    %c0_i32 = arith.constant 0 : i32
    %c0_i32_0 = arith.constant 0 : i32
    %c0_i32_1 = arith.constant 0 : i32
    %c0_i32_2 = arith.constant 0 : i32
    %c0_i32_3 = arith.constant 0 : i32
    return %c0_i32, %c0_i32_0, %c0_i32_1, %c0_i32_2 : i32, i32, i32, i32
  }
  func.func @transform_5(%arg0: i32, %arg1: i32) -> (i32, i32, i32, i32) {
    %c0_i32 = arith.constant 0 : i32
    %c0_i32_0 = arith.constant 0 : i32
    %c0_i32_1 = arith.constant 0 : i32
    %c0_i32_2 = arith.constant 0 : i32
    %c0_i32_3 = arith.constant 0 : i32
    return %c0_i32, %c0_i32_0, %c0_i32_1, %c0_i32_2 : i32, i32, i32, i32
  }
  func.func @transform_6(%arg0: i32, %arg1: i32) -> (i32, i32, i32, i32) {
    %c0_i32 = arith.constant 0 : i32
    %c0_i32_0 = arith.constant 0 : i32
    %c0_i32_1 = arith.constant 0 : i32
    %c0_i32_2 = arith.constant 0 : i32
    %c0_i32_3 = arith.constant 0 : i32
    return %c0_i32, %c0_i32_0, %c0_i32_1, %c0_i32_2 : i32, i32, i32, i32
  }
  func.func @transform_7(%arg0: i32, %arg1: i32) -> (i32, i32, i32, i32) {
    %c0_i32 = arith.constant 0 : i32
    %c0_i32_0 = arith.constant 0 : i32
    %c0_i32_1 = arith.constant 0 : i32
    %c0_i32_2 = arith.constant 0 : i32
    %c0_i32_3 = arith.constant 0 : i32
    return %c0_i32, %c0_i32_0, %c0_i32_1, %c0_i32_2 : i32, i32, i32, i32
  }
  func.func @transform_8(%arg0: i32, %arg1: i32) -> (i32, i32) {
    %c0_i32 = arith.constant 0 : i32
    %c0_i32_0 = arith.constant 0 : i32
    %c0_i32_1 = arith.constant 0 : i32
    return %c0_i32, %c0_i32_0 : i32, i32
  }
  func.func @transform_9(%arg0: i32, %arg1: i32) -> (i32, i32, i32) {
    %c0_i32 = arith.constant 0 : i32
    %c0_i32_0 = arith.constant 0 : i32
    %c0_i32_1 = arith.constant 0 : i32
    return %arg0, %c0_i32, %c0_i32_0 : i32, i32, i32
  }
}

</mosaic_0001>

<llo_original>
// kernel: forward.1
$region0: #{forward.1}
  #allocation0 [shape = 'u32[]', space=smem, size = 0x4, offset = 0x4, fixed_abs, tag = 'smem constant byte address 0x4 - core index']
  #allocation1 [shape = 'u32[144,128]{1,0:T(1,128)}', space=vmem, size = 0x12000, scoped, tag = 'internal scratch']
  #allocation2 [shape = 'bf16[88,565]{1,0:T(8,128)(2,1)}', space=vmem, size = 0x1b800, scoped, tag = 'scratch operand']
  %s0 = inlined_call_operand.vmem [shape: bf16[2,4,44,565], index: 0, kind: input, shape index: {}]
  %s1 = inlined_call_operand.vmem [shape: bf16[4,88,44], index: 1, kind: input, shape index: {}]
  %s2 = inlined_call_operand.vmem [shape: bf16[4,12,40,88], index: 2, kind: input, shape index: {}]
  %s3 = inlined_call_operand.vmem [shape: f32[4,40,554], index: 3, kind: input, shape index: {}]
  %s4 = inlined_call_operand.vmem [shape: f32[4,2,20,1], index: 4, kind: input, shape index: {}]
  %s5 = inlined_call_operand.vmem [shape: f32[4,2,20,1], index: 5, kind: input, shape index: {}]
  %s6 = inlined_call_operand.vmem [shape: f32[4,2,20,1], index: 6, kind: input, shape index: {}]
  %s7 = inlined_call_operand.vmem [shape: f32[4,4,40,42], index: 7, kind: input, shape index: {}]
  %s8 = inlined_call_operand.vmem [shape: f32[554,42], index: 8, kind: input, shape index: {}]
  %s9 = inlined_call_operand.vmem [shape: f32[2,4,1], index: 9, kind: output, shape index: {}]
  %s10 = sld [smem:[#allocation0]]
  $region73: #{forward.1} parent=0
    _
  %s12 = ssub.s32 1, %s10
  %s13 = scalar_select 0, %s12, %s10
  loop: start=0, step=1, limit=10
  $region2: #{forward.1} parent=0 // loop_pre_header
    _
  $region3: #{forward.1} parent=0 // loop_header
    %s15 = sphi 0, %s19
    %p16 = scmp.ge.s32.totalorder %s15, 10
    %s22 = sphi 0, %s34
    %s23 = sphi 0, %s30
    %s24 = sphi 0, %s22
    %s25 = sphi 0, %s23
    %s26 = sphi 0, %s24
    %s27 = sphi 0, %s25
    %s39 = sphi 0, %s41
    %s42 = sphi 0, %s39
    %s43 = sphi 0, %s42
    %s59 = sphi 0, %s43
    %s63 = sphi 0, %s63
    %s65 = sphi 0, %s63
    %s66 = sphi 0, %s65
    %s80 = sphi 0, %s66
    %s84 = sphi 0, %s84
    %s86 = sphi 0, %s84
    %s87 = sphi 0, %s86
    %s101 = sphi 0, %s87
    %s105 = sphi 0, %s105
    %s107 = sphi 0, %s105
    %s108 = sphi 0, %s107
    %s122 = sphi 0, %s108
    %s126 = sphi 0, %s126
    %s128 = sphi 0, %s126
    %s129 = sphi 0, %s128
    %s143 = sphi 0, %s129
    %s147 = sphi 0, %s147
    %s149 = sphi 0, %s147
    %s150 = sphi 0, %s149
    %s164 = sphi 0, %s150
    %s168 = sphi 0, %s168
    %s170 = sphi 0, %s168
    %s171 = sphi 0, %s170
    %s185 = sphi 0, %s171
    %s189 = sphi 0, %s189
    %s191 = sphi 0, %s189
    %s192 = sphi 0, %s191
    %s206 = sphi 0, %s192
    %s210 = sphi 0, %s210
    %s212 = sphi 0, %s210
    %s213 = sphi 0, %s212
    %s227 = sphi 0, %s213
    %s233 = sphi 0, %s235
    %s236 = sphi 0, %s233
    %s237 = sphi 0, %s236
    %s253 = sphi 0, %s237
  $region4: #{forward.1} parent=0 // loop_header_branch
    %18 = sbr.rel (%p16) target = $region8
  $region5: #{forward.1} parent=0 // loop_body
    %s20 = ssub.s32 %s15, 1
    %s21 = ssub.s32 %s15, 2
    %s28 = sadd.s32 1, %s23
    %p29 = scmp.ge.s32.totalorder %s28, 4
    %s30 = scalar_select %p29, 0, %s28
    %s31 = sadd.s32 1, %s22
    %s32 = scalar_select %p29, %s31, %s22
    %p33 = scmp.ge.s32.totalorder %s32, 2
    %s34 = scalar_select %p33, 0, %s32
    %s35 = ssub.s32 %s22, %s34
    %s36 = ssub.s32 %s23, %s30
    %s37 = sor.u32 %s35, %s36
    %p38 = scmp.eq.s32.totalorder %s37, 0
    %s40 = sadd.s32 %s39, 1
    %s41 = scalar_select %p38, %s39, %s40
    %p44 = pneg %p38
    %p45 = scmp.eq.s32.totalorder %s15, 7
    %p46 = por %p44, %p45
    %p47 = scmp.ne.s32.totalorder %s39, %s42
    %p48 = scmp.eq.s32.totalorder %s15, 0
    %p49 = por %p47, %p48
    %p50 = scmp.ne.s32.totalorder %s39, %s42
    %p51 = scmp.eq.s32.totalorder %s20, 7
    %p52 = por %p50, %p51
    %p53 = scmp.ne.s32.totalorder %s42, %s43
    %p54 = scmp.eq.s32.totalorder %s20, 0
    %p55 = por %p53, %p54
    %p56 = scmp.ne.s32.totalorder %s42, %s43
    %p57 = scmp.eq.s32.totalorder %s21, 7
    %p58 = por %p56, %p57
    %p60 = scmp.ne.s32.totalorder %s43, %s59
    %p61 = scmp.eq.s32.totalorder %s21, 0
    %p62 = por %p60, %p61
    %s64 = sadd.s32 %s63, 1
    %p67 = scmp.eq.s32.totalorder %s15, 7
    %p68 = scmp.ne.s32.totalorder %s63, %s65
    %p69 = scmp.eq.s32.totalorder %s15, 0
    %p70 = por %p68, %p69
    %p71 = scmp.ne.s32.totalorder %s63, %s65
    %p72 = scmp.eq.s32.totalorder %s20, 7
    %p73 = por %p71, %p72
    %p74 = scmp.ne.s32.totalorder %s65, %s66
    %p75 = scmp.eq.s32.totalorder %s20, 0
    %p76 = por %p74, %p75
    %p77 = scmp.ne.s32.totalorder %s65, %s66
    %p78 = scmp.eq.s32.totalorder %s21, 7
    %p79 = por %p77, %p78
    %p81 = scmp.ne.s32.totalorder %s66, %s80
    %p82 = scmp.eq.s32.totalorder %s21, 0
    %p83 = por %p81, %p82
    %s85 = sadd.s32 %s84, 1
    %p88 = scmp.eq.s32.totalorder %s15, 7
    %p89 = scmp.ne.s32.totalorder %s84, %s86
    %p90 = scmp.eq.s32.totalorder %s15, 0
    %p91 = por %p89, %p90
    %p92 = scmp.ne.s32.totalorder %s84, %s86
    %p93 = scmp.eq.s32.totalorder %s20, 7
    %p94 = por %p92, %p93
    %p95 = scmp.ne.s32.totalorder %s86, %s87
    %p96 = scmp.eq.s32.totalorder %s20, 0
    %p97 = por %p95, %p96
    %p98 = scmp.ne.s32.totalorder %s86, %s87
    %p99 = scmp.eq.s32.totalorder %s21, 7
    %p100 = por %p98, %p99
    %p102 = scmp.ne.s32.totalorder %s87, %s101
    %p103 = scmp.eq.s32.totalorder %s21, 0
    %p104 = por %p102, %p103
    %s106 = sadd.s32 %s105, 1
    %p109 = scmp.eq.s32.totalorder %s15, 7
    %p110 = scmp.ne.s32.totalorder %s105, %s107
    %p111 = scmp.eq.s32.totalorder %s15, 0
    %p112 = por %p110, %p111
    %p113 = scmp.ne.s32.totalorder %s105, %s107
    %p114 = scmp.eq.s32.totalorder %s20, 7
    %p115 = por %p113, %p114
    %p116 = scmp.ne.s32.totalorder %s107, %s108
    %p117 = scmp.eq.s32.totalorder %s20, 0
    %p118 = por %p116, %p117
    %p119 = scmp.ne.s32.totalorder %s107, %s108
    %p120 = scmp.eq.s32.totalorder %s21, 7
    %p121 = por %p119, %p120
    %p123 = scmp.ne.s32.totalorder %s108, %s122
    %p124 = scmp.eq.s32.totalorder %s21, 0
    %p125 = por %p123, %p124
    %s127 = sadd.s32 %s126, 1
    %p130 = scmp.eq.s32.totalorder %s15, 7
    %p131 = scmp.ne.s32.totalorder %s126, %s128
    %p132 = scmp.eq.s32.totalorder %s15, 0
    %p133 = por %p131, %p132
    %p134 = scmp.ne.s32.totalorder %s126, %s128
    %p135 = scmp.eq.s32.totalorder %s20, 7
    %p136 = por %p134, %p135
    %p137 = scmp.ne.s32.totalorder %s128, %s129
    %p138 = scmp.eq.s32.totalorder %s20, 0
    %p139 = por %p137, %p138
    %p140 = scmp.ne.s32.totalorder %s128, %s129
    %p141 = scmp.eq.s32.totalorder %s21, 7
    %p142 = por %p140, %p141
    %p144 = scmp.ne.s32.totalorder %s129, %s143
    %p145 = scmp.eq.s32.totalorder %s21, 0
    %p146 = por %p144, %p145
    %s148 = sadd.s32 %s147, 1
    %p151 = scmp.eq.s32.totalorder %s15, 7
    %p152 = scmp.ne.s32.totalorder %s147, %s149
    %p153 = scmp.eq.s32.totalorder %s15, 0
    %p154 = por %p152, %p153
    %p155 = scmp.ne.s32.totalorder %s147, %s149
    %p156 = scmp.eq.s32.totalorder %s20, 7
    %p157 = por %p155, %p156
    %p158 = scmp.ne.s32.totalorder %s149, %s150
    %p159 = scmp.eq.s32.totalorder %s20, 0
    %p160 = por %p158, %p159
    %p161 = scmp.ne.s32.totalorder %s149, %s150
    %p162 = scmp.eq.s32.totalorder %s21, 7
    %p163 = por %p161, %p162
    %p165 = scmp.ne.s32.totalorder %s150, %s164
    %p166 = scmp.eq.s32.totalorder %s21, 0
    %p167 = por %p165, %p166
    %s169 = sadd.s32 %s168, 1
    %p172 = scmp.eq.s32.totalorder %s15, 7
    %p173 = scmp.ne.s32.totalorder %s168, %s170
    %p174 = scmp.eq.s32.totalorder %s15, 0
    %p175 = por %p173, %p174
    %p176 = scmp.ne.s32.totalorder %s168, %s170
    %p177 = scmp.eq.s32.totalorder %s20, 7
    %p178 = por %p176, %p177
    %p179 = scmp.ne.s32.totalorder %s170, %s171
    %p180 = scmp.eq.s32.totalorder %s20, 0
    %p181 = por %p179, %p180
    %p182 = scmp.ne.s32.totalorder %s170, %s171
    %p183 = scmp.eq.s32.totalorder %s21, 7
    %p184 = por %p182, %p183
    %p186 = scmp.ne.s32.totalorder %s171, %s185
    %p187 = scmp.eq.s32.totalorder %s21, 0
    %p188 = por %p186, %p187
    %s190 = sadd.s32 %s189, 1
    %p193 = scmp.eq.s32.totalorder %s15, 7
    %p194 = scmp.ne.s32.totalorder %s189, %s191
    %p195 = scmp.eq.s32.totalorder %s15, 0
    %p196 = por %p194, %p195
    %p197 = scmp.ne.s32.totalorder %s189, %s191
    %p198 = scmp.eq.s32.totalorder %s20, 7
    %p199 = por %p197, %p198
    %p200 = scmp.ne.s32.totalorder %s191, %s192
    %p201 = scmp.eq.s32.totalorder %s20, 0
    %p202 = por %p200, %p201
    %p203 = scmp.ne.s32.totalorder %s191, %s192
    %p204 = scmp.eq.s32.totalorder %s21, 7
    %p205 = por %p203, %p204
    %p207 = scmp.ne.s32.totalorder %s192, %s206
    %p208 = scmp.eq.s32.totalorder %s21, 0
    %p209 = por %p207, %p208
    %s211 = sadd.s32 %s210, 1
    %p214 = scmp.eq.s32.totalorder %s15, 7
    %p215 = scmp.ne.s32.totalorder %s210, %s212
    %p216 = scmp.eq.s32.totalorder %s15, 0
    %p217 = por %p215, %p216
    %p218 = scmp.ne.s32.totalorder %s210, %s212
    %p219 = scmp.eq.s32.totalorder %s20, 7
    %p220 = por %p218, %p219
    %p221 = scmp.ne.s32.totalorder %s212, %s213
    %p222 = scmp.eq.s32.totalorder %s20, 0
    %p223 = por %p221, %p222
    %p224 = scmp.ne.s32.totalorder %s212, %s213
    %p225 = scmp.eq.s32.totalorder %s21, 7
    %p226 = por %p224, %p225
    %p228 = scmp.ne.s32.totalorder %s213, %s227
    %p229 = scmp.eq.s32.totalorder %s21, 0
    %p230 = por %p228, %p229
    %s231 = ssub.s32 %s22, %s34
    %p232 = scmp.eq.s32.totalorder %s231, 0
    %s234 = sadd.s32 %s233, 1
    %s235 = scalar_select %p232, %s233, %s234
    %p238 = pneg %p232
    %p239 = scmp.eq.s32.totalorder %s15, 7
    %p240 = por %p238, %p239
    %p241 = scmp.ne.s32.totalorder %s233, %s236
    %p242 = scmp.eq.s32.totalorder %s15, 0
    %p243 = por %p241, %p242
    %p244 = scmp.ne.s32.totalorder %s233, %s236
    %p245 = scmp.eq.s32.totalorder %s20, 7
    %p246 = por %p244, %p245
    %p247 = scmp.ne.s32.totalorder %s236, %s237
    %p248 = scmp.eq.s32.totalorder %s20, 0
    %p249 = por %p247, %p248
    %p250 = scmp.ne.s32.totalorder %s236, %s237
    %p251 = scmp.eq.s32.totalorder %s21, 7
    %p252 = por %p250, %p251
    %p254 = scmp.ne.s32.totalorder %s237, %s253
    %p255 = scmp.eq.s32.totalorder %s21, 0
    %p256 = por %p254, %p255
    %p257 = scmp.le.s32.totalorder 1, %s15
    %p258 = scmp.lt.s32.totalorder %s15, 9
    %p259 = pnand %p257, %p258
    %p260 = pneg %p259
    // Predicated region
    $region9: #{forward.1} parent=5 // pred_check
      _
    $region10: #{forward.1} parent=5 // pred_check_branch
      %262 = sbr.rel (%p259) target = $region12
    $region11: #{forward.1} parent=5 // pred_region
      %s263 = ssub.s32 %s15, 1
      // Predicated region
      $region13: #{forward.1} parent=11 // pred_check
        %p264 = pneg %p76
      $region14: #{forward.1} parent=11 // pred_check_branch
        %266 = sbr.rel (%p264) target = $region16
      $region15: #{forward.1} parent=11 // pred_region
        _
      $region16: #{forward.1} parent=11 // pred_fallthru
        _
      // Predicated region
      $region17: #{forward.1} parent=11 // pred_check
        %p267 = pneg %p97
      $region18: #{forward.1} parent=11 // pred_check_branch
        %269 = sbr.rel (%p267) target = $region20
      $region19: #{forward.1} parent=11 // pred_region
        _
      $region20: #{forward.1} parent=11 // pred_fallthru
        _
      // Predicated region
      $region21: #{forward.1} parent=11 // pred_check
        %p270 = pneg %p118
      $region22: #{forward.1} parent=11 // pred_check_branch
        %272 = sbr.rel (%p270) target = $region24
      $region23: #{forward.1} parent=11 // pred_region
        _
      $region24: #{forward.1} parent=11 // pred_fallthru
        _
      // Predicated region
      $region25: #{forward.1} parent=11 // pred_check
        %p273 = pneg %p139
      $region26: #{forward.1} parent=11 // pred_check_branch
        %275 = sbr.rel (%p273) target = $region28
      $region27: #{forward.1} parent=11 // pred_region
        _
      $region28: #{forward.1} parent=11 // pred_fallthru
        _
      // Predicated region
      $region29: #{forward.1} parent=11 // pred_check
        %p276 = pneg %p160
      $region30: #{forward.1} parent=11 // pred_check_branch
        %278 = sbr.rel (%p276) target = $region32
      $region31: #{forward.1} parent=11 // pred_region
        _
      $region32: #{forward.1} parent=11 // pred_fallthru
        _
      // Predicated region
      $region33: #{forward.1} parent=11 // pred_check
        %p279 = pneg %p181
      $region34: #{forward.1} parent=11 // pred_check_branch
        %281 = sbr.rel (%p279) target = $region36
      $region35: #{forward.1} parent=11 // pred_region
        _
      $region36: #{forward.1} parent=11 // pred_fallthru
        _
      // Predicated region
      $region37: #{forward.1} parent=11 // pred_check
        %p282 = pneg %p202
      $region38: #{forward.1} parent=11 // pred_check_branch
        %284 = sbr.rel (%p282) target = $region40
      $region39: #{forward.1} parent=11 // pred_region
        _
      $region40: #{forward.1} parent=11 // pred_fallthru
        _
      // Predicated region
      $region41: #{forward.1} parent=11 // pred_check
        %p285 = pneg %p223
      $region42: #{forward.1} parent=11 // pred_check_branch
        %287 = sbr.rel (%p285) target = $region44
      $region43: #{forward.1} parent=11 // pred_region
        _
      $region44: #{forward.1} parent=11 // pred_fallthru
        _
    $region12: #{forward.1} parent=5 // pred_fallthru
      _
    %p288 = scmp.lt.s32.totalorder %s15, 8
    // Predicated region
    $region45: #{forward.1} parent=5 // pred_check
      %p289 = pneg %p288
    $region46: #{forward.1} parent=5 // pred_check_branch
      %291 = sbr.rel (%p289) target = $region48
    $region47: #{forward.1} parent=5 // pred_region
      // Predicated region
      $region49: #{forward.1} parent=47 // pred_check
        %p292 = pneg %p49
      $region50: #{forward.1} parent=47 // pred_check_branch
        %294 = sbr.rel (%p292) target = $region52
      $region51: #{forward.1} parent=47 // pred_region
        %p295 = scmp.lt.s32.totalorder %s22, 1
        %s296 = scalar_select %p295, %s22, 1
        %p297 = scmp.lt.s32.totalorder %s23, 3
        %s298 = scalar_select %p297, %s23, 3
        %s299 = smul.addr %s298, 30
        %s300 = smul.addr %s296, 120
        %s301 = sadd.s32 %s299, %s300
        %s302 = smul.addr %s301, 4
        %s303 = scalar_lea.vmem %s0, %s302
      $region52: #{forward.1} parent=47 // pred_fallthru
        _
    $region48: #{forward.1} parent=5 // pred_fallthru
      _
    %p304 = scmp.le.s32.totalorder 1, %s15
    %p305 = scmp.lt.s32.totalorder %s15, 9
    %p306 = pnand %p304, %p305
    %p307 = pneg %p306
    // Predicated region
    $region53: #{forward.1} parent=5 // pred_check
      _
    $region54: #{forward.1} parent=5 // pred_check_branch
      %309 = sbr.rel (%p306) target = $region56
    $region55: #{forward.1} parent=5 // pred_region
      %s310 = ssub.s32 %s15, 1
      %p311 = scmp.lt.s32.totalorder %s24, 1
      %s312 = scalar_select %p311, %s24, 1
      %p313 = scmp.lt.s32.totalorder %s25, 3
      %s314 = scalar_select %p313, %s25, 3
      %s315 = smul.addr %s314, 30
      %s316 = smul.addr %s312, 120
      %s317 = sadd.s32 %s315, %s316
      %s318 = smul.addr %s317, 4
      %s319 = scalar_lea.vmem %s0, %s318
      %p320 = pneg %p55
      %p321 = pneg %p52
      %p322 = pneg %p76
      %p323 = pneg %p73
      %p324 = pneg %p97
      %p325 = pneg %p94
      %p326 = pneg %p118
      %p327 = pneg %p115
      %p328 = pneg %p139
      %p329 = pneg %p136
      %p330 = pneg %p160
      %p331 = pneg %p157
      %p332 = pneg %p181
      %p333 = pneg %p178
      %p334 = pneg %p202
      %p335 = pneg %p199
      %p336 = pneg %p223
      %p337 = pneg %p220
      %p338 = pneg %p249
      %p339 = pneg %p246
      %p340 = scmp.lt.s32.totalorder %s24, 1
      %s341 = scalar_select %p340, %s24, 1
      %s342 = smul.addr %s341, 4
      %s343 = scalar_lea.vmem %s9, %s342
      %p344 = scmp.lt.s32.totalorder %s24, 1
      %s345 = scalar_select %p344, %s24, 1
      %p346 = scmp.lt.s32.totalorder %s25, 3
      %s347 = scalar_select %p346, %s25, 3
      %s348 = smul.addr %s347, 30
      %s349 = smul.addr %s345, 120
      %s350 = sadd.s32 %s348, %s349
      %s351 = smul.addr %s350, 4
      %s352 = scalar_lea.vmem %s0, %s351
      %p353 = scmp.lt.s32.totalorder %s24, 1
      %s354 = scalar_select %p353, %s24, 1
      %s355 = smul.addr %s354, 4
      %s356 = scalar_lea.vmem %s9, %s355
      %p358 = scmp.eq.s32.totalorder %s25, 0
      // Predicated region
      $region57: #{forward.1} parent=55 // pred_check
        %p359 = pneg %p358
      $region58: #{forward.1} parent=55 // pred_check_branch
        %361 = sbr.rel (%p359) target = $region60
      $region59: #{forward.1} parent=55 // pred_region
        %vm362 = vcmask 3072
        %363 = vst.msk [vmem:[%s356] sm:$0xf] %vm362, 0.0
      $region60: #{forward.1} parent=55 // pred_fallthru
        _
      %v364 = vld [vmem:[%s352] sm:$0xff]
      %v365 = vld [vmem:[%s352 + $0x8] sm:$0xff]
      %v366 = vld [vmem:[%s352 + $0x10] sm:$0xf]
      %v367 = vld [vmem:[%s352 + $0x14] sm:$0xff]
      %v368 = vld [vmem:[%s352 + $0x1c] sm:$0xff]
      %v369 = vld [vmem:[%s352 + $0x24] sm:$0xf]
      %v370 = vld [vmem:[%s352 + $0x28] sm:$0xff]
      %v371 = vld [vmem:[%s352 + $0x30] sm:$0xff]
      %v372 = vld [vmem:[%s352 + $0x38] sm:$0xf]
      %v373 = vld [vmem:[%s352 + $0x3c] sm:$0xff]
      %v374 = vld [vmem:[%s352 + $0x44] sm:$0xff]
      %v375 = vld [vmem:[%s352 + $0x4c] sm:$0xf]
      %v376 = vld [vmem:[%s352 + $0x50] sm:$0xff]
      %v377 = vld [vmem:[%s352 + $0x58] sm:$0xff]
      %v378 = vld [vmem:[%s352 + $0x60] sm:$0xf]
      %v379 = vld [vmem:[%s352 + $0x64] sm:$0x33]
      %v380 = vld [vmem:[%s352 + $0x6c] sm:$0x33]
      %v381 = vld [vmem:[%s352 + $0x74] sm:$0x3]
      %s382 = smul.u32 %s25, 11
      %s383 = smul.addr %s382, 4
      %s384 = scalar_lea.vmem %s1, %s383
      %v385 = vld [vmem:[%s384] sm:$0xf]
      %v386 = vld [vmem:[%s384 + $0x4] sm:$0xf]
      %v387 = vld [vmem:[%s384 + $0x8] sm:$0xf]
      %v388 = vld [vmem:[%s384 + $0xc] sm:$0xf]
      %v389 = vld [vmem:[%s384 + $0x10] sm:$0xf]
      %v390 = vld [vmem:[%s384 + $0x14] sm:$0xf]
      %v391 = vld [vmem:[%s384 + $0x18] sm:$0xf]
      %v392 = vld [vmem:[%s384 + $0x1c] sm:$0xf]
      %v393 = vld [vmem:[%s384 + $0x20] sm:$0xf]
      %v394 = vld [vmem:[%s384 + $0x24] sm:$0xf]
      %v395 = vld [vmem:[%s384 + $0x28] sm:$0xf]
      %v407 = vunpack.c.l.b16 %v385
      %v408 = vunpack.c.l.b16 %v386
      %v409 = vunpack.c.l.b16 %v387
      %v410 = vunpack.c.l.b16 %v388
      %v411 = vunpack.c.l.b16 %v389
      %v412 = vunpack.c.l.b16 %v390
      %v413 = vunpack.c.l.b16 %v391
      %v414 = vunpack.c.l.b16 %v392
      %v415 = vunpack.c.l.b16 %v393
      %v416 = vunpack.c.l.b16 %v394
      %v417 = vunpack.c.l.b16 %v395
      %v418 = vpack.c.b16 %v408, %v407
      %v419 = vpack.c.b16 %v410, %v409
      %v420 = vpack.c.b16 %v412, %v411
      %v421 = vpack.c.b16 %v414, %v413
      %v422 = vpack.c.b16 %v416, %v415
      %v423 = vpack.c.b16 %v417, %v417
      %v442 = vunpack.c.l.b16 %v364
      %v443 = vunpack.c.h.b16 %v364
      %v444 = vunpack.c.l.b16 %v365
      %v445 = vunpack.c.h.b16 %v365
      %v446 = vunpack.c.l.b16 %v366
      %v447 = vunpack.c.l.b16 %v367
      %v448 = vunpack.c.h.b16 %v367
      %v449 = vunpack.c.l.b16 %v368
      %v450 = vunpack.c.h.b16 %v368
      %v451 = vunpack.c.l.b16 %v369
      %v452 = vunpack.c.l.b16 %v370
      %v453 = vunpack.c.h.b16 %v370
      %v454 = vunpack.c.l.b16 %v371
      %v455 = vunpack.c.h.b16 %v371
      %v456 = vunpack.c.l.b16 %v372
      %v457 = vunpack.c.l.b16 %v373
      %v458 = vunpack.c.h.b16 %v373
      %v459 = vunpack.c.l.b16 %v374
      %v460 = vunpack.c.h.b16 %v374
      %v461 = vunpack.c.l.b16 %v375
      %v462 = vunpack.c.l.b16 %v376
      %v463 = vunpack.c.h.b16 %v376
      %v464 = vunpack.c.l.b16 %v377
      %v465 = vunpack.c.h.b16 %v377
      %v466 = vunpack.c.l.b16 %v378
      %v467 = vunpack.c.l.b16 %v379
      %v468 = vunpack.c.h.b16 %v379
      %v469 = vunpack.c.l.b16 %v380
      %v470 = vunpack.c.h.b16 %v380
      %v471 = vunpack.c.l.b16 %v381
      %v472 = vpack.c.b16 %v447, %v442
      %v473 = vpack.c.b16 %v448, %v443
      %v474 = vpack.c.b16 %v449, %v444
      %v475 = vpack.c.b16 %v450, %v445
      %v476 = vpack.c.b16 %v451, %v446
      %v477 = vpack.c.b16 %v457, %v452
      %v478 = vpack.c.b16 %v458, %v453
      %v479 = vpack.c.b16 %v459, %v454
      %v480 = vpack.c.b16 %v460, %v455
      %v481 = vpack.c.b16 %v461, %v456
      %v482 = vpack.c.b16 %v467, %v462
      %v483 = vpack.c.b16 %v468, %v463
      %v484 = vpack.c.b16 %v469, %v464
      %v485 = vpack.c.b16 %v470, %v465
      %v486 = vpack.c.b16 %v471, %v466
      %vm497 = vcmask 359424
      %v499 = vsel %vm497, %v418, 0
      %v502 = vsel %vm497, %v419, 0
      %v505 = vsel %vm497, %v420, 0
      %v508 = vsel %vm497, %v421, 0
      %v511 = vsel %vm497, %v422, 0
      %v514 = vsel %vm497, %v423, 0
      %vm516 = vcmask 1045504
      %v518 = vsel %vm516, %v482, 0
      %v521 = vsel %vm516, %v483, 0
      %v524 = vsel %vm516, %v484, 0
      %v527 = vsel %vm516, %v485, 0
      %v530 = vsel %vm516, %v486, 0
      %532 = vmatprep.subr.bf16.mxu0 0
      %533 = vmatpush1.bf16.msra.mxu0 0
      %534 = vmatprep.subr.bf16.mxu0 0
      %535 = vmatpush1.bf16.msra.mxu0 0
      %536 = vmatprep.subr.bf16.mxu0 0
      %537 = vmatpush1.bf16.msra.mxu0 0
      %538 = vmatprep.subr.bf16.mxu0 0
      %539 = vmatpush1.bf16.msra.mxu0 0
      %540 = vmatprep.subr.bf16.mxu0 0
      %541 = vmatpush1.bf16.msra.mxu0 0
      %542 = vmatprep.subr.bf16.mxu0 %v521
      %543 = vmatpush1.bf16.msra.mxu0 %v518
      %544 = vmatprep.subr.bf16.mxu0 %v478
      %545 = vmatpush1.bf16.msra.mxu0 %v477
      %546 = vmatprep.subr.bf16.mxu0 %v473
      %547 = vmatpush1.bf16.msra.mxu0 %v472
      %548 = vmatprep.subr.bf16.mxu0 0
      %549 = vmatpush2.bf16.msra.mxu0 0
      %550 = vmatprep.subr.bf16.mxu0 0
      %551 = vmatpush2.bf16.msra.mxu0 0
      %552 = vmatprep.subr.bf16.mxu0 0
      %553 = vmatpush2.bf16.msra.mxu0 0
      %554 = vmatprep.subr.bf16.mxu0 0
      %555 = vmatpush2.bf16.msra.mxu0 0
      %556 = vmatprep.subr.bf16.mxu0 0
      %557 = vmatpush2.bf16.msra.mxu0 0
      %558 = vmatprep.subr.bf16.mxu0 0
      %559 = vmatpush2.bf16.msra.mxu0 0
      %560 = vmatprep.subr.bf16.mxu0 0
      %561 = vmatpush2.bf16.msra.mxu0 0
      %562 = vmatprep.subr.bf16.mxu0 0
      %563 = vmatpush2.bf16.msra.mxu0 0
      %564 = vmatprep.mubr.bf16.mxu0 0
      %565 = vmatmul.mubr.bf16.gmra.mxu0 %v499
      %v566 = vpop.f32.mrf.mxu0
      %v567 = vadd.f32 0.0, %v566
      %v568 = vpop.f32.mrf.mxu0
      %v569 = vadd.f32 0.0, %v568
      %v570 = vpop.f32.mrf.mxu0
      %v571 = vadd.f32 0.0, %v570
      %v572 = vpop.f32.mrf.mxu0
      %v573 = vadd.f32 0.0, %v572
      %574 = vmatprep.mubr.bf16.mxu0 0
      %575 = vmatmul.mubr.bf16.gmra.mxu0 %v502
      %v576 = vpop.f32.mrf.mxu0
      %v577 = vadd.f32 0.0, %v576
      %v578 = vpop.f32.mrf.mxu0
      %v579 = vadd.f32 0.0, %v578
      %v580 = vpop.f32.mrf.mxu0
      %v581 = vadd.f32 0.0, %v580
      %v582 = vpop.f32.mrf.mxu0
      %v583 = vadd.f32 0.0, %v582
      %584 = vmatprep.mubr.bf16.mxu0 0
      %585 = vmatmul.mubr.bf16.gmra.mxu0 %v505
      %v586 = vpop.f32.mrf.mxu0
      %v587 = vadd.f32 0.0, %v586
      %v588 = vpop.f32.mrf.mxu0
      %v589 = vadd.f32 0.0, %v588
      %v590 = vpop.f32.mrf.mxu0
      %v591 = vadd.f32 0.0, %v590
      %v592 = vpop.f32.mrf.mxu0
      %v593 = vadd.f32 0.0, %v592
      %594 = vmatprep.mubr.bf16.mxu0 0
      %595 = vmatmul.mubr.bf16.gmra.mxu0 %v508
      %v596 = vpop.f32.mrf.mxu0
      %v597 = vadd.f32 0.0, %v596
      %v598 = vpop.f32.mrf.mxu0
      %v599 = vadd.f32 0.0, %v598
      %v600 = vpop.f32.mrf.mxu0
      %v601 = vadd.f32 0.0, %v600
      %v602 = vpop.f32.mrf.mxu0
      %v603 = vadd.f32 0.0, %v602
      %604 = vmatprep.mubr.bf16.mxu0 0
      %605 = vmatmul.mubr.bf16.gmra.mxu0 %v511
      %v606 = vpop.f32.mrf.mxu0
      %v607 = vadd.f32 0.0, %v606
      %v608 = vpop.f32.mrf.mxu0
      %v609 = vadd.f32 0.0, %v608
      %v610 = vpop.f32.mrf.mxu0
      %v611 = vadd.f32 0.0, %v610
      %v612 = vpop.f32.mrf.mxu0
      %v613 = vadd.f32 0.0, %v612
      %614 = vmatprep.mubr.bf16.mxu0 0
      %615 = vmatmul.mubr.bf16.gmra.mxu0 %v514
      %v616 = vpop.f32.mrf.mxu0
      %v617 = vadd.f32 0.0, %v616
      %v618 = vpop.f32.mrf.mxu0
      %v619 = vadd.f32 0.0, %v618
      %v620 = vpop.f32.mrf.mxu0
      %v621 = vpop.f32.mrf.mxu0
      %622 = vdwg.mxu0
      %623 = vmatprep.subr.bf16.mxu0 0
      %624 = vmatpush1.bf16.msra.mxu0 0
      %625 = vmatprep.subr.bf16.mxu0 0
      %626 = vmatpush1.bf16.msra.mxu0 0
      %627 = vmatprep.subr.bf16.mxu0 0
      %628 = vmatpush1.bf16.msra.mxu0 0
      %629 = vmatprep.subr.bf16.mxu0 0
      %630 = vmatpush1.bf16.msra.mxu0 0
      %631 = vmatprep.subr.bf16.mxu0 0
      %632 = vmatpush1.bf16.msra.mxu0 0
      %633 = vmatprep.subr.bf16.mxu0 %v527
      %634 = vmatpush1.bf16.msra.mxu0 %v524
      %635 = vmatprep.subr.bf16.mxu0 %v480
      %636 = vmatpush1.bf16.msra.mxu0 %v479
      %637 = vmatprep.subr.bf16.mxu0 %v475
      %638 = vmatpush1.bf16.msra.mxu0 %v474
      %639 = vmatprep.subr.bf16.mxu0 0
      %640 = vmatpush2.bf16.msra.mxu0 0
      %641 = vmatprep.subr.bf16.mxu0 0
      %642 = vmatpush2.bf16.msra.mxu0 0
      %643 = vmatprep.subr.bf16.mxu0 0
      %644 = vmatpush2.bf16.msra.mxu0 0
      %645 = vmatprep.subr.bf16.mxu0 0
      %646 = vmatpush2.bf16.msra.mxu0 0
      %647 = vmatprep.subr.bf16.mxu0 0
      %648 = vmatpush2.bf16.msra.mxu0 0
      %649 = vmatprep.subr.bf16.mxu0 0
      %650 = vmatpush2.bf16.msra.mxu0 0
      %651 = vmatprep.subr.bf16.mxu0 0
      %652 = vmatpush2.bf16.msra.mxu0 0
      %653 = vmatprep.subr.bf16.mxu0 0
      %654 = vmatpush2.bf16.msra.mxu0 0
      %655 = vmatprep.mubr.bf16.mxu0 0
      %656 = vmatmul.mubr.bf16.gmra.mxu0 %v499
      %v657 = vpop.f32.mrf.mxu0
      %v658 = vadd.f32 0.0, %v657
      %v659 = vpop.f32.mrf.mxu0
      %v660 = vadd.f32 0.0, %v659
      %v661 = vpop.f32.mrf.mxu0
      %v662 = vadd.f32 0.0, %v661
      %v663 = vpop.f32.mrf.mxu0
      %v664 = vadd.f32 0.0, %v663
      %665 = vmatprep.mubr.bf16.mxu0 0
      %666 = vmatmul.mubr.bf16.gmra.mxu0 %v502
      %v667 = vpop.f32.mrf.mxu0
      %v668 = vadd.f32 0.0, %v667
      %v669 = vpop.f32.mrf.mxu0
      %v670 = vadd.f32 0.0, %v669
      %v671 = vpop.f32.mrf.mxu0
      %v672 = vadd.f32 0.0, %v671
      %v673 = vpop.f32.mrf.mxu0
      %v674 = vadd.f32 0.0, %v673
      %675 = vmatprep.mubr.bf16.mxu0 0
      %676 = vmatmul.mubr.bf16.gmra.mxu0 %v505
      %v677 = vpop.f32.mrf.mxu0
      %v678 = vadd.f32 0.0, %v677
      %v679 = vpop.f32.mrf.mxu0
      %v680 = vadd.f32 0.0, %v679
      %v681 = vpop.f32.mrf.mxu0
      %v682 = vadd.f32 0.0, %v681
      %v683 = vpop.f32.mrf.mxu0
      %v684 = vadd.f32 0.0, %v683
      %685 = vmatprep.mubr.bf16.mxu0 0
      %686 = vmatmul.mubr.bf16.gmra.mxu0 %v508
      %v687 = vpop.f32.mrf.mxu0
      %v688 = vadd.f32 0.0, %v687
      %v689 = vpop.f32.mrf.mxu0
      %v690 = vadd.f32 0.0, %v689
      %v691 = vpop.f32.mrf.mxu0
      %v692 = vadd.f32 0.0, %v691
      %v693 = vpop.f32.mrf.mxu0
      %v694 = vadd.f32 0.0, %v693
      %695 = vmatprep.mubr.bf16.mxu0 0
      %696 = vmatmul.mubr.bf16.gmra.mxu0 %v511
      %v697 = vpop.f32.mrf.mxu0
      %v698 = vadd.f32 0.0, %v697
      %v699 = vpop.f32.mrf.mxu0
      %v700 = vadd.f32 0.0, %v699
      %v701 = vpop.f32.mrf.mxu0
      %v702 = vadd.f32 0.0, %v701
      %v703 = vpop.f32.mrf.mxu0
      %v704 = vadd.f32 0.0, %v703
      %705 = vmatprep.mubr.bf16.mxu0 0
      %706 = vmatmul.mubr.bf16.gmra.mxu0 %v514
      %v707 = vpop.f32.mrf.mxu0
      %v708 = vadd.f32 0.0, %v707
      %v709 = vpop.f32.mrf.mxu0
      %v710 = vadd.f32 0.0, %v709
      %v711 = vpop.f32.mrf.mxu0
      %v712 = vpop.f32.mrf.mxu0
      %713 = vdwg.mxu0
      %714 = vmatprep.subr.bf16.mxu0 0
      %715 = vmatpush1.bf16.msra.mxu0 0
      %716 = vmatprep.subr.bf16.mxu0 0
      %717 = vmatpush1.bf16.msra.mxu0 0
      %718 = vmatprep.subr.bf16.mxu0 0
      %719 = vmatpush1.bf16.msra.mxu0 0
      %720 = vmatprep.subr.bf16.mxu0 0
      %721 = vmatpush1.bf16.msra.mxu0 0
      %722 = vmatprep.subr.bf16.mxu0 0
      %723 = vmatpush1.bf16.msra.mxu0 0
      %724 = vmatprep.subr.bf16.mxu0 0
      %725 = vmatpush1.bf16.msra.mxu0 %v530
      %726 = vmatprep.subr.bf16.mxu0 0
      %727 = vmatpush1.bf16.msra.mxu0 %v481
      %728 = vmatprep.subr.bf16.mxu0 0
      %729 = vmatpush1.bf16.msra.mxu0 %v476
      %730 = vmatprep.subr.bf16.mxu0 0
      %731 = vmatpush2.bf16.msra.mxu0 0
      %732 = vmatprep.subr.bf16.mxu0 0
      %733 = vmatpush2.bf16.msra.mxu0 0
      %734 = vmatprep.subr.bf16.mxu0 0
      %735 = vmatpush2.bf16.msra.mxu0 0
      %736 = vmatprep.subr.bf16.mxu0 0
      %737 = vmatpush2.bf16.msra.mxu0 0
      %738 = vmatprep.subr.bf16.mxu0 0
      %739 = vmatpush2.bf16.msra.mxu0 0
      %740 = vmatprep.subr.bf16.mxu0 0
      %741 = vmatpush2.bf16.msra.mxu0 0
      %742 = vmatprep.subr.bf16.mxu0 0
      %743 = vmatpush2.bf16.msra.mxu0 0
      %744 = vmatprep.subr.bf16.mxu0 0
      %745 = vmatpush2.bf16.msra.mxu0 0
      %746 = vmatprep.mubr.bf16.mxu0 0
      %747 = vmatmul.mubr.bf16.gmra.mxu0 %v499
      %v748 = vpop.f32.mrf.mxu0
      %v749 = vadd.f32 0.0, %v748
      %v750 = vpop.f32.mrf.mxu0
      %v751 = vpop.f32.mrf.mxu0
      %v752 = vadd.f32 0.0, %v751
      %v753 = vpop.f32.mrf.mxu0
      %754 = vmatprep.mubr.bf16.mxu0 0
      %755 = vmatmul.mubr.bf16.gmra.mxu0 %v502
      %v756 = vpop.f32.mrf.mxu0
      %v757 = vadd.f32 0.0, %v756
      %v758 = vpop.f32.mrf.mxu0
      %v759 = vpop.f32.mrf.mxu0
      %v760 = vadd.f32 0.0, %v759
      %v761 = vpop.f32.mrf.mxu0
      %762 = vmatprep.mubr.bf16.mxu0 0
      %763 = vmatmul.mubr.bf16.gmra.mxu0 %v505
      %v764 = vpop.f32.mrf.mxu0
      %v765 = vadd.f32 0.0, %v764
      %v766 = vpop.f32.mrf.mxu0
      %v767 = vpop.f32.mrf.mxu0
      %v768 = vadd.f32 0.0, %v767
      %v769 = vpop.f32.mrf.mxu0
      %770 = vmatprep.mubr.bf16.mxu0 0
      %771 = vmatmul.mubr.bf16.gmra.mxu0 %v508
      %v772 = vpop.f32.mrf.mxu0
      %v773 = vadd.f32 0.0, %v772
      %v774 = vpop.f32.mrf.mxu0
      %v775 = vpop.f32.mrf.mxu0
      %v776 = vadd.f32 0.0, %v775
      %v777 = vpop.f32.mrf.mxu0
      %778 = vmatprep.mubr.bf16.mxu0 0
      %779 = vmatmul.mubr.bf16.gmra.mxu0 %v511
      %v780 = vpop.f32.mrf.mxu0
      %v781 = vadd.f32 0.0, %v780
      %v782 = vpop.f32.mrf.mxu0
      %v783 = vpop.f32.mrf.mxu0
      %v784 = vadd.f32 0.0, %v783
      %v785 = vpop.f32.mrf.mxu0
      %786 = vmatprep.mubr.bf16.mxu0 0
      %787 = vmatmul.mubr.bf16.gmra.mxu0 %v514
      %v788 = vpop.f32.mrf.mxu0
      %v789 = vadd.f32 0.0, %v788
      %v790 = vpop.f32.mrf.mxu0
      %v791 = vpop.f32.mrf.mxu0
      %v792 = vpop.f32.mrf.mxu0
      %793 = vdwg.mxu0
      %v794 = vpack.c.bf16 %v571, %v567
      %v795 = vpack.c.bf16 %v573, %v569
      %v796 = vpack.c.bf16 %v662, %v658
      %v797 = vpack.c.bf16 %v664, %v660
      %v798 = vpack.c.bf16 %v752, %v749
      %v799 = vpack.c.bf16 %v581, %v577
      %v800 = vpack.c.bf16 %v583, %v579
      %v801 = vpack.c.bf16 %v672, %v668
      %v802 = vpack.c.bf16 %v674, %v670
      %v803 = vpack.c.bf16 %v760, %v757
      %v804 = vpack.c.bf16 %v591, %v587
      %v805 = vpack.c.bf16 %v593, %v589
      %v806 = vpack.c.bf16 %v682, %v678
      %v807 = vpack.c.bf16 %v684, %v680
      %v808 = vpack.c.bf16 %v768, %v765
      %v809 = vpack.c.bf16 %v601, %v597
      %v810 = vpack.c.bf16 %v603, %v599
      %v811 = vpack.c.bf16 %v692, %v688
      %v812 = vpack.c.bf16 %v694, %v690
      %v813 = vpack.c.bf16 %v776, %v773
      %v814 = vpack.c.bf16 %v611, %v607
      %v815 = vpack.c.bf16 %v613, %v609
      %v816 = vpack.c.bf16 %v702, %v698
      %v817 = vpack.c.bf16 %v704, %v700
      %v818 = vpack.c.bf16 %v784, %v781
      %v819 = vpack.c.bf16 %v617, %v617
      %v820 = vpack.c.bf16 %v619, %v619
      %v821 = vpack.c.bf16 %v708, %v708
      %v822 = vpack.c.bf16 %v710, %v710
      %v823 = vpack.c.bf16 %v789, %v789
      %v854 = vunpack.c.l.b16 %v794
      %v855 = vunpack.c.l.b16 %v795
      %v856 = vunpack.c.l.b16 %v796
      %v857 = vunpack.c.l.b16 %v797
      %v858 = vunpack.c.l.b16 %v798
      %v859 = vunpack.c.h.b16 %v794
      %v860 = vunpack.c.h.b16 %v795
      %v861 = vunpack.c.h.b16 %v796
      %v862 = vunpack.c.h.b16 %v797
      %v863 = vunpack.c.h.b16 %v798
      %v864 = vunpack.c.l.b16 %v799
      %v865 = vunpack.c.l.b16 %v800
      %v866 = vunpack.c.l.b16 %v801
      %v867 = vunpack.c.l.b16 %v802
      %v868 = vunpack.c.l.b16 %v803
      %v869 = vunpack.c.h.b16 %v799
      %v870 = vunpack.c.h.b16 %v800
      %v871 = vunpack.c.h.b16 %v801
      %v872 = vunpack.c.h.b16 %v802
      %v873 = vunpack.c.h.b16 %v803
      %v874 = vunpack.c.l.b16 %v804
      %v875 = vunpack.c.l.b16 %v805
      %v876 = vunpack.c.l.b16 %v806
      %v877 = vunpack.c.l.b16 %v807
      %v878 = vunpack.c.l.b16 %v808
      %v879 = vunpack.c.h.b16 %v804
      %v880 = vunpack.c.h.b16 %v805
      %v881 = vunpack.c.h.b16 %v806
      %v882 = vunpack.c.h.b16 %v807
      %v883 = vunpack.c.h.b16 %v808
      %v884 = vunpack.c.l.b16 %v809
      %v885 = vunpack.c.l.b16 %v810
      %v886 = vunpack.c.l.b16 %v811
      %v887 = vunpack.c.l.b16 %v812
      %v888 = vunpack.c.l.b16 %v813
      %v889 = vunpack.c.h.b16 %v809
      %v890 = vunpack.c.h.b16 %v810
      %v891 = vunpack.c.h.b16 %v811
      %v892 = vunpack.c.h.b16 %v812
      %v893 = vunpack.c.h.b16 %v813
      %v894 = vunpack.c.l.b16 %v814
      %v895 = vunpack.c.l.b16 %v815
      %v896 = vunpack.c.l.b16 %v816
      %v897 = vunpack.c.l.b16 %v817
      %v898 = vunpack.c.l.b16 %v818
      %v899 = vunpack.c.h.b16 %v814
      %v900 = vunpack.c.h.b16 %v815
      %v901 = vunpack.c.h.b16 %v816
      %v902 = vunpack.c.h.b16 %v817
      %v903 = vunpack.c.h.b16 %v818
      %v904 = vunpack.c.l.b16 %v819
      %v905 = vunpack.c.l.b16 %v820
      %v906 = vunpack.c.l.b16 %v821
      %v907 = vunpack.c.l.b16 %v822
      %v908 = vunpack.c.l.b16 %v823
      %v909 = vpack.c.b16 %v855, %v854
      %v910 = vpack.c.b16 %v857, %v856
      %v911 = vpack.c.b16 %v858, %v858
      %v912 = vpack.c.b16 %v860, %v859
      %v913 = vpack.c.b16 %v862, %v861
      %v914 = vpack.c.b16 %v863, %v863
      %v915 = vpack.c.b16 %v865, %v864
      %v916 = vpack.c.b16 %v867, %v866
      %v917 = vpack.c.b16 %v868, %v868
      %v918 = vpack.c.b16 %v870, %v869
      %v919 = vpack.c.b16 %v872, %v871
      %v920 = vpack.c.b16 %v873, %v873
      %v921 = vpack.c.b16 %v875, %v874
      %v922 = vpack.c.b16 %v877, %v876
      %v923 = vpack.c.b16 %v878, %v878
      %v924 = vpack.c.b16 %v880, %v879
      %v925 = vpack.c.b16 %v882, %v881
      %v926 = vpack.c.b16 %v883, %v883
      %v927 = vpack.c.b16 %v885, %v884
      %v928 = vpack.c.b16 %v887, %v886
      %v929 = vpack.c.b16 %v888, %v888
      %v930 = vpack.c.b16 %v890, %v889
      %v931 = vpack.c.b16 %v892, %v891
      %v932 = vpack.c.b16 %v893, %v893
      %v933 = vpack.c.b16 %v895, %v894
      %v934 = vpack.c.b16 %v897, %v896
      %v935 = vpack.c.b16 %v898, %v898
      %v936 = vpack.c.b16 %v900, %v899
      %v937 = vpack.c.b16 %v902, %v901
      %v938 = vpack.c.b16 %v903, %v903
      %v939 = vpack.c.b16 %v905, %v904
      %v940 = vpack.c.b16 %v907, %v906
      %v941 = vpack.c.b16 %v908, %v908
      %975 = vst [vmem:[#allocation2] sm:$0xff] %v909
      %976 = vst [vmem:[#allocation2 + $0x8] sm:$0xff] %v910
      %vm977 = vcmask 429056
      %978 = vst.msk [vmem:[#allocation2 + $0x10] sm:$0xf] %vm977, %v911
      %979 = vst [vmem:[#allocation2 + $0x14] sm:$0xff] %v912
      %980 = vst [vmem:[#allocation2 + $0x1c] sm:$0xff] %v913
      %981 = vst.msk [vmem:[#allocation2 + $0x24] sm:$0xf] %vm977, %v914
      %982 = vst [vmem:[#allocation2 + $0x28] sm:$0xff] %v915
      %983 = vst [vmem:[#allocation2 + $0x30] sm:$0xff] %v916
      %984 = vst.msk [vmem:[#allocation2 + $0x38] sm:$0xf] %vm977, %v917
      %985 = vst [vmem:[#allocation2 + $0x3c] sm:$0xff] %v918
      %986 = vst [vmem:[#allocation2 + $0x44] sm:$0xff] %v919
      %987 = vst.msk [vmem:[#allocation2 + $0x4c] sm:$0xf] %vm977, %v920
      %988 = vst [vmem:[#allocation2 + $0x50] sm:$0xff] %v921
      %989 = vst [vmem:[#allocation2 + $0x58] sm:$0xff] %v922
      %990 = vst.msk [vmem:[#allocation2 + $0x60] sm:$0xf] %vm977, %v923
      %991 = vst [vmem:[#allocation2 + $0x64] sm:$0xff] %v924
      %992 = vst [vmem:[#allocation2 + $0x6c] sm:$0xff] %v925
      %993 = vst.msk [vmem:[#allocation2 + $0x74] sm:$0xf] %vm977, %v926
      %994 = vst [vmem:[#allocation2 + $0x78] sm:$0xff] %v927
      %995 = vst [vmem:[#allocation2 + $0x80] sm:$0xff] %v928
      %996 = vst.msk [vmem:[#allocation2 + $0x88] sm:$0xf] %vm977, %v929
      %997 = vst [vmem:[#allocation2 + $0x8c] sm:$0xff] %v930
      %998 = vst [vmem:[#allocation2 + $0x94] sm:$0xff] %v931
      %999 = vst.msk [vmem:[#allocation2 + $0x9c] sm:$0xf] %vm977, %v932
      %1000 = vst [vmem:[#allocation2 + $0xa0] sm:$0xff] %v933
      %1001 = vst [vmem:[#allocation2 + $0xa8] sm:$0xff] %v934
      %1002 = vst.msk [vmem:[#allocation2 + $0xb0] sm:$0xf] %vm977, %v935
      %1003 = vst [vmem:[#allocation2 + $0xb4] sm:$0xff] %v936
      %1004 = vst [vmem:[#allocation2 + $0xbc] sm:$0xff] %v937
      %1005 = vst.msk [vmem:[#allocation2 + $0xc4] sm:$0xf] %vm977, %v938
      %1006 = vst [vmem:[#allocation2 + $0xc8] sm:$0xff] %v939
      %1007 = vst [vmem:[#allocation2 + $0xd0] sm:$0xff] %v940
      %1008 = vst.msk [vmem:[#allocation2 + $0xd8] sm:$0xf] %vm977, %v941
      %s1009 = smul.u32 %s25, 60
      %s1010 = smul.addr %s1009, 4
      %s1011 = scalar_lea.vmem %s2, %s1010
      %v1012 = vld [vmem:[%s1011] sm:$0xf]
      %v1013 = vld [vmem:[%s1011 + $0x4] sm:$0xf]
      %v1014 = vld [vmem:[%s1011 + $0x8] sm:$0xf]
      %v1015 = vld [vmem:[%s1011 + $0xc] sm:$0xf]
      %v1016 = vld [vmem:[%s1011 + $0x10] sm:$0xf]
      %v1017 = vld [vmem:[#allocation2] sm:$0xff]
      %v1018 = vld [vmem:[#allocation2 + $0x8] sm:$0xff]
      %v1019 = vld [vmem:[#allocation2 + $0x10] sm:$0xf]
      %v1020 = vld [vmem:[#allocation2 + $0x14] sm:$0xff]
      %v1021 = vld [vmem:[#allocation2 + $0x1c] sm:$0xff]
      %v1022 = vld [vmem:[#allocation2 + $0x24] sm:$0xf]
      %v1023 = vld [vmem:[#allocation2 + $0x28] sm:$0xff]
      %v1024 = vld [vmem:[#allocation2 + $0x30] sm:$0xff]
      %v1025 = vld [vmem:[#allocation2 + $0x38] sm:$0xf]
      %v1026 = vld [vmem:[#allocation2 + $0x3c] sm:$0xff]
      %v1027 = vld [vmem:[#allocation2 + $0x44] sm:$0xff]
      %v1028 = vld [vmem:[#allocation2 + $0x4c] sm:$0xf]
      %v1029 = vld [vmem:[#allocation2 + $0x50] sm:$0xff]
      %v1030 = vld [vmem:[#allocation2 + $0x58] sm:$0xff]
      %v1031 = vld [vmem:[#allocation2 + $0x60] sm:$0xf]
      %v1032 = vld [vmem:[#allocation2 + $0x64] sm:$0xff]
      %v1033 = vld [vmem:[#allocation2 + $0x6c] sm:$0xff]
      %v1034 = vld [vmem:[#allocation2 + $0x74] sm:$0xf]
      %v1035 = vld [vmem:[#allocation2 + $0x78] sm:$0xff]
      %v1036 = vld [vmem:[#allocation2 + $0x80] sm:$0xff]
      %v1037 = vld [vmem:[#allocation2 + $0x88] sm:$0xf]
      %v1038 = vld [vmem:[#allocation2 + $0x8c] sm:$0xff]
      %v1039 = vld [vmem:[#allocation2 + $0x94] sm:$0xff]
      %v1040 = vld [vmem:[#allocation2 + $0x9c] sm:$0xf]
      %v1041 = vld [vmem:[#allocation2 + $0xa0] sm:$0xff]
      %v1042 = vld [vmem:[#allocation2 + $0xa8] sm:$0xff]
      %v1043 = vld [vmem:[#allocation2 + $0xb0] sm:$0xf]
      %v1044 = vld [vmem:[#allocation2 + $0xb4] sm:$0xff]
      %v1045 = vld [vmem:[#allocation2 + $0xbc] sm:$0xff]
      %v1046 = vld [vmem:[#allocation2 + $0xc4] sm:$0xf]
      %v1047 = vld [vmem:[#allocation2 + $0xc8] sm:$0xff]
      %v1048 = vld [vmem:[#allocation2 + $0xd0] sm:$0xff]
      %v1049 = vld [vmem:[#allocation2 + $0xd8] sm:$0xf]
      %s1050 = sadd.s32 5, %s1009
      %s1051 = smul.addr %s1050, 4
      %s1052 = scalar_lea.vmem %s2, %s1051
      %v1053 = vld [vmem:[%s1052] sm:$0xf]
      %v1054 = vld [vmem:[%s1052 + $0x4] sm:$0xf]
      %v1055 = vld [vmem:[%s1052 + $0x8] sm:$0xf]
      %v1056 = vld [vmem:[%s1052 + $0xc] sm:$0xf]
      %v1057 = vld [vmem:[%s1052 + $0x10] sm:$0xf]
      %v1063 = vunpack.c.l.b16 %v1053
      %v1064 = vunpack.c.l.b16 %v1054
      %v1065 = vunpack.c.l.b16 %v1055
      %v1066 = vunpack.c.l.b16 %v1056
      %v1067 = vunpack.c.l.b16 %v1057
      %v1068 = vpack.c.b16 %v1064, %v1063
      %v1069 = vpack.c.b16 %v1066, %v1065
      %v1070 = vpack.c.b16 %v1067, %v1067
      %v1104 = vunpack.c.l.b16 %v1017
      %v1105 = vunpack.c.h.b16 %v1017
      %v1106 = vunpack.c.l.b16 %v1018
      %v1107 = vunpack.c.h.b16 %v1018
      %v1108 = vunpack.c.l.b16 %v1019
      %v1109 = vunpack.c.l.b16 %v1020
      %v1110 = vunpack.c.h.b16 %v1020
      %v1111 = vunpack.c.l.b16 %v1021
      %v1112 = vunpack.c.h.b16 %v1021
      %v1113 = vunpack.c.l.b16 %v1022
      %v1114 = vunpack.c.l.b16 %v1023
      %v1115 = vunpack.c.h.b16 %v1023
      %v1116 = vunpack.c.l.b16 %v1024
      %v1117 = vunpack.c.h.b16 %v1024
      %v1118 = vunpack.c.l.b16 %v1025
      %v1119 = vunpack.c.l.b16 %v1026
      %v1120 = vunpack.c.h.b16 %v1026
      %v1121 = vunpack.c.l.b16 %v1027
      %v1122 = vunpack.c.h.b16 %v1027
      %v1123 = vunpack.c.l.b16 %v1028
      %v1124 = vunpack.c.l.b16 %v1029
      %v1125 = vunpack.c.h.b16 %v1029
      %v1126 = vunpack.c.l.b16 %v1030
      %v1127 = vunpack.c.h.b16 %v1030
      %v1128 = vunpack.c.l.b16 %v1031
      %v1129 = vunpack.c.l.b16 %v1032
      %v1130 = vunpack.c.h.b16 %v1032
      %v1131 = vunpack.c.l.b16 %v1033
      %v1132 = vunpack.c.h.b16 %v1033
      %v1133 = vunpack.c.l.b16 %v1034
      %v1134 = vunpack.c.l.b16 %v1035
      %v1135 = vunpack.c.h.b16 %v1035
      %v1136 = vunpack.c.l.b16 %v1036
      %v1137 = vunpack.c.h.b16 %v1036
      %v1138 = vunpack.c.l.b16 %v1037
      %v1139 = vunpack.c.l.b16 %v1038
      %v1140 = vunpack.c.h.b16 %v1038
      %v1141 = vunpack.c.l.b16 %v1039
      %v1142 = vunpack.c.h.b16 %v1039
      %v1143 = vunpack.c.l.b16 %v1040
      %v1144 = vunpack.c.l.b16 %v1041
      %v1145 = vunpack.c.h.b16 %v1041
      %v1146 = vunpack.c.l.b16 %v1042
      %v1147 = vunpack.c.h.b16 %v1042
      %v1148 = vunpack.c.l.b16 %v1043
      %v1149 = vunpack.c.l.b16 %v1044
      %v1150 = vunpack.c.h.b16 %v1044
      %v1151 = vunpack.c.l.b16 %v1045
      %v1152 = vunpack.c.h.b16 %v1045
      %v1153 = vunpack.c.l.b16 %v1046
      %v1154 = vunpack.c.l.b16 %v1047
      %v1155 = vunpack.c.h.b16 %v1047
      %v1156 = vunpack.c.l.b16 %v1048
      %v1157 = vunpack.c.h.b16 %v1048
      %v1158 = vunpack.c.l.b16 %v1049
      %v1159 = vpack.c.b16 %v1109, %v1104
      %v1160 = vpack.c.b16 %v1110, %v1105
      %v1161 = vpack.c.b16 %v1111, %v1106
      %v1162 = vpack.c.b16 %v1112, %v1107
      %v1163 = vpack.c.b16 %v1113, %v1108
      %v1164 = vpack.c.b16 %v1119, %v1114
      %v1165 = vpack.c.b16 %v1120, %v1115
      %v1166 = vpack.c.b16 %v1121, %v1116
      %v1167 = vpack.c.b16 %v1122, %v1117
      %v1168 = vpack.c.b16 %v1123, %v1118
      %v1169 = vpack.c.b16 %v1129, %v1124
      %v1170 = vpack.c.b16 %v1130, %v1125
      %v1171 = vpack.c.b16 %v1131, %v1126
      %v1172 = vpack.c.b16 %v1132, %v1127
      %v1173 = vpack.c.b16 %v1133, %v1128
      %v1174 = vpack.c.b16 %v1139, %v1134
      %v1175 = vpack.c.b16 %v1140, %v1135
      %v1176 = vpack.c.b16 %v1141, %v1136
      %v1177 = vpack.c.b16 %v1142, %v1137
      %v1178 = vpack.c.b16 %v1143, %v1138
      %v1179 = vpack.c.b16 %v1149, %v1144
      %v1180 = vpack.c.b16 %v1150, %v1145
      %v1181 = vpack.c.b16 %v1151, %v1146
      %v1182 = vpack.c.b16 %v1152, %v1147
      %v1183 = vpack.c.b16 %v1153, %v1148
      %v1184 = vpack.c.b16 %v1154, %v1154
      %v1185 = vpack.c.b16 %v1155, %v1155
      %v1186 = vpack.c.b16 %v1156, %v1156
      %v1187 = vpack.c.b16 %v1157, %v1157
      %v1188 = vpack.c.b16 %v1158, %v1158
      %1189 = vrot.lane.b32.xlu0 %v1159, 127
      %v1190 = vpop.permute.xlu0 %1189
      %1191 = vrot.lane.b32.xlu0 %v1160, 127
      %v1192 = vpop.permute.xlu0 %1191
      %1193 = vrot.lane.b32.xlu0 %v1161, 127
      %v1194 = vpop.permute.xlu0 %1193
      %1195 = vrot.lane.b32.xlu0 %v1162, 127
      %v1196 = vpop.permute.xlu0 %1195
      %1197 = vrot.lane.b32.xlu0 %v1163, 127
      %v1198 = vpop.permute.xlu0 %1197
      %1199 = vrot.lane.b32.xlu0 %v1164, 127
      %v1200 = vpop.permute.xlu0 %1199
      %1201 = vrot.lane.b32.xlu0 %v1165, 127
      %v1202 = vpop.permute.xlu0 %1201
      %1203 = vrot.lane.b32.xlu0 %v1166, 127
      %v1204 = vpop.permute.xlu0 %1203
      %1205 = vrot.lane.b32.xlu0 %v1167, 127
      %v1206 = vpop.permute.xlu0 %1205
      %1207 = vrot.lane.b32.xlu0 %v1168, 127
      %v1208 = vpop.permute.xlu0 %1207
      %1209 = vrot.lane.b32.xlu0 %v1169, 127
      %v1210 = vpop.permute.xlu0 %1209
      %1211 = vrot.lane.b32.xlu0 %v1170, 127
      %v1212 = vpop.permute.xlu0 %1211
      %1213 = vrot.lane.b32.xlu0 %v1171, 127
      %v1214 = vpop.permute.xlu0 %1213
      %1215 = vrot.lane.b32.xlu0 %v1172, 127
      %v1216 = vpop.permute.xlu0 %1215
      %1217 = vrot.lane.b32.xlu0 %v1173, 127
      %v1218 = vpop.permute.xlu0 %1217
      %1219 = vrot.lane.b32.xlu0 %v1174, 127
      %v1220 = vpop.permute.xlu0 %1219
      %1221 = vrot.lane.b32.xlu0 %v1175, 127
      %v1222 = vpop.permute.xlu0 %1221
      %1223 = vrot.lane.b32.xlu0 %v1176, 127
      %v1224 = vpop.permute.xlu0 %1223
      %1225 = vrot.lane.b32.xlu0 %v1177, 127
      %v1226 = vpop.permute.xlu0 %1225
      %1227 = vrot.lane.b32.xlu0 %v1178, 127
      %v1228 = vpop.permute.xlu0 %1227
      %1229 = vrot.lane.b32.xlu0 %v1179, 127
      %v1230 = vpop.permute.xlu0 %1229
      %1231 = vrot.lane.b32.xlu0 %v1180, 127
      %v1232 = vpop.permute.xlu0 %1231
      %1233 = vrot.lane.b32.xlu0 %v1181, 127
      %v1234 = vpop.permute.xlu0 %1233
      %1235 = vrot.lane.b32.xlu0 %v1182, 127
      %v1236 = vpop.permute.xlu0 %1235
      %1237 = vrot.lane.b32.xlu0 %v1183, 127
      %v1238 = vpop.permute.xlu0 %1237
      %1239 = vrot.lane.b32.xlu0 %v1184, 127
      %v1240 = vpop.permute.xlu0 %1239
      %1241 = vrot.lane.b32.xlu0 %v1185, 127
      %v1242 = vpop.permute.xlu0 %1241
      %1243 = vrot.lane.b32.xlu0 %v1186, 127
      %v1244 = vpop.permute.xlu0 %1243
      %1245 = vrot.lane.b32.xlu0 %v1187, 127
      %v1246 = vpop.permute.xlu0 %1245
      %1247 = vrot.lane.b32.xlu0 %v1188, 127
      %v1248 = vpop.permute.xlu0 %1247
      %vm1249 = vcmask 1039360
      %v1250 = vsel %vm1249, %v1190, %v1192
      %v1251 = vsel %vm1249, %v1192, %v1194
      %v1252 = vsel %vm1249, %v1194, %v1196
      %v1253 = vsel %vm1249, %v1196, %v1198
      %v1254 = vsel %vm1249, %v1200, %v1202
      %v1255 = vsel %vm1249, %v1202, %v1204
      %v1256 = vsel %vm1249, %v1204, %v1206
      %v1257 = vsel %vm1249, %v1206, %v1208
      %v1258 = vsel %vm1249, %v1210, %v1212
      %v1259 = vsel %vm1249, %v1212, %v1214
      %v1260 = vsel %vm1249, %v1214, %v1216
      %v1261 = vsel %vm1249, %v1216, %v1218
      %v1262 = vsel %vm1249, %v1220, %v1222
      %v1263 = vsel %vm1249, %v1222, %v1224
      %v1264 = vsel %vm1249, %v1224, %v1226
      %v1265 = vsel %vm1249, %v1226, %v1228
      %v1266 = vsel %vm1249, %v1230, %v1232
      %v1267 = vsel %vm1249, %v1232, %v1234
      %v1268 = vsel %vm1249, %v1234, %v1236
      %v1269 = vsel %vm1249, %v1236, %v1238
      %v1270 = vsel %vm1249, %v1240, %v1242
      %v1271 = vsel %vm1249, %v1242, %v1244
      %v1272 = vsel %vm1249, %v1244, %v1246
      %v1273 = vsel %vm1249, %v1246, %v1248
      %vm1299 = vcmask 719872
      %v1301 = vsel %vm1299, %v1068, 0
      %v1304 = vsel %vm1299, %v1069, 0
      %v1307 = vsel %vm1299, %v1070, 0
      %vm1309 = vcmask 1043456
      %v1311 = vsel %vm1309, %v1270, 0
      %v1314 = vsel %vm1309, %v1271, 0
      %v1317 = vsel %vm1309, %v1272, 0
      %v1320 = vsel %vm1309, %v1273, 0
      %v1323 = vsel %vm1309, %v1248, 0
      %1325 = vmatprep.subr.bf16.mxu0 0
      %1326 = vmatpush1.bf16.msra.mxu0 0
      %1327 = vmatprep.subr.bf16.mxu0 0
      %1328 = vmatpush1.bf16.msra.mxu0 0
      %1329 = vmatprep.subr.bf16.mxu0 %v1314
      %1330 = vmatpush1.bf16.msra.mxu0 %v1311
      %1331 = vmatprep.subr.bf16.mxu0 %v1267
      %1332 = vmatpush1.bf16.msra.mxu0 %v1266
      %1333 = vmatprep.subr.bf16.mxu0 %v1263
      %1334 = vmatpush1.bf16.msra.mxu0 %v1262
      %1335 = vmatprep.subr.bf16.mxu0 %v1259
      %1336 = vmatpush1.bf16.msra.mxu0 %v1258
      %1337 = vmatprep.subr.bf16.mxu0 %v1255
      %1338 = vmatpush1.bf16.msra.mxu0 %v1254
      %1339 = vmatprep.subr.bf16.mxu0 %v1251
      %1340 = vmatpush1.bf16.msra.mxu0 %v1250
      %1341 = vmatprep.subr.bf16.mxu0 0
      %1342 = vmatpush2.bf16.msra.mxu0 0
      %1343 = vmatprep.subr.bf16.mxu0 0
      %1344 = vmatpush2.bf16.msra.mxu0 0
      %1345 = vmatprep.subr.bf16.mxu0 0
      %1346 = vmatpush2.bf16.msra.mxu0 0
      %1347 = vmatprep.subr.bf16.mxu0 0
      %1348 = vmatpush2.bf16.msra.mxu0 0
      %1349 = vmatprep.subr.bf16.mxu0 0
      %1350 = vmatpush2.bf16.msra.mxu0 0
      %1351 = vmatprep.subr.bf16.mxu0 0
      %1352 = vmatpush2.bf16.msra.mxu0 0
      %1353 = vmatprep.subr.bf16.mxu0 0
      %1354 = vmatpush2.bf16.msra.mxu0 0
      %1355 = vmatprep.subr.bf16.mxu0 0
      %1356 = vmatpush2.bf16.msra.mxu0 0
      %1357 = vmatprep.mubr.bf16.mxu0 0
      %1358 = vmatmul.mubr.bf16.gmra.mxu0 %v1301
      %v1359 = vpop.f32.mrf.mxu0
      %v1360 = vadd.f32 0.0, %v1359
      %v1361 = vpop.f32.mrf.mxu0
      %v1362 = vadd.f32 0.0, %v1361
      %v1363 = vpop.f32.mrf.mxu0
      %v1364 = vadd.f32 0.0, %v1363
      %v1365 = vpop.f32.mrf.mxu0
      %v1366 = vadd.f32 0.0, %v1365
      %1367 = vmatprep.mubr.bf16.mxu0 0
      %1368 = vmatmul.mubr.bf16.gmra.mxu0 %v1304
      %v1369 = vpop.f32.mrf.mxu0
      %v1370 = vadd.f32 0.0, %v1369
      %v1371 = vpop.f32.mrf.mxu0
      %v1372 = vadd.f32 0.0, %v1371
      %v1373 = vpop.f32.mrf.mxu0
      %v1374 = vadd.f32 0.0, %v1373
      %v1375 = vpop.f32.mrf.mxu0
      %v1376 = vadd.f32 0.0, %v1375
      %1377 = vmatprep.mubr.bf16.mxu0 0
      %1378 = vmatmul.mubr.bf16.gmra.mxu0 %v1307
      %v1379 = vpop.f32.mrf.mxu0
      %v1380 = vadd.f32 0.0, %v1379
      %v1381 = vpop.f32.mrf.mxu0
      %v1382 = vadd.f32 0.0, %v1381
      %v1383 = vpop.f32.mrf.mxu0
      %v1384 = vpop.f32.mrf.mxu0
      %1385 = vdwg.mxu0
      %1386 = vmatprep.subr.bf16.mxu0 0
      %1387 = vmatpush1.bf16.msra.mxu0 0
      %1388 = vmatprep.subr.bf16.mxu0 0
      %1389 = vmatpush1.bf16.msra.mxu0 0
      %1390 = vmatprep.subr.bf16.mxu0 %v1320
      %1391 = vmatpush1.bf16.msra.mxu0 %v1317
      %1392 = vmatprep.subr.bf16.mxu0 %v1269
      %1393 = vmatpush1.bf16.msra.mxu0 %v1268
      %1394 = vmatprep.subr.bf16.mxu0 %v1265
      %1395 = vmatpush1.bf16.msra.mxu0 %v1264
      %1396 = vmatprep.subr.bf16.mxu0 %v1261
      %1397 = vmatpush1.bf16.msra.mxu0 %v1260
      %1398 = vmatprep.subr.bf16.mxu0 %v1257
      %1399 = vmatpush1.bf16.msra.mxu0 %v1256
      %1400 = vmatprep.subr.bf16.mxu0 %v1253
      %1401 = vmatpush1.bf16.msra.mxu0 %v1252
      %1402 = vmatprep.subr.bf16.mxu0 0
      %1403 = vmatpush2.bf16.msra.mxu0 0
      %1404 = vmatprep.subr.bf16.mxu0 0
      %1405 = vmatpush2.bf16.msra.mxu0 0
      %1406 = vmatprep.subr.bf16.mxu0 0
      %1407 = vmatpush2.bf16.msra.mxu0 0
      %1408 = vmatprep.subr.bf16.mxu0 0
      %1409 = vmatpush2.bf16.msra.mxu0 0
      %1410 = vmatprep.subr.bf16.mxu0 0
      %1411 = vmatpush2.bf16.msra.mxu0 0
      %1412 = vmatprep.subr.bf16.mxu0 0
      %1413 = vmatpush2.bf16.msra.mxu0 0
      %1414 = vmatprep.subr.bf16.mxu0 0
      %1415 = vmatpush2.bf16.msra.mxu0 0
      %1416 = vmatprep.subr.bf16.mxu0 0
      %1417 = vmatpush2.bf16.msra.mxu0 0
      %1418 = vmatprep.mubr.bf16.mxu0 0
      %1419 = vmatmul.mubr.bf16.gmra.mxu0 %v1301
      %v1420 = vpop.f32.mrf.mxu0
      %v1421 = vadd.f32 0.0, %v1420
      %v1422 = vpop.f32.mrf.mxu0
      %v1423 = vadd.f32 0.0, %v1422
      %v1424 = vpop.f32.mrf.mxu0
      %v1425 = vadd.f32 0.0, %v1424
      %v1426 = vpop.f32.mrf.mxu0
      %v1427 = vadd.f32 0.0, %v1426
      %1428 = vmatprep.mubr.bf16.mxu0 0
      %1429 = vmatmul.mubr.bf16.gmra.mxu0 %v1304
      %v1430 = vpop.f32.mrf.mxu0
      %v1431 = vadd.f32 0.0, %v1430
      %v1432 = vpop.f32.mrf.mxu0
      %v1433 = vadd.f32 0.0, %v1432
      %v1434 = vpop.f32.mrf.mxu0
      %v1435 = vadd.f32 0.0, %v1434
      %v1436 = vpop.f32.mrf.mxu0
      %v1437 = vadd.f32 0.0, %v1436
      %1438 = vmatprep.mubr.bf16.mxu0 0
      %1439 = vmatmul.mubr.bf16.gmra.mxu0 %v1307
      %v1440 = vpop.f32.mrf.mxu0
      %v1441 = vadd.f32 0.0, %v1440
      %v1442 = vpop.f32.mrf.mxu0
      %v1443 = vadd.f32 0.0, %v1442
      %v1444 = vpop.f32.mrf.mxu0
      %v1445 = vpop.f32.mrf.mxu0
      %1446 = vdwg.mxu0
      %1447 = vmatprep.subr.bf16.mxu0 0
      %1448 = vmatpush1.bf16.msra.mxu0 0
      %1449 = vmatprep.subr.bf16.mxu0 0
      %1450 = vmatpush1.bf16.msra.mxu0 0
      %1451 = vmatprep.subr.bf16.mxu0 0
      %1452 = vmatpush1.bf16.msra.mxu0 %v1323
      %1453 = vmatprep.subr.bf16.mxu0 0
      %1454 = vmatpush1.bf16.msra.mxu0 %v1238
      %1455 = vmatprep.subr.bf16.mxu0 0
      %1456 = vmatpush1.bf16.msra.mxu0 %v1228
      %1457 = vmatprep.subr.bf16.mxu0 0
      %1458 = vmatpush1.bf16.msra.mxu0 %v1218
      %1459 = vmatprep.subr.bf16.mxu0 0
      %1460 = vmatpush1.bf16.msra.mxu0 %v1208
      %1461 = vmatprep.subr.bf16.mxu0 0
      %1462 = vmatpush1.bf16.msra.mxu0 %v1198
      %1463 = vmatprep.subr.bf16.mxu0 0
      %1464 = vmatpush2.bf16.msra.mxu0 0
      %1465 = vmatprep.subr.bf16.mxu0 0
      %1466 = vmatpush2.bf16.msra.mxu0 0
      %1467 = vmatprep.subr.bf16.mxu0 0
      %1468 = vmatpush2.bf16.msra.mxu0 0
      %1469 = vmatprep.subr.bf16.mxu0 0
      %1470 = vmatpush2.bf16.msra.mxu0 0
      %1471 = vmatprep.subr.bf16.mxu0 0
      %1472 = vmatpush2.bf16.msra.mxu0 0
      %1473 = vmatprep.subr.bf16.mxu0 0
      %1474 = vmatpush2.bf16.msra.mxu0 0
      %1475 = vmatprep.subr.bf16.mxu0 0
      %1476 = vmatpush2.bf16.msra.mxu0 0
      %1477 = vmatprep.subr.bf16.mxu0 0
      %1478 = vmatpush2.bf16.msra.mxu0 0
      %1479 = vmatprep.mubr.bf16.mxu0 0
      %1480 = vmatmul.mubr.bf16.gmra.mxu0 %v1301
      %v1481 = vpop.f32.mrf.mxu0
      %v1482 = vadd.f32 0.0, %v1481
      %v1483 = vpop.f32.mrf.mxu0
      %v1484 = vpop.f32.mrf.mxu0
      %v1485 = vadd.f32 0.0, %v1484
      %v1486 = vpop.f32.mrf.mxu0
      %1487 = vmatprep.mubr.bf16.mxu0 0
      %1488 = vmatmul.mubr.bf16.gmra.mxu0 %v1304
      %v1489 = vpop.f32.mrf.mxu0
      %v1490 = vadd.f32 0.0, %v1489
      %v1491 = vpop.f32.mrf.mxu0
      %v1492 = vpop.f32.mrf.mxu0
      %v1493 = vadd.f32 0.0, %v1492
      %v1494 = vpop.f32.mrf.mxu0
      %1495 = vmatprep.mubr.bf16.mxu0 0
      %1496 = vmatmul.mubr.bf16.gmra.mxu0 %v1307
      %v1497 = vpop.f32.mrf.mxu0
      %v1498 = vadd.f32 0.0, %v1497
      %v1499 = vpop.f32.mrf.mxu0
      %v1500 = vpop.f32.mrf.mxu0
      %v1501 = vpop.f32.mrf.mxu0
      %1502 = vdwg.mxu0
      %v1508 = vunpack.c.l.b16 %v1012
      %v1509 = vunpack.c.l.b16 %v1013
      %v1510 = vunpack.c.l.b16 %v1014
      %v1511 = vunpack.c.l.b16 %v1015
      %v1512 = vunpack.c.l.b16 %v1016
      %v1513 = vpack.c.b16 %v1509, %v1508
      %v1514 = vpack.c.b16 %v1511, %v1510
      %v1515 = vpack.c.b16 %v1512, %v1512
      %v1542 = vsel %vm1299, %v1513, 0
      %v1545 = vsel %vm1299, %v1514, 0
      %v1548 = vsel %vm1299, %v1515, 0
      %v1551 = vsel %vm1309, %v1184, 0
      %v1554 = vsel %vm1309, %v1185, 0
      %v1557 = vsel %vm1309, %v1186, 0
      %v1560 = vsel %vm1309, %v1187, 0
      %v1563 = vsel %vm1309, %v1188, 0
      %1565 = vmatprep.subr.bf16.mxu0 0
      %1566 = vmatpush1.bf16.msra.mxu0 0
      %1567 = vmatprep.subr.bf16.mxu0 0
      %1568 = vmatpush1.bf16.msra.mxu0 0
      %1569 = vmatprep.subr.bf16.mxu0 %v1554
      %1570 = vmatpush1.bf16.msra.mxu0 %v1551
      %1571 = vmatprep.subr.bf16.mxu0 %v1180
      %1572 = vmatpush1.bf16.msra.mxu0 %v1179
      %1573 = vmatprep.subr.bf16.mxu0 %v1175
      %1574 = vmatpush1.bf16.msra.mxu0 %v1174
      %1575 = vmatprep.subr.bf16.mxu0 %v1170
      %1576 = vmatpush1.bf16.msra.mxu0 %v1169
      %1577 = vmatprep.subr.bf16.mxu0 %v1165
      %1578 = vmatpush1.bf16.msra.mxu0 %v1164
      %1579 = vmatprep.subr.bf16.mxu0 %v1160
      %1580 = vmatpush1.bf16.msra.mxu0 %v1159
      %1581 = vmatprep.subr.bf16.mxu0 0
      %1582 = vmatpush2.bf16.msra.mxu0 0
      %1583 = vmatprep.subr.bf16.mxu0 0
      %1584 = vmatpush2.bf16.msra.mxu0 0
      %1585 = vmatprep.subr.bf16.mxu0 0
      %1586 = vmatpush2.bf16.msra.mxu0 0
      %1587 = vmatprep.subr.bf16.mxu0 0
      %1588 = vmatpush2.bf16.msra.mxu0 0
      %1589 = vmatprep.subr.bf16.mxu0 0
      %1590 = vmatpush2.bf16.msra.mxu0 0
      %1591 = vmatprep.subr.bf16.mxu0 0
      %1592 = vmatpush2.bf16.msra.mxu0 0
      %1593 = vmatprep.subr.bf16.mxu0 0
      %1594 = vmatpush2.bf16.msra.mxu0 0
      %1595 = vmatprep.subr.bf16.mxu0 0
      %1596 = vmatpush2.bf16.msra.mxu0 0
      %1597 = vmatprep.mubr.bf16.mxu0 0
      %1598 = vmatmul.mubr.bf16.gmra.mxu0 %v1542
      %v1599 = vpop.f32.mrf.mxu0
      %v1600 = vadd.f32 %v1360, %v1599
      %v1601 = vpop.f32.mrf.mxu0
      %v1602 = vadd.f32 %v1362, %v1601
      %v1603 = vpop.f32.mrf.mxu0
      %v1604 = vadd.f32 %v1364, %v1603
      %v1605 = vpop.f32.mrf.mxu0
      %v1606 = vadd.f32 %v1366, %v1605
      %1607 = vmatprep.mubr.bf16.mxu0 0
      %1608 = vmatmul.mubr.bf16.gmra.mxu0 %v1545
      %v1609 = vpop.f32.mrf.mxu0
      %v1610 = vadd.f32 %v1370, %v1609
      %v1611 = vpop.f32.mrf.mxu0
      %v1612 = vadd.f32 %v1372, %v1611
      %v1613 = vpop.f32.mrf.mxu0
      %v1614 = vadd.f32 %v1374, %v1613
      %v1615 = vpop.f32.mrf.mxu0
      %v1616 = vadd.f32 %v1376, %v1615
      %1617 = vmatprep.mubr.bf16.mxu0 0
      %1618 = vmatmul.mubr.bf16.gmra.mxu0 %v1548
      %v1619 = vpop.f32.mrf.mxu0
      %v1620 = vadd.f32 %v1380, %v1619
      %v1621 = vpop.f32.mrf.mxu0
      %v1622 = vadd.f32 %v1382, %v1621
      %v1623 = vpop.f32.mrf.mxu0
      %v1624 = vpop.f32.mrf.mxu0
      %1625 = vdwg.mxu0
      %1626 = vmatprep.subr.bf16.mxu0 0
      %1627 = vmatpush1.bf16.msra.mxu0 0
      %1628 = vmatprep.subr.bf16.mxu0 0
      %1629 = vmatpush1.bf16.msra.mxu0 0
      %1630 = vmatprep.subr.bf16.mxu0 %v1560
      %1631 = vmatpush1.bf16.msra.mxu0 %v1557
      %1632 = vmatprep.subr.bf16.mxu0 %v1182
      %1633 = vmatpush1.bf16.msra.mxu0 %v1181
      %1634 = vmatprep.subr.bf16.mxu0 %v1177
      %1635 = vmatpush1.bf16.msra.mxu0 %v1176
      %1636 = vmatprep.subr.bf16.mxu0 %v1172
      %1637 = vmatpush1.bf16.msra.mxu0 %v1171
      %1638 = vmatprep.subr.bf16.mxu0 %v1167
      %1639 = vmatpush1.bf16.msra.mxu0 %v1166
      %1640 = vmatprep.subr.bf16.mxu0 %v1162
      %1641 = vmatpush1.bf16.msra.mxu0 %v1161
      %1642 = vmatprep.subr.bf16.mxu0 0
      %1643 = vmatpush2.bf16.msra.mxu0 0
      %1644 = vmatprep.subr.bf16.mxu0 0
      %1645 = vmatpush2.bf16.msra.mxu0 0
      %1646 = vmatprep.subr.bf16.mxu0 0
      %1647 = vmatpush2.bf16.msra.mxu0 0
      %1648 = vmatprep.subr.bf16.mxu0 0
      %1649 = vmatpush2.bf16.msra.mxu0 0
      %1650 = vmatprep.subr.bf16.mxu0 0
      %1651 = vmatpush2.bf16.msra.mxu0 0
      %1652 = vmatprep.subr.bf16.mxu0 0
      %1653 = vmatpush2.bf16.msra.mxu0 0
      %1654 = vmatprep.subr.bf16.mxu0 0
      %1655 = vmatpush2.bf16.msra.mxu0 0
      %1656 = vmatprep.subr.bf16.mxu0 0
      %1657 = vmatpush2.bf16.msra.mxu0 0
      %1658 = vmatprep.mubr.bf16.mxu0 0
      %1659 = vmatmul.mubr.bf16.gmra.mxu0 %v1542
      %v1660 = vpop.f32.mrf.mxu0
      %v1661 = vadd.f32 %v1421, %v1660
      %v1662 = vpop.f32.mrf.mxu0
      %v1663 = vadd.f32 %v1423, %v1662
      %v1664 = vpop.f32.mrf.mxu0
      %v1665 = vadd.f32 %v1425, %v1664
      %v1666 = vpop.f32.mrf.mxu0
      %v1667 = vadd.f32 %v1427, %v1666
      %1668 = vmatprep.mubr.bf16.mxu0 0
      %1669 = vmatmul.mubr.bf16.gmra.mxu0 %v1545
      %v1670 = vpop.f32.mrf.mxu0
      %v1671 = vadd.f32 %v1431, %v1670
      %v1672 = vpop.f32.mrf.mxu0
      %v1673 = vadd.f32 %v1433, %v1672
      %v1674 = vpop.f32.mrf.mxu0
      %v1675 = vadd.f32 %v1435, %v1674
      %v1676 = vpop.f32.mrf.mxu0
      %v1677 = vadd.f32 %v1437, %v1676
      %1678 = vmatprep.mubr.bf16.mxu0 0
      %1679 = vmatmul.mubr.bf16.gmra.mxu0 %v1548
      %v1680 = vpop.f32.mrf.mxu0
      %v1681 = vadd.f32 %v1441, %v1680
      %v1682 = vpop.f32.mrf.mxu0
      %v1683 = vadd.f32 %v1443, %v1682
      %v1684 = vpop.f32.mrf.mxu0
      %v1685 = vpop.f32.mrf.mxu0
      %1686 = vdwg.mxu0
      %1687 = vmatprep.subr.bf16.mxu0 0
      %1688 = vmatpush1.bf16.msra.mxu0 0
      %1689 = vmatprep.subr.bf16.mxu0 0
      %1690 = vmatpush1.bf16.msra.mxu0 0
      %1691 = vmatprep.subr.bf16.mxu0 0
      %1692 = vmatpush1.bf16.msra.mxu0 %v1563
      %1693 = vmatprep.subr.bf16.mxu0 0
      %1694 = vmatpush1.bf16.msra.mxu0 %v1183
      %1695 = vmatprep.subr.bf16.mxu0 0
      %1696 = vmatpush1.bf16.msra.mxu0 %v1178
      %1697 = vmatprep.subr.bf16.mxu0 0
      %1698 = vmatpush1.bf16.msra.mxu0 %v1173
      %1699 = vmatprep.subr.bf16.mxu0 0
      %1700 = vmatpush1.bf16.msra.mxu0 %v1168
      %1701 = vmatprep.subr.bf16.mxu0 0
      %1702 = vmatpush1.bf16.msra.mxu0 %v1163
      %1703 = vmatprep.subr.bf16.mxu0 0
      %1704 = vmatpush2.bf16.msra.mxu0 0
      %1705 = vmatprep.subr.bf16.mxu0 0
      %1706 = vmatpush2.bf16.msra.mxu0 0
      %1707 = vmatprep.subr.bf16.mxu0 0
      %1708 = vmatpush2.bf16.msra.mxu0 0
      %1709 = vmatprep.subr.bf16.mxu0 0
      %1710 = vmatpush2.bf16.msra.mxu0 0
      %1711 = vmatprep.subr.bf16.mxu0 0
      %1712 = vmatpush2.bf16.msra.mxu0 0
      %1713 = vmatprep.subr.bf16.mxu0 0
      %1714 = vmatpush2.bf16.msra.mxu0 0
      %1715 = vmatprep.subr.bf16.mxu0 0
      %1716 = vmatpush2.bf16.msra.mxu0 0
      %1717 = vmatprep.subr.bf16.mxu0 0
      %1718 = vmatpush2.bf16.msra.mxu0 0
      %1719 = vmatprep.mubr.bf16.mxu0 0
      %1720 = vmatmul.mubr.bf16.gmra.mxu0 %v1542
      %v1721 = vpop.f32.mrf.mxu0
      %v1722 = vadd.f32 %v1482, %v1721
      %v1723 = vpop.f32.mrf.mxu0
      %v1724 = vpop.f32.mrf.mxu0
      %v1725 = vadd.f32 %v1485, %v1724
      %v1726 = vpop.f32.mrf.mxu0
      %1727 = vmatprep.mubr.bf16.mxu0 0
      %1728 = vmatmul.mubr.bf16.gmra.mxu0 %v1545
      %v1729 = vpop.f32.mrf.mxu0
      %v1730 = vadd.f32 %v1490, %v1729
      %v1731 = vpop.f32.mrf.mxu0
      %v1732 = vpop.f32.mrf.mxu0
      %v1733 = vadd.f32 %v1493, %v1732
      %v1734 = vpop.f32.mrf.mxu0
      %1735 = vmatprep.mubr.bf16.mxu0 0
      %1736 = vmatmul.mubr.bf16.gmra.mxu0 %v1548
      %v1737 = vpop.f32.mrf.mxu0
      %v1738 = vadd.f32 %v1498, %v1737
      %v1739 = vpop.f32.mrf.mxu0
      %v1740 = vpop.f32.mrf.mxu0
      %v1741 = vpop.f32.mrf.mxu0
      %1742 = vdwg.mxu0
      %s1743 = sadd.s32 10, %s1009
      %s1744 = smul.addr %s1743, 4
      %s1745 = scalar_lea.vmem %s2, %s1744
      %v1746 = vld [vmem:[%s1745] sm:$0xf]
      %v1747 = vld [vmem:[%s1745 + $0x4] sm:$0xf]
      %v1748 = vld [vmem:[%s1745 + $0x8] sm:$0xf]
      %v1749 = vld [vmem:[%s1745 + $0xc] sm:$0xf]
      %v1750 = vld [vmem:[%s1745 + $0x10] sm:$0xf]
      %v1756 = vunpack.c.l.b16 %v1746
      %v1757 = vunpack.c.l.b16 %v1747
      %v1758 = vunpack.c.l.b16 %v1748
      %v1759 = vunpack.c.l.b16 %v1749
      %v1760 = vunpack.c.l.b16 %v1750
      %v1761 = vpack.c.b16 %v1757, %v1756
      %v1762 = vpack.c.b16 %v1759, %v1758
      %v1763 = vpack.c.b16 %v1760, %v1760
      %1764 = vrot.lane.b32.xlu0 %v1159, 126
      %v1765 = vpop.permute.xlu0 %1764
      %1766 = vrot.lane.b32.xlu0 %v1160, 126
      %v1767 = vpop.permute.xlu0 %1766
      %1768 = vrot.lane.b32.xlu0 %v1161, 126
      %v1769 = vpop.permute.xlu0 %1768
      %1770 = vrot.lane.b32.xlu0 %v1162, 126
      %v1771 = vpop.permute.xlu0 %1770
      %1772 = vrot.lane.b32.xlu0 %v1163, 126
      %v1773 = vpop.permute.xlu0 %1772
      %1774 = vrot.lane.b32.xlu0 %v1164, 126
      %v1775 = vpop.permute.xlu0 %1774
      %1776 = vrot.lane.b32.xlu0 %v1165, 126
      %v1777 = vpop.permute.xlu0 %1776
      %1778 = vrot.lane.b32.xlu0 %v1166, 126
      %v1779 = vpop.permute.xlu0 %1778
      %1780 = vrot.lane.b32.xlu0 %v1167, 126
      %v1781 = vpop.permute.xlu0 %1780
      %1782 = vrot.lane.b32.xlu0 %v1168, 126
      %v1783 = vpop.permute.xlu0 %1782
      %1784 = vrot.lane.b32.xlu0 %v1169, 126
      %v1785 = vpop.permute.xlu0 %1784
      %1786 = vrot.lane.b32.xlu0 %v1170, 126
      %v1787 = vpop.permute.xlu0 %1786
      %1788 = vrot.lane.b32.xlu0 %v1171, 126
      %v1789 = vpop.permute.xlu0 %1788
      %1790 = vrot.lane.b32.xlu0 %v1172, 126
      %v1791 = vpop.permute.xlu0 %1790
      %1792 = vrot.lane.b32.xlu0 %v1173, 126
      %v1793 = vpop.permute.xlu0 %1792
      %1794 = vrot.lane.b32.xlu0 %v1174, 126
      %v1795 = vpop.permute.xlu0 %1794
      %1796 = vrot.lane.b32.xlu0 %v1175, 126
      %v1797 = vpop.permute.xlu0 %1796
      %1798 = vrot.lane.b32.xlu0 %v1176, 126
      %v1799 = vpop.permute.xlu0 %1798
      %1800 = vrot.lane.b32.xlu0 %v1177, 126
      %v1801 = vpop.permute.xlu0 %1800
      %1802 = vrot.lane.b32.xlu0 %v1178, 126
      %v1803 = vpop.permute.xlu0 %1802
      %1804 = vrot.lane.b32.xlu0 %v1179, 126
      %v1805 = vpop.permute.xlu0 %1804
      %1806 = vrot.lane.b32.xlu0 %v1180, 126
      %v1807 = vpop.permute.xlu0 %1806
      %1808 = vrot.lane.b32.xlu0 %v1181, 126
      %v1809 = vpop.permute.xlu0 %1808
      %1810 = vrot.lane.b32.xlu0 %v1182, 126
      %v1811 = vpop.permute.xlu0 %1810
      %1812 = vrot.lane.b32.xlu0 %v1183, 126
      %v1813 = vpop.permute.xlu0 %1812
      %1814 = vrot.lane.b32.xlu0 %v1184, 126
      %v1815 = vpop.permute.xlu0 %1814
      %1816 = vrot.lane.b32.xlu0 %v1185, 126
      %v1817 = vpop.permute.xlu0 %1816
      %1818 = vrot.lane.b32.xlu0 %v1186, 126
      %v1819 = vpop.permute.xlu0 %1818
      %1820 = vrot.lane.b32.xlu0 %v1187, 126
      %v1821 = vpop.permute.xlu0 %1820
      %1822 = vrot.lane.b32.xlu0 %v1188, 126
      %v1823 = vpop.permute.xlu0 %1822
      %vm1824 = vcmask 1031168
      %v1825 = vsel %vm1824, %v1765, %v1767
      %v1826 = vsel %vm1824, %v1767, %v1769
      %v1827 = vsel %vm1824, %v1769, %v1771
      %v1828 = vsel %vm1824, %v1771, %v1773
      %v1829 = vsel %vm1824, %v1775, %v1777
      %v1830 = vsel %vm1824, %v1777, %v1779
      %v1831 = vsel %vm1824, %v1779, %v1781
      %v1832 = vsel %vm1824, %v1781, %v1783
      %v1833 = vsel %vm1824, %v1785, %v1787
      %v1834 = vsel %vm1824, %v1787, %v1789
      %v1835 = vsel %vm1824, %v1789, %v1791
      %v1836 = vsel %vm1824, %v1791, %v1793
      %v1837 = vsel %vm1824, %v1795, %v1797
      %v1838 = vsel %vm1824, %v1797, %v1799
      %v1839 = vsel %vm1824, %v1799, %v1801
      %v1840 = vsel %vm1824, %v1801, %v1803
      %v1841 = vsel %vm1824, %v1805, %v1807
      %v1842 = vsel %vm1824, %v1807, %v1809
      %v1843 = vsel %vm1824, %v1809, %v1811
      %v1844 = vsel %vm1824, %v1811, %v1813
      %v1845 = vsel %vm1824, %v1815, %v1817
      %v1846 = vsel %vm1824, %v1817, %v1819
      %v1847 = vsel %vm1824, %v1819, %v1821
      %v1848 = vsel %vm1824, %v1821, %v1823
      %v1875 = vsel %vm1299, %v1761, 0
      %v1878 = vsel %vm1299, %v1762, 0
      %v1881 = vsel %vm1299, %v1763, 0
      %v1884 = vsel %vm1309, %v1845, 0
      %v1887 = vsel %vm1309, %v1846, 0
      %v1890 = vsel %vm1309, %v1847, 0
      %v1893 = vsel %vm1309, %v1848, 0
      %v1896 = vsel %vm1309, %v1823, 0
      %1898 = vmatprep.subr.bf16.mxu0 0
      %1899 = vmatpush1.bf16.msra.mxu0 0
      %1900 = vmatprep.subr.bf16.mxu0 0
      %1901 = vmatpush1.bf16.msra.mxu0 0
      %1902 = vmatprep.subr.bf16.mxu0 %v1887
      %1903 = vmatpush1.bf16.msra.mxu0 %v1884
      %1904 = vmatprep.subr.bf16.mxu0 %v1842
      %1905 = vmatpush1.bf16.msra.mxu0 %v1841
      %1906 = vmatprep.subr.bf16.mxu0 %v1838
      %1907 = vmatpush1.bf16.msra.mxu0 %v1837
      %1908 = vmatprep.subr.bf16.mxu0 %v1834
      %1909 = vmatpush1.bf16.msra.mxu0 %v1833
      %1910 = vmatprep.subr.bf16.mxu0 %v1830
      %1911 = vmatpush1.bf16.msra.mxu0 %v1829
      %1912 = vmatprep.subr.bf16.mxu0 %v1826
      %1913 = vmatpush1.bf16.msra.mxu0 %v1825
      %1914 = vmatprep.subr.bf16.mxu0 0
      %1915 = vmatpush2.bf16.msra.mxu0 0
      %1916 = vmatprep.subr.bf16.mxu0 0
      %1917 = vmatpush2.bf16.msra.mxu0 0
      %1918 = vmatprep.subr.bf16.mxu0 0
      %1919 = vmatpush2.bf16.msra.mxu0 0
      %1920 = vmatprep.subr.bf16.mxu0 0
      %1921 = vmatpush2.bf16.msra.mxu0 0
      %1922 = vmatprep.subr.bf16.mxu0 0
      %1923 = vmatpush2.bf16.msra.mxu0 0
      %1924 = vmatprep.subr.bf16.mxu0 0
      %1925 = vmatpush2.bf16.msra.mxu0 0
      %1926 = vmatprep.subr.bf16.mxu0 0
      %1927 = vmatpush2.bf16.msra.mxu0 0
      %1928 = vmatprep.subr.bf16.mxu0 0
      %1929 = vmatpush2.bf16.msra.mxu0 0
      %1930 = vmatprep.mubr.bf16.mxu0 0
      %1931 = vmatmul.mubr.bf16.gmra.mxu0 %v1875
      %v1932 = vpop.f32.mrf.mxu0
      %v1933 = vadd.f32 0.0, %v1932
      %v1934 = vpop.f32.mrf.mxu0
      %v1935 = vadd.f32 0.0, %v1934
      %v1936 = vpop.f32.mrf.mxu0
      %v1937 = vadd.f32 0.0, %v1936
      %v1938 = vpop.f32.mrf.mxu0
      %v1939 = vadd.f32 0.0, %v1938
      %1940 = vmatprep.mubr.bf16.mxu0 0
      %1941 = vmatmul.mubr.bf16.gmra.mxu0 %v1878
      %v1942 = vpop.f32.mrf.mxu0
      %v1943 = vadd.f32 0.0, %v1942
      %v1944 = vpop.f32.mrf.mxu0
      %v1945 = vadd.f32 0.0, %v1944
      %v1946 = vpop.f32.mrf.mxu0
      %v1947 = vadd.f32 0.0, %v1946
      %v1948 = vpop.f32.mrf.mxu0
      %v1949 = vadd.f32 0.0, %v1948
      %1950 = vmatprep.mubr.bf16.mxu0 0
      %1951 = vmatmul.mubr.bf16.gmra.mxu0 %v1881
      %v1952 = vpop.f32.mrf.mxu0
      %v1953 = vadd.f32 0.0, %v1952
      %v1954 = vpop.f32.mrf.mxu0
      %v1955 = vadd.f32 0.0, %v1954
      %v1956 = vpop.f32.mrf.mxu0
      %v1957 = vpop.f32.mrf.mxu0
      %1958 = vdwg.mxu0
      %1959 = vmatprep.subr.bf16.mxu0 0
      %1960 = vmatpush1.bf16.msra.mxu0 0
      %1961 = vmatprep.subr.bf16.mxu0 0
      %1962 = vmatpush1.bf16.msra.mxu0 0
      %1963 = vmatprep.subr.bf16.mxu0 %v1893
      %1964 = vmatpush1.bf16.msra.mxu0 %v1890
      %1965 = vmatprep.subr.bf16.mxu0 %v1844
      %1966 = vmatpush1.bf16.msra.mxu0 %v1843
      %1967 = vmatprep.subr.bf16.mxu0 %v1840
      %1968 = vmatpush1.bf16.msra.mxu0 %v1839
      %1969 = vmatprep.subr.bf16.mxu0 %v1836
      %1970 = vmatpush1.bf16.msra.mxu0 %v1835
      %1971 = vmatprep.subr.bf16.mxu0 %v1832
      %1972 = vmatpush1.bf16.msra.mxu0 %v1831
      %1973 = vmatprep.subr.bf16.mxu0 %v1828
      %1974 = vmatpush1.bf16.msra.mxu0 %v1827
      %1975 = vmatprep.subr.bf16.mxu0 0
      %1976 = vmatpush2.bf16.msra.mxu0 0
      %1977 = vmatprep.subr.bf16.mxu0 0
      %1978 = vmatpush2.bf16.msra.mxu0 0
      %1979 = vmatprep.subr.bf16.mxu0 0
      %1980 = vmatpush2.bf16.msra.mxu0 0
      %1981 = vmatprep.subr.bf16.mxu0 0
      %1982 = vmatpush2.bf16.msra.mxu0 0
      %1983 = vmatprep.subr.bf16.mxu0 0
      %1984 = vmatpush2.bf16.msra.mxu0 0
      %1985 = vmatprep.subr.bf16.mxu0 0
      %1986 = vmatpush2.bf16.msra.mxu0 0
      %1987 = vmatprep.subr.bf16.mxu0 0
      %1988 = vmatpush2.bf16.msra.mxu0 0
      %1989 = vmatprep.subr.bf16.mxu0 0
      %1990 = vmatpush2.bf16.msra.mxu0 0
      %1991 = vmatprep.mubr.bf16.mxu0 0
      %1992 = vmatmul.mubr.bf16.gmra.mxu0 %v1875
      %v1993 = vpop.f32.mrf.mxu0
      %v1994 = vadd.f32 0.0, %v1993
      %v1995 = vpop.f32.mrf.mxu0
      %v1996 = vadd.f32 0.0, %v1995
      %v1997 = vpop.f32.mrf.mxu0
      %v1998 = vadd.f32 0.0, %v1997
      %v1999 = vpop.f32.mrf.mxu0
      %v2000 = vadd.f32 0.0, %v1999
      %2001 = vmatprep.mubr.bf16.mxu0 0
      %2002 = vmatmul.mubr.bf16.gmra.mxu0 %v1878
      %v2003 = vpop.f32.mrf.mxu0
      %v2004 = vadd.f32 0.0, %v2003
      %v2005 = vpop.f32.mrf.mxu0
      %v2006 = vadd.f32 0.0, %v2005
      %v2007 = vpop.f32.mrf.mxu0
      %v2008 = vadd.f32 0.0, %v2007
      %v2009 = vpop.f32.mrf.mxu0
      %v2010 = vadd.f32 0.0, %v2009
      %2011 = vmatprep.mubr.bf16.mxu0 0
      %2012 = vmatmul.mubr.bf16.gmra.mxu0 %v1881
      %v2013 = vpop.f32.mrf.mxu0
      %v2014 = vadd.f32 0.0, %v2013
      %v2015 = vpop.f32.mrf.mxu0
      %v2016 = vadd.f32 0.0, %v2015
      %v2017 = vpop.f32.mrf.mxu0
      %v2018 = vpop.f32.mrf.mxu0
      %2019 = vdwg.mxu0
      %2020 = vmatprep.subr.bf16.mxu0 0
      %2021 = vmatpush1.bf16.msra.mxu0 0
      %2022 = vmatprep.subr.bf16.mxu0 0
      %2023 = vmatpush1.bf16.msra.mxu0 0
      %2024 = vmatprep.subr.bf16.mxu0 0
      %2025 = vmatpush1.bf16.msra.mxu0 %v1896
      %2026 = vmatprep.subr.bf16.mxu0 0
      %2027 = vmatpush1.bf16.msra.mxu0 %v1813
      %2028 = vmatprep.subr.bf16.mxu0 0
      %2029 = vmatpush1.bf16.msra.mxu0 %v1803
      %2030 = vmatprep.subr.bf16.mxu0 0
      %2031 = vmatpush1.bf16.msra.mxu0 %v1793
      %2032 = vmatprep.subr.bf16.mxu0 0
      %2033 = vmatpush1.bf16.msra.mxu0 %v1783
      %2034 = vmatprep.subr.bf16.mxu0 0
      %2035 = vmatpush1.bf16.msra.mxu0 %v1773
      %2036 = vmatprep.subr.bf16.mxu0 0
      %2037 = vmatpush2.bf16.msra.mxu0 0
      %2038 = vmatprep.subr.bf16.mxu0 0
      %2039 = vmatpush2.bf16.msra.mxu0 0
      %2040 = vmatprep.subr.bf16.mxu0 0
      %2041 = vmatpush2.bf16.msra.mxu0 0
      %2042 = vmatprep.subr.bf16.mxu0 0
      %2043 = vmatpush2.bf16.msra.mxu0 0
      %2044 = vmatprep.subr.bf16.mxu0 0
      %2045 = vmatpush2.bf16.msra.mxu0 0
      %2046 = vmatprep.subr.bf16.mxu0 0
      %2047 = vmatpush2.bf16.msra.mxu0 0
      %2048 = vmatprep.subr.bf16.mxu0 0
      %2049 = vmatpush2.bf16.msra.mxu0 0
      %2050 = vmatprep.subr.bf16.mxu0 0
      %2051 = vmatpush2.bf16.msra.mxu0 0
      %2052 = vmatprep.mubr.bf16.mxu0 0
      %2053 = vmatmul.mubr.bf16.gmra.mxu0 %v1875
      %v2054 = vpop.f32.mrf.mxu0
      %v2055 = vadd.f32 0.0, %v2054
      %v2056 = vpop.f32.mrf.mxu0
      %v2057 = vpop.f32.mrf.mxu0
      %v2058 = vadd.f32 0.0, %v2057
      %v2059 = vpop.f32.mrf.mxu0
      %2060 = vmatprep.mubr.bf16.mxu0 0
      %2061 = vmatmul.mubr.bf16.gmra.mxu0 %v1878
      %v2062 = vpop.f32.mrf.mxu0
      %v2063 = vadd.f32 0.0, %v2062
      %v2064 = vpop.f32.mrf.mxu0
      %v2065 = vpop.f32.mrf.mxu0
      %v2066 = vadd.f32 0.0, %v2065
      %v2067 = vpop.f32.mrf.mxu0
      %2068 = vmatprep.mubr.bf16.mxu0 0
      %2069 = vmatmul.mubr.bf16.gmra.mxu0 %v1881
      %v2070 = vpop.f32.mrf.mxu0
      %v2071 = vadd.f32 0.0, %v2070
      %v2072 = vpop.f32.mrf.mxu0
      %v2073 = vpop.f32.mrf.mxu0
      %v2074 = vpop.f32.mrf.mxu0
      %2075 = vdwg.mxu0
      %v2076 = vadd.f32 %v1600, %v1933
      %v2077 = vadd.f32 %v1602, %v1935
      %v2078 = vadd.f32 %v1661, %v1994
      %v2079 = vadd.f32 %v1663, %v1996
      %v2080 = vadd.f32 %v1722, %v2055
      %v2081 = vadd.f32 %v1604, %v1937
      %v2082 = vadd.f32 %v1606, %v1939
      %v2083 = vadd.f32 %v1665, %v1998
      %v2084 = vadd.f32 %v1667, %v2000
      %v2085 = vadd.f32 %v1725, %v2058
      %v2086 = vadd.f32 %v1610, %v1943
      %v2087 = vadd.f32 %v1612, %v1945
      %v2088 = vadd.f32 %v1671, %v2004
      %v2089 = vadd.f32 %v1673, %v2006
      %v2090 = vadd.f32 %v1730, %v2063
      %v2091 = vadd.f32 %v1614, %v1947
      %v2092 = vadd.f32 %v1616, %v1949
      %v2093 = vadd.f32 %v1675, %v2008
      %v2094 = vadd.f32 %v1677, %v2010
      %v2095 = vadd.f32 %v1733, %v2066
      %v2096 = vadd.f32 %v1620, %v1953
      %v2097 = vadd.f32 %v1622, %v1955
      %v2098 = vadd.f32 %v1681, %v2014
      %v2099 = vadd.f32 %v1683, %v2016
      %v2100 = vadd.f32 %v1738, %v2071
      %s2101 = sadd.s32 15, %s1009
      %s2102 = smul.addr %s2101, 4
      %s2103 = scalar_lea.vmem %s2, %s2102
      %v2104 = vld [vmem:[%s2103] sm:$0xf]
      %v2105 = vld [vmem:[%s2103 + $0x4] sm:$0xf]
      %v2106 = vld [vmem:[%s2103 + $0x8] sm:$0xf]
      %v2107 = vld [vmem:[%s2103 + $0xc] sm:$0xf]
      %v2108 = vld [vmem:[%s2103 + $0x10] sm:$0xf]
      %v2114 = vunpack.c.l.b16 %v2104
      %v2115 = vunpack.c.l.b16 %v2105
      %v2116 = vunpack.c.l.b16 %v2106
      %v2117 = vunpack.c.l.b16 %v2107
      %v2118 = vunpack.c.l.b16 %v2108
      %v2119 = vpack.c.b16 %v2115, %v2114
      %v2120 = vpack.c.b16 %v2117, %v2116
      %v2121 = vpack.c.b16 %v2118, %v2118
      %2122 = vrot.lane.b32.xlu0 %v1159, 125
      %v2123 = vpop.permute.xlu0 %2122
      %2124 = vrot.lane.b32.xlu0 %v1160, 125
      %v2125 = vpop.permute.xlu0 %2124
      %2126 = vrot.lane.b32.xlu0 %v1161, 125
      %v2127 = vpop.permute.xlu0 %2126
      %2128 = vrot.lane.b32.xlu0 %v1162, 125
      %v2129 = vpop.permute.xlu0 %2128
      %2130 = vrot.lane.b32.xlu0 %v1163, 125
      %v2131 = vpop.permute.xlu0 %2130
      %2132 = vrot.lane.b32.xlu0 %v1164, 125
      %v2133 = vpop.permute.xlu0 %2132
      %2134 = vrot.lane.b32.xlu0 %v1165, 125
      %v2135 = vpop.permute.xlu0 %2134
      %2136 = vrot.lane.b32.xlu0 %v1166, 125
      %v2137 = vpop.permute.xlu0 %2136
      %2138 = vrot.lane.b32.xlu0 %v1167, 125
      %v2139 = vpop.permute.xlu0 %2138
      %2140 = vrot.lane.b32.xlu0 %v1168, 125
      %v2141 = vpop.permute.xlu0 %2140
      %2142 = vrot.lane.b32.xlu0 %v1169, 125
      %v2143 = vpop.permute.xlu0 %2142
      %2144 = vrot.lane.b32.xlu0 %v1170, 125
      %v2145 = vpop.permute.xlu0 %2144
      %2146 = vrot.lane.b32.xlu0 %v1171, 125
      %v2147 = vpop.permute.xlu0 %2146
      %2148 = vrot.lane.b32.xlu0 %v1172, 125
      %v2149 = vpop.permute.xlu0 %2148
      %2150 = vrot.lane.b32.xlu0 %v1173, 125
      %v2151 = vpop.permute.xlu0 %2150
      %2152 = vrot.lane.b32.xlu0 %v1174, 125
      %v2153 = vpop.permute.xlu0 %2152
      %2154 = vrot.lane.b32.xlu0 %v1175, 125
      %v2155 = vpop.permute.xlu0 %2154
      %2156 = vrot.lane.b32.xlu0 %v1176, 125
      %v2157 = vpop.permute.xlu0 %2156
      %2158 = vrot.lane.b32.xlu0 %v1177, 125
      %v2159 = vpop.permute.xlu0 %2158
      %2160 = vrot.lane.b32.xlu0 %v1178, 125
      %v2161 = vpop.permute.xlu0 %2160
      %2162 = vrot.lane.b32.xlu0 %v1179, 125
      %v2163 = vpop.permute.xlu0 %2162
      %2164 = vrot.lane.b32.xlu0 %v1180, 125
      %v2165 = vpop.permute.xlu0 %2164
      %2166 = vrot.lane.b32.xlu0 %v1181, 125
      %v2167 = vpop.permute.xlu0 %2166
      %2168 = vrot.lane.b32.xlu0 %v1182, 125
      %v2169 = vpop.permute.xlu0 %2168
      %2170 = vrot.lane.b32.xlu0 %v1183, 125
      %v2171 = vpop.permute.xlu0 %2170
      %2172 = vrot.lane.b32.xlu0 %v1184, 125
      %v2173 = vpop.permute.xlu0 %2172
      %2174 = vrot.lane.b32.xlu0 %v1185, 125
      %v2175 = vpop.permute.xlu0 %2174
      %2176 = vrot.lane.b32.xlu0 %v1186, 125
      %v2177 = vpop.permute.xlu0 %2176
      %2178 = vrot.lane.b32.xlu0 %v1187, 125
      %v2179 = vpop.permute.xlu0 %2178
      %2180 = vrot.lane.b32.xlu0 %v1188, 125
      %v2181 = vpop.permute.xlu0 %2180
      %vm2182 = vcmask 1022976
      %v2183 = vsel %vm2182, %v2123, %v2125
      %v2184 = vsel %vm2182, %v2125, %v2127
      %v2185 = vsel %vm2182, %v2127, %v2129
      %v2186 = vsel %vm2182, %v2129, %v2131
      %v2187 = vsel %vm2182, %v2133, %v2135
      %v2188 = vsel %vm2182, %v2135, %v2137
      %v2189 = vsel %vm2182, %v2137, %v2139
      %v2190 = vsel %vm2182, %v2139, %v2141
      %v2191 = vsel %vm2182, %v2143, %v2145
      %v2192 = vsel %vm2182, %v2145, %v2147
      %v2193 = vsel %vm2182, %v2147, %v2149
      %v2194 = vsel %vm2182, %v2149, %v2151
      %v2195 = vsel %vm2182, %v2153, %v2155
      %v2196 = vsel %vm2182, %v2155, %v2157
      %v2197 = vsel %vm2182, %v2157, %v2159
      %v2198 = vsel %vm2182, %v2159, %v2161
      %v2199 = vsel %vm2182, %v2163, %v2165
      %v2200 = vsel %vm2182, %v2165, %v2167
      %v2201 = vsel %vm2182, %v2167, %v2169
      %v2202 = vsel %vm2182, %v2169, %v2171
      %v2203 = vsel %vm2182, %v2173, %v2175
      %v2204 = vsel %vm2182, %v2175, %v2177
      %v2205 = vsel %vm2182, %v2177, %v2179
      %v2206 = vsel %vm2182, %v2179, %v2181
      %v2233 = vsel %vm1299, %v2119, 0
      %v2236 = vsel %vm1299, %v2120, 0
      %v2239 = vsel %vm1299, %v2121, 0
      %v2242 = vsel %vm1309, %v2203, 0
      %v2245 = vsel %vm1309, %v2204, 0
      %v2248 = vsel %vm1309, %v2205, 0
      %v2251 = vsel %vm1309, %v2206, 0
      %v2254 = vsel %vm1309, %v2181, 0
      %2256 = vmatprep.subr.bf16.mxu0 0
      %2257 = vmatpush1.bf16.msra.mxu0 0
      %2258 = vmatprep.subr.bf16.mxu0 0
      %2259 = vmatpush1.bf16.msra.mxu0 0
      %2260 = vmatprep.subr.bf16.mxu0 %v2245
      %2261 = vmatpush1.bf16.msra.mxu0 %v2242
      %2262 = vmatprep.subr.bf16.mxu0 %v2200
      %2263 = vmatpush1.bf16.msra.mxu0 %v2199
      %2264 = vmatprep.subr.bf16.mxu0 %v2196
      %2265 = vmatpush1.bf16.msra.mxu0 %v2195
      %2266 = vmatprep.subr.bf16.mxu0 %v2192
      %2267 = vmatpush1.bf16.msra.mxu0 %v2191
      %2268 = vmatprep.subr.bf16.mxu0 %v2188
      %2269 = vmatpush1.bf16.msra.mxu0 %v2187
      %2270 = vmatprep.subr.bf16.mxu0 %v2184
      %2271 = vmatpush1.bf16.msra.mxu0 %v2183
      %2272 = vmatprep.subr.bf16.mxu0 0
      %2273 = vmatpush2.bf16.msra.mxu0 0
      %2274 = vmatprep.subr.bf16.mxu0 0
      %2275 = vmatpush2.bf16.msra.mxu0 0
      %2276 = vmatprep.subr.bf16.mxu0 0
      %2277 = vmatpush2.bf16.msra.mxu0 0
      %2278 = vmatprep.subr.bf16.mxu0 0
      %2279 = vmatpush2.bf16.msra.mxu0 0
      %2280 = vmatprep.subr.bf16.mxu0 0
      %2281 = vmatpush2.bf16.msra.mxu0 0
      %2282 = vmatprep.subr.bf16.mxu0 0
      %2283 = vmatpush2.bf16.msra.mxu0 0
      %2284 = vmatprep.subr.bf16.mxu0 0
      %2285 = vmatpush2.bf16.msra.mxu0 0
      %2286 = vmatprep.subr.bf16.mxu0 0
      %2287 = vmatpush2.bf16.msra.mxu0 0
      %2288 = vmatprep.mubr.bf16.mxu0 0
      %2289 = vmatmul.mubr.bf16.gmra.mxu0 %v2233
      %v2290 = vpop.f32.mrf.mxu0
      %v2291 = vadd.f32 0.0, %v2290
      %v2292 = vpop.f32.mrf.mxu0
      %v2293 = vadd.f32 0.0, %v2292
      %v2294 = vpop.f32.mrf.mxu0
      %v2295 = vadd.f32 0.0, %v2294
      %v2296 = vpop.f32.mrf.mxu0
      %v2297 = vadd.f32 0.0, %v2296
      %2298 = vmatprep.mubr.bf16.mxu0 0
      %2299 = vmatmul.mubr.bf16.gmra.mxu0 %v2236
      %v2300 = vpop.f32.mrf.mxu0
      %v2301 = vadd.f32 0.0, %v2300
      %v2302 = vpop.f32.mrf.mxu0
      %v2303 = vadd.f32 0.0, %v2302
      %v2304 = vpop.f32.mrf.mxu0
      %v2305 = vadd.f32 0.0, %v2304
      %v2306 = vpop.f32.mrf.mxu0
      %v2307 = vadd.f32 0.0, %v2306
      %2308 = vmatprep.mubr.bf16.mxu0 0
      %2309 = vmatmul.mubr.bf16.gmra.mxu0 %v2239
      %v2310 = vpop.f32.mrf.mxu0
      %v2311 = vadd.f32 0.0, %v2310
      %v2312 = vpop.f32.mrf.mxu0
      %v2313 = vadd.f32 0.0, %v2312
      %v2314 = vpop.f32.mrf.mxu0
      %v2315 = vpop.f32.mrf.mxu0
      %2316 = vdwg.mxu0
      %2317 = vmatprep.subr.bf16.mxu0 0
      %2318 = vmatpush1.bf16.msra.mxu0 0
      %2319 = vmatprep.subr.bf16.mxu0 0
      %2320 = vmatpush1.bf16.msra.mxu0 0
      %2321 = vmatprep.subr.bf16.mxu0 %v2251
      %2322 = vmatpush1.bf16.msra.mxu0 %v2248
      %2323 = vmatprep.subr.bf16.mxu0 %v2202
      %2324 = vmatpush1.bf16.msra.mxu0 %v2201
      %2325 = vmatprep.subr.bf16.mxu0 %v2198
      %2326 = vmatpush1.bf16.msra.mxu0 %v2197
      %2327 = vmatprep.subr.bf16.mxu0 %v2194
      %2328 = vmatpush1.bf16.msra.mxu0 %v2193
      %2329 = vmatprep.subr.bf16.mxu0 %v2190
      %2330 = vmatpush1.bf16.msra.mxu0 %v2189
      %2331 = vmatprep.subr.bf16.mxu0 %v2186
      %2332 = vmatpush1.bf16.msra.mxu0 %v2185
      %2333 = vmatprep.subr.bf16.mxu0 0
      %2334 = vmatpush2.bf16.msra.mxu0 0
      %2335 = vmatprep.subr.bf16.mxu0 0
      %2336 = vmatpush2.bf16.msra.mxu0 0
      %2337 = vmatprep.subr.bf16.mxu0 0
      %2338 = vmatpush2.bf16.msra.mxu0 0
      %2339 = vmatprep.subr.bf16.mxu0 0
      %2340 = vmatpush2.bf16.msra.mxu0 0
      %2341 = vmatprep.subr.bf16.mxu0 0
      %2342 = vmatpush2.bf16.msra.mxu0 0
      %2343 = vmatprep.subr.bf16.mxu0 0
      %2344 = vmatpush2.bf16.msra.mxu0 0
      %2345 = vmatprep.subr.bf16.mxu0 0
      %2346 = vmatpush2.bf16.msra.mxu0 0
      %2347 = vmatprep.subr.bf16.mxu0 0
      %2348 = vmatpush2.bf16.msra.mxu0 0
      %2349 = vmatprep.mubr.bf16.mxu0 0
      %2350 = vmatmul.mubr.bf16.gmra.mxu0 %v2233
      %v2351 = vpop.f32.mrf.mxu0
      %v2352 = vadd.f32 0.0, %v2351
      %v2353 = vpop.f32.mrf.mxu0
      %v2354 = vadd.f32 0.0, %v2353
      %v2355 = vpop.f32.mrf.mxu0
      %v2356 = vadd.f32 0.0, %v2355
      %v2357 = vpop.f32.mrf.mxu0
      %v2358 = vadd.f32 0.0, %v2357
      %2359 = vmatprep.mubr.bf16.mxu0 0
      %2360 = vmatmul.mubr.bf16.gmra.mxu0 %v2236
      %v2361 = vpop.f32.mrf.mxu0
      %v2362 = vadd.f32 0.0, %v2361
      %v2363 = vpop.f32.mrf.mxu0
      %v2364 = vadd.f32 0.0, %v2363
      %v2365 = vpop.f32.mrf.mxu0
      %v2366 = vadd.f32 0.0, %v2365
      %v2367 = vpop.f32.mrf.mxu0
      %v2368 = vadd.f32 0.0, %v2367
      %2369 = vmatprep.mubr.bf16.mxu0 0
      %2370 = vmatmul.mubr.bf16.gmra.mxu0 %v2239
      %v2371 = vpop.f32.mrf.mxu0
      %v2372 = vadd.f32 0.0, %v2371
      %v2373 = vpop.f32.mrf.mxu0
      %v2374 = vadd.f32 0.0, %v2373
      %v2375 = vpop.f32.mrf.mxu0
      %v2376 = vpop.f32.mrf.mxu0
      %2377 = vdwg.mxu0
      %2378 = vmatprep.subr.bf16.mxu0 0
      %2379 = vmatpush1.bf16.msra.mxu0 0
      %2380 = vmatprep.subr.bf16.mxu0 0
      %2381 = vmatpush1.bf16.msra.mxu0 0
      %2382 = vmatprep.subr.bf16.mxu0 0
      %2383 = vmatpush1.bf16.msra.mxu0 %v2254
      %2384 = vmatprep.subr.bf16.mxu0 0
      %2385 = vmatpush1.bf16.msra.mxu0 %v2171
      %2386 = vmatprep.subr.bf16.mxu0 0
      %2387 = vmatpush1.bf16.msra.mxu0 %v2161
      %2388 = vmatprep.subr.bf16.mxu0 0
      %2389 = vmatpush1.bf16.msra.mxu0 %v2151
      %2390 = vmatprep.subr.bf16.mxu0 0
      %2391 = vmatpush1.bf16.msra.mxu0 %v2141
      %2392 = vmatprep.subr.bf16.mxu0 0
      %2393 = vmatpush1.bf16.msra.mxu0 %v2131
      %2394 = vmatprep.subr.bf16.mxu0 0
      %2395 = vmatpush2.bf16.msra.mxu0 0
      %2396 = vmatprep.subr.bf16.mxu0 0
      %2397 = vmatpush2.bf16.msra.mxu0 0
      %2398 = vmatprep.subr.bf16.mxu0 0
      %2399 = vmatpush2.bf16.msra.mxu0 0
      %2400 = vmatprep.subr.bf16.mxu0 0
      %2401 = vmatpush2.bf16.msra.mxu0 0
      %2402 = vmatprep.subr.bf16.mxu0 0
      %2403 = vmatpush2.bf16.msra.mxu0 0
      %2404 = vmatprep.subr.bf16.mxu0 0
      %2405 = vmatpush2.bf16.msra.mxu0 0
      %2406 = vmatprep.subr.bf16.mxu0 0
      %2407 = vmatpush2.bf16.msra.mxu0 0
      %2408 = vmatprep.subr.bf16.mxu0 0
      %2409 = vmatpush2.bf16.msra.mxu0 0
      %2410 = vmatprep.mubr.bf16.mxu0 0
      %2411 = vmatmul.mubr.bf16.gmra.mxu0 %v2233
      %v2412 = vpop.f32.mrf.mxu0
      %v2413 = vadd.f32 0.0, %v2412
      %v2414 = vpop.f32.mrf.mxu0
      %v2415 = vpop.f32.mrf.mxu0
      %v2416 = vadd.f32 0.0, %v2415
      %v2417 = vpop.f32.mrf.mxu0
      %2418 = vmatprep.mubr.bf16.mxu0 0
      %2419 = vmatmul.mubr.bf16.gmra.mxu0 %v2236
      %v2420 = vpop.f32.mrf.mxu0
      %v2421 = vadd.f32 0.0, %v2420
      %v2422 = vpop.f32.mrf.mxu0
      %v2423 = vpop.f32.mrf.mxu0
      %v2424 = vadd.f32 0.0, %v2423
      %v2425 = vpop.f32.mrf.mxu0
      %2426 = vmatprep.mubr.bf16.mxu0 0
      %2427 = vmatmul.mubr.bf16.gmra.mxu0 %v2239
      %v2428 = vpop.f32.mrf.mxu0
      %v2429 = vadd.f32 0.0, %v2428
      %v2430 = vpop.f32.mrf.mxu0
      %v2431 = vpop.f32.mrf.mxu0
      %v2432 = vpop.f32.mrf.mxu0
      %2433 = vdwg.mxu0
      %v2434 = vadd.f32 %v2076, %v2291
      %v2435 = vadd.f32 %v2077, %v2293
      %v2436 = vadd.f32 %v2078, %v2352
      %v2437 = vadd.f32 %v2079, %v2354
      %v2438 = vadd.f32 %v2080, %v2413
      %v2439 = vadd.f32 %v2081, %v2295
      %v2440 = vadd.f32 %v2082, %v2297
      %v2441 = vadd.f32 %v2083, %v2356
      %v2442 = vadd.f32 %v2084, %v2358
      %v2443 = vadd.f32 %v2085, %v2416
      %v2444 = vadd.f32 %v2086, %v2301
      %v2445 = vadd.f32 %v2087, %v2303
      %v2446 = vadd.f32 %v2088, %v2362
      %v2447 = vadd.f32 %v2089, %v2364
      %v2448 = vadd.f32 %v2090, %v2421
      %v2449 = vadd.f32 %v2091, %v2305
      %v2450 = vadd.f32 %v2092, %v2307
      %v2451 = vadd.f32 %v2093, %v2366
      %v2452 = vadd.f32 %v2094, %v2368
      %v2453 = vadd.f32 %v2095, %v2424
      %v2454 = vadd.f32 %v2096, %v2311
      %v2455 = vadd.f32 %v2097, %v2313
      %v2456 = vadd.f32 %v2098, %v2372
      %v2457 = vadd.f32 %v2099, %v2374
      %v2458 = vadd.f32 %v2100, %v2429
      %s2459 = sadd.s32 20, %s1009
      %s2460 = smul.addr %s2459, 4
      %s2461 = scalar_lea.vmem %s2, %s2460
      %v2462 = vld [vmem:[%s2461] sm:$0xf]
      %v2463 = vld [vmem:[%s2461 + $0x4] sm:$0xf]
      %v2464 = vld [vmem:[%s2461 + $0x8] sm:$0xf]
      %v2465 = vld [vmem:[%s2461 + $0xc] sm:$0xf]
      %v2466 = vld [vmem:[%s2461 + $0x10] sm:$0xf]
      %v2472 = vunpack.c.l.b16 %v2462
      %v2473 = vunpack.c.l.b16 %v2463
      %v2474 = vunpack.c.l.b16 %v2464
      %v2475 = vunpack.c.l.b16 %v2465
      %v2476 = vunpack.c.l.b16 %v2466
      %v2477 = vpack.c.b16 %v2473, %v2472
      %v2478 = vpack.c.b16 %v2475, %v2474
      %v2479 = vpack.c.b16 %v2476, %v2476
      %2480 = vrot.lane.b32.xlu0 %v1159, 124
      %v2481 = vpop.permute.xlu0 %2480
      %2482 = vrot.lane.b32.xlu0 %v1160, 124
      %v2483 = vpop.permute.xlu0 %2482
      %2484 = vrot.lane.b32.xlu0 %v1161, 124
      %v2485 = vpop.permute.xlu0 %2484
      %2486 = vrot.lane.b32.xlu0 %v1162, 124
      %v2487 = vpop.permute.xlu0 %2486
      %2488 = vrot.lane.b32.xlu0 %v1163, 124
      %v2489 = vpop.permute.xlu0 %2488
      %2490 = vrot.lane.b32.xlu0 %v1164, 124
      %v2491 = vpop.permute.xlu0 %2490
      %2492 = vrot.lane.b32.xlu0 %v1165, 124
      %v2493 = vpop.permute.xlu0 %2492
      %2494 = vrot.lane.b32.xlu0 %v1166, 124
      %v2495 = vpop.permute.xlu0 %2494
      %2496 = vrot.lane.b32.xlu0 %v1167, 124
      %v2497 = vpop.permute.xlu0 %2496
      %2498 = vrot.lane.b32.xlu0 %v1168, 124
      %v2499 = vpop.permute.xlu0 %2498
      %2500 = vrot.lane.b32.xlu0 %v1169, 124
      %v2501 = vpop.permute.xlu0 %2500
      %2502 = vrot.lane.b32.xlu0 %v1170, 124
      %v2503 = vpop.permute.xlu0 %2502
      %2504 = vrot.lane.b32.xlu0 %v1171, 124
      %v2505 = vpop.permute.xlu0 %2504
      %2506 = vrot.lane.b32.xlu0 %v1172, 124
      %v2507 = vpop.permute.xlu0 %2506
      %2508 = vrot.lane.b32.xlu0 %v1173, 124
      %v2509 = vpop.permute.xlu0 %2508
      %2510 = vrot.lane.b32.xlu0 %v1174, 124
      %v2511 = vpop.permute.xlu0 %2510
      %2512 = vrot.lane.b32.xlu0 %v1175, 124
      %v2513 = vpop.permute.xlu0 %2512
      %2514 = vrot.lane.b32.xlu0 %v1176, 124
      %v2515 = vpop.permute.xlu0 %2514
      %2516 = vrot.lane.b32.xlu0 %v1177, 124
      %v2517 = vpop.permute.xlu0 %2516
      %2518 = vrot.lane.b32.xlu0 %v1178, 124
      %v2519 = vpop.permute.xlu0 %2518
      %2520 = vrot.lane.b32.xlu0 %v1179, 124
      %v2521 = vpop.permute.xlu0 %2520
      %2522 = vrot.lane.b32.xlu0 %v1180, 124
      %v2523 = vpop.permute.xlu0 %2522
      %2524 = vrot.lane.b32.xlu0 %v1181, 124
      %v2525 = vpop.permute.xlu0 %2524
      %2526 = vrot.lane.b32.xlu0 %v1182, 124
      %v2527 = vpop.permute.xlu0 %2526
      %2528 = vrot.lane.b32.xlu0 %v1183, 124
      %v2529 = vpop.permute.xlu0 %2528
      %2530 = vrot.lane.b32.xlu0 %v1184, 124
      %v2531 = vpop.permute.xlu0 %2530
      %2532 = vrot.lane.b32.xlu0 %v1185, 124
      %v2533 = vpop.permute.xlu0 %2532
      %2534 = vrot.lane.b32.xlu0 %v1186, 124
      %v2535 = vpop.permute.xlu0 %2534
      %2536 = vrot.lane.b32.xlu0 %v1187, 124
      %v2537 = vpop.permute.xlu0 %2536
      %2538 = vrot.lane.b32.xlu0 %v1188, 124
      %v2539 = vpop.permute.xlu0 %2538
      %vm2540 = vcmask 1014784
      %v2541 = vsel %vm2540, %v2481, %v2483
      %v2542 = vsel %vm2540, %v2483, %v2485
      %v2543 = vsel %vm2540, %v2485, %v2487
      %v2544 = vsel %vm2540, %v2487, %v2489
      %v2545 = vsel %vm2540, %v2491, %v2493
      %v2546 = vsel %vm2540, %v2493, %v2495
      %v2547 = vsel %vm2540, %v2495, %v2497
      %v2548 = vsel %vm2540, %v2497, %v2499
      %v2549 = vsel %vm2540, %v2501, %v2503
      %v2550 = vsel %vm2540, %v2503, %v2505
      %v2551 = vsel %vm2540, %v2505, %v2507
      %v2552 = vsel %vm2540, %v2507, %v2509
      %v2553 = vsel %vm2540, %v2511, %v2513
      %v2554 = vsel %vm2540, %v2513, %v2515
      %v2555 = vsel %vm2540, %v2515, %v2517
      %v2556 = vsel %vm2540, %v2517, %v2519
      %v2557 = vsel %vm2540, %v2521, %v2523
      %v2558 = vsel %vm2540, %v2523, %v2525
      %v2559 = vsel %vm2540, %v2525, %v2527
      %v2560 = vsel %vm2540, %v2527, %v2529
      %v2561 = vsel %vm2540, %v2531, %v2533
      %v2562 = vsel %vm2540, %v2533, %v2535
      %v2563 = vsel %vm2540, %v2535, %v2537
      %v2564 = vsel %vm2540, %v2537, %v2539
      %v2591 = vsel %vm1299, %v2477, 0
      %v2594 = vsel %vm1299, %v2478, 0
      %v2597 = vsel %vm1299, %v2479, 0
      %v2600 = vsel %vm1309, %v2561, 0
      %v2603 = vsel %vm1309, %v2562, 0
      %v2606 = vsel %vm1309, %v2563, 0
      %v2609 = vsel %vm1309, %v2564, 0
      %v2612 = vsel %vm1309, %v2539, 0
      %2614 = vmatprep.subr.bf16.mxu0 0
      %2615 = vmatpush1.bf16.msra.mxu0 0
      %2616 = vmatprep.subr.bf16.mxu0 0
      %2617 = vmatpush1.bf16.msra.mxu0 0
      %2618 = vmatprep.subr.bf16.mxu0 %v2603
      %2619 = vmatpush1.bf16.msra.mxu0 %v2600
      %2620 = vmatprep.subr.bf16.mxu0 %v2558
      %2621 = vmatpush1.bf16.msra.mxu0 %v2557
      %2622 = vmatprep.subr.bf16.mxu0 %v2554
      %2623 = vmatpush1.bf16.msra.mxu0 %v2553
      %2624 = vmatprep.subr.bf16.mxu0 %v2550
      %2625 = vmatpush1.bf16.msra.mxu0 %v2549
      %2626 = vmatprep.subr.bf16.mxu0 %v2546
      %2627 = vmatpush1.bf16.msra.mxu0 %v2545
      %2628 = vmatprep.subr.bf16.mxu0 %v2542
      %2629 = vmatpush1.bf16.msra.mxu0 %v2541
      %2630 = vmatprep.subr.bf16.mxu0 0
      %2631 = vmatpush2.bf16.msra.mxu0 0
      %2632 = vmatprep.subr.bf16.mxu0 0
      %2633 = vmatpush2.bf16.msra.mxu0 0
      %2634 = vmatprep.subr.bf16.mxu0 0
      %2635 = vmatpush2.bf16.msra.mxu0 0
      %2636 = vmatprep.subr.bf16.mxu0 0
      %2637 = vmatpush2.bf16.msra.mxu0 0
      %2638 = vmatprep.subr.bf16.mxu0 0
      %2639 = vmatpush2.bf16.msra.mxu0 0
      %2640 = vmatprep.subr.bf16.mxu0 0
      %2641 = vmatpush2.bf16.msra.mxu0 0
      %2642 = vmatprep.subr.bf16.mxu0 0
      %2643 = vmatpush2.bf16.msra.mxu0 0
      %2644 = vmatprep.subr.bf16.mxu0 0
      %2645 = vmatpush2.bf16.msra.mxu0 0
      %2646 = vmatprep.mubr.bf16.mxu0 0
      %2647 = vmatmul.mubr.bf16.gmra.mxu0 %v2591
      %v2648 = vpop.f32.mrf.mxu0
      %v2649 = vadd.f32 0.0, %v2648
      %v2650 = vpop.f32.mrf.mxu0
      %v2651 = vadd.f32 0.0, %v2650
      %v2652 = vpop.f32.mrf.mxu0
      %v2653 = vadd.f32 0.0, %v2652
      %v2654 = vpop.f32.mrf.mxu0
      %v2655 = vadd.f32 0.0, %v2654
      %2656 = vmatprep.mubr.bf16.mxu0 0
      %2657 = vmatmul.mubr.bf16.gmra.mxu0 %v2594
      %v2658 = vpop.f32.mrf.mxu0
      %v2659 = vadd.f32 0.0, %v2658
      %v2660 = vpop.f32.mrf.mxu0
      %v2661 = vadd.f32 0.0, %v2660
      %v2662 = vpop.f32.mrf.mxu0
      %v2663 = vadd.f32 0.0, %v2662
      %v2664 = vpop.f32.mrf.mxu0
      %v2665 = vadd.f32 0.0, %v2664
      %2666 = vmatprep.mubr.bf16.mxu0 0
      %2667 = vmatmul.mubr.bf16.gmra.mxu0 %v2597
      %v2668 = vpop.f32.mrf.mxu0
      %v2669 = vadd.f32 0.0, %v2668
      %v2670 = vpop.f32.mrf.mxu0
      %v2671 = vadd.f32 0.0, %v2670
      %v2672 = vpop.f32.mrf.mxu0
      %v2673 = vpop.f32.mrf.mxu0
      %2674 = vdwg.mxu0
      %2675 = vmatprep.subr.bf16.mxu0 0
      %2676 = vmatpush1.bf16.msra.mxu0 0
      %2677 = vmatprep.subr.bf16.mxu0 0
      %2678 = vmatpush1.bf16.msra.mxu0 0
      %2679 = vmatprep.subr.bf16.mxu0 %v2609
      %2680 = vmatpush1.bf16.msra.mxu0 %v2606
      %2681 = vmatprep.subr.bf16.mxu0 %v2560
      %2682 = vmatpush1.bf16.msra.mxu0 %v2559
      %2683 = vmatprep.subr.bf16.mxu0 %v2556
      %2684 = vmatpush1.bf16.msra.mxu0 %v2555
      %2685 = vmatprep.subr.bf16.mxu0 %v2552
      %2686 = vmatpush1.bf16.msra.mxu0 %v2551
      %2687 = vmatprep.subr.bf16.mxu0 %v2548
      %2688 = vmatpush1.bf16.msra.mxu0 %v2547
      %2689 = vmatprep.subr.bf16.mxu0 %v2544
      %2690 = vmatpush1.bf16.msra.mxu0 %v2543
      %2691 = vmatprep.subr.bf16.mxu0 0
      %2692 = vmatpush2.bf16.msra.mxu0 0
      %2693 = vmatprep.subr.bf16.mxu0 0
      %2694 = vmatpush2.bf16.msra.mxu0 0
      %2695 = vmatprep.subr.bf16.mxu0 0
      %2696 = vmatpush2.bf16.msra.mxu0 0
      %2697 = vmatprep.subr.bf16.mxu0 0
      %2698 = vmatpush2.bf16.msra.mxu0 0
      %2699 = vmatprep.subr.bf16.mxu0 0
      %2700 = vmatpush2.bf16.msra.mxu0 0
      %2701 = vmatprep.subr.bf16.mxu0 0
      %2702 = vmatpush2.bf16.msra.mxu0 0
      %2703 = vmatprep.subr.bf16.mxu0 0
      %2704 = vmatpush2.bf16.msra.mxu0 0
      %2705 = vmatprep.subr.bf16.mxu0 0
      %2706 = vmatpush2.bf16.msra.mxu0 0
      %2707 = vmatprep.mubr.bf16.mxu0 0
      %2708 = vmatmul.mubr.bf16.gmra.mxu0 %v2591
      %v2709 = vpop.f32.mrf.mxu0
      %v2710 = vadd.f32 0.0, %v2709
      %v2711 = vpop.f32.mrf.mxu0
      %v2712 = vadd.f32 0.0, %v2711
      %v2713 = vpop.f32.mrf.mxu0
      %v2714 = vadd.f32 0.0, %v2713
      %v2715 = vpop.f32.mrf.mxu0
      %v2716 = vadd.f32 0.0, %v2715
      %2717 = vmatprep.mubr.bf16.mxu0 0
      %2718 = vmatmul.mubr.bf16.gmra.mxu0 %v2594
      %v2719 = vpop.f32.mrf.mxu0
      %v2720 = vadd.f32 0.0, %v2719
      %v2721 = vpop.f32.mrf.mxu0
      %v2722 = vadd.f32 0.0, %v2721
      %v2723 = vpop.f32.mrf.mxu0
      %v2724 = vadd.f32 0.0, %v2723
      %v2725 = vpop.f32.mrf.mxu0
      %v2726 = vadd.f32 0.0, %v2725
      %2727 = vmatprep.mubr.bf16.mxu0 0
      %2728 = vmatmul.mubr.bf16.gmra.mxu0 %v2597
      %v2729 = vpop.f32.mrf.mxu0
      %v2730 = vadd.f32 0.0, %v2729
      %v2731 = vpop.f32.mrf.mxu0
      %v2732 = vadd.f32 0.0, %v2731
      %v2733 = vpop.f32.mrf.mxu0
      %v2734 = vpop.f32.mrf.mxu0
      %2735 = vdwg.mxu0
      %2736 = vmatprep.subr.bf16.mxu0 0
      %2737 = vmatpush1.bf16.msra.mxu0 0
      %2738 = vmatprep.subr.bf16.mxu0 0
      %2739 = vmatpush1.bf16.msra.mxu0 0
      %2740 = vmatprep.subr.bf16.mxu0 0
      %2741 = vmatpush1.bf16.msra.mxu0 %v2612
      %2742 = vmatprep.subr.bf16.mxu0 0
      %2743 = vmatpush1.bf16.msra.mxu0 %v2529
      %2744 = vmatprep.subr.bf16.mxu0 0
      %2745 = vmatpush1.bf16.msra.mxu0 %v2519
      %2746 = vmatprep.subr.bf16.mxu0 0
      %2747 = vmatpush1.bf16.msra.mxu0 %v2509
      %2748 = vmatprep.subr.bf16.mxu0 0
      %2749 = vmatpush1.bf16.msra.mxu0 %v2499
      %2750 = vmatprep.subr.bf16.mxu0 0
      %2751 = vmatpush1.bf16.msra.mxu0 %v2489
      %2752 = vmatprep.subr.bf16.mxu0 0
      %2753 = vmatpush2.bf16.msra.mxu0 0
      %2754 = vmatprep.subr.bf16.mxu0 0
      %2755 = vmatpush2.bf16.msra.mxu0 0
      %2756 = vmatprep.subr.bf16.mxu0 0
      %2757 = vmatpush2.bf16.msra.mxu0 0
      %2758 = vmatprep.subr.bf16.mxu0 0
      %2759 = vmatpush2.bf16.msra.mxu0 0
      %2760 = vmatprep.subr.bf16.mxu0 0
      %2761 = vmatpush2.bf16.msra.mxu0 0
      %2762 = vmatprep.subr.bf16.mxu0 0
      %2763 = vmatpush2.bf16.msra.mxu0 0
      %2764 = vmatprep.subr.bf16.mxu0 0
      %2765 = vmatpush2.bf16.msra.mxu0 0
      %2766 = vmatprep.subr.bf16.mxu0 0
      %2767 = vmatpush2.bf16.msra.mxu0 0
      %2768 = vmatprep.mubr.bf16.mxu0 0
      %2769 = vmatmul.mubr.bf16.gmra.mxu0 %v2591
      %v2770 = vpop.f32.mrf.mxu0
      %v2771 = vadd.f32 0.0, %v2770
      %v2772 = vpop.f32.mrf.mxu0
      %v2773 = vpop.f32.mrf.mxu0
      %v2774 = vadd.f32 0.0, %v2773
      %v2775 = vpop.f32.mrf.mxu0
      %2776 = vmatprep.mubr.bf16.mxu0 0
      %2777 = vmatmul.mubr.bf16.gmra.mxu0 %v2594
      %v2778 = vpop.f32.mrf.mxu0
      %v2779 = vadd.f32 0.0, %v2778
      %v2780 = vpop.f32.mrf.mxu0
      %v2781 = vpop.f32.mrf.mxu0
      %v2782 = vadd.f32 0.0, %v2781
      %v2783 = vpop.f32.mrf.mxu0
      %2784 = vmatprep.mubr.bf16.mxu0 0
      %2785 = vmatmul.mubr.bf16.gmra.mxu0 %v2597
      %v2786 = vpop.f32.mrf.mxu0
      %v2787 = vadd.f32 0.0, %v2786
      %v2788 = vpop.f32.mrf.mxu0
      %v2789 = vpop.f32.mrf.mxu0
      %v2790 = vpop.f32.mrf.mxu0
      %2791 = vdwg.mxu0
      %v2792 = vadd.f32 %v2434, %v2649
      %v2793 = vadd.f32 %v2435, %v2651
      %v2794 = vadd.f32 %v2436, %v2710
      %v2795 = vadd.f32 %v2437, %v2712
      %v2796 = vadd.f32 %v2438, %v2771
      %v2797 = vadd.f32 %v2439, %v2653
      %v2798 = vadd.f32 %v2440, %v2655
      %v2799 = vadd.f32 %v2441, %v2714
      %v2800 = vadd.f32 %v2442, %v2716
      %v2801 = vadd.f32 %v2443, %v2774
      %v2802 = vadd.f32 %v2444, %v2659
      %v2803 = vadd.f32 %v2445, %v2661
      %v2804 = vadd.f32 %v2446, %v2720
      %v2805 = vadd.f32 %v2447, %v2722
      %v2806 = vadd.f32 %v2448, %v2779
      %v2807 = vadd.f32 %v2449, %v2663
      %v2808 = vadd.f32 %v2450, %v2665
      %v2809 = vadd.f32 %v2451, %v2724
      %v2810 = vadd.f32 %v2452, %v2726
      %v2811 = vadd.f32 %v2453, %v2782
      %v2812 = vadd.f32 %v2454, %v2669
      %v2813 = vadd.f32 %v2455, %v2671
      %v2814 = vadd.f32 %v2456, %v2730
      %v2815 = vadd.f32 %v2457, %v2732
      %v2816 = vadd.f32 %v2458, %v2787
      %s2817 = sadd.s32 25, %s1009
      %s2818 = smul.addr %s2817, 4
      %s2819 = scalar_lea.vmem %s2, %s2818
      %v2820 = vld [vmem:[%s2819] sm:$0xf]
      %v2821 = vld [vmem:[%s2819 + $0x4] sm:$0xf]
      %v2822 = vld [vmem:[%s2819 + $0x8] sm:$0xf]
      %v2823 = vld [vmem:[%s2819 + $0xc] sm:$0xf]
      %v2824 = vld [vmem:[%s2819 + $0x10] sm:$0xf]
      %v2830 = vunpack.c.l.b16 %v2820
      %v2831 = vunpack.c.l.b16 %v2821
      %v2832 = vunpack.c.l.b16 %v2822
      %v2833 = vunpack.c.l.b16 %v2823
      %v2834 = vunpack.c.l.b16 %v2824
      %v2835 = vpack.c.b16 %v2831, %v2830
      %v2836 = vpack.c.b16 %v2833, %v2832
      %v2837 = vpack.c.b16 %v2834, %v2834
      %2838 = vrot.lane.b32.xlu0 %v1159, 123
      %v2839 = vpop.permute.xlu0 %2838
      %2840 = vrot.lane.b32.xlu0 %v1160, 123
      %v2841 = vpop.permute.xlu0 %2840
      %2842 = vrot.lane.b32.xlu0 %v1161, 123
      %v2843 = vpop.permute.xlu0 %2842
      %2844 = vrot.lane.b32.xlu0 %v1162, 123
      %v2845 = vpop.permute.xlu0 %2844
      %2846 = vrot.lane.b32.xlu0 %v1163, 123
      %v2847 = vpop.permute.xlu0 %2846
      %2848 = vrot.lane.b32.xlu0 %v1164, 123
      %v2849 = vpop.permute.xlu0 %2848
      %2850 = vrot.lane.b32.xlu0 %v1165, 123
      %v2851 = vpop.permute.xlu0 %2850
      %2852 = vrot.lane.b32.xlu0 %v1166, 123
      %v2853 = vpop.permute.xlu0 %2852
      %2854 = vrot.lane.b32.xlu0 %v1167, 123
      %v2855 = vpop.permute.xlu0 %2854
      %2856 = vrot.lane.b32.xlu0 %v1168, 123
      %v2857 = vpop.permute.xlu0 %2856
      %2858 = vrot.lane.b32.xlu0 %v1169, 123
      %v2859 = vpop.permute.xlu0 %2858
      %2860 = vrot.lane.b32.xlu0 %v1170, 123
      %v2861 = vpop.permute.xlu0 %2860
      %2862 = vrot.lane.b32.xlu0 %v1171, 123
      %v2863 = vpop.permute.xlu0 %2862
      %2864 = vrot.lane.b32.xlu0 %v1172, 123
      %v2865 = vpop.permute.xlu0 %2864
      %2866 = vrot.lane.b32.xlu0 %v1173, 123
      %v2867 = vpop.permute.xlu0 %2866
      %2868 = vrot.lane.b32.xlu0 %v1174, 123
      %v2869 = vpop.permute.xlu0 %2868
      %2870 = vrot.lane.b32.xlu0 %v1175, 123
      %v2871 = vpop.permute.xlu0 %2870
      %2872 = vrot.lane.b32.xlu0 %v1176, 123
      %v2873 = vpop.permute.xlu0 %2872
      %2874 = vrot.lane.b32.xlu0 %v1177, 123
      %v2875 = vpop.permute.xlu0 %2874
      %2876 = vrot.lane.b32.xlu0 %v1178, 123
      %v2877 = vpop.permute.xlu0 %2876
      %2878 = vrot.lane.b32.xlu0 %v1179, 123
      %v2879 = vpop.permute.xlu0 %2878
      %2880 = vrot.lane.b32.xlu0 %v1180, 123
      %v2881 = vpop.permute.xlu0 %2880
      %2882 = vrot.lane.b32.xlu0 %v1181, 123
      %v2883 = vpop.permute.xlu0 %2882
      %2884 = vrot.lane.b32.xlu0 %v1182, 123
      %v2885 = vpop.permute.xlu0 %2884
      %2886 = vrot.lane.b32.xlu0 %v1183, 123
      %v2887 = vpop.permute.xlu0 %2886
      %2888 = vrot.lane.b32.xlu0 %v1184, 123
      %v2889 = vpop.permute.xlu0 %2888
      %2890 = vrot.lane.b32.xlu0 %v1185, 123
      %v2891 = vpop.permute.xlu0 %2890
      %2892 = vrot.lane.b32.xlu0 %v1186, 123
      %v2893 = vpop.permute.xlu0 %2892
      %2894 = vrot.lane.b32.xlu0 %v1187, 123
      %v2895 = vpop.permute.xlu0 %2894
      %2896 = vrot.lane.b32.xlu0 %v1188, 123
      %v2897 = vpop.permute.xlu0 %2896
      %vm2898 = vcmask 1006592
      %v2899 = vsel %vm2898, %v2839, %v2841
      %v2900 = vsel %vm2898, %v2841, %v2843
      %v2901 = vsel %vm2898, %v2843, %v2845
      %v2902 = vsel %vm2898, %v2845, %v2847
      %v2903 = vsel %vm2898, %v2849, %v2851
      %v2904 = vsel %vm2898, %v2851, %v2853
      %v2905 = vsel %vm2898, %v2853, %v2855
      %v2906 = vsel %vm2898, %v2855, %v2857
      %v2907 = vsel %vm2898, %v2859, %v2861
      %v2908 = vsel %vm2898, %v2861, %v2863
      %v2909 = vsel %vm2898, %v2863, %v2865
      %v2910 = vsel %vm2898, %v2865, %v2867
      %v2911 = vsel %vm2898, %v2869, %v2871
      %v2912 = vsel %vm2898, %v2871, %v2873
      %v2913 = vsel %vm2898, %v2873, %v2875
      %v2914 = vsel %vm2898, %v2875, %v2877
      %v2915 = vsel %vm2898, %v2879, %v2881
      %v2916 = vsel %vm2898, %v2881, %v2883
      %v2917 = vsel %vm2898, %v2883, %v2885
      %v2918 = vsel %vm2898, %v2885, %v2887
      %v2919 = vsel %vm2898, %v2889, %v2891
      %v2920 = vsel %vm2898, %v2891, %v2893
      %v2921 = vsel %vm2898, %v2893, %v2895
      %v2922 = vsel %vm2898, %v2895, %v2897
      %v2949 = vsel %vm1299, %v2835, 0
      %v2952 = vsel %vm1299, %v2836, 0
      %v2955 = vsel %vm1299, %v2837, 0
      %v2958 = vsel %vm1309, %v2919, 0
      %v2961 = vsel %vm1309, %v2920, 0
      %v2964 = vsel %vm1309, %v2921, 0
      %v2967 = vsel %vm1309, %v2922, 0
      %v2970 = vsel %vm1309, %v2897, 0
      %2972 = vmatprep.subr.bf16.mxu0 0
      %2973 = vmatpush1.bf16.msra.mxu0 0
      %2974 = vmatprep.subr.bf16.mxu0 0
      %2975 = vmatpush1.bf16.msra.mxu0 0
      %2976 = vmatprep.subr.bf16.mxu0 %v2961
      %2977 = vmatpush1.bf16.msra.mxu0 %v2958
      %2978 = vmatprep.subr.bf16.mxu0 %v2916
      %2979 = vmatpush1.bf16.msra.mxu0 %v2915
      %2980 = vmatprep.subr.bf16.mxu0 %v2912
      %2981 = vmatpush1.bf16.msra.mxu0 %v2911
      %2982 = vmatprep.subr.bf16.mxu0 %v2908
      %2983 = vmatpush1.bf16.msra.mxu0 %v2907
      %2984 = vmatprep.subr.bf16.mxu0 %v2904
      %2985 = vmatpush1.bf16.msra.mxu0 %v2903
      %2986 = vmatprep.subr.bf16.mxu0 %v2900
      %2987 = vmatpush1.bf16.msra.mxu0 %v2899
      %2988 = vmatprep.subr.bf16.mxu0 0
      %2989 = vmatpush2.bf16.msra.mxu0 0
      %2990 = vmatprep.subr.bf16.mxu0 0
      %2991 = vmatpush2.bf16.msra.mxu0 0
      %2992 = vmatprep.subr.bf16.mxu0 0
      %2993 = vmatpush2.bf16.msra.mxu0 0
      %2994 = vmatprep.subr.bf16.mxu0 0
      %2995 = vmatpush2.bf16.msra.mxu0 0
      %2996 = vmatprep.subr.bf16.mxu0 0
      %2997 = vmatpush2.bf16.msra.mxu0 0
      %2998 = vmatprep.subr.bf16.mxu0 0
      %2999 = vmatpush2.bf16.msra.mxu0 0
      %3000 = vmatprep.subr.bf16.mxu0 0
      %3001 = vmatpush2.bf16.msra.mxu0 0
      %3002 = vmatprep.subr.bf16.mxu0 0
      %3003 = vmatpush2.bf16.msra.mxu0 0
      %3004 = vmatprep.mubr.bf16.mxu0 0
      %3005 = vmatmul.mubr.bf16.gmra.mxu0 %v2949
      %v3006 = vpop.f32.mrf.mxu0
      %v3007 = vadd.f32 0.0, %v3006
      %v3008 = vpop.f32.mrf.mxu0
      %v3009 = vadd.f32 0.0, %v3008
      %v3010 = vpop.f32.mrf.mxu0
      %v3011 = vadd.f32 0.0, %v3010
      %v3012 = vpop.f32.mrf.mxu0
      %v3013 = vadd.f32 0.0, %v3012
      %3014 = vmatprep.mubr.bf16.mxu0 0
      %3015 = vmatmul.mubr.bf16.gmra.mxu0 %v2952
      %v3016 = vpop.f32.mrf.mxu0
      %v3017 = vadd.f32 0.0, %v3016
      %v3018 = vpop.f32.mrf.mxu0
      %v3019 = vadd.f32 0.0, %v3018
      %v3020 = vpop.f32.mrf.mxu0
      %v3021 = vadd.f32 0.0, %v3020
      %v3022 = vpop.f32.mrf.mxu0
      %v3023 = vadd.f32 0.0, %v3022
      %3024 = vmatprep.mubr.bf16.mxu0 0
      %3025 = vmatmul.mubr.bf16.gmra.mxu0 %v2955
      %v3026 = vpop.f32.mrf.mxu0
      %v3027 = vadd.f32 0.0, %v3026
      %v3028 = vpop.f32.mrf.mxu0
      %v3029 = vadd.f32 0.0, %v3028
      %v3030 = vpop.f32.mrf.mxu0
      %v3031 = vpop.f32.mrf.mxu0
      %3032 = vdwg.mxu0
      %3033 = vmatprep.subr.bf16.mxu0 0
      %3034 = vmatpush1.bf16.msra.mxu0 0
      %3035 = vmatprep.subr.bf16.mxu0 0
      %3036 = vmatpush1.bf16.msra.mxu0 0
      %3037 = vmatprep.subr.bf16.mxu0 %v2967
      %3038 = vmatpush1.bf16.msra.mxu0 %v2964
      %3039 = vmatprep.subr.bf16.mxu0 %v2918
      %3040 = vmatpush1.bf16.msra.mxu0 %v2917
      %3041 = vmatprep.subr.bf16.mxu0 %v2914
      %3042 = vmatpush1.bf16.msra.mxu0 %v2913
      %3043 = vmatprep.subr.bf16.mxu0 %v2910
      %3044 = vmatpush1.bf16.msra.mxu0 %v2909
      %3045 = vmatprep.subr.bf16.mxu0 %v2906
      %3046 = vmatpush1.bf16.msra.mxu0 %v2905
      %3047 = vmatprep.subr.bf16.mxu0 %v2902
      %3048 = vmatpush1.bf16.msra.mxu0 %v2901
      %3049 = vmatprep.subr.bf16.mxu0 0
      %3050 = vmatpush2.bf16.msra.mxu0 0
      %3051 = vmatprep.subr.bf16.mxu0 0
      %3052 = vmatpush2.bf16.msra.mxu0 0
      %3053 = vmatprep.subr.bf16.mxu0 0
      %3054 = vmatpush2.bf16.msra.mxu0 0
      %3055 = vmatprep.subr.bf16.mxu0 0
      %3056 = vmatpush2.bf16.msra.mxu0 0
      %3057 = vmatprep.subr.bf16.mxu0 0
      %3058 = vmatpush2.bf16.msra.mxu0 0
      %3059 = vmatprep.subr.bf16.mxu0 0
      %3060 = vmatpush2.bf16.msra.mxu0 0
      %3061 = vmatprep.subr.bf16.mxu0 0
      %3062 = vmatpush2.bf16.msra.mxu0 0
      %3063 = vmatprep.subr.bf16.mxu0 0
      %3064 = vmatpush2.bf16.msra.mxu0 0
      %3065 = vmatprep.mubr.bf16.mxu0 0
      %3066 = vmatmul.mubr.bf16.gmra.mxu0 %v2949
      %v3067 = vpop.f32.mrf.mxu0
      %v3068 = vadd.f32 0.0, %v3067
      %v3069 = vpop.f32.mrf.mxu0
      %v3070 = vadd.f32 0.0, %v3069
      %v3071 = vpop.f32.mrf.mxu0
      %v3072 = vadd.f32 0.0, %v3071
      %v3073 = vpop.f32.mrf.mxu0
      %v3074 = vadd.f32 0.0, %v3073
      %3075 = vmatprep.mubr.bf16.mxu0 0
      %3076 = vmatmul.mubr.bf16.gmra.mxu0 %v2952
      %v3077 = vpop.f32.mrf.mxu0
      %v3078 = vadd.f32 0.0, %v3077
      %v3079 = vpop.f32.mrf.mxu0
      %v3080 = vadd.f32 0.0, %v3079
      %v3081 = vpop.f32.mrf.mxu0
      %v3082 = vadd.f32 0.0, %v3081
      %v3083 = vpop.f32.mrf.mxu0
      %v3084 = vadd.f32 0.0, %v3083
      %3085 = vmatprep.mubr.bf16.mxu0 0
      %3086 = vmatmul.mubr.bf16.gmra.mxu0 %v2955
      %v3087 = vpop.f32.mrf.mxu0
      %v3088 = vadd.f32 0.0, %v3087
      %v3089 = vpop.f32.mrf.mxu0
      %v3090 = vadd.f32 0.0, %v3089
      %v3091 = vpop.f32.mrf.mxu0
      %v3092 = vpop.f32.mrf.mxu0
      %3093 = vdwg.mxu0
      %3094 = vmatprep.subr.bf16.mxu0 0
      %3095 = vmatpush1.bf16.msra.mxu0 0
      %3096 = vmatprep.subr.bf16.mxu0 0
      %3097 = vmatpush1.bf16.msra.mxu0 0
      %3098 = vmatprep.subr.bf16.mxu0 0
      %3099 = vmatpush1.bf16.msra.mxu0 %v2970
      %3100 = vmatprep.subr.bf16.mxu0 0
      %3101 = vmatpush1.bf16.msra.mxu0 %v2887
      %3102 = vmatprep.subr.bf16.mxu0 0
      %3103 = vmatpush1.bf16.msra.mxu0 %v2877
      %3104 = vmatprep.subr.bf16.mxu0 0
      %3105 = vmatpush1.bf16.msra.mxu0 %v2867
      %3106 = vmatprep.subr.bf16.mxu0 0
      %3107 = vmatpush1.bf16.msra.mxu0 %v2857
      %3108 = vmatprep.subr.bf16.mxu0 0
      %3109 = vmatpush1.bf16.msra.mxu0 %v2847
      %3110 = vmatprep.subr.bf16.mxu0 0
      %3111 = vmatpush2.bf16.msra.mxu0 0
      %3112 = vmatprep.subr.bf16.mxu0 0
      %3113 = vmatpush2.bf16.msra.mxu0 0
      %3114 = vmatprep.subr.bf16.mxu0 0
      %3115 = vmatpush2.bf16.msra.mxu0 0
      %3116 = vmatprep.subr.bf16.mxu0 0
      %3117 = vmatpush2.bf16.msra.mxu0 0
      %3118 = vmatprep.subr.bf16.mxu0 0
      %3119 = vmatpush2.bf16.msra.mxu0 0
      %3120 = vmatprep.subr.bf16.mxu0 0
      %3121 = vmatpush2.bf16.msra.mxu0 0
      %3122 = vmatprep.subr.bf16.mxu0 0
      %3123 = vmatpush2.bf16.msra.mxu0 0
      %3124 = vmatprep.subr.bf16.mxu0 0
      %3125 = vmatpush2.bf16.msra.mxu0 0
      %3126 = vmatprep.mubr.bf16.mxu0 0
      %3127 = vmatmul.mubr.bf16.gmra.mxu0 %v2949
      %v3128 = vpop.f32.mrf.mxu0
      %v3129 = vadd.f32 0.0, %v3128
      %v3130 = vpop.f32.mrf.mxu0
      %v3131 = vpop.f32.mrf.mxu0
      %v3132 = vadd.f32 0.0, %v3131
      %v3133 = vpop.f32.mrf.mxu0
      %3134 = vmatprep.mubr.bf16.mxu0 0
      %3135 = vmatmul.mubr.bf16.gmra.mxu0 %v2952
      %v3136 = vpop.f32.mrf.mxu0
      %v3137 = vadd.f32 0.0, %v3136
      %v3138 = vpop.f32.mrf.mxu0
      %v3139 = vpop.f32.mrf.mxu0
      %v3140 = vadd.f32 0.0, %v3139
      %v3141 = vpop.f32.mrf.mxu0
      %3142 = vmatprep.mubr.bf16.mxu0 0
      %3143 = vmatmul.mubr.bf16.gmra.mxu0 %v2955
      %v3144 = vpop.f32.mrf.mxu0
      %v3145 = vadd.f32 0.0, %v3144
      %v3146 = vpop.f32.mrf.mxu0
      %v3147 = vpop.f32.mrf.mxu0
      %v3148 = vpop.f32.mrf.mxu0
      %3149 = vdwg.mxu0
      %v3150 = vadd.f32 %v2792, %v3007
      %v3151 = vadd.f32 %v2793, %v3009
      %v3152 = vadd.f32 %v2794, %v3068
      %v3153 = vadd.f32 %v2795, %v3070
      %v3154 = vadd.f32 %v2796, %v3129
      %v3155 = vadd.f32 %v2797, %v3011
      %v3156 = vadd.f32 %v2798, %v3013
      %v3157 = vadd.f32 %v2799, %v3072
      %v3158 = vadd.f32 %v2800, %v3074
      %v3159 = vadd.f32 %v2801, %v3132
      %v3160 = vadd.f32 %v2802, %v3017
      %v3161 = vadd.f32 %v2803, %v3019
      %v3162 = vadd.f32 %v2804, %v3078
      %v3163 = vadd.f32 %v2805, %v3080
      %v3164 = vadd.f32 %v2806, %v3137
      %v3165 = vadd.f32 %v2807, %v3021
      %v3166 = vadd.f32 %v2808, %v3023
      %v3167 = vadd.f32 %v2809, %v3082
      %v3168 = vadd.f32 %v2810, %v3084
      %v3169 = vadd.f32 %v2811, %v3140
      %v3170 = vadd.f32 %v2812, %v3027
      %v3171 = vadd.f32 %v2813, %v3029
      %v3172 = vadd.f32 %v2814, %v3088
      %v3173 = vadd.f32 %v2815, %v3090
      %v3174 = vadd.f32 %v2816, %v3145
      %s3175 = sadd.s32 30, %s1009
      %s3176 = smul.addr %s3175, 4
      %s3177 = scalar_lea.vmem %s2, %s3176
      %v3178 = vld [vmem:[%s3177] sm:$0xf]
      %v3179 = vld [vmem:[%s3177 + $0x4] sm:$0xf]
      %v3180 = vld [vmem:[%s3177 + $0x8] sm:$0xf]
      %v3181 = vld [vmem:[%s3177 + $0xc] sm:$0xf]
      %v3182 = vld [vmem:[%s3177 + $0x10] sm:$0xf]
      %v3188 = vunpack.c.l.b16 %v3178
      %v3189 = vunpack.c.l.b16 %v3179
      %v3190 = vunpack.c.l.b16 %v3180
      %v3191 = vunpack.c.l.b16 %v3181
      %v3192 = vunpack.c.l.b16 %v3182
      %v3193 = vpack.c.b16 %v3189, %v3188
      %v3194 = vpack.c.b16 %v3191, %v3190
      %v3195 = vpack.c.b16 %v3192, %v3192
      %3196 = vrot.lane.b32.xlu0 %v1159, 122
      %v3197 = vpop.permute.xlu0 %3196
      %3198 = vrot.lane.b32.xlu0 %v1160, 122
      %v3199 = vpop.permute.xlu0 %3198
      %3200 = vrot.lane.b32.xlu0 %v1161, 122
      %v3201 = vpop.permute.xlu0 %3200
      %3202 = vrot.lane.b32.xlu0 %v1162, 122
      %v3203 = vpop.permute.xlu0 %3202
      %3204 = vrot.lane.b32.xlu0 %v1163, 122
      %v3205 = vpop.permute.xlu0 %3204
      %3206 = vrot.lane.b32.xlu0 %v1164, 122
      %v3207 = vpop.permute.xlu0 %3206
      %3208 = vrot.lane.b32.xlu0 %v1165, 122
      %v3209 = vpop.permute.xlu0 %3208
      %3210 = vrot.lane.b32.xlu0 %v1166, 122
      %v3211 = vpop.permute.xlu0 %3210
      %3212 = vrot.lane.b32.xlu0 %v1167, 122
      %v3213 = vpop.permute.xlu0 %3212
      %3214 = vrot.lane.b32.xlu0 %v1168, 122
      %v3215 = vpop.permute.xlu0 %3214
      %3216 = vrot.lane.b32.xlu0 %v1169, 122
      %v3217 = vpop.permute.xlu0 %3216
      %3218 = vrot.lane.b32.xlu0 %v1170, 122
      %v3219 = vpop.permute.xlu0 %3218
      %3220 = vrot.lane.b32.xlu0 %v1171, 122
      %v3221 = vpop.permute.xlu0 %3220
      %3222 = vrot.lane.b32.xlu0 %v1172, 122
      %v3223 = vpop.permute.xlu0 %3222
      %3224 = vrot.lane.b32.xlu0 %v1173, 122
      %v3225 = vpop.permute.xlu0 %3224
      %3226 = vrot.lane.b32.xlu0 %v1174, 122
      %v3227 = vpop.permute.xlu0 %3226
      %3228 = vrot.lane.b32.xlu0 %v1175, 122
      %v3229 = vpop.permute.xlu0 %3228
      %3230 = vrot.lane.b32.xlu0 %v1176, 122
      %v3231 = vpop.permute.xlu0 %3230
      %3232 = vrot.lane.b32.xlu0 %v1177, 122
      %v3233 = vpop.permute.xlu0 %3232
      %3234 = vrot.lane.b32.xlu0 %v1178, 122
      %v3235 = vpop.permute.xlu0 %3234
      %3236 = vrot.lane.b32.xlu0 %v1179, 122
      %v3237 = vpop.permute.xlu0 %3236
      %3238 = vrot.lane.b32.xlu0 %v1180, 122
      %v3239 = vpop.permute.xlu0 %3238
      %3240 = vrot.lane.b32.xlu0 %v1181, 122
      %v3241 = vpop.permute.xlu0 %3240
      %3242 = vrot.lane.b32.xlu0 %v1182, 122
      %v3243 = vpop.permute.xlu0 %3242
      %3244 = vrot.lane.b32.xlu0 %v1183, 122
      %v3245 = vpop.permute.xlu0 %3244
      %3246 = vrot.lane.b32.xlu0 %v1184, 122
      %v3247 = vpop.permute.xlu0 %3246
      %3248 = vrot.lane.b32.xlu0 %v1185, 122
      %v3249 = vpop.permute.xlu0 %3248
      %3250 = vrot.lane.b32.xlu0 %v1186, 122
      %v3251 = vpop.permute.xlu0 %3250
      %3252 = vrot.lane.b32.xlu0 %v1187, 122
      %v3253 = vpop.permute.xlu0 %3252
      %3254 = vrot.lane.b32.xlu0 %v1188, 122
      %v3255 = vpop.permute.xlu0 %3254
      %vm3256 = vcmask 998400
      %v3257 = vsel %vm3256, %v3197, %v3199
      %v3258 = vsel %vm3256, %v3199, %v3201
      %v3259 = vsel %vm3256, %v3201, %v3203
      %v3260 = vsel %vm3256, %v3203, %v3205
      %v3261 = vsel %vm3256, %v3207, %v3209
      %v3262 = vsel %vm3256, %v3209, %v3211
      %v3263 = vsel %vm3256, %v3211, %v3213
      %v3264 = vsel %vm3256, %v3213, %v3215
      %v3265 = vsel %vm3256, %v3217, %v3219
      %v3266 = vsel %vm3256, %v3219, %v3221
      %v3267 = vsel %vm3256, %v3221, %v3223
      %v3268 = vsel %vm3256, %v3223, %v3225
      %v3269 = vsel %vm3256, %v3227, %v3229
      %v3270 = vsel %vm3256, %v3229, %v3231
      %v3271 = vsel %vm3256, %v3231, %v3233
      %v3272 = vsel %vm3256, %v3233, %v3235
      %v3273 = vsel %vm3256, %v3237, %v3239
      %v3274 = vsel %vm3256, %v3239, %v3241
      %v3275 = vsel %vm3256, %v3241, %v3243
      %v3276 = vsel %vm3256, %v3243, %v3245
      %v3277 = vsel %vm3256, %v3247, %v3249
      %v3278 = vsel %vm3256, %v3249, %v3251
      %v3279 = vsel %vm3256, %v3251, %v3253
      %v3280 = vsel %vm3256, %v3253, %v3255
      %v3307 = vsel %vm1299, %v3193, 0
      %v3310 = vsel %vm1299, %v3194, 0
      %v3313 = vsel %vm1299, %v3195, 0
      %v3316 = vsel %vm1309, %v3277, 0
      %v3319 = vsel %vm1309, %v3278, 0
      %v3322 = vsel %vm1309, %v3279, 0
      %v3325 = vsel %vm1309, %v3280, 0
      %v3328 = vsel %vm1309, %v3255, 0
      %3330 = vmatprep.subr.bf16.mxu0 0
      %3331 = vmatpush1.bf16.msra.mxu0 0
      %3332 = vmatprep.subr.bf16.mxu0 0
      %3333 = vmatpush1.bf16.msra.mxu0 0
      %3334 = vmatprep.subr.bf16.mxu0 %v3319
      %3335 = vmatpush1.bf16.msra.mxu0 %v3316
      %3336 = vmatprep.subr.bf16.mxu0 %v3274
      %3337 = vmatpush1.bf16.msra.mxu0 %v3273
      %3338 = vmatprep.subr.bf16.mxu0 %v3270
      %3339 = vmatpush1.bf16.msra.mxu0 %v3269
      %3340 = vmatprep.subr.bf16.mxu0 %v3266
      %3341 = vmatpush1.bf16.msra.mxu0 %v3265
      %3342 = vmatprep.subr.bf16.mxu0 %v3262
      %3343 = vmatpush1.bf16.msra.mxu0 %v3261
      %3344 = vmatprep.subr.bf16.mxu0 %v3258
      %3345 = vmatpush1.bf16.msra.mxu0 %v3257
      %3346 = vmatprep.subr.bf16.mxu0 0
      %3347 = vmatpush2.bf16.msra.mxu0 0
      %3348 = vmatprep.subr.bf16.mxu0 0
      %3349 = vmatpush2.bf16.msra.mxu0 0
      %3350 = vmatprep.subr.bf16.mxu0 0
      %3351 = vmatpush2.bf16.msra.mxu0 0
      %3352 = vmatprep.subr.bf16.mxu0 0
      %3353 = vmatpush2.bf16.msra.mxu0 0
      %3354 = vmatprep.subr.bf16.mxu0 0
      %3355 = vmatpush2.bf16.msra.mxu0 0
      %3356 = vmatprep.subr.bf16.mxu0 0
      %3357 = vmatpush2.bf16.msra.mxu0 0
      %3358 = vmatprep.subr.bf16.mxu0 0
      %3359 = vmatpush2.bf16.msra.mxu0 0
      %3360 = vmatprep.subr.bf16.mxu0 0
      %3361 = vmatpush2.bf16.msra.mxu0 0
      %3362 = vmatprep.mubr.bf16.mxu0 0
      %3363 = vmatmul.mubr.bf16.gmra.mxu0 %v3307
      %v3364 = vpop.f32.mrf.mxu0
      %v3365 = vadd.f32 0.0, %v3364
      %v3366 = vpop.f32.mrf.mxu0
      %v3367 = vadd.f32 0.0, %v3366
      %v3368 = vpop.f32.mrf.mxu0
      %v3369 = vadd.f32 0.0, %v3368
      %v3370 = vpop.f32.mrf.mxu0
      %v3371 = vadd.f32 0.0, %v3370
      %3372 = vmatprep.mubr.bf16.mxu0 0
      %3373 = vmatmul.mubr.bf16.gmra.mxu0 %v3310
      %v3374 = vpop.f32.mrf.mxu0
      %v3375 = vadd.f32 0.0, %v3374
      %v3376 = vpop.f32.mrf.mxu0
      %v3377 = vadd.f32 0.0, %v3376
      %v3378 = vpop.f32.mrf.mxu0
      %v3379 = vadd.f32 0.0, %v3378
      %v3380 = vpop.f32.mrf.mxu0
      %v3381 = vadd.f32 0.0, %v3380
      %3382 = vmatprep.mubr.bf16.mxu0 0
      %3383 = vmatmul.mubr.bf16.gmra.mxu0 %v3313
      %v3384 = vpop.f32.mrf.mxu0
      %v3385 = vadd.f32 0.0, %v3384
      %v3386 = vpop.f32.mrf.mxu0
      %v3387 = vadd.f32 0.0, %v3386
      %v3388 = vpop.f32.mrf.mxu0
      %v3389 = vpop.f32.mrf.mxu0
      %3390 = vdwg.mxu0
      %3391 = vmatprep.subr.bf16.mxu0 0
      %3392 = vmatpush1.bf16.msra.mxu0 0
      %3393 = vmatprep.subr.bf16.mxu0 0
      %3394 = vmatpush1.bf16.msra.mxu0 0
      %3395 = vmatprep.subr.bf16.mxu0 %v3325
      %3396 = vmatpush1.bf16.msra.mxu0 %v3322
      %3397 = vmatprep.subr.bf16.mxu0 %v3276
      %3398 = vmatpush1.bf16.msra.mxu0 %v3275
      %3399 = vmatprep.subr.bf16.mxu0 %v3272
      %3400 = vmatpush1.bf16.msra.mxu0 %v3271
      %3401 = vmatprep.subr.bf16.mxu0 %v3268
      %3402 = vmatpush1.bf16.msra.mxu0 %v3267
      %3403 = vmatprep.subr.bf16.mxu0 %v3264
      %3404 = vmatpush1.bf16.msra.mxu0 %v3263
      %3405 = vmatprep.subr.bf16.mxu0 %v3260
      %3406 = vmatpush1.bf16.msra.mxu0 %v3259
      %3407 = vmatprep.subr.bf16.mxu0 0
      %3408 = vmatpush2.bf16.msra.mxu0 0
      %3409 = vmatprep.subr.bf16.mxu0 0
      %3410 = vmatpush2.bf16.msra.mxu0 0
      %3411 = vmatprep.subr.bf16.mxu0 0
      %3412 = vmatpush2.bf16.msra.mxu0 0
      %3413 = vmatprep.subr.bf16.mxu0 0
      %3414 = vmatpush2.bf16.msra.mxu0 0
      %3415 = vmatprep.subr.bf16.mxu0 0
      %3416 = vmatpush2.bf16.msra.mxu0 0
      %3417 = vmatprep.subr.bf16.mxu0 0
      %3418 = vmatpush2.bf16.msra.mxu0 0
      %3419 = vmatprep.subr.bf16.mxu0 0
      %3420 = vmatpush2.bf16.msra.mxu0 0
      %3421 = vmatprep.subr.bf16.mxu0 0
      %3422 = vmatpush2.bf16.msra.mxu0 0
      %3423 = vmatprep.mubr.bf16.mxu0 0
      %3424 = vmatmul.mubr.bf16.gmra.mxu0 %v3307
      %v3425 = vpop.f32.mrf.mxu0
      %v3426 = vadd.f32 0.0, %v3425
      %v3427 = vpop.f32.mrf.mxu0
      %v3428 = vadd.f32 0.0, %v3427
      %v3429 = vpop.f32.mrf.mxu0
      %v3430 = vadd.f32 0.0, %v3429
      %v3431 = vpop.f32.mrf.mxu0
      %v3432 = vadd.f32 0.0, %v3431
      %3433 = vmatprep.mubr.bf16.mxu0 0
      %3434 = vmatmul.mubr.bf16.gmra.mxu0 %v3310
      %v3435 = vpop.f32.mrf.mxu0
      %v3436 = vadd.f32 0.0, %v3435
      %v3437 = vpop.f32.mrf.mxu0
      %v3438 = vadd.f32 0.0, %v3437
      %v3439 = vpop.f32.mrf.mxu0
      %v3440 = vadd.f32 0.0, %v3439
      %v3441 = vpop.f32.mrf.mxu0
      %v3442 = vadd.f32 0.0, %v3441
      %3443 = vmatprep.mubr.bf16.mxu0 0
      %3444 = vmatmul.mubr.bf16.gmra.mxu0 %v3313
      %v3445 = vpop.f32.mrf.mxu0
      %v3446 = vadd.f32 0.0, %v3445
      %v3447 = vpop.f32.mrf.mxu0
      %v3448 = vadd.f32 0.0, %v3447
      %v3449 = vpop.f32.mrf.mxu0
      %v3450 = vpop.f32.mrf.mxu0
      %3451 = vdwg.mxu0
      %3452 = vmatprep.subr.bf16.mxu0 0
      %3453 = vmatpush1.bf16.msra.mxu0 0
      %3454 = vmatprep.subr.bf16.mxu0 0
      %3455 = vmatpush1.bf16.msra.mxu0 0
      %3456 = vmatprep.subr.bf16.mxu0 0
      %3457 = vmatpush1.bf16.msra.mxu0 %v3328
      %3458 = vmatprep.subr.bf16.mxu0 0
      %3459 = vmatpush1.bf16.msra.mxu0 %v3245
      %3460 = vmatprep.subr.bf16.mxu0 0
      %3461 = vmatpush1.bf16.msra.mxu0 %v3235
      %3462 = vmatprep.subr.bf16.mxu0 0
      %3463 = vmatpush1.bf16.msra.mxu0 %v3225
      %3464 = vmatprep.subr.bf16.mxu0 0
      %3465 = vmatpush1.bf16.msra.mxu0 %v3215
      %3466 = vmatprep.subr.bf16.mxu0 0
      %3467 = vmatpush1.bf16.msra.mxu0 %v3205
      %3468 = vmatprep.subr.bf16.mxu0 0
      %3469 = vmatpush2.bf16.msra.mxu0 0
      %3470 = vmatprep.subr.bf16.mxu0 0
      %3471 = vmatpush2.bf16.msra.mxu0 0
      %3472 = vmatprep.subr.bf16.mxu0 0
      %3473 = vmatpush2.bf16.msra.mxu0 0
      %3474 = vmatprep.subr.bf16.mxu0 0
      %3475 = vmatpush2.bf16.msra.mxu0 0
      %3476 = vmatprep.subr.bf16.mxu0 0
      %3477 = vmatpush2.bf16.msra.mxu0 0
      %3478 = vmatprep.subr.bf16.mxu0 0
      %3479 = vmatpush2.bf16.msra.mxu0 0
      %3480 = vmatprep.subr.bf16.mxu0 0
      %3481 = vmatpush2.bf16.msra.mxu0 0
      %3482 = vmatprep.subr.bf16.mxu0 0
      %3483 = vmatpush2.bf16.msra.mxu0 0
      %3484 = vmatprep.mubr.bf16.mxu0 0
      %3485 = vmatmul.mubr.bf16.gmra.mxu0 %v3307
      %v3486 = vpop.f32.mrf.mxu0
      %v3487 = vadd.f32 0.0, %v3486
      %v3488 = vpop.f32.mrf.mxu0
      %v3489 = vpop.f32.mrf.mxu0
      %v3490 = vadd.f32 0.0, %v3489
      %v3491 = vpop.f32.mrf.mxu0
      %3492 = vmatprep.mubr.bf16.mxu0 0
      %3493 = vmatmul.mubr.bf16.gmra.mxu0 %v3310
      %v3494 = vpop.f32.mrf.mxu0
      %v3495 = vadd.f32 0.0, %v3494
      %v3496 = vpop.f32.mrf.mxu0
      %v3497 = vpop.f32.mrf.mxu0
      %v3498 = vadd.f32 0.0, %v3497
      %v3499 = vpop.f32.mrf.mxu0
      %3500 = vmatprep.mubr.bf16.mxu0 0
      %3501 = vmatmul.mubr.bf16.gmra.mxu0 %v3313
      %v3502 = vpop.f32.mrf.mxu0
      %v3503 = vadd.f32 0.0, %v3502
      %v3504 = vpop.f32.mrf.mxu0
      %v3505 = vpop.f32.mrf.mxu0
      %v3506 = vpop.f32.mrf.mxu0
      %3507 = vdwg.mxu0
      %v3508 = vadd.f32 %v3150, %v3365
      %v3509 = vadd.f32 %v3151, %v3367
      %v3510 = vadd.f32 %v3152, %v3426
      %v3511 = vadd.f32 %v3153, %v3428
      %v3512 = vadd.f32 %v3154, %v3487
      %v3513 = vadd.f32 %v3155, %v3369
      %v3514 = vadd.f32 %v3156, %v3371
      %v3515 = vadd.f32 %v3157, %v3430
      %v3516 = vadd.f32 %v3158, %v3432
      %v3517 = vadd.f32 %v3159, %v3490
      %v3518 = vadd.f32 %v3160, %v3375
      %v3519 = vadd.f32 %v3161, %v3377
      %v3520 = vadd.f32 %v3162, %v3436
      %v3521 = vadd.f32 %v3163, %v3438
      %v3522 = vadd.f32 %v3164, %v3495
      %v3523 = vadd.f32 %v3165, %v3379
      %v3524 = vadd.f32 %v3166, %v3381
      %v3525 = vadd.f32 %v3167, %v3440
      %v3526 = vadd.f32 %v3168, %v3442
      %v3527 = vadd.f32 %v3169, %v3498
      %v3528 = vadd.f32 %v3170, %v3385
      %v3529 = vadd.f32 %v3171, %v3387
      %v3530 = vadd.f32 %v3172, %v3446
      %v3531 = vadd.f32 %v3173, %v3448
      %v3532 = vadd.f32 %v3174, %v3503
      %s3533 = sadd.s32 35, %s1009
      %s3534 = smul.addr %s3533, 4
      %s3535 = scalar_lea.vmem %s2, %s3534
      %v3536 = vld [vmem:[%s3535] sm:$0xf]
      %v3537 = vld [vmem:[%s3535 + $0x4] sm:$0xf]
      %v3538 = vld [vmem:[%s3535 + $0x8] sm:$0xf]
      %v3539 = vld [vmem:[%s3535 + $0xc] sm:$0xf]
      %v3540 = vld [vmem:[%s3535 + $0x10] sm:$0xf]
      %v3546 = vunpack.c.l.b16 %v3536
      %v3547 = vunpack.c.l.b16 %v3537
      %v3548 = vunpack.c.l.b16 %v3538
      %v3549 = vunpack.c.l.b16 %v3539
      %v3550 = vunpack.c.l.b16 %v3540
      %v3551 = vpack.c.b16 %v3547, %v3546
      %v3552 = vpack.c.b16 %v3549, %v3548
      %v3553 = vpack.c.b16 %v3550, %v3550
      %3554 = vrot.lane.b32.xlu0 %v1159, 121
      %v3555 = vpop.permute.xlu0 %3554
      %3556 = vrot.lane.b32.xlu0 %v1160, 121
      %v3557 = vpop.permute.xlu0 %3556
      %3558 = vrot.lane.b32.xlu0 %v1161, 121
      %v3559 = vpop.permute.xlu0 %3558
      %3560 = vrot.lane.b32.xlu0 %v1162, 121
      %v3561 = vpop.permute.xlu0 %3560
      %3562 = vrot.lane.b32.xlu0 %v1163, 121
      %v3563 = vpop.permute.xlu0 %3562
      %3564 = vrot.lane.b32.xlu0 %v1164, 121
      %v3565 = vpop.permute.xlu0 %3564
      %3566 = vrot.lane.b32.xlu0 %v1165, 121
      %v3567 = vpop.permute.xlu0 %3566
      %3568 = vrot.lane.b32.xlu0 %v1166, 121
      %v3569 = vpop.permute.xlu0 %3568
      %3570 = vrot.lane.b32.xlu0 %v1167, 121
      %v3571 = vpop.permute.xlu0 %3570
      %3572 = vrot.lane.b32.xlu0 %v1168, 121
      %v3573 = vpop.permute.xlu0 %3572
      %3574 = vrot.lane.b32.xlu0 %v1169, 121
      %v3575 = vpop.permute.xlu0 %3574
      %3576 = vrot.lane.b32.xlu0 %v1170, 121
      %v3577 = vpop.permute.xlu0 %3576
      %3578 = vrot.lane.b32.xlu0 %v1171, 121
      %v3579 = vpop.permute.xlu0 %3578
      %3580 = vrot.lane.b32.xlu0 %v1172, 121
      %v3581 = vpop.permute.xlu0 %3580
      %3582 = vrot.lane.b32.xlu0 %v1173, 121
      %v3583 = vpop.permute.xlu0 %3582
      %3584 = vrot.lane.b32.xlu0 %v1174, 121
      %v3585 = vpop.permute.xlu0 %3584
      %3586 = vrot.lane.b32.xlu0 %v1175, 121
      %v3587 = vpop.permute.xlu0 %3586
      %3588 = vrot.lane.b32.xlu0 %v1176, 121
      %v3589 = vpop.permute.xlu0 %3588
      %3590 = vrot.lane.b32.xlu0 %v1177, 121
      %v3591 = vpop.permute.xlu0 %3590
      %3592 = vrot.lane.b32.xlu0 %v1178, 121
      %v3593 = vpop.permute.xlu0 %3592
      %3594 = vrot.lane.b32.xlu0 %v1179, 121
      %v3595 = vpop.permute.xlu0 %3594
      %3596 = vrot.lane.b32.xlu0 %v1180, 121
      %v3597 = vpop.permute.xlu0 %3596
      %3598 = vrot.lane.b32.xlu0 %v1181, 121
      %v3599 = vpop.permute.xlu0 %3598
      %3600 = vrot.lane.b32.xlu0 %v1182, 121
      %v3601 = vpop.permute.xlu0 %3600
      %3602 = vrot.lane.b32.xlu0 %v1183, 121
      %v3603 = vpop.permute.xlu0 %3602
      %3604 = vrot.lane.b32.xlu0 %v1184, 121
      %v3605 = vpop.permute.xlu0 %3604
      %3606 = vrot.lane.b32.xlu0 %v1185, 121
      %v3607 = vpop.permute.xlu0 %3606
      %3608 = vrot.lane.b32.xlu0 %v1186, 121
      %v3609 = vpop.permute.xlu0 %3608
      %3610 = vrot.lane.b32.xlu0 %v1187, 121
      %v3611 = vpop.permute.xlu0 %3610
      %3612 = vrot.lane.b32.xlu0 %v1188, 121
      %v3613 = vpop.permute.xlu0 %3612
      %vm3614 = vcmask 990208
      %v3615 = vsel %vm3614, %v3555, %v3557
      %v3616 = vsel %vm3614, %v3557, %v3559
      %v3617 = vsel %vm3614, %v3559, %v3561
      %v3618 = vsel %vm3614, %v3561, %v3563
      %v3619 = vsel %vm3614, %v3565, %v3567
      %v3620 = vsel %vm3614, %v3567, %v3569
      %v3621 = vsel %vm3614, %v3569, %v3571
      %v3622 = vsel %vm3614, %v3571, %v3573
      %v3623 = vsel %vm3614, %v3575, %v3577
      %v3624 = vsel %vm3614, %v3577, %v3579
      %v3625 = vsel %vm3614, %v3579, %v3581
      %v3626 = vsel %vm3614, %v3581, %v3583
      %v3627 = vsel %vm3614, %v3585, %v3587
      %v3628 = vsel %vm3614, %v3587, %v3589
      %v3629 = vsel %vm3614, %v3589, %v3591
      %v3630 = vsel %vm3614, %v3591, %v3593
      %v3631 = vsel %vm3614, %v3595, %v3597
      %v3632 = vsel %vm3614, %v3597, %v3599
      %v3633 = vsel %vm3614, %v3599, %v3601
      %v3634 = vsel %vm3614, %v3601, %v3603
      %v3635 = vsel %vm3614, %v3605, %v3607
      %v3636 = vsel %vm3614, %v3607, %v3609
      %v3637 = vsel %vm3614, %v3609, %v3611
      %v3638 = vsel %vm3614, %v3611, %v3613
      %v3665 = vsel %vm1299, %v3551, 0
      %v3668 = vsel %vm1299, %v3552, 0
      %v3671 = vsel %vm1299, %v3553, 0
      %v3674 = vsel %vm1309, %v3635, 0
      %v3677 = vsel %vm1309, %v3636, 0
      %v3680 = vsel %vm1309, %v3637, 0
      %v3683 = vsel %vm1309, %v3638, 0
      %v3686 = vsel %vm1309, %v3613, 0
      %3688 = vmatprep.subr.bf16.mxu0 0
      %3689 = vmatpush1.bf16.msra.mxu0 0
      %3690 = vmatprep.subr.bf16.mxu0 0
      %3691 = vmatpush1.bf16.msra.mxu0 0
      %3692 = vmatprep.subr.bf16.mxu0 %v3677
      %3693 = vmatpush1.bf16.msra.mxu0 %v3674
      %3694 = vmatprep.subr.bf16.mxu0 %v3632
      %3695 = vmatpush1.bf16.msra.mxu0 %v3631
      %3696 = vmatprep.subr.bf16.mxu0 %v3628
      %3697 = vmatpush1.bf16.msra.mxu0 %v3627
      %3698 = vmatprep.subr.bf16.mxu0 %v3624
      %3699 = vmatpush1.bf16.msra.mxu0 %v3623
      %3700 = vmatprep.subr.bf16.mxu0 %v3620
      %3701 = vmatpush1.bf16.msra.mxu0 %v3619
      %3702 = vmatprep.subr.bf16.mxu0 %v3616
      %3703 = vmatpush1.bf16.msra.mxu0 %v3615
      %3704 = vmatprep.subr.bf16.mxu0 0
      %3705 = vmatpush2.bf16.msra.mxu0 0
      %3706 = vmatprep.subr.bf16.mxu0 0
      %3707 = vmatpush2.bf16.msra.mxu0 0
      %3708 = vmatprep.subr.bf16.mxu0 0
      %3709 = vmatpush2.bf16.msra.mxu0 0
      %3710 = vmatprep.subr.bf16.mxu0 0
      %3711 = vmatpush2.bf16.msra.mxu0 0
      %3712 = vmatprep.subr.bf16.mxu0 0
      %3713 = vmatpush2.bf16.msra.mxu0 0
      %3714 = vmatprep.subr.bf16.mxu0 0
      %3715 = vmatpush2.bf16.msra.mxu0 0
      %3716 = vmatprep.subr.bf16.mxu0 0
      %3717 = vmatpush2.bf16.msra.mxu0 0
      %3718 = vmatprep.subr.bf16.mxu0 0
      %3719 = vmatpush2.bf16.msra.mxu0 0
      %3720 = vmatprep.mubr.bf16.mxu0 0
      %3721 = vmatmul.mubr.bf16.gmra.mxu0 %v3665
      %v3722 = vpop.f32.mrf.mxu0
      %v3723 = vadd.f32 0.0, %v3722
      %v3724 = vpop.f32.mrf.mxu0
      %v3725 = vadd.f32 0.0, %v3724
      %v3726 = vpop.f32.mrf.mxu0
      %v3727 = vadd.f32 0.0, %v3726
      %v3728 = vpop.f32.mrf.mxu0
      %v3729 = vadd.f32 0.0, %v3728
      %3730 = vmatprep.mubr.bf16.mxu0 0
      %3731 = vmatmul.mubr.bf16.gmra.mxu0 %v3668
      %v3732 = vpop.f32.mrf.mxu0
      %v3733 = vadd.f32 0.0, %v3732
      %v3734 = vpop.f32.mrf.mxu0
      %v3735 = vadd.f32 0.0, %v3734
      %v3736 = vpop.f32.mrf.mxu0
      %v3737 = vadd.f32 0.0, %v3736
      %v3738 = vpop.f32.mrf.mxu0
      %v3739 = vadd.f32 0.0, %v3738
      %3740 = vmatprep.mubr.bf16.mxu0 0
      %3741 = vmatmul.mubr.bf16.gmra.mxu0 %v3671
      %v3742 = vpop.f32.mrf.mxu0
      %v3743 = vadd.f32 0.0, %v3742
      %v3744 = vpop.f32.mrf.mxu0
      %v3745 = vadd.f32 0.0, %v3744
      %v3746 = vpop.f32.mrf.mxu0
      %v3747 = vpop.f32.mrf.mxu0
      %3748 = vdwg.mxu0
      %3749 = vmatprep.subr.bf16.mxu0 0
      %3750 = vmatpush1.bf16.msra.mxu0 0
      %3751 = vmatprep.subr.bf16.mxu0 0
      %3752 = vmatpush1.bf16.msra.mxu0 0
      %3753 = vmatprep.subr.bf16.mxu0 %v3683
      %3754 = vmatpush1.bf16.msra.mxu0 %v3680
      %3755 = vmatprep.subr.bf16.mxu0 %v3634
      %3756 = vmatpush1.bf16.msra.mxu0 %v3633
      %3757 = vmatprep.subr.bf16.mxu0 %v3630
      %3758 = vmatpush1.bf16.msra.mxu0 %v3629
      %3759 = vmatprep.subr.bf16.mxu0 %v3626
      %3760 = vmatpush1.bf16.msra.mxu0 %v3625
      %3761 = vmatprep.subr.bf16.mxu0 %v3622
      %3762 = vmatpush1.bf16.msra.mxu0 %v3621
      %3763 = vmatprep.subr.bf16.mxu0 %v3618
      %3764 = vmatpush1.bf16.msra.mxu0 %v3617
      %3765 = vmatprep.subr.bf16.mxu0 0
      %3766 = vmatpush2.bf16.msra.mxu0 0
      %3767 = vmatprep.subr.bf16.mxu0 0
      %3768 = vmatpush2.bf16.msra.mxu0 0
      %3769 = vmatprep.subr.bf16.mxu0 0
      %3770 = vmatpush2.bf16.msra.mxu0 0
      %3771 = vmatprep.subr.bf16.mxu0 0
      %3772 = vmatpush2.bf16.msra.mxu0 0
      %3773 = vmatprep.subr.bf16.mxu0 0
      %3774 = vmatpush2.bf16.msra.mxu0 0
      %3775 = vmatprep.subr.bf16.mxu0 0
      %3776 = vmatpush2.bf16.msra.mxu0 0
      %3777 = vmatprep.subr.bf16.mxu0 0
      %3778 = vmatpush2.bf16.msra.mxu0 0
      %3779 = vmatprep.subr.bf16.mxu0 0
      %3780 = vmatpush2.bf16.msra.mxu0 0
      %3781 = vmatprep.mubr.bf16.mxu0 0
      %3782 = vmatmul.mubr.bf16.gmra.mxu0 %v3665
      %v3783 = vpop.f32.mrf.mxu0
      %v3784 = vadd.f32 0.0, %v3783
      %v3785 = vpop.f32.mrf.mxu0
      %v3786 = vadd.f32 0.0, %v3785
      %v3787 = vpop.f32.mrf.mxu0
      %v3788 = vadd.f32 0.0, %v3787
      %v3789 = vpop.f32.mrf.mxu0
      %v3790 = vadd.f32 0.0, %v3789
      %3791 = vmatprep.mubr.bf16.mxu0 0
      %3792 = vmatmul.mubr.bf16.gmra.mxu0 %v3668
      %v3793 = vpop.f32.mrf.mxu0
      %v3794 = vadd.f32 0.0, %v3793
      %v3795 = vpop.f32.mrf.mxu0
      %v3796 = vadd.f32 0.0, %v3795
      %v3797 = vpop.f32.mrf.mxu0
      %v3798 = vadd.f32 0.0, %v3797
      %v3799 = vpop.f32.mrf.mxu0
      %v3800 = vadd.f32 0.0, %v3799
      %3801 = vmatprep.mubr.bf16.mxu0 0
      %3802 = vmatmul.mubr.bf16.gmra.mxu0 %v3671
      %v3803 = vpop.f32.mrf.mxu0
      %v3804 = vadd.f32 0.0, %v3803
      %v3805 = vpop.f32.mrf.mxu0
      %v3806 = vadd.f32 0.0, %v3805
      %v3807 = vpop.f32.mrf.mxu0
      %v3808 = vpop.f32.mrf.mxu0
      %3809 = vdwg.mxu0
      %3810 = vmatprep.subr.bf16.mxu0 0
      %3811 = vmatpush1.bf16.msra.mxu0 0
      %3812 = vmatprep.subr.bf16.mxu0 0
      %3813 = vmatpush1.bf16.msra.mxu0 0
      %3814 = vmatprep.subr.bf16.mxu0 0
      %3815 = vmatpush1.bf16.msra.mxu0 %v3686
      %3816 = vmatprep.subr.bf16.mxu0 0
      %3817 = vmatpush1.bf16.msra.mxu0 %v3603
      %3818 = vmatprep.subr.bf16.mxu0 0
      %3819 = vmatpush1.bf16.msra.mxu0 %v3593
      %3820 = vmatprep.subr.bf16.mxu0 0
      %3821 = vmatpush1.bf16.msra.mxu0 %v3583
      %3822 = vmatprep.subr.bf16.mxu0 0
      %3823 = vmatpush1.bf16.msra.mxu0 %v3573
      %3824 = vmatprep.subr.bf16.mxu0 0
      %3825 = vmatpush1.bf16.msra.mxu0 %v3563
      %3826 = vmatprep.subr.bf16.mxu0 0
      %3827 = vmatpush2.bf16.msra.mxu0 0
      %3828 = vmatprep.subr.bf16.mxu0 0
      %3829 = vmatpush2.bf16.msra.mxu0 0
      %3830 = vmatprep.subr.bf16.mxu0 0
      %3831 = vmatpush2.bf16.msra.mxu0 0
      %3832 = vmatprep.subr.bf16.mxu0 0
      %3833 = vmatpush2.bf16.msra.mxu0 0
      %3834 = vmatprep.subr.bf16.mxu0 0
      %3835 = vmatpush2.bf16.msra.mxu0 0
      %3836 = vmatprep.subr.bf16.mxu0 0
      %3837 = vmatpush2.bf16.msra.mxu0 0
      %3838 = vmatprep.subr.bf16.mxu0 0
      %3839 = vmatpush2.bf16.msra.mxu0 0
      %3840 = vmatprep.subr.bf16.mxu0 0
      %3841 = vmatpush2.bf16.msra.mxu0 0
      %3842 = vmatprep.mubr.bf16.mxu0 0
      %3843 = vmatmul.mubr.bf16.gmra.mxu0 %v3665
      %v3844 = vpop.f32.mrf.mxu0
      %v3845 = vadd.f32 0.0, %v3844
      %v3846 = vpop.f32.mrf.mxu0
      %v3847 = vpop.f32.mrf.mxu0
      %v3848 = vadd.f32 0.0, %v3847
      %v3849 = vpop.f32.mrf.mxu0
      %3850 = vmatprep.mubr.bf16.mxu0 0
      %3851 = vmatmul.mubr.bf16.gmra.mxu0 %v3668
      %v3852 = vpop.f32.mrf.mxu0
      %v3853 = vadd.f32 0.0, %v3852
      %v3854 = vpop.f32.mrf.mxu0
      %v3855 = vpop.f32.mrf.mxu0
      %v3856 = vadd.f32 0.0, %v3855
      %v3857 = vpop.f32.mrf.mxu0
      %3858 = vmatprep.mubr.bf16.mxu0 0
      %3859 = vmatmul.mubr.bf16.gmra.mxu0 %v3671
      %v3860 = vpop.f32.mrf.mxu0
      %v3861 = vadd.f32 0.0, %v3860
      %v3862 = vpop.f32.mrf.mxu0
      %v3863 = vpop.f32.mrf.mxu0
      %v3864 = vpop.f32.mrf.mxu0
      %3865 = vdwg.mxu0
      %v3866 = vadd.f32 %v3508, %v3723
      %v3867 = vadd.f32 %v3509, %v3725
      %v3868 = vadd.f32 %v3510, %v3784
      %v3869 = vadd.f32 %v3511, %v3786
      %v3870 = vadd.f32 %v3512, %v3845
      %v3871 = vadd.f32 %v3513, %v3727
      %v3872 = vadd.f32 %v3514, %v3729
      %v3873 = vadd.f32 %v3515, %v3788
      %v3874 = vadd.f32 %v3516, %v3790
      %v3875 = vadd.f32 %v3517, %v3848
      %v3876 = vadd.f32 %v3518, %v3733
      %v3877 = vadd.f32 %v3519, %v3735
      %v3878 = vadd.f32 %v3520, %v3794
      %v3879 = vadd.f32 %v3521, %v3796
      %v3880 = vadd.f32 %v3522, %v3853
      %v3881 = vadd.f32 %v3523, %v3737
      %v3882 = vadd.f32 %v3524, %v3739
      %v3883 = vadd.f32 %v3525, %v3798
      %v3884 = vadd.f32 %v3526, %v3800
      %v3885 = vadd.f32 %v3527, %v3856
      %v3886 = vadd.f32 %v3528, %v3743
      %v3887 = vadd.f32 %v3529, %v3745
      %v3888 = vadd.f32 %v3530, %v3804
      %v3889 = vadd.f32 %v3531, %v3806
      %v3890 = vadd.f32 %v3532, %v3861
      %s3891 = sadd.s32 40, %s1009
      %s3892 = smul.addr %s3891, 4
      %s3893 = scalar_lea.vmem %s2, %s3892
      %v3894 = vld [vmem:[%s3893] sm:$0xf]
      %v3895 = vld [vmem:[%s3893 + $0x4] sm:$0xf]
      %v3896 = vld [vmem:[%s3893 + $0x8] sm:$0xf]
      %v3897 = vld [vmem:[%s3893 + $0xc] sm:$0xf]
      %v3898 = vld [vmem:[%s3893 + $0x10] sm:$0xf]
      %v3904 = vunpack.c.l.b16 %v3894
      %v3905 = vunpack.c.l.b16 %v3895
      %v3906 = vunpack.c.l.b16 %v3896
      %v3907 = vunpack.c.l.b16 %v3897
      %v3908 = vunpack.c.l.b16 %v3898
      %v3909 = vpack.c.b16 %v3905, %v3904
      %v3910 = vpack.c.b16 %v3907, %v3906
      %v3911 = vpack.c.b16 %v3908, %v3908
      %3912 = vrot.lane.b32.xlu0 %v1159, 120
      %v3913 = vpop.permute.xlu0 %3912
      %3914 = vrot.lane.b32.xlu0 %v1160, 120
      %v3915 = vpop.permute.xlu0 %3914
      %3916 = vrot.lane.b32.xlu0 %v1161, 120
      %v3917 = vpop.permute.xlu0 %3916
      %3918 = vrot.lane.b32.xlu0 %v1162, 120
      %v3919 = vpop.permute.xlu0 %3918
      %3920 = vrot.lane.b32.xlu0 %v1163, 120
      %v3921 = vpop.permute.xlu0 %3920
      %3922 = vrot.lane.b32.xlu0 %v1164, 120
      %v3923 = vpop.permute.xlu0 %3922
      %3924 = vrot.lane.b32.xlu0 %v1165, 120
      %v3925 = vpop.permute.xlu0 %3924
      %3926 = vrot.lane.b32.xlu0 %v1166, 120
      %v3927 = vpop.permute.xlu0 %3926
      %3928 = vrot.lane.b32.xlu0 %v1167, 120
      %v3929 = vpop.permute.xlu0 %3928
      %3930 = vrot.lane.b32.xlu0 %v1168, 120
      %v3931 = vpop.permute.xlu0 %3930
      %3932 = vrot.lane.b32.xlu0 %v1169, 120
      %v3933 = vpop.permute.xlu0 %3932
      %3934 = vrot.lane.b32.xlu0 %v1170, 120
      %v3935 = vpop.permute.xlu0 %3934
      %3936 = vrot.lane.b32.xlu0 %v1171, 120
      %v3937 = vpop.permute.xlu0 %3936
      %3938 = vrot.lane.b32.xlu0 %v1172, 120
      %v3939 = vpop.permute.xlu0 %3938
      %3940 = vrot.lane.b32.xlu0 %v1173, 120
      %v3941 = vpop.permute.xlu0 %3940
      %3942 = vrot.lane.b32.xlu0 %v1174, 120
      %v3943 = vpop.permute.xlu0 %3942
      %3944 = vrot.lane.b32.xlu0 %v1175, 120
      %v3945 = vpop.permute.xlu0 %3944
      %3946 = vrot.lane.b32.xlu0 %v1176, 120
      %v3947 = vpop.permute.xlu0 %3946
      %3948 = vrot.lane.b32.xlu0 %v1177, 120
      %v3949 = vpop.permute.xlu0 %3948
      %3950 = vrot.lane.b32.xlu0 %v1178, 120
      %v3951 = vpop.permute.xlu0 %3950
      %3952 = vrot.lane.b32.xlu0 %v1179, 120
      %v3953 = vpop.permute.xlu0 %3952
      %3954 = vrot.lane.b32.xlu0 %v1180, 120
      %v3955 = vpop.permute.xlu0 %3954
      %3956 = vrot.lane.b32.xlu0 %v1181, 120
      %v3957 = vpop.permute.xlu0 %3956
      %3958 = vrot.lane.b32.xlu0 %v1182, 120
      %v3959 = vpop.permute.xlu0 %3958
      %3960 = vrot.lane.b32.xlu0 %v1183, 120
      %v3961 = vpop.permute.xlu0 %3960
      %3962 = vrot.lane.b32.xlu0 %v1184, 120
      %v3963 = vpop.permute.xlu0 %3962
      %3964 = vrot.lane.b32.xlu0 %v1185, 120
      %v3965 = vpop.permute.xlu0 %3964
      %3966 = vrot.lane.b32.xlu0 %v1186, 120
      %v3967 = vpop.permute.xlu0 %3966
      %3968 = vrot.lane.b32.xlu0 %v1187, 120
      %v3969 = vpop.permute.xlu0 %3968
      %3970 = vrot.lane.b32.xlu0 %v1188, 120
      %v3971 = vpop.permute.xlu0 %3970
      %vm3972 = vcmask 982016
      %v3973 = vsel %vm3972, %v3913, %v3915
      %v3974 = vsel %vm3972, %v3915, %v3917
      %v3975 = vsel %vm3972, %v3917, %v3919
      %v3976 = vsel %vm3972, %v3919, %v3921
      %v3977 = vsel %vm3972, %v3923, %v3925
      %v3978 = vsel %vm3972, %v3925, %v3927
      %v3979 = vsel %vm3972, %v3927, %v3929
      %v3980 = vsel %vm3972, %v3929, %v3931
      %v3981 = vsel %vm3972, %v3933, %v3935
      %v3982 = vsel %vm3972, %v3935, %v3937
      %v3983 = vsel %vm3972, %v3937, %v3939
      %v3984 = vsel %vm3972, %v3939, %v3941
      %v3985 = vsel %vm3972, %v3943, %v3945
      %v3986 = vsel %vm3972, %v3945, %v3947
      %v3987 = vsel %vm3972, %v3947, %v3949
      %v3988 = vsel %vm3972, %v3949, %v3951
      %v3989 = vsel %vm3972, %v3953, %v3955
      %v3990 = vsel %vm3972, %v3955, %v3957
      %v3991 = vsel %vm3972, %v3957, %v3959
      %v3992 = vsel %vm3972, %v3959, %v3961
      %v3993 = vsel %vm3972, %v3963, %v3965
      %v3994 = vsel %vm3972, %v3965, %v3967
      %v3995 = vsel %vm3972, %v3967, %v3969
      %v3996 = vsel %vm3972, %v3969, %v3971
      %v4023 = vsel %vm1299, %v3909, 0
      %v4026 = vsel %vm1299, %v3910, 0
      %v4029 = vsel %vm1299, %v3911, 0
      %v4032 = vsel %vm1309, %v3993, 0
      %v4035 = vsel %vm1309, %v3994, 0
      %v4038 = vsel %vm1309, %v3995, 0
      %v4041 = vsel %vm1309, %v3996, 0
      %v4044 = vsel %vm1309, %v3971, 0
      %4046 = vmatprep.subr.bf16.mxu0 0
      %4047 = vmatpush1.bf16.msra.mxu0 0
      %4048 = vmatprep.subr.bf16.mxu0 0
      %4049 = vmatpush1.bf16.msra.mxu0 0
      %4050 = vmatprep.subr.bf16.mxu0 %v4035
      %4051 = vmatpush1.bf16.msra.mxu0 %v4032
      %4052 = vmatprep.subr.bf16.mxu0 %v3990
      %4053 = vmatpush1.bf16.msra.mxu0 %v3989
      %4054 = vmatprep.subr.bf16.mxu0 %v3986
      %4055 = vmatpush1.bf16.msra.mxu0 %v3985
      %4056 = vmatprep.subr.bf16.mxu0 %v3982
      %4057 = vmatpush1.bf16.msra.mxu0 %v3981
      %4058 = vmatprep.subr.bf16.mxu0 %v3978
      %4059 = vmatpush1.bf16.msra.mxu0 %v3977
      %4060 = vmatprep.subr.bf16.mxu0 %v3974
      %4061 = vmatpush1.bf16.msra.mxu0 %v3973
      %4062 = vmatprep.subr.bf16.mxu0 0
      %4063 = vmatpush2.bf16.msra.mxu0 0
      %4064 = vmatprep.subr.bf16.mxu0 0
      %4065 = vmatpush2.bf16.msra.mxu0 0
      %4066 = vmatprep.subr.bf16.mxu0 0
      %4067 = vmatpush2.bf16.msra.mxu0 0
      %4068 = vmatprep.subr.bf16.mxu0 0
      %4069 = vmatpush2.bf16.msra.mxu0 0
      %4070 = vmatprep.subr.bf16.mxu0 0
      %4071 = vmatpush2.bf16.msra.mxu0 0
      %4072 = vmatprep.subr.bf16.mxu0 0
      %4073 = vmatpush2.bf16.msra.mxu0 0
      %4074 = vmatprep.subr.bf16.mxu0 0
      %4075 = vmatpush2.bf16.msra.mxu0 0
      %4076 = vmatprep.subr.bf16.mxu0 0
      %4077 = vmatpush2.bf16.msra.mxu0 0
      %4078 = vmatprep.mubr.bf16.mxu0 0
      %4079 = vmatmul.mubr.bf16.gmra.mxu0 %v4023
      %v4080 = vpop.f32.mrf.mxu0
      %v4081 = vadd.f32 0.0, %v4080
      %v4082 = vpop.f32.mrf.mxu0
      %v4083 = vadd.f32 0.0, %v4082
      %v4084 = vpop.f32.mrf.mxu0
      %v4085 = vadd.f32 0.0, %v4084
      %v4086 = vpop.f32.mrf.mxu0
      %v4087 = vadd.f32 0.0, %v4086
      %4088 = vmatprep.mubr.bf16.mxu0 0
      %4089 = vmatmul.mubr.bf16.gmra.mxu0 %v4026
      %v4090 = vpop.f32.mrf.mxu0
      %v4091 = vadd.f32 0.0, %v4090
      %v4092 = vpop.f32.mrf.mxu0
      %v4093 = vadd.f32 0.0, %v4092
      %v4094 = vpop.f32.mrf.mxu0
      %v4095 = vadd.f32 0.0, %v4094
      %v4096 = vpop.f32.mrf.mxu0
      %v4097 = vadd.f32 0.0, %v4096
      %4098 = vmatprep.mubr.bf16.mxu0 0
      %4099 = vmatmul.mubr.bf16.gmra.mxu0 %v4029
      %v4100 = vpop.f32.mrf.mxu0
      %v4101 = vadd.f32 0.0, %v4100
      %v4102 = vpop.f32.mrf.mxu0
      %v4103 = vadd.f32 0.0, %v4102
      %v4104 = vpop.f32.mrf.mxu0
      %v4105 = vpop.f32.mrf.mxu0
      %4106 = vdwg.mxu0
      %4107 = vmatprep.subr.bf16.mxu0 0
      %4108 = vmatpush1.bf16.msra.mxu0 0
      %4109 = vmatprep.subr.bf16.mxu0 0
      %4110 = vmatpush1.bf16.msra.mxu0 0
      %4111 = vmatprep.subr.bf16.mxu0 %v4041
      %4112 = vmatpush1.bf16.msra.mxu0 %v4038
      %4113 = vmatprep.subr.bf16.mxu0 %v3992
      %4114 = vmatpush1.bf16.msra.mxu0 %v3991
      %4115 = vmatprep.subr.bf16.mxu0 %v3988
      %4116 = vmatpush1.bf16.msra.mxu0 %v3987
      %4117 = vmatprep.subr.bf16.mxu0 %v3984
      %4118 = vmatpush1.bf16.msra.mxu0 %v3983
      %4119 = vmatprep.subr.bf16.mxu0 %v3980
      %4120 = vmatpush1.bf16.msra.mxu0 %v3979
      %4121 = vmatprep.subr.bf16.mxu0 %v3976
      %4122 = vmatpush1.bf16.msra.mxu0 %v3975
      %4123 = vmatprep.subr.bf16.mxu0 0
      %4124 = vmatpush2.bf16.msra.mxu0 0
      %4125 = vmatprep.subr.bf16.mxu0 0
      %4126 = vmatpush2.bf16.msra.mxu0 0
      %4127 = vmatprep.subr.bf16.mxu0 0
      %4128 = vmatpush2.bf16.msra.mxu0 0
      %4129 = vmatprep.subr.bf16.mxu0 0
      %4130 = vmatpush2.bf16.msra.mxu0 0
      %4131 = vmatprep.subr.bf16.mxu0 0
      %4132 = vmatpush2.bf16.msra.mxu0 0
      %4133 = vmatprep.subr.bf16.mxu0 0
      %4134 = vmatpush2.bf16.msra.mxu0 0
      %4135 = vmatprep.subr.bf16.mxu0 0
      %4136 = vmatpush2.bf16.msra.mxu0 0
      %4137 = vmatprep.subr.bf16.mxu0 0
      %4138 = vmatpush2.bf16.msra.mxu0 0
      %4139 = vmatprep.mubr.bf16.mxu0 0
      %4140 = vmatmul.mubr.bf16.gmra.mxu0 %v4023
      %v4141 = vpop.f32.mrf.mxu0
      %v4142 = vadd.f32 0.0, %v4141
      %v4143 = vpop.f32.mrf.mxu0
      %v4144 = vadd.f32 0.0, %v4143
      %v4145 = vpop.f32.mrf.mxu0
      %v4146 = vadd.f32 0.0, %v4145
      %v4147 = vpop.f32.mrf.mxu0
      %v4148 = vadd.f32 0.0, %v4147
      %4149 = vmatprep.mubr.bf16.mxu0 0
      %4150 = vmatmul.mubr.bf16.gmra.mxu0 %v4026
      %v4151 = vpop.f32.mrf.mxu0
      %v4152 = vadd.f32 0.0, %v4151
      %v4153 = vpop.f32.mrf.mxu0
      %v4154 = vadd.f32 0.0, %v4153
      %v4155 = vpop.f32.mrf.mxu0
      %v4156 = vadd.f32 0.0, %v4155
      %v4157 = vpop.f32.mrf.mxu0
      %v4158 = vadd.f32 0.0, %v4157
      %4159 = vmatprep.mubr.bf16.mxu0 0
      %4160 = vmatmul.mubr.bf16.gmra.mxu0 %v4029
      %v4161 = vpop.f32.mrf.mxu0
      %v4162 = vadd.f32 0.0, %v4161
      %v4163 = vpop.f32.mrf.mxu0
      %v4164 = vadd.f32 0.0, %v4163
      %v4165 = vpop.f32.mrf.mxu0
      %v4166 = vpop.f32.mrf.mxu0
      %4167 = vdwg.mxu0
      %4168 = vmatprep.subr.bf16.mxu0 0
      %4169 = vmatpush1.bf16.msra.mxu0 0
      %4170 = vmatprep.subr.bf16.mxu0 0
      %4171 = vmatpush1.bf16.msra.mxu0 0
      %4172 = vmatprep.subr.bf16.mxu0 0
      %4173 = vmatpush1.bf16.msra.mxu0 %v4044
      %4174 = vmatprep.subr.bf16.mxu0 0
      %4175 = vmatpush1.bf16.msra.mxu0 %v3961
      %4176 = vmatprep.subr.bf16.mxu0 0
      %4177 = vmatpush1.bf16.msra.mxu0 %v3951
      %4178 = vmatprep.subr.bf16.mxu0 0
      %4179 = vmatpush1.bf16.msra.mxu0 %v3941
      %4180 = vmatprep.subr.bf16.mxu0 0
      %4181 = vmatpush1.bf16.msra.mxu0 %v3931
      %4182 = vmatprep.subr.bf16.mxu0 0
      %4183 = vmatpush1.bf16.msra.mxu0 %v3921
      %4184 = vmatprep.subr.bf16.mxu0 0
      %4185 = vmatpush2.bf16.msra.mxu0 0
      %4186 = vmatprep.subr.bf16.mxu0 0
      %4187 = vmatpush2.bf16.msra.mxu0 0
      %4188 = vmatprep.subr.bf16.mxu0 0
      %4189 = vmatpush2.bf16.msra.mxu0 0
      %4190 = vmatprep.subr.bf16.mxu0 0
      %4191 = vmatpush2.bf16.msra.mxu0 0
      %4192 = vmatprep.subr.bf16.mxu0 0
      %4193 = vmatpush2.bf16.msra.mxu0 0
      %4194 = vmatprep.subr.bf16.mxu0 0
      %4195 = vmatpush2.bf16.msra.mxu0 0
      %4196 = vmatprep.subr.bf16.mxu0 0
      %4197 = vmatpush2.bf16.msra.mxu0 0
      %4198 = vmatprep.subr.bf16.mxu0 0
      %4199 = vmatpush2.bf16.msra.mxu0 0
      %4200 = vmatprep.mubr.bf16.mxu0 0
      %4201 = vmatmul.mubr.bf16.gmra.mxu0 %v4023
      %v4202 = vpop.f32.mrf.mxu0
      %v4203 = vadd.f32 0.0, %v4202
      %v4204 = vpop.f32.mrf.mxu0
      %v4205 = vpop.f32.mrf.mxu0
      %v4206 = vadd.f32 0.0, %v4205
      %v4207 = vpop.f32.mrf.mxu0
      %4208 = vmatprep.mubr.bf16.mxu0 0
      %4209 = vmatmul.mubr.bf16.gmra.mxu0 %v4026
      %v4210 = vpop.f32.mrf.mxu0
      %v4211 = vadd.f32 0.0, %v4210
      %v4212 = vpop.f32.mrf.mxu0
      %v4213 = vpop.f32.mrf.mxu0
      %v4214 = vadd.f32 0.0, %v4213
      %v4215 = vpop.f32.mrf.mxu0
      %4216 = vmatprep.mubr.bf16.mxu0 0
      %4217 = vmatmul.mubr.bf16.gmra.mxu0 %v4029
      %v4218 = vpop.f32.mrf.mxu0
      %v4219 = vadd.f32 0.0, %v4218
      %v4220 = vpop.f32.mrf.mxu0
      %v4221 = vpop.f32.mrf.mxu0
      %v4222 = vpop.f32.mrf.mxu0
      %4223 = vdwg.mxu0
      %v4224 = vadd.f32 %v3866, %v4081
      %v4225 = vadd.f32 %v3867, %v4083
      %v4226 = vadd.f32 %v3868, %v4142
      %v4227 = vadd.f32 %v3869, %v4144
      %v4228 = vadd.f32 %v3870, %v4203
      %v4229 = vadd.f32 %v3871, %v4085
      %v4230 = vadd.f32 %v3872, %v4087
      %v4231 = vadd.f32 %v3873, %v4146
      %v4232 = vadd.f32 %v3874, %v4148
      %v4233 = vadd.f32 %v3875, %v4206
      %v4234 = vadd.f32 %v3876, %v4091
      %v4235 = vadd.f32 %v3877, %v4093
      %v4236 = vadd.f32 %v3878, %v4152
      %v4237 = vadd.f32 %v3879, %v4154
      %v4238 = vadd.f32 %v3880, %v4211
      %v4239 = vadd.f32 %v3881, %v4095
      %v4240 = vadd.f32 %v3882, %v4097
      %v4241 = vadd.f32 %v3883, %v4156
      %v4242 = vadd.f32 %v3884, %v4158
      %v4243 = vadd.f32 %v3885, %v4214
      %v4244 = vadd.f32 %v3886, %v4101
      %v4245 = vadd.f32 %v3887, %v4103
      %v4246 = vadd.f32 %v3888, %v4162
      %v4247 = vadd.f32 %v3889, %v4164
      %v4248 = vadd.f32 %v3890, %v4219
      %s4249 = sadd.s32 45, %s1009
      %s4250 = smul.addr %s4249, 4
      %s4251 = scalar_lea.vmem %s2, %s4250
      %v4252 = vld [vmem:[%s4251] sm:$0xf]
      %v4253 = vld [vmem:[%s4251 + $0x4] sm:$0xf]
      %v4254 = vld [vmem:[%s4251 + $0x8] sm:$0xf]
      %v4255 = vld [vmem:[%s4251 + $0xc] sm:$0xf]
      %v4256 = vld [vmem:[%s4251 + $0x10] sm:$0xf]
      %v4262 = vunpack.c.l.b16 %v4252
      %v4263 = vunpack.c.l.b16 %v4253
      %v4264 = vunpack.c.l.b16 %v4254
      %v4265 = vunpack.c.l.b16 %v4255
      %v4266 = vunpack.c.l.b16 %v4256
      %v4267 = vpack.c.b16 %v4263, %v4262
      %v4268 = vpack.c.b16 %v4265, %v4264
      %v4269 = vpack.c.b16 %v4266, %v4266
      %4270 = vrot.lane.b32.xlu0 %v1159, 119
      %v4271 = vpop.permute.xlu0 %4270
      %4272 = vrot.lane.b32.xlu0 %v1160, 119
      %v4273 = vpop.permute.xlu0 %4272
      %4274 = vrot.lane.b32.xlu0 %v1161, 119
      %v4275 = vpop.permute.xlu0 %4274
      %4276 = vrot.lane.b32.xlu0 %v1162, 119
      %v4277 = vpop.permute.xlu0 %4276
      %4278 = vrot.lane.b32.xlu0 %v1163, 119
      %v4279 = vpop.permute.xlu0 %4278
      %4280 = vrot.lane.b32.xlu0 %v1164, 119
      %v4281 = vpop.permute.xlu0 %4280
      %4282 = vrot.lane.b32.xlu0 %v1165, 119
      %v4283 = vpop.permute.xlu0 %4282
      %4284 = vrot.lane.b32.xlu0 %v1166, 119
      %v4285 = vpop.permute.xlu0 %4284
      %4286 = vrot.lane.b32.xlu0 %v1167, 119
      %v4287 = vpop.permute.xlu0 %4286
      %4288 = vrot.lane.b32.xlu0 %v1168, 119
      %v4289 = vpop.permute.xlu0 %4288
      %4290 = vrot.lane.b32.xlu0 %v1169, 119
      %v4291 = vpop.permute.xlu0 %4290
      %4292 = vrot.lane.b32.xlu0 %v1170, 119
      %v4293 = vpop.permute.xlu0 %4292
      %4294 = vrot.lane.b32.xlu0 %v1171, 119
      %v4295 = vpop.permute.xlu0 %4294
      %4296 = vrot.lane.b32.xlu0 %v1172, 119
      %v4297 = vpop.permute.xlu0 %4296
      %4298 = vrot.lane.b32.xlu0 %v1173, 119
      %v4299 = vpop.permute.xlu0 %4298
      %4300 = vrot.lane.b32.xlu0 %v1174, 119
      %v4301 = vpop.permute.xlu0 %4300
      %4302 = vrot.lane.b32.xlu0 %v1175, 119
      %v4303 = vpop.permute.xlu0 %4302
      %4304 = vrot.lane.b32.xlu0 %v1176, 119
      %v4305 = vpop.permute.xlu0 %4304
      %4306 = vrot.lane.b32.xlu0 %v1177, 119
      %v4307 = vpop.permute.xlu0 %4306
      %4308 = vrot.lane.b32.xlu0 %v1178, 119
      %v4309 = vpop.permute.xlu0 %4308
      %4310 = vrot.lane.b32.xlu0 %v1179, 119
      %v4311 = vpop.permute.xlu0 %4310
      %4312 = vrot.lane.b32.xlu0 %v1180, 119
      %v4313 = vpop.permute.xlu0 %4312
      %4314 = vrot.lane.b32.xlu0 %v1181, 119
      %v4315 = vpop.permute.xlu0 %4314
      %4316 = vrot.lane.b32.xlu0 %v1182, 119
      %v4317 = vpop.permute.xlu0 %4316
      %4318 = vrot.lane.b32.xlu0 %v1183, 119
      %v4319 = vpop.permute.xlu0 %4318
      %4320 = vrot.lane.b32.xlu0 %v1184, 119
      %v4321 = vpop.permute.xlu0 %4320
      %4322 = vrot.lane.b32.xlu0 %v1185, 119
      %v4323 = vpop.permute.xlu0 %4322
      %4324 = vrot.lane.b32.xlu0 %v1186, 119
      %v4325 = vpop.permute.xlu0 %4324
      %4326 = vrot.lane.b32.xlu0 %v1187, 119
      %v4327 = vpop.permute.xlu0 %4326
      %4328 = vrot.lane.b32.xlu0 %v1188, 119
      %v4329 = vpop.permute.xlu0 %4328
      %vm4330 = vcmask 973824
      %v4331 = vsel %vm4330, %v4271, %v4273
      %v4332 = vsel %vm4330, %v4273, %v4275
      %v4333 = vsel %vm4330, %v4275, %v4277
      %v4334 = vsel %vm4330, %v4277, %v4279
      %v4335 = vsel %vm4330, %v4281, %v4283
      %v4336 = vsel %vm4330, %v4283, %v4285
      %v4337 = vsel %vm4330, %v4285, %v4287
      %v4338 = vsel %vm4330, %v4287, %v4289
      %v4339 = vsel %vm4330, %v4291, %v4293
      %v4340 = vsel %vm4330, %v4293, %v4295
      %v4341 = vsel %vm4330, %v4295, %v4297
      %v4342 = vsel %vm4330, %v4297, %v4299
      %v4343 = vsel %vm4330, %v4301, %v4303
      %v4344 = vsel %vm4330, %v4303, %v4305
      %v4345 = vsel %vm4330, %v4305, %v4307
      %v4346 = vsel %vm4330, %v4307, %v4309
      %v4347 = vsel %vm4330, %v4311, %v4313
      %v4348 = vsel %vm4330, %v4313, %v4315
      %v4349 = vsel %vm4330, %v4315, %v4317
      %v4350 = vsel %vm4330, %v4317, %v4319
      %v4351 = vsel %vm4330, %v4321, %v4323
      %v4352 = vsel %vm4330, %v4323, %v4325
      %v4353 = vsel %vm4330, %v4325, %v4327
      %v4354 = vsel %vm4330, %v4327, %v4329
      %v4381 = vsel %vm1299, %v4267, 0
      %v4384 = vsel %vm1299, %v4268, 0
      %v4387 = vsel %vm1299, %v4269, 0
      %v4390 = vsel %vm1309, %v4351, 0
      %v4393 = vsel %vm1309, %v4352, 0
      %v4396 = vsel %vm1309, %v4353, 0
      %v4399 = vsel %vm1309, %v4354, 0
      %v4402 = vsel %vm1309, %v4329, 0
      %4404 = vmatprep.subr.bf16.mxu0 0
      %4405 = vmatpush1.bf16.msra.mxu0 0
      %4406 = vmatprep.subr.bf16.mxu0 0
      %4407 = vmatpush1.bf16.msra.mxu0 0
      %4408 = vmatprep.subr.bf16.mxu0 %v4393
      %4409 = vmatpush1.bf16.msra.mxu0 %v4390
      %4410 = vmatprep.subr.bf16.mxu0 %v4348
      %4411 = vmatpush1.bf16.msra.mxu0 %v4347
      %4412 = vmatprep.subr.bf16.mxu0 %v4344
      %4413 = vmatpush1.bf16.msra.mxu0 %v4343
      %4414 = vmatprep.subr.bf16.mxu0 %v4340
      %4415 = vmatpush1.bf16.msra.mxu0 %v4339
      %4416 = vmatprep.subr.bf16.mxu0 %v4336
      %4417 = vmatpush1.bf16.msra.mxu0 %v4335
      %4418 = vmatprep.subr.bf16.mxu0 %v4332
      %4419 = vmatpush1.bf16.msra.mxu0 %v4331
      %4420 = vmatprep.subr.bf16.mxu0 0
      %4421 = vmatpush2.bf16.msra.mxu0 0
      %4422 = vmatprep.subr.bf16.mxu0 0
      %4423 = vmatpush2.bf16.msra.mxu0 0
      %4424 = vmatprep.subr.bf16.mxu0 0
      %4425 = vmatpush2.bf16.msra.mxu0 0
      %4426 = vmatprep.subr.bf16.mxu0 0
      %4427 = vmatpush2.bf16.msra.mxu0 0
      %4428 = vmatprep.subr.bf16.mxu0 0
      %4429 = vmatpush2.bf16.msra.mxu0 0
      %4430 = vmatprep.subr.bf16.mxu0 0
      %4431 = vmatpush2.bf16.msra.mxu0 0
      %4432 = vmatprep.subr.bf16.mxu0 0
      %4433 = vmatpush2.bf16.msra.mxu0 0
      %4434 = vmatprep.subr.bf16.mxu0 0
      %4435 = vmatpush2.bf16.msra.mxu0 0
      %4436 = vmatprep.mubr.bf16.mxu0 0
      %4437 = vmatmul.mubr.bf16.gmra.mxu0 %v4381
      %v4438 = vpop.f32.mrf.mxu0
      %v4439 = vadd.f32 0.0, %v4438
      %v4440 = vpop.f32.mrf.mxu0
      %v4441 = vadd.f32 0.0, %v4440
      %v4442 = vpop.f32.mrf.mxu0
      %v4443 = vadd.f32 0.0, %v4442
      %v4444 = vpop.f32.mrf.mxu0
      %v4445 = vadd.f32 0.0, %v4444
      %4446 = vmatprep.mubr.bf16.mxu0 0
      %4447 = vmatmul.mubr.bf16.gmra.mxu0 %v4384
      %v4448 = vpop.f32.mrf.mxu0
      %v4449 = vadd.f32 0.0, %v4448
      %v4450 = vpop.f32.mrf.mxu0
      %v4451 = vadd.f32 0.0, %v4450
      %v4452 = vpop.f32.mrf.mxu0
      %v4453 = vadd.f32 0.0, %v4452
      %v4454 = vpop.f32.mrf.mxu0
      %v4455 = vadd.f32 0.0, %v4454
      %4456 = vmatprep.mubr.bf16.mxu0 0
      %4457 = vmatmul.mubr.bf16.gmra.mxu0 %v4387
      %v4458 = vpop.f32.mrf.mxu0
      %v4459 = vadd.f32 0.0, %v4458
      %v4460 = vpop.f32.mrf.mxu0
      %v4461 = vadd.f32 0.0, %v4460
      %v4462 = vpop.f32.mrf.mxu0
      %v4463 = vpop.f32.mrf.mxu0
      %4464 = vdwg.mxu0
      %4465 = vmatprep.subr.bf16.mxu0 0
      %4466 = vmatpush1.bf16.msra.mxu0 0
      %4467 = vmatprep.subr.bf16.mxu0 0
      %4468 = vmatpush1.bf16.msra.mxu0 0
      %4469 = vmatprep.subr.bf16.mxu0 %v4399
      %4470 = vmatpush1.bf16.msra.mxu0 %v4396
      %4471 = vmatprep.subr.bf16.mxu0 %v4350
      %4472 = vmatpush1.bf16.msra.mxu0 %v4349
      %4473 = vmatprep.subr.bf16.mxu0 %v4346
      %4474 = vmatpush1.bf16.msra.mxu0 %v4345
      %4475 = vmatprep.subr.bf16.mxu0 %v4342
      %4476 = vmatpush1.bf16.msra.mxu0 %v4341
      %4477 = vmatprep.subr.bf16.mxu0 %v4338
      %4478 = vmatpush1.bf16.msra.mxu0 %v4337
      %4479 = vmatprep.subr.bf16.mxu0 %v4334
      %4480 = vmatpush1.bf16.msra.mxu0 %v4333
      %4481 = vmatprep.subr.bf16.mxu0 0
      %4482 = vmatpush2.bf16.msra.mxu0 0
      %4483 = vmatprep.subr.bf16.mxu0 0
      %4484 = vmatpush2.bf16.msra.mxu0 0
      %4485 = vmatprep.subr.bf16.mxu0 0
      %4486 = vmatpush2.bf16.msra.mxu0 0
      %4487 = vmatprep.subr.bf16.mxu0 0
      %4488 = vmatpush2.bf16.msra.mxu0 0
      %4489 = vmatprep.subr.bf16.mxu0 0
      %4490 = vmatpush2.bf16.msra.mxu0 0
      %4491 = vmatprep.subr.bf16.mxu0 0
      %4492 = vmatpush2.bf16.msra.mxu0 0
      %4493 = vmatprep.subr.bf16.mxu0 0
      %4494 = vmatpush2.bf16.msra.mxu0 0
      %4495 = vmatprep.subr.bf16.mxu0 0
      %4496 = vmatpush2.bf16.msra.mxu0 0
      %4497 = vmatprep.mubr.bf16.mxu0 0
      %4498 = vmatmul.mubr.bf16.gmra.mxu0 %v4381
      %v4499 = vpop.f32.mrf.mxu0
      %v4500 = vadd.f32 0.0, %v4499
      %v4501 = vpop.f32.mrf.mxu0
      %v4502 = vadd.f32 0.0, %v4501
      %v4503 = vpop.f32.mrf.mxu0
      %v4504 = vadd.f32 0.0, %v4503
      %v4505 = vpop.f32.mrf.mxu0
      %v4506 = vadd.f32 0.0, %v4505
      %4507 = vmatprep.mubr.bf16.mxu0 0
      %4508 = vmatmul.mubr.bf16.gmra.mxu0 %v4384
      %v4509 = vpop.f32.mrf.mxu0
      %v4510 = vadd.f32 0.0, %v4509
      %v4511 = vpop.f32.mrf.mxu0
      %v4512 = vadd.f32 0.0, %v4511
      %v4513 = vpop.f32.mrf.mxu0
      %v4514 = vadd.f32 0.0, %v4513
      %v4515 = vpop.f32.mrf.mxu0
      %v4516 = vadd.f32 0.0, %v4515
      %4517 = vmatprep.mubr.bf16.mxu0 0
      %4518 = vmatmul.mubr.bf16.gmra.mxu0 %v4387
      %v4519 = vpop.f32.mrf.mxu0
      %v4520 = vadd.f32 0.0, %v4519
      %v4521 = vpop.f32.mrf.mxu0
      %v4522 = vadd.f32 0.0, %v4521
      %v4523 = vpop.f32.mrf.mxu0
      %v4524 = vpop.f32.mrf.mxu0
      %4525 = vdwg.mxu0
      %4526 = vmatprep.subr.bf16.mxu0 0
      %4527 = vmatpush1.bf16.msra.mxu0 0
      %4528 = vmatprep.subr.bf16.mxu0 0
      %4529 = vmatpush1.bf16.msra.mxu0 0
      %4530 = vmatprep.subr.bf16.mxu0 0
      %4531 = vmatpush1.bf16.msra.mxu0 %v4402
      %4532 = vmatprep.subr.bf16.mxu0 0
      %4533 = vmatpush1.bf16.msra.mxu0 %v4319
      %4534 = vmatprep.subr.bf16.mxu0 0
      %4535 = vmatpush1.bf16.msra.mxu0 %v4309
      %4536 = vmatprep.subr.bf16.mxu0 0
      %4537 = vmatpush1.bf16.msra.mxu0 %v4299
      %4538 = vmatprep.subr.bf16.mxu0 0
      %4539 = vmatpush1.bf16.msra.mxu0 %v4289
      %4540 = vmatprep.subr.bf16.mxu0 0
      %4541 = vmatpush1.bf16.msra.mxu0 %v4279
      %4542 = vmatprep.subr.bf16.mxu0 0
      %4543 = vmatpush2.bf16.msra.mxu0 0
      %4544 = vmatprep.subr.bf16.mxu0 0
      %4545 = vmatpush2.bf16.msra.mxu0 0
      %4546 = vmatprep.subr.bf16.mxu0 0
      %4547 = vmatpush2.bf16.msra.mxu0 0
      %4548 = vmatprep.subr.bf16.mxu0 0
      %4549 = vmatpush2.bf16.msra.mxu0 0
      %4550 = vmatprep.subr.bf16.mxu0 0
      %4551 = vmatpush2.bf16.msra.mxu0 0
      %4552 = vmatprep.subr.bf16.mxu0 0
      %4553 = vmatpush2.bf16.msra.mxu0 0
      %4554 = vmatprep.subr.bf16.mxu0 0
      %4555 = vmatpush2.bf16.msra.mxu0 0
      %4556 = vmatprep.subr.bf16.mxu0 0
      %4557 = vmatpush2.bf16.msra.mxu0 0
      %4558 = vmatprep.mubr.bf16.mxu0 0
      %4559 = vmatmul.mubr.bf16.gmra.mxu0 %v4381
      %v4560 = vpop.f32.mrf.mxu0
      %v4561 = vadd.f32 0.0, %v4560
      %v4562 = vpop.f32.mrf.mxu0
      %v4563 = vpop.f32.mrf.mxu0
      %v4564 = vadd.f32 0.0, %v4563
      %v4565 = vpop.f32.mrf.mxu0
      %4566 = vmatprep.mubr.bf16.mxu0 0
      %4567 = vmatmul.mubr.bf16.gmra.mxu0 %v4384
      %v4568 = vpop.f32.mrf.mxu0
      %v4569 = vadd.f32 0.0, %v4568
      %v4570 = vpop.f32.mrf.mxu0
      %v4571 = vpop.f32.mrf.mxu0
      %v4572 = vadd.f32 0.0, %v4571
      %v4573 = vpop.f32.mrf.mxu0
      %4574 = vmatprep.mubr.bf16.mxu0 0
      %4575 = vmatmul.mubr.bf16.gmra.mxu0 %v4387
      %v4576 = vpop.f32.mrf.mxu0
      %v4577 = vadd.f32 0.0, %v4576
      %v4578 = vpop.f32.mrf.mxu0
      %v4579 = vpop.f32.mrf.mxu0
      %v4580 = vpop.f32.mrf.mxu0
      %4581 = vdwg.mxu0
      %v4582 = vadd.f32 %v4224, %v4439
      %v4583 = vadd.f32 %v4225, %v4441
      %v4584 = vadd.f32 %v4226, %v4500
      %v4585 = vadd.f32 %v4227, %v4502
      %v4586 = vadd.f32 %v4228, %v4561
      %v4587 = vadd.f32 %v4229, %v4443
      %v4588 = vadd.f32 %v4230, %v4445
      %v4589 = vadd.f32 %v4231, %v4504
      %v4590 = vadd.f32 %v4232, %v4506
      %v4591 = vadd.f32 %v4233, %v4564
      %v4592 = vadd.f32 %v4234, %v4449
      %v4593 = vadd.f32 %v4235, %v4451
      %v4594 = vadd.f32 %v4236, %v4510
      %v4595 = vadd.f32 %v4237, %v4512
      %v4596 = vadd.f32 %v4238, %v4569
      %v4597 = vadd.f32 %v4239, %v4453
      %v4598 = vadd.f32 %v4240, %v4455
      %v4599 = vadd.f32 %v4241, %v4514
      %v4600 = vadd.f32 %v4242, %v4516
      %v4601 = vadd.f32 %v4243, %v4572
      %v4602 = vadd.f32 %v4244, %v4459
      %v4603 = vadd.f32 %v4245, %v4461
      %v4604 = vadd.f32 %v4246, %v4520
      %v4605 = vadd.f32 %v4247, %v4522
      %v4606 = vadd.f32 %v4248, %v4577
      %s4607 = sadd.s32 50, %s1009
      %s4608 = smul.addr %s4607, 4
      %s4609 = scalar_lea.vmem %s2, %s4608
      %v4610 = vld [vmem:[%s4609] sm:$0xf]
      %v4611 = vld [vmem:[%s4609 + $0x4] sm:$0xf]
      %v4612 = vld [vmem:[%s4609 + $0x8] sm:$0xf]
      %v4613 = vld [vmem:[%s4609 + $0xc] sm:$0xf]
      %v4614 = vld [vmem:[%s4609 + $0x10] sm:$0xf]
      %v4620 = vunpack.c.l.b16 %v4610
      %v4621 = vunpack.c.l.b16 %v4611
      %v4622 = vunpack.c.l.b16 %v4612
      %v4623 = vunpack.c.l.b16 %v4613
      %v4624 = vunpack.c.l.b16 %v4614
      %v4625 = vpack.c.b16 %v4621, %v4620
      %v4626 = vpack.c.b16 %v4623, %v4622
      %v4627 = vpack.c.b16 %v4624, %v4624
      %4628 = vrot.lane.b32.xlu0 %v1159, 118
      %v4629 = vpop.permute.xlu0 %4628
      %4630 = vrot.lane.b32.xlu0 %v1160, 118
      %v4631 = vpop.permute.xlu0 %4630
      %4632 = vrot.lane.b32.xlu0 %v1161, 118
      %v4633 = vpop.permute.xlu0 %4632
      %4634 = vrot.lane.b32.xlu0 %v1162, 118
      %v4635 = vpop.permute.xlu0 %4634
      %4636 = vrot.lane.b32.xlu0 %v1163, 118
      %v4637 = vpop.permute.xlu0 %4636
      %4638 = vrot.lane.b32.xlu0 %v1164, 118
      %v4639 = vpop.permute.xlu0 %4638
      %4640 = vrot.lane.b32.xlu0 %v1165, 118
      %v4641 = vpop.permute.xlu0 %4640
      %4642 = vrot.lane.b32.xlu0 %v1166, 118
      %v4643 = vpop.permute.xlu0 %4642
      %4644 = vrot.lane.b32.xlu0 %v1167, 118
      %v4645 = vpop.permute.xlu0 %4644
      %4646 = vrot.lane.b32.xlu0 %v1168, 118
      %v4647 = vpop.permute.xlu0 %4646
      %4648 = vrot.lane.b32.xlu0 %v1169, 118
      %v4649 = vpop.permute.xlu0 %4648
      %4650 = vrot.lane.b32.xlu0 %v1170, 118
      %v4651 = vpop.permute.xlu0 %4650
      %4652 = vrot.lane.b32.xlu0 %v1171, 118
      %v4653 = vpop.permute.xlu0 %4652
      %4654 = vrot.lane.b32.xlu0 %v1172, 118
      %v4655 = vpop.permute.xlu0 %4654
      %4656 = vrot.lane.b32.xlu0 %v1173, 118
      %v4657 = vpop.permute.xlu0 %4656
      %4658 = vrot.lane.b32.xlu0 %v1174, 118
      %v4659 = vpop.permute.xlu0 %4658
      %4660 = vrot.lane.b32.xlu0 %v1175, 118
      %v4661 = vpop.permute.xlu0 %4660
      %4662 = vrot.lane.b32.xlu0 %v1176, 118
      %v4663 = vpop.permute.xlu0 %4662
      %4664 = vrot.lane.b32.xlu0 %v1177, 118
      %v4665 = vpop.permute.xlu0 %4664
      %4666 = vrot.lane.b32.xlu0 %v1178, 118
      %v4667 = vpop.permute.xlu0 %4666
      %4668 = vrot.lane.b32.xlu0 %v1179, 118
      %v4669 = vpop.permute.xlu0 %4668
      %4670 = vrot.lane.b32.xlu0 %v1180, 118
      %v4671 = vpop.permute.xlu0 %4670
      %4672 = vrot.lane.b32.xlu0 %v1181, 118
      %v4673 = vpop.permute.xlu0 %4672
      %4674 = vrot.lane.b32.xlu0 %v1182, 118
      %v4675 = vpop.permute.xlu0 %4674
      %4676 = vrot.lane.b32.xlu0 %v1183, 118
      %v4677 = vpop.permute.xlu0 %4676
      %4678 = vrot.lane.b32.xlu0 %v1184, 118
      %v4679 = vpop.permute.xlu0 %4678
      %4680 = vrot.lane.b32.xlu0 %v1185, 118
      %v4681 = vpop.permute.xlu0 %4680
      %4682 = vrot.lane.b32.xlu0 %v1186, 118
      %v4683 = vpop.permute.xlu0 %4682
      %4684 = vrot.lane.b32.xlu0 %v1187, 118
      %v4685 = vpop.permute.xlu0 %4684
      %4686 = vrot.lane.b32.xlu0 %v1188, 118
      %v4687 = vpop.permute.xlu0 %4686
      %vm4688 = vcmask 965632
      %v4689 = vsel %vm4688, %v4629, %v4631
      %v4690 = vsel %vm4688, %v4631, %v4633
      %v4691 = vsel %vm4688, %v4633, %v4635
      %v4692 = vsel %vm4688, %v4635, %v4637
      %v4693 = vsel %vm4688, %v4639, %v4641
      %v4694 = vsel %vm4688, %v4641, %v4643
      %v4695 = vsel %vm4688, %v4643, %v4645
      %v4696 = vsel %vm4688, %v4645, %v4647
      %v4697 = vsel %vm4688, %v4649, %v4651
      %v4698 = vsel %vm4688, %v4651, %v4653
      %v4699 = vsel %vm4688, %v4653, %v4655
      %v4700 = vsel %vm4688, %v4655, %v4657
      %v4701 = vsel %vm4688, %v4659, %v4661
      %v4702 = vsel %vm4688, %v4661, %v4663
      %v4703 = vsel %vm4688, %v4663, %v4665
      %v4704 = vsel %vm4688, %v4665, %v4667
      %v4705 = vsel %vm4688, %v4669, %v4671
      %v4706 = vsel %vm4688, %v4671, %v4673
      %v4707 = vsel %vm4688, %v4673, %v4675
      %v4708 = vsel %vm4688, %v4675, %v4677
      %v4709 = vsel %vm4688, %v4679, %v4681
      %v4710 = vsel %vm4688, %v4681, %v4683
      %v4711 = vsel %vm4688, %v4683, %v4685
      %v4712 = vsel %vm4688, %v4685, %v4687
      %v4739 = vsel %vm1299, %v4625, 0
      %v4742 = vsel %vm1299, %v4626, 0
      %v4745 = vsel %vm1299, %v4627, 0
      %v4748 = vsel %vm1309, %v4709, 0
      %v4751 = vsel %vm1309, %v4710, 0
      %v4754 = vsel %vm1309, %v4711, 0
      %v4757 = vsel %vm1309, %v4712, 0
      %v4760 = vsel %vm1309, %v4687, 0
      %4762 = vmatprep.subr.bf16.mxu0 0
      %4763 = vmatpush1.bf16.msra.mxu0 0
      %4764 = vmatprep.subr.bf16.mxu0 0
      %4765 = vmatpush1.bf16.msra.mxu0 0
      %4766 = vmatprep.subr.bf16.mxu0 %v4751
      %4767 = vmatpush1.bf16.msra.mxu0 %v4748
      %4768 = vmatprep.subr.bf16.mxu0 %v4706
      %4769 = vmatpush1.bf16.msra.mxu0 %v4705
      %4770 = vmatprep.subr.bf16.mxu0 %v4702
      %4771 = vmatpush1.bf16.msra.mxu0 %v4701
      %4772 = vmatprep.subr.bf16.mxu0 %v4698
      %4773 = vmatpush1.bf16.msra.mxu0 %v4697
      %4774 = vmatprep.subr.bf16.mxu0 %v4694
      %4775 = vmatpush1.bf16.msra.mxu0 %v4693
      %4776 = vmatprep.subr.bf16.mxu0 %v4690
      %4777 = vmatpush1.bf16.msra.mxu0 %v4689
      %4778 = vmatprep.subr.bf16.mxu0 0
      %4779 = vmatpush2.bf16.msra.mxu0 0
      %4780 = vmatprep.subr.bf16.mxu0 0
      %4781 = vmatpush2.bf16.msra.mxu0 0
      %4782 = vmatprep.subr.bf16.mxu0 0
      %4783 = vmatpush2.bf16.msra.mxu0 0
      %4784 = vmatprep.subr.bf16.mxu0 0
      %4785 = vmatpush2.bf16.msra.mxu0 0
      %4786 = vmatprep.subr.bf16.mxu0 0
      %4787 = vmatpush2.bf16.msra.mxu0 0
      %4788 = vmatprep.subr.bf16.mxu0 0
      %4789 = vmatpush2.bf16.msra.mxu0 0
      %4790 = vmatprep.subr.bf16.mxu0 0
      %4791 = vmatpush2.bf16.msra.mxu0 0
      %4792 = vmatprep.subr.bf16.mxu0 0
      %4793 = vmatpush2.bf16.msra.mxu0 0
      %4794 = vmatprep.mubr.bf16.mxu0 0
      %4795 = vmatmul.mubr.bf16.gmra.mxu0 %v4739
      %v4796 = vpop.f32.mrf.mxu0
      %v4797 = vadd.f32 0.0, %v4796
      %v4798 = vpop.f32.mrf.mxu0
      %v4799 = vadd.f32 0.0, %v4798
      %v4800 = vpop.f32.mrf.mxu0
      %v4801 = vadd.f32 0.0, %v4800
      %v4802 = vpop.f32.mrf.mxu0
      %v4803 = vadd.f32 0.0, %v4802
      %4804 = vmatprep.mubr.bf16.mxu0 0
      %4805 = vmatmul.mubr.bf16.gmra.mxu0 %v4742
      %v4806 = vpop.f32.mrf.mxu0
      %v4807 = vadd.f32 0.0, %v4806
      %v4808 = vpop.f32.mrf.mxu0
      %v4809 = vadd.f32 0.0, %v4808
      %v4810 = vpop.f32.mrf.mxu0
      %v4811 = vadd.f32 0.0, %v4810
      %v4812 = vpop.f32.mrf.mxu0
      %v4813 = vadd.f32 0.0, %v4812
      %4814 = vmatprep.mubr.bf16.mxu0 0
      %4815 = vmatmul.mubr.bf16.gmra.mxu0 %v4745
      %v4816 = vpop.f32.mrf.mxu0
      %v4817 = vadd.f32 0.0, %v4816
      %v4818 = vpop.f32.mrf.mxu0
      %v4819 = vadd.f32 0.0, %v4818
      %v4820 = vpop.f32.mrf.mxu0
      %v4821 = vpop.f32.mrf.mxu0
      %4822 = vdwg.mxu0
      %4823 = vmatprep.subr.bf16.mxu0 0
      %4824 = vmatpush1.bf16.msra.mxu0 0
      %4825 = vmatprep.subr.bf16.mxu0 0
      %4826 = vmatpush1.bf16.msra.mxu0 0
      %4827 = vmatprep.subr.bf16.mxu0 %v4757
      %4828 = vmatpush1.bf16.msra.mxu0 %v4754
      %4829 = vmatprep.subr.bf16.mxu0 %v4708
      %4830 = vmatpush1.bf16.msra.mxu0 %v4707
      %4831 = vmatprep.subr.bf16.mxu0 %v4704
      %4832 = vmatpush1.bf16.msra.mxu0 %v4703
      %4833 = vmatprep.subr.bf16.mxu0 %v4700
      %4834 = vmatpush1.bf16.msra.mxu0 %v4699
      %4835 = vmatprep.subr.bf16.mxu0 %v4696
      %4836 = vmatpush1.bf16.msra.mxu0 %v4695
      %4837 = vmatprep.subr.bf16.mxu0 %v4692
      %4838 = vmatpush1.bf16.msra.mxu0 %v4691
      %4839 = vmatprep.subr.bf16.mxu0 0
      %4840 = vmatpush2.bf16.msra.mxu0 0
      %4841 = vmatprep.subr.bf16.mxu0 0
      %4842 = vmatpush2.bf16.msra.mxu0 0
      %4843 = vmatprep.subr.bf16.mxu0 0
      %4844 = vmatpush2.bf16.msra.mxu0 0
      %4845 = vmatprep.subr.bf16.mxu0 0
      %4846 = vmatpush2.bf16.msra.mxu0 0
      %4847 = vmatprep.subr.bf16.mxu0 0
      %4848 = vmatpush2.bf16.msra.mxu0 0
      %4849 = vmatprep.subr.bf16.mxu0 0
      %4850 = vmatpush2.bf16.msra.mxu0 0
      %4851 = vmatprep.subr.bf16.mxu0 0
      %4852 = vmatpush2.bf16.msra.mxu0 0
      %4853 = vmatprep.subr.bf16.mxu0 0
      %4854 = vmatpush2.bf16.msra.mxu0 0
      %4855 = vmatprep.mubr.bf16.mxu0 0
      %4856 = vmatmul.mubr.bf16.gmra.mxu0 %v4739
      %v4857 = vpop.f32.mrf.mxu0
      %v4858 = vadd.f32 0.0, %v4857
      %v4859 = vpop.f32.mrf.mxu0
      %v4860 = vadd.f32 0.0, %v4859
      %v4861 = vpop.f32.mrf.mxu0
      %v4862 = vadd.f32 0.0, %v4861
      %v4863 = vpop.f32.mrf.mxu0
      %v4864 = vadd.f32 0.0, %v4863
      %4865 = vmatprep.mubr.bf16.mxu0 0
      %4866 = vmatmul.mubr.bf16.gmra.mxu0 %v4742
      %v4867 = vpop.f32.mrf.mxu0
      %v4868 = vadd.f32 0.0, %v4867
      %v4869 = vpop.f32.mrf.mxu0
      %v4870 = vadd.f32 0.0, %v4869
      %v4871 = vpop.f32.mrf.mxu0
      %v4872 = vadd.f32 0.0, %v4871
      %v4873 = vpop.f32.mrf.mxu0
      %v4874 = vadd.f32 0.0, %v4873
      %4875 = vmatprep.mubr.bf16.mxu0 0
      %4876 = vmatmul.mubr.bf16.gmra.mxu0 %v4745
      %v4877 = vpop.f32.mrf.mxu0
      %v4878 = vadd.f32 0.0, %v4877
      %v4879 = vpop.f32.mrf.mxu0
      %v4880 = vadd.f32 0.0, %v4879
      %v4881 = vpop.f32.mrf.mxu0
      %v4882 = vpop.f32.mrf.mxu0
      %4883 = vdwg.mxu0
      %4884 = vmatprep.subr.bf16.mxu0 0
      %4885 = vmatpush1.bf16.msra.mxu0 0
      %4886 = vmatprep.subr.bf16.mxu0 0
      %4887 = vmatpush1.bf16.msra.mxu0 0
      %4888 = vmatprep.subr.bf16.mxu0 0
      %4889 = vmatpush1.bf16.msra.mxu0 %v4760
      %4890 = vmatprep.subr.bf16.mxu0 0
      %4891 = vmatpush1.bf16.msra.mxu0 %v4677
      %4892 = vmatprep.subr.bf16.mxu0 0
      %4893 = vmatpush1.bf16.msra.mxu0 %v4667
      %4894 = vmatprep.subr.bf16.mxu0 0
      %4895 = vmatpush1.bf16.msra.mxu0 %v4657
      %4896 = vmatprep.subr.bf16.mxu0 0
      %4897 = vmatpush1.bf16.msra.mxu0 %v4647
      %4898 = vmatprep.subr.bf16.mxu0 0
      %4899 = vmatpush1.bf16.msra.mxu0 %v4637
      %4900 = vmatprep.subr.bf16.mxu0 0
      %4901 = vmatpush2.bf16.msra.mxu0 0
      %4902 = vmatprep.subr.bf16.mxu0 0
      %4903 = vmatpush2.bf16.msra.mxu0 0
      %4904 = vmatprep.subr.bf16.mxu0 0
      %4905 = vmatpush2.bf16.msra.mxu0 0
      %4906 = vmatprep.subr.bf16.mxu0 0
      %4907 = vmatpush2.bf16.msra.mxu0 0
      %4908 = vmatprep.subr.bf16.mxu0 0
      %4909 = vmatpush2.bf16.msra.mxu0 0
      %4910 = vmatprep.subr.bf16.mxu0 0
      %4911 = vmatpush2.bf16.msra.mxu0 0
      %4912 = vmatprep.subr.bf16.mxu0 0
      %4913 = vmatpush2.bf16.msra.mxu0 0
      %4914 = vmatprep.subr.bf16.mxu0 0
      %4915 = vmatpush2.bf16.msra.mxu0 0
      %4916 = vmatprep.mubr.bf16.mxu0 0
      %4917 = vmatmul.mubr.bf16.gmra.mxu0 %v4739
      %v4918 = vpop.f32.mrf.mxu0
      %v4919 = vadd.f32 0.0, %v4918
      %v4920 = vpop.f32.mrf.mxu0
      %v4921 = vpop.f32.mrf.mxu0
      %v4922 = vadd.f32 0.0, %v4921
      %v4923 = vpop.f32.mrf.mxu0
      %4924 = vmatprep.mubr.bf16.mxu0 0
      %4925 = vmatmul.mubr.bf16.gmra.mxu0 %v4742
      %v4926 = vpop.f32.mrf.mxu0
      %v4927 = vadd.f32 0.0, %v4926
      %v4928 = vpop.f32.mrf.mxu0
      %v4929 = vpop.f32.mrf.mxu0
      %v4930 = vadd.f32 0.0, %v4929
      %v4931 = vpop.f32.mrf.mxu0
      %4932 = vmatprep.mubr.bf16.mxu0 0
      %4933 = vmatmul.mubr.bf16.gmra.mxu0 %v4745
      %v4934 = vpop.f32.mrf.mxu0
      %v4935 = vadd.f32 0.0, %v4934
      %v4936 = vpop.f32.mrf.mxu0
      %v4937 = vpop.f32.mrf.mxu0
      %v4938 = vpop.f32.mrf.mxu0
      %4939 = vdwg.mxu0
      %v4940 = vadd.f32 %v4582, %v4797
      %v4941 = vadd.f32 %v4583, %v4799
      %v4942 = vadd.f32 %v4584, %v4858
      %v4943 = vadd.f32 %v4585, %v4860
      %v4944 = vadd.f32 %v4586, %v4919
      %v4945 = vadd.f32 %v4587, %v4801
      %v4946 = vadd.f32 %v4588, %v4803
      %v4947 = vadd.f32 %v4589, %v4862
      %v4948 = vadd.f32 %v4590, %v4864
      %v4949 = vadd.f32 %v4591, %v4922
      %v4950 = vadd.f32 %v4592, %v4807
      %v4951 = vadd.f32 %v4593, %v4809
      %v4952 = vadd.f32 %v4594, %v4868
      %v4953 = vadd.f32 %v4595, %v4870
      %v4954 = vadd.f32 %v4596, %v4927
      %v4955 = vadd.f32 %v4597, %v4811
      %v4956 = vadd.f32 %v4598, %v4813
      %v4957 = vadd.f32 %v4599, %v4872
      %v4958 = vadd.f32 %v4600, %v4874
      %v4959 = vadd.f32 %v4601, %v4930
      %v4960 = vadd.f32 %v4602, %v4817
      %v4961 = vadd.f32 %v4603, %v4819
      %v4962 = vadd.f32 %v4604, %v4878
      %v4963 = vadd.f32 %v4605, %v4880
      %v4964 = vadd.f32 %v4606, %v4935
      %s4965 = sadd.s32 55, %s1009
      %s4966 = smul.addr %s4965, 4
      %s4967 = scalar_lea.vmem %s2, %s4966
      %v4968 = vld [vmem:[%s4967] sm:$0xf]
      %v4969 = vld [vmem:[%s4967 + $0x4] sm:$0xf]
      %v4970 = vld [vmem:[%s4967 + $0x8] sm:$0xf]
      %v4971 = vld [vmem:[%s4967 + $0xc] sm:$0xf]
      %v4972 = vld [vmem:[%s4967 + $0x10] sm:$0xf]
      %v4978 = vunpack.c.l.b16 %v4968
      %v4979 = vunpack.c.l.b16 %v4969
      %v4980 = vunpack.c.l.b16 %v4970
      %v4981 = vunpack.c.l.b16 %v4971
      %v4982 = vunpack.c.l.b16 %v4972
      %v4983 = vpack.c.b16 %v4979, %v4978
      %v4984 = vpack.c.b16 %v4981, %v4980
      %v4985 = vpack.c.b16 %v4982, %v4982
      %4986 = vrot.lane.b32.xlu0 %v1159, 117
      %v4987 = vpop.permute.xlu0 %4986
      %4988 = vrot.lane.b32.xlu0 %v1160, 117
      %v4989 = vpop.permute.xlu0 %4988
      %4990 = vrot.lane.b32.xlu0 %v1161, 117
      %v4991 = vpop.permute.xlu0 %4990
      %4992 = vrot.lane.b32.xlu0 %v1162, 117
      %v4993 = vpop.permute.xlu0 %4992
      %4994 = vrot.lane.b32.xlu0 %v1163, 117
      %v4995 = vpop.permute.xlu0 %4994
      %4996 = vrot.lane.b32.xlu0 %v1164, 117
      %v4997 = vpop.permute.xlu0 %4996
      %4998 = vrot.lane.b32.xlu0 %v1165, 117
      %v4999 = vpop.permute.xlu0 %4998
      %5000 = vrot.lane.b32.xlu0 %v1166, 117
      %v5001 = vpop.permute.xlu0 %5000
      %5002 = vrot.lane.b32.xlu0 %v1167, 117
      %v5003 = vpop.permute.xlu0 %5002
      %5004 = vrot.lane.b32.xlu0 %v1168, 117
      %v5005 = vpop.permute.xlu0 %5004
      %5006 = vrot.lane.b32.xlu0 %v1169, 117
      %v5007 = vpop.permute.xlu0 %5006
      %5008 = vrot.lane.b32.xlu0 %v1170, 117
      %v5009 = vpop.permute.xlu0 %5008
      %5010 = vrot.lane.b32.xlu0 %v1171, 117
      %v5011 = vpop.permute.xlu0 %5010
      %5012 = vrot.lane.b32.xlu0 %v1172, 117
      %v5013 = vpop.permute.xlu0 %5012
      %5014 = vrot.lane.b32.xlu0 %v1173, 117
      %v5015 = vpop.permute.xlu0 %5014
      %5016 = vrot.lane.b32.xlu0 %v1174, 117
      %v5017 = vpop.permute.xlu0 %5016
      %5018 = vrot.lane.b32.xlu0 %v1175, 117
      %v5019 = vpop.permute.xlu0 %5018
      %5020 = vrot.lane.b32.xlu0 %v1176, 117
      %v5021 = vpop.permute.xlu0 %5020
      %5022 = vrot.lane.b32.xlu0 %v1177, 117
      %v5023 = vpop.permute.xlu0 %5022
      %5024 = vrot.lane.b32.xlu0 %v1178, 117
      %v5025 = vpop.permute.xlu0 %5024
      %5026 = vrot.lane.b32.xlu0 %v1179, 117
      %v5027 = vpop.permute.xlu0 %5026
      %5028 = vrot.lane.b32.xlu0 %v1180, 117
      %v5029 = vpop.permute.xlu0 %5028
      %5030 = vrot.lane.b32.xlu0 %v1181, 117
      %v5031 = vpop.permute.xlu0 %5030
      %5032 = vrot.lane.b32.xlu0 %v1182, 117
      %v5033 = vpop.permute.xlu0 %5032
      %5034 = vrot.lane.b32.xlu0 %v1183, 117
      %v5035 = vpop.permute.xlu0 %5034
      %5036 = vrot.lane.b32.xlu0 %v1184, 117
      %v5037 = vpop.permute.xlu0 %5036
      %5038 = vrot.lane.b32.xlu0 %v1185, 117
      %v5039 = vpop.permute.xlu0 %5038
      %5040 = vrot.lane.b32.xlu0 %v1186, 117
      %v5041 = vpop.permute.xlu0 %5040
      %5042 = vrot.lane.b32.xlu0 %v1187, 117
      %v5043 = vpop.permute.xlu0 %5042
      %5044 = vrot.lane.b32.xlu0 %v1188, 117
      %v5045 = vpop.permute.xlu0 %5044
      %vm5046 = vcmask 957440
      %v5047 = vsel %vm5046, %v4987, %v4989
      %v5048 = vsel %vm5046, %v4989, %v4991
      %v5049 = vsel %vm5046, %v4991, %v4993
      %v5050 = vsel %vm5046, %v4993, %v4995
      %v5051 = vsel %vm5046, %v4997, %v4999
      %v5052 = vsel %vm5046, %v4999, %v5001
      %v5053 = vsel %vm5046, %v5001, %v5003
      %v5054 = vsel %vm5046, %v5003, %v5005
      %v5055 = vsel %vm5046, %v5007, %v5009
      %v5056 = vsel %vm5046, %v5009, %v5011
      %v5057 = vsel %vm5046, %v5011, %v5013
      %v5058 = vsel %vm5046, %v5013, %v5015
      %v5059 = vsel %vm5046, %v5017, %v5019
      %v5060 = vsel %vm5046, %v5019, %v5021
      %v5061 = vsel %vm5046, %v5021, %v5023
      %v5062 = vsel %vm5046, %v5023, %v5025
      %v5063 = vsel %vm5046, %v5027, %v5029
      %v5064 = vsel %vm5046, %v5029, %v5031
      %v5065 = vsel %vm5046, %v5031, %v5033
      %v5066 = vsel %vm5046, %v5033, %v5035
      %v5067 = vsel %vm5046, %v5037, %v5039
      %v5068 = vsel %vm5046, %v5039, %v5041
      %v5069 = vsel %vm5046, %v5041, %v5043
      %v5070 = vsel %vm5046, %v5043, %v5045
      %v5097 = vsel %vm1299, %v4983, 0
      %v5100 = vsel %vm1299, %v4984, 0
      %v5103 = vsel %vm1299, %v4985, 0
      %v5106 = vsel %vm1309, %v5067, 0
      %v5109 = vsel %vm1309, %v5068, 0
      %v5112 = vsel %vm1309, %v5069, 0
      %v5115 = vsel %vm1309, %v5070, 0
      %v5118 = vsel %vm1309, %v5045, 0
      %5120 = vmatprep.subr.bf16.mxu0 0
      %5121 = vmatpush1.bf16.msra.mxu0 0
      %5122 = vmatprep.subr.bf16.mxu0 0
      %5123 = vmatpush1.bf16.msra.mxu0 0
      %5124 = vmatprep.subr.bf16.mxu0 %v5109
      %5125 = vmatpush1.bf16.msra.mxu0 %v5106
      %5126 = vmatprep.subr.bf16.mxu0 %v5064
      %5127 = vmatpush1.bf16.msra.mxu0 %v5063
      %5128 = vmatprep.subr.bf16.mxu0 %v5060
      %5129 = vmatpush1.bf16.msra.mxu0 %v5059
      %5130 = vmatprep.subr.bf16.mxu0 %v5056
      %5131 = vmatpush1.bf16.msra.mxu0 %v5055
      %5132 = vmatprep.subr.bf16.mxu0 %v5052
      %5133 = vmatpush1.bf16.msra.mxu0 %v5051
      %5134 = vmatprep.subr.bf16.mxu0 %v5048
      %5135 = vmatpush1.bf16.msra.mxu0 %v5047
      %5136 = vmatprep.subr.bf16.mxu0 0
      %5137 = vmatpush2.bf16.msra.mxu0 0
      %5138 = vmatprep.subr.bf16.mxu0 0
      %5139 = vmatpush2.bf16.msra.mxu0 0
      %5140 = vmatprep.subr.bf16.mxu0 0
      %5141 = vmatpush2.bf16.msra.mxu0 0
      %5142 = vmatprep.subr.bf16.mxu0 0
      %5143 = vmatpush2.bf16.msra.mxu0 0
      %5144 = vmatprep.subr.bf16.mxu0 0
      %5145 = vmatpush2.bf16.msra.mxu0 0
      %5146 = vmatprep.subr.bf16.mxu0 0
      %5147 = vmatpush2.bf16.msra.mxu0 0
      %5148 = vmatprep.subr.bf16.mxu0 0
      %5149 = vmatpush2.bf16.msra.mxu0 0
      %5150 = vmatprep.subr.bf16.mxu0 0
      %5151 = vmatpush2.bf16.msra.mxu0 0
      %5152 = vmatprep.mubr.bf16.mxu0 0
      %5153 = vmatmul.mubr.bf16.gmra.mxu0 %v5097
      %v5154 = vpop.f32.mrf.mxu0
      %v5155 = vadd.f32 0.0, %v5154
      %v5156 = vpop.f32.mrf.mxu0
      %v5157 = vadd.f32 0.0, %v5156
      %v5158 = vpop.f32.mrf.mxu0
      %v5159 = vadd.f32 0.0, %v5158
      %v5160 = vpop.f32.mrf.mxu0
      %v5161 = vadd.f32 0.0, %v5160
      %5162 = vmatprep.mubr.bf16.mxu0 0
      %5163 = vmatmul.mubr.bf16.gmra.mxu0 %v5100
      %v5164 = vpop.f32.mrf.mxu0
      %v5165 = vadd.f32 0.0, %v5164
      %v5166 = vpop.f32.mrf.mxu0
      %v5167 = vadd.f32 0.0, %v5166
      %v5168 = vpop.f32.mrf.mxu0
      %v5169 = vadd.f32 0.0, %v5168
      %v5170 = vpop.f32.mrf.mxu0
      %v5171 = vadd.f32 0.0, %v5170
      %5172 = vmatprep.mubr.bf16.mxu0 0
      %5173 = vmatmul.mubr.bf16.gmra.mxu0 %v5103
      %v5174 = vpop.f32.mrf.mxu0
      %v5175 = vadd.f32 0.0, %v5174
      %v5176 = vpop.f32.mrf.mxu0
      %v5177 = vadd.f32 0.0, %v5176
      %v5178 = vpop.f32.mrf.mxu0
      %v5179 = vpop.f32.mrf.mxu0
      %5180 = vdwg.mxu0
      %5181 = vmatprep.subr.bf16.mxu0 0
      %5182 = vmatpush1.bf16.msra.mxu0 0
      %5183 = vmatprep.subr.bf16.mxu0 0
      %5184 = vmatpush1.bf16.msra.mxu0 0
      %5185 = vmatprep.subr.bf16.mxu0 %v5115
      %5186 = vmatpush1.bf16.msra.mxu0 %v5112
      %5187 = vmatprep.subr.bf16.mxu0 %v5066
      %5188 = vmatpush1.bf16.msra.mxu0 %v5065
      %5189 = vmatprep.subr.bf16.mxu0 %v5062
      %5190 = vmatpush1.bf16.msra.mxu0 %v5061
      %5191 = vmatprep.subr.bf16.mxu0 %v5058
      %5192 = vmatpush1.bf16.msra.mxu0 %v5057
      %5193 = vmatprep.subr.bf16.mxu0 %v5054
      %5194 = vmatpush1.bf16.msra.mxu0 %v5053
      %5195 = vmatprep.subr.bf16.mxu0 %v5050
      %5196 = vmatpush1.bf16.msra.mxu0 %v5049
      %5197 = vmatprep.subr.bf16.mxu0 0
      %5198 = vmatpush2.bf16.msra.mxu0 0
      %5199 = vmatprep.subr.bf16.mxu0 0
      %5200 = vmatpush2.bf16.msra.mxu0 0
      %5201 = vmatprep.subr.bf16.mxu0 0
      %5202 = vmatpush2.bf16.msra.mxu0 0
      %5203 = vmatprep.subr.bf16.mxu0 0
      %5204 = vmatpush2.bf16.msra.mxu0 0
      %5205 = vmatprep.subr.bf16.mxu0 0
      %5206 = vmatpush2.bf16.msra.mxu0 0
      %5207 = vmatprep.subr.bf16.mxu0 0
      %5208 = vmatpush2.bf16.msra.mxu0 0
      %5209 = vmatprep.subr.bf16.mxu0 0
      %5210 = vmatpush2.bf16.msra.mxu0 0
      %5211 = vmatprep.subr.bf16.mxu0 0
      %5212 = vmatpush2.bf16.msra.mxu0 0
      %5213 = vmatprep.mubr.bf16.mxu0 0
      %5214 = vmatmul.mubr.bf16.gmra.mxu0 %v5097
      %v5215 = vpop.f32.mrf.mxu0
      %v5216 = vadd.f32 0.0, %v5215
      %v5217 = vpop.f32.mrf.mxu0
      %v5218 = vadd.f32 0.0, %v5217
      %v5219 = vpop.f32.mrf.mxu0
      %v5220 = vadd.f32 0.0, %v5219
      %v5221 = vpop.f32.mrf.mxu0
      %v5222 = vadd.f32 0.0, %v5221
      %5223 = vmatprep.mubr.bf16.mxu0 0
      %5224 = vmatmul.mubr.bf16.gmra.mxu0 %v5100
      %v5225 = vpop.f32.mrf.mxu0
      %v5226 = vadd.f32 0.0, %v5225
      %v5227 = vpop.f32.mrf.mxu0
      %v5228 = vadd.f32 0.0, %v5227
      %v5229 = vpop.f32.mrf.mxu0
      %v5230 = vadd.f32 0.0, %v5229
      %v5231 = vpop.f32.mrf.mxu0
      %v5232 = vadd.f32 0.0, %v5231
      %5233 = vmatprep.mubr.bf16.mxu0 0
      %5234 = vmatmul.mubr.bf16.gmra.mxu0 %v5103
      %v5235 = vpop.f32.mrf.mxu0
      %v5236 = vadd.f32 0.0, %v5235
      %v5237 = vpop.f32.mrf.mxu0
      %v5238 = vadd.f32 0.0, %v5237
      %v5239 = vpop.f32.mrf.mxu0
      %v5240 = vpop.f32.mrf.mxu0
      %5241 = vdwg.mxu0
      %5242 = vmatprep.subr.bf16.mxu0 0
      %5243 = vmatpush1.bf16.msra.mxu0 0
      %5244 = vmatprep.subr.bf16.mxu0 0
      %5245 = vmatpush1.bf16.msra.mxu0 0
      %5246 = vmatprep.subr.bf16.mxu0 0
      %5247 = vmatpush1.bf16.msra.mxu0 %v5118
      %5248 = vmatprep.subr.bf16.mxu0 0
      %5249 = vmatpush1.bf16.msra.mxu0 %v5035
      %5250 = vmatprep.subr.bf16.mxu0 0
      %5251 = vmatpush1.bf16.msra.mxu0 %v5025
      %5252 = vmatprep.subr.bf16.mxu0 0
      %5253 = vmatpush1.bf16.msra.mxu0 %v5015
      %5254 = vmatprep.subr.bf16.mxu0 0
      %5255 = vmatpush1.bf16.msra.mxu0 %v5005
      %5256 = vmatprep.subr.bf16.mxu0 0
      %5257 = vmatpush1.bf16.msra.mxu0 %v4995
      %5258 = vmatprep.subr.bf16.mxu0 0
      %5259 = vmatpush2.bf16.msra.mxu0 0
      %5260 = vmatprep.subr.bf16.mxu0 0
      %5261 = vmatpush2.bf16.msra.mxu0 0
      %5262 = vmatprep.subr.bf16.mxu0 0
      %5263 = vmatpush2.bf16.msra.mxu0 0
      %5264 = vmatprep.subr.bf16.mxu0 0
      %5265 = vmatpush2.bf16.msra.mxu0 0
      %5266 = vmatprep.subr.bf16.mxu0 0
      %5267 = vmatpush2.bf16.msra.mxu0 0
      %5268 = vmatprep.subr.bf16.mxu0 0
      %5269 = vmatpush2.bf16.msra.mxu0 0
      %5270 = vmatprep.subr.bf16.mxu0 0
      %5271 = vmatpush2.bf16.msra.mxu0 0
      %5272 = vmatprep.subr.bf16.mxu0 0
      %5273 = vmatpush2.bf16.msra.mxu0 0
      %5274 = vmatprep.mubr.bf16.mxu0 0
      %5275 = vmatmul.mubr.bf16.gmra.mxu0 %v5097
      %v5276 = vpop.f32.mrf.mxu0
      %v5277 = vadd.f32 0.0, %v5276
      %v5278 = vpop.f32.mrf.mxu0
      %v5279 = vpop.f32.mrf.mxu0
      %v5280 = vadd.f32 0.0, %v5279
      %v5281 = vpop.f32.mrf.mxu0
      %5282 = vmatprep.mubr.bf16.mxu0 0
      %5283 = vmatmul.mubr.bf16.gmra.mxu0 %v5100
      %v5284 = vpop.f32.mrf.mxu0
      %v5285 = vadd.f32 0.0, %v5284
      %v5286 = vpop.f32.mrf.mxu0
      %v5287 = vpop.f32.mrf.mxu0
      %v5288 = vadd.f32 0.0, %v5287
      %v5289 = vpop.f32.mrf.mxu0
      %5290 = vmatprep.mubr.bf16.mxu0 0
      %5291 = vmatmul.mubr.bf16.gmra.mxu0 %v5103
      %v5292 = vpop.f32.mrf.mxu0
      %v5293 = vadd.f32 0.0, %v5292
      %v5294 = vpop.f32.mrf.mxu0
      %v5295 = vpop.f32.mrf.mxu0
      %v5296 = vpop.f32.mrf.mxu0
      %5297 = vdwg.mxu0
      %v5298 = vadd.f32 %v4940, %v5155
      %v5299 = vadd.f32 %v4941, %v5157
      %v5300 = vadd.f32 %v4942, %v5216
      %v5301 = vadd.f32 %v4943, %v5218
      %v5302 = vadd.f32 %v4944, %v5277
      %v5303 = vadd.f32 %v4945, %v5159
      %v5304 = vadd.f32 %v4946, %v5161
      %v5305 = vadd.f32 %v4947, %v5220
      %v5306 = vadd.f32 %v4948, %v5222
      %v5307 = vadd.f32 %v4949, %v5280
      %v5308 = vadd.f32 %v4950, %v5165
      %v5309 = vadd.f32 %v4951, %v5167
      %v5310 = vadd.f32 %v4952, %v5226
      %v5311 = vadd.f32 %v4953, %v5228
      %v5312 = vadd.f32 %v4954, %v5285
      %v5313 = vadd.f32 %v4955, %v5169
      %v5314 = vadd.f32 %v4956, %v5171
      %v5315 = vadd.f32 %v4957, %v5230
      %v5316 = vadd.f32 %v4958, %v5232
      %v5317 = vadd.f32 %v4959, %v5288
      %v5318 = vadd.f32 %v4960, %v5175
      %v5319 = vadd.f32 %v4961, %v5177
      %v5320 = vadd.f32 %v4962, %v5236
      %v5321 = vadd.f32 %v4963, %v5238
      %v5322 = vadd.f32 %v4964, %v5293
      %s5323 = smul.u32 %s25, 25
      %s5324 = smul.addr %s5323, 8
      %s5325 = scalar_lea.vmem %s3, %s5324
      %v5326 = vld [vmem:[%s5325] sm:$0xff]
      %v5327 = vld [vmem:[%s5325 + $0x8] sm:$0xff]
      %v5328 = vld [vmem:[%s5325 + $0x10] sm:$0xff]
      %v5329 = vld [vmem:[%s5325 + $0x18] sm:$0xff]
      %v5330 = vld [vmem:[%s5325 + $0x20] sm:$0xff]
      %v5331 = vld [vmem:[%s5325 + $0x28] sm:$0xff]
      %v5332 = vld [vmem:[%s5325 + $0x30] sm:$0xff]
      %v5333 = vld [vmem:[%s5325 + $0x38] sm:$0xff]
      %v5334 = vld [vmem:[%s5325 + $0x40] sm:$0xff]
      %v5335 = vld [vmem:[%s5325 + $0x48] sm:$0xff]
      %v5336 = vld [vmem:[%s5325 + $0x50] sm:$0xff]
      %v5337 = vld [vmem:[%s5325 + $0x58] sm:$0xff]
      %v5338 = vld [vmem:[%s5325 + $0x60] sm:$0xff]
      %v5339 = vld [vmem:[%s5325 + $0x68] sm:$0xff]
      %v5340 = vld [vmem:[%s5325 + $0x70] sm:$0xff]
      %v5341 = vld [vmem:[%s5325 + $0x78] sm:$0xff]
      %v5342 = vld [vmem:[%s5325 + $0x80] sm:$0xff]
      %v5343 = vld [vmem:[%s5325 + $0x88] sm:$0xff]
      %v5344 = vld [vmem:[%s5325 + $0x90] sm:$0xff]
      %v5345 = vld [vmem:[%s5325 + $0x98] sm:$0xff]
      %v5346 = vld [vmem:[%s5325 + $0xa0] sm:$0xff]
      %v5347 = vld [vmem:[%s5325 + $0xa8] sm:$0xff]
      %v5348 = vld [vmem:[%s5325 + $0xb0] sm:$0xff]
      %v5349 = vld [vmem:[%s5325 + $0xb8] sm:$0xff]
      %v5350 = vld [vmem:[%s5325 + $0xc0] sm:$0xff]
      %v5351 = vld [vmem:[%s8] sm:$0xff]
      %v5352 = vld [vmem:[%s8 + $0x8] sm:$0xff]
      %v5353 = vld [vmem:[%s8 + $0x10] sm:$0xff]
      %v5354 = vld [vmem:[%s8 + $0x18] sm:$0xff]
      %v5355 = vld [vmem:[%s8 + $0x20] sm:$0xff]
      %v5356 = vld [vmem:[%s8 + $0x28] sm:$0xff]
      %v5357 = vld [vmem:[%s8 + $0x30] sm:$0xff]
      %v5358 = vld [vmem:[%s8 + $0x38] sm:$0xff]
      %v5359 = vld [vmem:[%s8 + $0x40] sm:$0xff]
      %v5360 = vld [vmem:[%s8 + $0x48] sm:$0xff]
      %v5361 = vld [vmem:[%s8 + $0x50] sm:$0xff]
      %v5362 = vld [vmem:[%s8 + $0x58] sm:$0xff]
      %v5363 = vld [vmem:[%s8 + $0x60] sm:$0xff]
      %v5364 = vld [vmem:[%s8 + $0x68] sm:$0xff]
      %v5365 = vld [vmem:[%s8 + $0x70] sm:$0xff]
      %v5366 = vld [vmem:[%s8 + $0x78] sm:$0xff]
      %v5367 = vld [vmem:[%s8 + $0x80] sm:$0xff]
      %v5368 = vld [vmem:[%s8 + $0x88] sm:$0xff]
      %v5369 = vld [vmem:[%s8 + $0x90] sm:$0xff]
      %v5370 = vld [vmem:[%s8 + $0x98] sm:$0xff]
      %v5371 = vld [vmem:[%s8 + $0xa0] sm:$0xff]
      %v5372 = vld [vmem:[%s8 + $0xa8] sm:$0xff]
      %v5373 = vld [vmem:[%s8 + $0xb0] sm:$0xff]
      %v5374 = vld [vmem:[%s8 + $0xb8] sm:$0xff]
      %v5375 = vld [vmem:[%s8 + $0xc0] sm:$0xff]
      %v5376 = vld [vmem:[%s8 + $0xc8] sm:$0xff]
      %v5377 = vld [vmem:[%s8 + $0xd0] sm:$0xff]
      %v5378 = vld [vmem:[%s8 + $0xd8] sm:$0xff]
      %v5379 = vld [vmem:[%s8 + $0xe0] sm:$0xff]
      %v5380 = vld [vmem:[%s8 + $0xe8] sm:$0xff]
      %v5381 = vld [vmem:[%s8 + $0xf0] sm:$0xff]
      %v5382 = vld [vmem:[%s8 + $0xf8] sm:$0xff]
      %v5383 = vld [vmem:[%s8 + $0x100] sm:$0xff]
      %v5384 = vld [vmem:[%s8 + $0x108] sm:$0xff]
      %v5385 = vld [vmem:[%s8 + $0x110] sm:$0xff]
      %v5386 = vld [vmem:[%s8 + $0x118] sm:$0xff]
      %v5387 = vld [vmem:[%s8 + $0x120] sm:$0xff]
      %v5388 = vld [vmem:[%s8 + $0x128] sm:$0xff]
      %v5389 = vld [vmem:[%s8 + $0x130] sm:$0xff]
      %v5390 = vld [vmem:[%s8 + $0x138] sm:$0xff]
      %v5391 = vld [vmem:[%s8 + $0x140] sm:$0xff]
      %v5392 = vld [vmem:[%s8 + $0x148] sm:$0xff]
      %v5393 = vld [vmem:[%s8 + $0x150] sm:$0xff]
      %v5394 = vld [vmem:[%s8 + $0x158] sm:$0xff]
      %v5395 = vld [vmem:[%s8 + $0x160] sm:$0xff]
      %v5396 = vld [vmem:[%s8 + $0x168] sm:$0xff]
      %v5397 = vld [vmem:[%s8 + $0x170] sm:$0xff]
      %v5398 = vld [vmem:[%s8 + $0x178] sm:$0xff]
      %v5399 = vld [vmem:[%s8 + $0x180] sm:$0xff]
      %v5400 = vld [vmem:[%s8 + $0x188] sm:$0xff]
      %v5401 = vld [vmem:[%s8 + $0x190] sm:$0xff]
      %v5402 = vld [vmem:[%s8 + $0x198] sm:$0xff]
      %v5403 = vld [vmem:[%s8 + $0x1a0] sm:$0xff]
      %v5404 = vld [vmem:[%s8 + $0x1a8] sm:$0xff]
      %v5405 = vld [vmem:[%s8 + $0x1b0] sm:$0xff]
      %v5406 = vld [vmem:[%s8 + $0x1b8] sm:$0xff]
      %v5407 = vld [vmem:[%s8 + $0x1c0] sm:$0xff]
      %v5408 = vld [vmem:[%s8 + $0x1c8] sm:$0xff]
      %v5409 = vld [vmem:[%s8 + $0x1d0] sm:$0xff]
      %v5410 = vld [vmem:[%s8 + $0x1d8] sm:$0xff]
      %v5411 = vld [vmem:[%s8 + $0x1e0] sm:$0xff]
      %v5412 = vld [vmem:[%s8 + $0x1e8] sm:$0xff]
      %v5413 = vld [vmem:[%s8 + $0x1f0] sm:$0xff]
      %v5414 = vld [vmem:[%s8 + $0x1f8] sm:$0xff]
      %v5415 = vld [vmem:[%s8 + $0x200] sm:$0xff]
      %v5416 = vld [vmem:[%s8 + $0x208] sm:$0xff]
      %v5417 = vld [vmem:[%s8 + $0x210] sm:$0xff]
      %v5418 = vld [vmem:[%s8 + $0x218] sm:$0xff]
      %v5419 = vld [vmem:[%s8 + $0x220] sm:$0xff]
      %v5420 = vld [vmem:[%s8 + $0x228] sm:$0x3]
      %s5421 = smul.u32 %s25, 48
      %s5422 = scalar_lea.vmem %s4, %s5421
      %v5423 = vld [vmem:[%s5422] sm:$0xff]
      %v5424 = vld [vmem:[%s5422 + $0x8] sm:$0xff]
      %v5425 = vld [vmem:[%s5422 + $0x10] sm:$0xf]
      %v5426 = vld [vmem:[%s5422 + $0x18] sm:$0xff]
      %v5427 = vld [vmem:[%s5422 + $0x20] sm:$0xff]
      %v5428 = vld [vmem:[%s5422 + $0x28] sm:$0xf]
      %s5429 = scalar_lea.vmem %s5, %s5421
      %v5430 = vld [vmem:[%s5429] sm:$0xff]
      %v5431 = vld [vmem:[%s5429 + $0x8] sm:$0xff]
      %v5432 = vld [vmem:[%s5429 + $0x10] sm:$0xf]
      %v5433 = vld [vmem:[%s5429 + $0x18] sm:$0xff]
      %v5434 = vld [vmem:[%s5429 + $0x20] sm:$0xff]
      %v5435 = vld [vmem:[%s5429 + $0x28] sm:$0xf]
      %s5436 = scalar_lea.vmem %s6, %s5421
      %v5437 = vld [vmem:[%s5436] sm:$0xff]
      %v5438 = vld [vmem:[%s5436 + $0x8] sm:$0xff]
      %v5439 = vld [vmem:[%s5436 + $0x10] sm:$0xf]
      %v5440 = vld [vmem:[%s5436 + $0x18] sm:$0xff]
      %v5441 = vld [vmem:[%s5436 + $0x20] sm:$0xff]
      %v5442 = vld [vmem:[%s5436 + $0x28] sm:$0xf]
      %s5443 = smul.u32 %s25, 160
      %s5444 = scalar_lea.vmem %s7, %s5443
      %v5445 = vld [vmem:[%s5444] sm:$0xff]
      %v5446 = vld [vmem:[%s5444 + $0x8] sm:$0xff]
      %v5447 = vld [vmem:[%s5444 + $0x10] sm:$0xff]
      %v5448 = vld [vmem:[%s5444 + $0x18] sm:$0xff]
      %v5449 = vld [vmem:[%s5444 + $0x20] sm:$0xff]
      %v5450 = vld [vmem:[%s5444 + $0x28] sm:$0xff]
      %v5451 = vld [vmem:[%s5444 + $0x30] sm:$0xff]
      %v5452 = vld [vmem:[%s5444 + $0x38] sm:$0xff]
      %v5453 = vld [vmem:[%s5444 + $0x40] sm:$0xff]
      %v5454 = vld [vmem:[%s5444 + $0x48] sm:$0xff]
      %v5455 = vld [vmem:[%s5444 + $0x50] sm:$0xff]
      %v5456 = vld [vmem:[%s5444 + $0x58] sm:$0xff]
      %v5457 = vld [vmem:[%s5444 + $0x60] sm:$0xff]
      %v5458 = vld [vmem:[%s5444 + $0x68] sm:$0xff]
      %v5459 = vld [vmem:[%s5444 + $0x70] sm:$0xff]
      %v5460 = vld [vmem:[%s5444 + $0x78] sm:$0xff]
      %v5461 = vld [vmem:[%s5444 + $0x80] sm:$0xff]
      %v5462 = vld [vmem:[%s5444 + $0x88] sm:$0xff]
      %v5463 = vld [vmem:[%s5444 + $0x90] sm:$0xff]
      %v5464 = vld [vmem:[%s5444 + $0x98] sm:$0xff]
      %v5465 = vadd.f32 %v5298, %v5326
      %v5466 = vadd.f32 %v5299, %v5327
      %v5467 = vadd.f32 %v5300, %v5328
      %v5468 = vadd.f32 %v5301, %v5329
      %v5469 = vadd.f32 %v5302, %v5330
      %v5470 = vadd.f32 %v5303, %v5331
      %v5471 = vadd.f32 %v5304, %v5332
      %v5472 = vadd.f32 %v5305, %v5333
      %v5473 = vadd.f32 %v5306, %v5334
      %v5474 = vadd.f32 %v5307, %v5335
      %v5475 = vadd.f32 %v5308, %v5336
      %v5476 = vadd.f32 %v5309, %v5337
      %v5477 = vadd.f32 %v5310, %v5338
      %v5478 = vadd.f32 %v5311, %v5339
      %v5479 = vadd.f32 %v5312, %v5340
      %v5480 = vadd.f32 %v5313, %v5341
      %v5481 = vadd.f32 %v5314, %v5342
      %v5482 = vadd.f32 %v5315, %v5343
      %v5483 = vadd.f32 %v5316, %v5344
      %v5484 = vadd.f32 %v5317, %v5345
      %v5485 = vadd.f32 %v5318, %v5346
      %v5486 = vadd.f32 %v5319, %v5347
      %v5487 = vadd.f32 %v5320, %v5348
      %v5488 = vadd.f32 %v5321, %v5349
      %v5489 = vadd.f32 %v5322, %v5350
      %v5490 = vmul.f32 %v5465, %v5465
      %v5491 = vmul.f32 %v5466, %v5466
      %v5492 = vmul.f32 %v5467, %v5467
      %v5493 = vmul.f32 %v5468, %v5468
      %v5494 = vmul.f32 %v5469, %v5469
      %v5495 = vmul.f32 %v5470, %v5470
      %v5496 = vmul.f32 %v5471, %v5471
      %v5497 = vmul.f32 %v5472, %v5472
      %v5498 = vmul.f32 %v5473, %v5473
      %v5499 = vmul.f32 %v5474, %v5474
      %v5500 = vmul.f32 %v5475, %v5475
      %v5501 = vmul.f32 %v5476, %v5476
      %v5502 = vmul.f32 %v5477, %v5477
      %v5503 = vmul.f32 %v5478, %v5478
      %v5504 = vmul.f32 %v5479, %v5479
      %v5505 = vmul.f32 %v5480, %v5480
      %v5506 = vmul.f32 %v5481, %v5481
      %v5507 = vmul.f32 %v5482, %v5482
      %v5508 = vmul.f32 %v5483, %v5483
      %v5509 = vmul.f32 %v5484, %v5484
      %v5510 = vmul.f32 %v5485, %v5485
      %v5511 = vmul.f32 %v5486, %v5486
      %v5512 = vmul.f32 %v5487, %v5487
      %v5513 = vmul.f32 %v5488, %v5488
      %v5514 = vmul.f32 %v5489, %v5489
      %v5530 = vrot.slane %v5500, 4
      %v5531 = vrot.slane %v5505, 4
      %v5532 = vsel %vm1309, %v5530, %v5531
      %v5533 = vrot.slane %v5501, 4
      %v5534 = vrot.slane %v5506, 4
      %v5535 = vsel %vm1309, %v5533, %v5534
      %v5536 = vrot.slane %v5502, 4
      %v5537 = vrot.slane %v5507, 4
      %v5538 = vsel %vm1309, %v5536, %v5537
      %v5539 = vrot.slane %v5503, 4
      %v5540 = vrot.slane %v5508, 4
      %v5541 = vsel %vm1309, %v5539, %v5540
      %v5542 = vrot.slane %v5504, 4
      %v5543 = vrot.slane %v5509, 4
      %v5544 = vsel %vm1309, %v5542, %v5543
      %v5545 = vrot.slane %v5510, 4
      %v5546 = vsel %vm1309, %v5531, %v5545
      %v5547 = vrot.slane %v5511, 4
      %v5548 = vsel %vm1309, %v5534, %v5547
      %v5549 = vrot.slane %v5512, 4
      %v5550 = vsel %vm1309, %v5537, %v5549
      %v5551 = vrot.slane %v5513, 4
      %v5552 = vsel %vm1309, %v5540, %v5551
      %v5553 = vrot.slane %v5514, 4
      %v5554 = vsel %vm1309, %v5543, %v5553
      %v5570 = vadd.f32 %v5490, %v5532
      %v5571 = vadd.f32 %v5491, %v5535
      %v5572 = vadd.f32 %v5492, %v5538
      %v5573 = vadd.f32 %v5493, %v5541
      %v5574 = vadd.f32 %v5494, %v5544
      %v5575 = vadd.f32 %v5495, %v5546
      %v5576 = vadd.f32 %v5496, %v5548
      %v5577 = vadd.f32 %v5497, %v5550
      %v5578 = vadd.f32 %v5498, %v5552
      %v5579 = vadd.f32 %v5499, %v5554
      %v5580 = vadd.f32 %v5500, %v5545
      %v5581 = vadd.f32 %v5501, %v5547
      %v5582 = vadd.f32 %v5502, %v5549
      %v5583 = vadd.f32 %v5503, %v5551
      %v5584 = vadd.f32 %v5504, %v5553
      %vm5585 = vcmask 343040
      %v5587 = vsel %vm5585, %v5574, 0
      %v5590 = vsel %vm5585, %v5579, 0
      %v5593 = vsel %vm5585, %v5584, 0
      %vm5595 = vcmask 1041408
      %v5597 = vsel %vm5595, %v5420, 0
      %5599 = vmatprep.subr.mxu0 0.0
      %5600 = vmatpush1.msra.mxu0 %v5366
      %5601 = vmatprep.subr.mxu0 0.0
      %5602 = vmatpush1.msra.mxu0 %v5365
      %5603 = vmatprep.subr.mxu0 0.0
      %5604 = vmatpush1.msra.mxu0 %v5364
      %5605 = vmatprep.subr.mxu0 0.0
      %5606 = vmatpush1.msra.mxu0 %v5363
      %5607 = vmatprep.subr.mxu0 0.0
      %5608 = vmatpush1.msra.mxu0 %v5362
      %5609 = vmatprep.subr.mxu0 0.0
      %5610 = vmatpush1.msra.mxu0 %v5361
      %5611 = vmatprep.subr.mxu0 0.0
      %5612 = vmatpush1.msra.mxu0 %v5360
      %5613 = vmatprep.subr.mxu0 0.0
      %5614 = vmatpush1.msra.mxu0 %v5359
      %5615 = vmatprep.subr.mxu0 0.0
      %5616 = vmatpush1.msra.mxu0 %v5358
      %5617 = vmatprep.subr.mxu0 0.0
      %5618 = vmatpush1.msra.mxu0 %v5357
      %5619 = vmatprep.subr.mxu0 0.0
      %5620 = vmatpush1.msra.mxu0 %v5356
      %5621 = vmatprep.subr.mxu0 0.0
      %5622 = vmatpush1.msra.mxu0 %v5355
      %5623 = vmatprep.subr.mxu0 0.0
      %5624 = vmatpush1.msra.mxu0 %v5354
      %5625 = vmatprep.subr.mxu0 0.0
      %5626 = vmatpush1.msra.mxu0 %v5353
      %5627 = vmatprep.subr.mxu0 0.0
      %5628 = vmatpush1.msra.mxu0 %v5352
      %5629 = vmatprep.subr.mxu0 0.0
      %5630 = vmatpush1.msra.mxu0 %v5351
      %5631 = vmatprep.subr.mxu0 0.0
      %5632 = vmatpush2.msra.mxu0 %v5382
      %5633 = vmatprep.subr.mxu0 0.0
      %5634 = vmatpush2.msra.mxu0 %v5381
      %5635 = vmatprep.subr.mxu0 0.0
      %5636 = vmatpush2.msra.mxu0 %v5380
      %5637 = vmatprep.subr.mxu0 0.0
      %5638 = vmatpush2.msra.mxu0 %v5379
      %5639 = vmatprep.subr.mxu0 0.0
      %5640 = vmatpush2.msra.mxu0 %v5378
      %5641 = vmatprep.subr.mxu0 0.0
      %5642 = vmatpush2.msra.mxu0 %v5377
      %5643 = vmatprep.subr.mxu0 0.0
      %5644 = vmatpush2.msra.mxu0 %v5376
      %5645 = vmatprep.subr.mxu0 0.0
      %5646 = vmatpush2.msra.mxu0 %v5375
      %5647 = vmatprep.subr.mxu0 0.0
      %5648 = vmatpush2.msra.mxu0 %v5374
      %5649 = vmatprep.subr.mxu0 0.0
      %5650 = vmatpush2.msra.mxu0 %v5373
      %5651 = vmatprep.subr.mxu0 0.0
      %5652 = vmatpush2.msra.mxu0 %v5372
      %5653 = vmatprep.subr.mxu0 0.0
      %5654 = vmatpush2.msra.mxu0 %v5371
      %5655 = vmatprep.subr.mxu0 0.0
      %5656 = vmatpush2.msra.mxu0 %v5370
      %5657 = vmatprep.subr.mxu0 0.0
      %5658 = vmatpush2.msra.mxu0 %v5369
      %5659 = vmatprep.subr.mxu0 0.0
      %5660 = vmatpush2.msra.mxu0 %v5368
      %5661 = vmatprep.subr.mxu0 0.0
      %5662 = vmatpush2.msra.mxu0 %v5367
      %5663 = vmatprep.mubr.f32.mxu0 %v5571
      %5664 = vmatmul.mubr.f32.gmra.mxu0 %v5570
      %v5665 = vpop.f32.mrf.mxu0
      %v5666 = vadd.f32 0.0, %v5665
      %v5667 = vpop.f32.mrf.mxu0
      %5668 = vmatprep.mubr.f32.mxu0 %v5576
      %5669 = vmatmul.mubr.f32.gmra.mxu0 %v5575
      %v5670 = vpop.f32.mrf.mxu0
      %v5671 = vadd.f32 0.0, %v5670
      %v5672 = vpop.f32.mrf.mxu0
      %5673 = vmatprep.mubr.f32.mxu0 %v5581
      %5674 = vmatmul.mubr.f32.gmra.mxu0 %v5580
      %v5675 = vpop.f32.mrf.mxu0
      %v5676 = vadd.f32 0.0, %v5675
      %v5677 = vpop.f32.mrf.mxu0
      %5678 = vdwg.mxu0
      %5679 = vmatprep.subr.mxu0 0.0
      %5680 = vmatpush1.msra.mxu0 %v5398
      %5681 = vmatprep.subr.mxu0 0.0
      %5682 = vmatpush1.msra.mxu0 %v5397
      %5683 = vmatprep.subr.mxu0 0.0
      %5684 = vmatpush1.msra.mxu0 %v5396
      %5685 = vmatprep.subr.mxu0 0.0
      %5686 = vmatpush1.msra.mxu0 %v5395
      %5687 = vmatprep.subr.mxu0 0.0
      %5688 = vmatpush1.msra.mxu0 %v5394
      %5689 = vmatprep.subr.mxu0 0.0
      %5690 = vmatpush1.msra.mxu0 %v5393
      %5691 = vmatprep.subr.mxu0 0.0
      %5692 = vmatpush1.msra.mxu0 %v5392
      %5693 = vmatprep.subr.mxu0 0.0
      %5694 = vmatpush1.msra.mxu0 %v5391
      %5695 = vmatprep.subr.mxu0 0.0
      %5696 = vmatpush1.msra.mxu0 %v5390
      %5697 = vmatprep.subr.mxu0 0.0
      %5698 = vmatpush1.msra.mxu0 %v5389
      %5699 = vmatprep.subr.mxu0 0.0
      %5700 = vmatpush1.msra.mxu0 %v5388
      %5701 = vmatprep.subr.mxu0 0.0
      %5702 = vmatpush1.msra.mxu0 %v5387
      %5703 = vmatprep.subr.mxu0 0.0
      %5704 = vmatpush1.msra.mxu0 %v5386
      %5705 = vmatprep.subr.mxu0 0.0
      %5706 = vmatpush1.msra.mxu0 %v5385
      %5707 = vmatprep.subr.mxu0 0.0
      %5708 = vmatpush1.msra.mxu0 %v5384
      %5709 = vmatprep.subr.mxu0 0.0
      %5710 = vmatpush1.msra.mxu0 %v5383
      %5711 = vmatprep.subr.mxu0 0.0
      %5712 = vmatpush2.msra.mxu0 %v5414
      %5713 = vmatprep.subr.mxu0 0.0
      %5714 = vmatpush2.msra.mxu0 %v5413
      %5715 = vmatprep.subr.mxu0 0.0
      %5716 = vmatpush2.msra.mxu0 %v5412
      %5717 = vmatprep.subr.mxu0 0.0
      %5718 = vmatpush2.msra.mxu0 %v5411
      %5719 = vmatprep.subr.mxu0 0.0
      %5720 = vmatpush2.msra.mxu0 %v5410
      %5721 = vmatprep.subr.mxu0 0.0
      %5722 = vmatpush2.msra.mxu0 %v5409
      %5723 = vmatprep.subr.mxu0 0.0
      %5724 = vmatpush2.msra.mxu0 %v5408
      %5725 = vmatprep.subr.mxu0 0.0
      %5726 = vmatpush2.msra.mxu0 %v5407
      %5727 = vmatprep.subr.mxu0 0.0
      %5728 = vmatpush2.msra.mxu0 %v5406
      %5729 = vmatprep.subr.mxu0 0.0
      %5730 = vmatpush2.msra.mxu0 %v5405
      %5731 = vmatprep.subr.mxu0 0.0
      %5732 = vmatpush2.msra.mxu0 %v5404
      %5733 = vmatprep.subr.mxu0 0.0
      %5734 = vmatpush2.msra.mxu0 %v5403
      %5735 = vmatprep.subr.mxu0 0.0
      %5736 = vmatpush2.msra.mxu0 %v5402
      %5737 = vmatprep.subr.mxu0 0.0
      %5738 = vmatpush2.msra.mxu0 %v5401
      %5739 = vmatprep.subr.mxu0 0.0
      %5740 = vmatpush2.msra.mxu0 %v5400
      %5741 = vmatprep.subr.mxu0 0.0
      %5742 = vmatpush2.msra.mxu0 %v5399
      %5743 = vmatprep.mubr.f32.mxu0 %v5573
      %5744 = vmatmul.mubr.f32.gmra.mxu0 %v5572
      %v5745 = vpop.f32.mrf.mxu0
      %v5746 = vadd.f32 %v5666, %v5745
      %v5747 = vpop.f32.mrf.mxu0
      %5748 = vmatprep.mubr.f32.mxu0 %v5578
      %5749 = vmatmul.mubr.f32.gmra.mxu0 %v5577
      %v5750 = vpop.f32.mrf.mxu0
      %v5751 = vadd.f32 %v5671, %v5750
      %v5752 = vpop.f32.mrf.mxu0
      %5753 = vmatprep.mubr.f32.mxu0 %v5583
      %5754 = vmatmul.mubr.f32.gmra.mxu0 %v5582
      %v5755 = vpop.f32.mrf.mxu0
      %v5756 = vadd.f32 %v5676, %v5755
      %v5757 = vpop.f32.mrf.mxu0
      %5758 = vdwg.mxu0
      %5759 = vmatprep.subr.mxu0 0.0
      %5760 = vmatpush1.msra.mxu0 0.0
      %5761 = vmatprep.subr.mxu0 0.0
      %5762 = vmatpush1.msra.mxu0 0.0
      %5763 = vmatprep.subr.mxu0 0.0
      %5764 = vmatpush1.msra.mxu0 0.0
      %5765 = vmatprep.subr.mxu0 0.0
      %5766 = vmatpush1.msra.mxu0 0.0
      %5767 = vmatprep.subr.mxu0 0.0
      %5768 = vmatpush1.msra.mxu0 0.0
      %5769 = vmatprep.subr.mxu0 0.0
      %5770 = vmatpush1.msra.mxu0 0.0
      %5771 = vmatprep.subr.mxu0 0.0
      %5772 = vmatpush1.msra.mxu0 0.0
      %5773 = vmatprep.subr.mxu0 0.0
      %5774 = vmatpush1.msra.mxu0 0.0
      %5775 = vmatprep.subr.mxu0 0.0
      %5776 = vmatpush1.msra.mxu0 0.0
      %5777 = vmatprep.subr.mxu0 0.0
      %5778 = vmatpush1.msra.mxu0 0.0
      %5779 = vmatprep.subr.mxu0 0.0
      %5780 = vmatpush1.msra.mxu0 %v5597
      %5781 = vmatprep.subr.mxu0 0.0
      %5782 = vmatpush1.msra.mxu0 %v5419
      %5783 = vmatprep.subr.mxu0 0.0
      %5784 = vmatpush1.msra.mxu0 %v5418
      %5785 = vmatprep.subr.mxu0 0.0
      %5786 = vmatpush1.msra.mxu0 %v5417
      %5787 = vmatprep.subr.mxu0 0.0
      %5788 = vmatpush1.msra.mxu0 %v5416
      %5789 = vmatprep.subr.mxu0 0.0
      %5790 = vmatpush1.msra.mxu0 %v5415
      %5791 = vmatprep.subr.mxu0 0.0
      %5792 = vmatpush2.msra.mxu0 0.0
      %5793 = vmatprep.subr.mxu0 0.0
      %5794 = vmatpush2.msra.mxu0 0.0
      %5795 = vmatprep.subr.mxu0 0.0
      %5796 = vmatpush2.msra.mxu0 0.0
      %5797 = vmatprep.subr.mxu0 0.0
      %5798 = vmatpush2.msra.mxu0 0.0
      %5799 = vmatprep.subr.mxu0 0.0
      %5800 = vmatpush2.msra.mxu0 0.0
      %5801 = vmatprep.subr.mxu0 0.0
      %5802 = vmatpush2.msra.mxu0 0.0
      %5803 = vmatprep.subr.mxu0 0.0
      %5804 = vmatpush2.msra.mxu0 0.0
      %5805 = vmatprep.subr.mxu0 0.0
      %5806 = vmatpush2.msra.mxu0 0.0
      %5807 = vmatprep.subr.mxu0 0.0
      %5808 = vmatpush2.msra.mxu0 0.0
      %5809 = vmatprep.subr.mxu0 0.0
      %5810 = vmatpush2.msra.mxu0 0.0
      %5811 = vmatprep.subr.mxu0 0.0
      %5812 = vmatpush2.msra.mxu0 0.0
      %5813 = vmatprep.subr.mxu0 0.0
      %5814 = vmatpush2.msra.mxu0 0.0
      %5815 = vmatprep.subr.mxu0 0.0
      %5816 = vmatpush2.msra.mxu0 0.0
      %5817 = vmatprep.subr.mxu0 0.0
      %5818 = vmatpush2.msra.mxu0 0.0
      %5819 = vmatprep.subr.mxu0 0.0
      %5820 = vmatpush2.msra.mxu0 0.0
      %5821 = vmatprep.subr.mxu0 0.0
      %5822 = vmatpush2.msra.mxu0 0.0
      %5823 = vmatprep.mubr.f32.mxu0 0.0
      %5824 = vmatmul.mubr.f32.gmra.mxu0 %v5587
      %v5825 = vpop.f32.mrf.mxu0
      %v5826 = vadd.f32 %v5746, %v5825
      %v5827 = vpop.f32.mrf.mxu0
      %5828 = vmatprep.mubr.f32.mxu0 0.0
      %5829 = vmatmul.mubr.f32.gmra.mxu0 %v5590
      %v5830 = vpop.f32.mrf.mxu0
      %v5831 = vadd.f32 %v5751, %v5830
      %v5832 = vpop.f32.mrf.mxu0
      %5833 = vmatprep.mubr.f32.mxu0 0.0
      %5834 = vmatmul.mubr.f32.gmra.mxu0 %v5593
      %v5835 = vpop.f32.mrf.mxu0
      %v5836 = vadd.f32 %v5756, %v5835
      %v5837 = vpop.f32.mrf.mxu0
      %5838 = vdwg.mxu0
      %v5854 = vrot.slane %v5475, 4
      %v5855 = vrot.slane %v5480, 4
      %v5856 = vsel %vm1309, %v5854, %v5855
      %v5857 = vrot.slane %v5476, 4
      %v5858 = vrot.slane %v5481, 4
      %v5859 = vsel %vm1309, %v5857, %v5858
      %v5860 = vrot.slane %v5477, 4
      %v5861 = vrot.slane %v5482, 4
      %v5862 = vsel %vm1309, %v5860, %v5861
      %v5863 = vrot.slane %v5478, 4
      %v5864 = vrot.slane %v5483, 4
      %v5865 = vsel %vm1309, %v5863, %v5864
      %v5866 = vrot.slane %v5479, 4
      %v5867 = vrot.slane %v5484, 4
      %v5868 = vsel %vm1309, %v5866, %v5867
      %v5869 = vrot.slane %v5485, 4
      %v5870 = vsel %vm1309, %v5855, %v5869
      %v5871 = vrot.slane %v5486, 4
      %v5872 = vsel %vm1309, %v5858, %v5871
      %v5873 = vrot.slane %v5487, 4
      %v5874 = vsel %vm1309, %v5861, %v5873
      %v5875 = vrot.slane %v5488, 4
      %v5876 = vsel %vm1309, %v5864, %v5875
      %v5877 = vrot.slane %v5489, 4
      %v5878 = vsel %vm1309, %v5867, %v5877
      %v5894 = vadd.f32 %v5465, %v5856
      %v5895 = vadd.f32 %v5466, %v5859
      %v5896 = vadd.f32 %v5467, %v5862
      %v5897 = vadd.f32 %v5468, %v5865
      %v5898 = vadd.f32 %v5469, %v5868
      %v5899 = vadd.f32 %v5470, %v5870
      %v5900 = vadd.f32 %v5471, %v5872
      %v5901 = vadd.f32 %v5472, %v5874
      %v5902 = vadd.f32 %v5473, %v5876
      %v5903 = vadd.f32 %v5474, %v5878
      %v5904 = vadd.f32 %v5475, %v5869
      %v5905 = vadd.f32 %v5476, %v5871
      %v5906 = vadd.f32 %v5477, %v5873
      %v5907 = vadd.f32 %v5478, %v5875
      %v5908 = vadd.f32 %v5479, %v5877
      %v5910 = vsel %vm5585, %v5898, 0
      %v5913 = vsel %vm5585, %v5903, 0
      %v5916 = vsel %vm5585, %v5908, 0
      %5918 = vmatprep.subr.mxu0 0.0
      %5919 = vmatpush1.msra.mxu0 %v5366
      %5920 = vmatprep.subr.mxu0 0.0
      %5921 = vmatpush1.msra.mxu0 %v5365
      %5922 = vmatprep.subr.mxu0 0.0
      %5923 = vmatpush1.msra.mxu0 %v5364
      %5924 = vmatprep.subr.mxu0 0.0
      %5925 = vmatpush1.msra.mxu0 %v5363
      %5926 = vmatprep.subr.mxu0 0.0
      %5927 = vmatpush1.msra.mxu0 %v5362
      %5928 = vmatprep.subr.mxu0 0.0
      %5929 = vmatpush1.msra.mxu0 %v5361
      %5930 = vmatprep.subr.mxu0 0.0
      %5931 = vmatpush1.msra.mxu0 %v5360
      %5932 = vmatprep.subr.mxu0 0.0
      %5933 = vmatpush1.msra.mxu0 %v5359
      %5934 = vmatprep.subr.mxu0 0.0
      %5935 = vmatpush1.msra.mxu0 %v5358
      %5936 = vmatprep.subr.mxu0 0.0
      %5937 = vmatpush1.msra.mxu0 %v5357
      %5938 = vmatprep.subr.mxu0 0.0
      %5939 = vmatpush1.msra.mxu0 %v5356
      %5940 = vmatprep.subr.mxu0 0.0
      %5941 = vmatpush1.msra.mxu0 %v5355
      %5942 = vmatprep.subr.mxu0 0.0
      %5943 = vmatpush1.msra.mxu0 %v5354
      %5944 = vmatprep.subr.mxu0 0.0
      %5945 = vmatpush1.msra.mxu0 %v5353
      %5946 = vmatprep.subr.mxu0 0.0
      %5947 = vmatpush1.msra.mxu0 %v5352
      %5948 = vmatprep.subr.mxu0 0.0
      %5949 = vmatpush1.msra.mxu0 %v5351
      %5950 = vmatprep.subr.mxu0 0.0
      %5951 = vmatpush2.msra.mxu0 %v5382
      %5952 = vmatprep.subr.mxu0 0.0
      %5953 = vmatpush2.msra.mxu0 %v5381
      %5954 = vmatprep.subr.mxu0 0.0
      %5955 = vmatpush2.msra.mxu0 %v5380
      %5956 = vmatprep.subr.mxu0 0.0
      %5957 = vmatpush2.msra.mxu0 %v5379
      %5958 = vmatprep.subr.mxu0 0.0
      %5959 = vmatpush2.msra.mxu0 %v5378
      %5960 = vmatprep.subr.mxu0 0.0
      %5961 = vmatpush2.msra.mxu0 %v5377
      %5962 = vmatprep.subr.mxu0 0.0
      %5963 = vmatpush2.msra.mxu0 %v5376
      %5964 = vmatprep.subr.mxu0 0.0
      %5965 = vmatpush2.msra.mxu0 %v5375
      %5966 = vmatprep.subr.mxu0 0.0
      %5967 = vmatpush2.msra.mxu0 %v5374
      %5968 = vmatprep.subr.mxu0 0.0
      %5969 = vmatpush2.msra.mxu0 %v5373
      %5970 = vmatprep.subr.mxu0 0.0
      %5971 = vmatpush2.msra.mxu0 %v5372
      %5972 = vmatprep.subr.mxu0 0.0
      %5973 = vmatpush2.msra.mxu0 %v5371
      %5974 = vmatprep.subr.mxu0 0.0
      %5975 = vmatpush2.msra.mxu0 %v5370
      %5976 = vmatprep.subr.mxu0 0.0
      %5977 = vmatpush2.msra.mxu0 %v5369
      %5978 = vmatprep.subr.mxu0 0.0
      %5979 = vmatpush2.msra.mxu0 %v5368
      %5980 = vmatprep.subr.mxu0 0.0
      %5981 = vmatpush2.msra.mxu0 %v5367
      %5982 = vmatprep.mubr.f32.mxu0 %v5895
      %5983 = vmatmul.mubr.f32.gmra.mxu0 %v5894
      %v5984 = vpop.f32.mrf.mxu0
      %v5985 = vadd.f32 0.0, %v5984
      %v5986 = vpop.f32.mrf.mxu0
      %5987 = vmatprep.mubr.f32.mxu0 %v5900
      %5988 = vmatmul.mubr.f32.gmra.mxu0 %v5899
      %v5989 = vpop.f32.mrf.mxu0
      %v5990 = vadd.f32 0.0, %v5989
      %v5991 = vpop.f32.mrf.mxu0
      %5992 = vmatprep.mubr.f32.mxu0 %v5905
      %5993 = vmatmul.mubr.f32.gmra.mxu0 %v5904
      %v5994 = vpop.f32.mrf.mxu0
      %v5995 = vadd.f32 0.0, %v5994
      %v5996 = vpop.f32.mrf.mxu0
      %5997 = vdwg.mxu0
      %5998 = vmatprep.subr.mxu0 0.0
      %5999 = vmatpush1.msra.mxu0 %v5398
      %6000 = vmatprep.subr.mxu0 0.0
      %6001 = vmatpush1.msra.mxu0 %v5397
      %6002 = vmatprep.subr.mxu0 0.0
      %6003 = vmatpush1.msra.mxu0 %v5396
      %6004 = vmatprep.subr.mxu0 0.0
      %6005 = vmatpush1.msra.mxu0 %v5395
      %6006 = vmatprep.subr.mxu0 0.0
      %6007 = vmatpush1.msra.mxu0 %v5394
      %6008 = vmatprep.subr.mxu0 0.0
      %6009 = vmatpush1.msra.mxu0 %v5393
      %6010 = vmatprep.subr.mxu0 0.0
      %6011 = vmatpush1.msra.mxu0 %v5392
      %6012 = vmatprep.subr.mxu0 0.0
      %6013 = vmatpush1.msra.mxu0 %v5391
      %6014 = vmatprep.subr.mxu0 0.0
      %6015 = vmatpush1.msra.mxu0 %v5390
      %6016 = vmatprep.subr.mxu0 0.0
      %6017 = vmatpush1.msra.mxu0 %v5389
      %6018 = vmatprep.subr.mxu0 0.0
      %6019 = vmatpush1.msra.mxu0 %v5388
      %6020 = vmatprep.subr.mxu0 0.0
      %6021 = vmatpush1.msra.mxu0 %v5387
      %6022 = vmatprep.subr.mxu0 0.0
      %6023 = vmatpush1.msra.mxu0 %v5386
      %6024 = vmatprep.subr.mxu0 0.0
      %6025 = vmatpush1.msra.mxu0 %v5385
      %6026 = vmatprep.subr.mxu0 0.0
      %6027 = vmatpush1.msra.mxu0 %v5384
      %6028 = vmatprep.subr.mxu0 0.0
      %6029 = vmatpush1.msra.mxu0 %v5383
      %6030 = vmatprep.subr.mxu0 0.0
      %6031 = vmatpush2.msra.mxu0 %v5414
      %6032 = vmatprep.subr.mxu0 0.0
      %6033 = vmatpush2.msra.mxu0 %v5413
      %6034 = vmatprep.subr.mxu0 0.0
      %6035 = vmatpush2.msra.mxu0 %v5412
      %6036 = vmatprep.subr.mxu0 0.0
      %6037 = vmatpush2.msra.mxu0 %v5411
      %6038 = vmatprep.subr.mxu0 0.0
      %6039 = vmatpush2.msra.mxu0 %v5410
      %6040 = vmatprep.subr.mxu0 0.0
      %6041 = vmatpush2.msra.mxu0 %v5409
      %6042 = vmatprep.subr.mxu0 0.0
      %6043 = vmatpush2.msra.mxu0 %v5408
      %6044 = vmatprep.subr.mxu0 0.0
      %6045 = vmatpush2.msra.mxu0 %v5407
      %6046 = vmatprep.subr.mxu0 0.0
      %6047 = vmatpush2.msra.mxu0 %v5406
      %6048 = vmatprep.subr.mxu0 0.0
      %6049 = vmatpush2.msra.mxu0 %v5405
      %6050 = vmatprep.subr.mxu0 0.0
      %6051 = vmatpush2.msra.mxu0 %v5404
      %6052 = vmatprep.subr.mxu0 0.0
      %6053 = vmatpush2.msra.mxu0 %v5403
      %6054 = vmatprep.subr.mxu0 0.0
      %6055 = vmatpush2.msra.mxu0 %v5402
      %6056 = vmatprep.subr.mxu0 0.0
      %6057 = vmatpush2.msra.mxu0 %v5401
      %6058 = vmatprep.subr.mxu0 0.0
      %6059 = vmatpush2.msra.mxu0 %v5400
      %6060 = vmatprep.subr.mxu0 0.0
      %6061 = vmatpush2.msra.mxu0 %v5399
      %6062 = vmatprep.mubr.f32.mxu0 %v5897
      %6063 = vmatmul.mubr.f32.gmra.mxu0 %v5896
      %v6064 = vpop.f32.mrf.mxu0
      %v6065 = vadd.f32 %v5985, %v6064
      %v6066 = vpop.f32.mrf.mxu0
      %6067 = vmatprep.mubr.f32.mxu0 %v5902
      %6068 = vmatmul.mubr.f32.gmra.mxu0 %v5901
      %v6069 = vpop.f32.mrf.mxu0
      %v6070 = vadd.f32 %v5990, %v6069
      %v6071 = vpop.f32.mrf.mxu0
      %6072 = vmatprep.mubr.f32.mxu0 %v5907
      %6073 = vmatmul.mubr.f32.gmra.mxu0 %v5906
      %v6074 = vpop.f32.mrf.mxu0
      %v6075 = vadd.f32 %v5995, %v6074
      %v6076 = vpop.f32.mrf.mxu0
      %6077 = vdwg.mxu0
      %6078 = vmatprep.subr.mxu0 0.0
      %6079 = vmatpush1.msra.mxu0 0.0
      %6080 = vmatprep.subr.mxu0 0.0
      %6081 = vmatpush1.msra.mxu0 0.0
      %6082 = vmatprep.subr.mxu0 0.0
      %6083 = vmatpush1.msra.mxu0 0.0
      %6084 = vmatprep.subr.mxu0 0.0
      %6085 = vmatpush1.msra.mxu0 0.0
      %6086 = vmatprep.subr.mxu0 0.0
      %6087 = vmatpush1.msra.mxu0 0.0
      %6088 = vmatprep.subr.mxu0 0.0
      %6089 = vmatpush1.msra.mxu0 0.0
      %6090 = vmatprep.subr.mxu0 0.0
      %6091 = vmatpush1.msra.mxu0 0.0
      %6092 = vmatprep.subr.mxu0 0.0
      %6093 = vmatpush1.msra.mxu0 0.0
      %6094 = vmatprep.subr.mxu0 0.0
      %6095 = vmatpush1.msra.mxu0 0.0
      %6096 = vmatprep.subr.mxu0 0.0
      %6097 = vmatpush1.msra.mxu0 0.0
      %6098 = vmatprep.subr.mxu0 0.0
      %6099 = vmatpush1.msra.mxu0 %v5597
      %6100 = vmatprep.subr.mxu0 0.0
      %6101 = vmatpush1.msra.mxu0 %v5419
      %6102 = vmatprep.subr.mxu0 0.0
      %6103 = vmatpush1.msra.mxu0 %v5418
      %6104 = vmatprep.subr.mxu0 0.0
      %6105 = vmatpush1.msra.mxu0 %v5417
      %6106 = vmatprep.subr.mxu0 0.0
      %6107 = vmatpush1.msra.mxu0 %v5416
      %6108 = vmatprep.subr.mxu0 0.0
      %6109 = vmatpush1.msra.mxu0 %v5415
      %6110 = vmatprep.subr.mxu0 0.0
      %6111 = vmatpush2.msra.mxu0 0.0
      %6112 = vmatprep.subr.mxu0 0.0
      %6113 = vmatpush2.msra.mxu0 0.0
      %6114 = vmatprep.subr.mxu0 0.0
      %6115 = vmatpush2.msra.mxu0 0.0
      %6116 = vmatprep.subr.mxu0 0.0
      %6117 = vmatpush2.msra.mxu0 0.0
      %6118 = vmatprep.subr.mxu0 0.0
      %6119 = vmatpush2.msra.mxu0 0.0
      %6120 = vmatprep.subr.mxu0 0.0
      %6121 = vmatpush2.msra.mxu0 0.0
      %6122 = vmatprep.subr.mxu0 0.0
      %6123 = vmatpush2.msra.mxu0 0.0
      %6124 = vmatprep.subr.mxu0 0.0
      %6125 = vmatpush2.msra.mxu0 0.0
      %6126 = vmatprep.subr.mxu0 0.0
      %6127 = vmatpush2.msra.mxu0 0.0
      %6128 = vmatprep.subr.mxu0 0.0
      %6129 = vmatpush2.msra.mxu0 0.0
      %6130 = vmatprep.subr.mxu0 0.0
      %6131 = vmatpush2.msra.mxu0 0.0
      %6132 = vmatprep.subr.mxu0 0.0
      %6133 = vmatpush2.msra.mxu0 0.0
      %6134 = vmatprep.subr.mxu0 0.0
      %6135 = vmatpush2.msra.mxu0 0.0
      %6136 = vmatprep.subr.mxu0 0.0
      %6137 = vmatpush2.msra.mxu0 0.0
      %6138 = vmatprep.subr.mxu0 0.0
      %6139 = vmatpush2.msra.mxu0 0.0
      %6140 = vmatprep.subr.mxu0 0.0
      %6141 = vmatpush2.msra.mxu0 0.0
      %6142 = vmatprep.mubr.f32.mxu0 0.0
      %6143 = vmatmul.mubr.f32.gmra.mxu0 %v5910
      %v6144 = vpop.f32.mrf.mxu0
      %v6145 = vadd.f32 %v6065, %v6144
      %v6146 = vpop.f32.mrf.mxu0
      %6147 = vmatprep.mubr.f32.mxu0 0.0
      %6148 = vmatmul.mubr.f32.gmra.mxu0 %v5913
      %v6149 = vpop.f32.mrf.mxu0
      %v6150 = vadd.f32 %v6070, %v6149
      %v6151 = vpop.f32.mrf.mxu0
      %6152 = vmatprep.mubr.f32.mxu0 0.0
      %6153 = vmatmul.mubr.f32.gmra.mxu0 %v5916
      %v6154 = vpop.f32.mrf.mxu0
      %v6155 = vadd.f32 %v6075, %v6154
      %v6156 = vpop.f32.mrf.mxu0
      %6157 = vdwg.mxu0
      %6159 = vset.pattern.permute.xlu0 0
      %6160 = vperm.xlu0 %6159, %v5423
      %v6161 = vpop.permute.xlu0 %6160
      %6164 = vset.pattern.permute.xlu0 0
      %6165 = vperm.xlu0 %6164, %v5424
      %v6166 = vpop.permute.xlu0 %6165
      %6169 = vset.pattern.permute.xlu0 0
      %6170 = vperm.xlu0 %6169, %v5425
      %v6171 = vpop.permute.xlu0 %6170
      %v6173 = vmul.f32 %v6161, %v5826
      %v6174 = vmul.f32 %v6166, %v5831
      %v6175 = vmul.f32 %v6171, %v5836
      %6177 = vset.pattern.permute.xlu0 0
      %6178 = vperm.xlu0 %6177, %v5430
      %v6179 = vpop.permute.xlu0 %6178
      %6182 = vset.pattern.permute.xlu0 0
      %6183 = vperm.xlu0 %6182, %v5431
      %v6184 = vpop.permute.xlu0 %6183
      %6187 = vset.pattern.permute.xlu0 0
      %6188 = vperm.xlu0 %6187, %v5432
      %v6189 = vpop.permute.xlu0 %6188
      %v6191 = vmul.f32 %v6179, %v6145
      %v6192 = vmul.f32 %v6184, %v6150
      %v6193 = vmul.f32 %v6189, %v6155
      %v6194 = vadd.f32 %v6173, %v6191
      %v6195 = vadd.f32 %v6174, %v6192
      %v6196 = vadd.f32 %v6175, %v6193
      %6198 = vset.pattern.permute.xlu0 0
      %6199 = vperm.xlu0 %6198, %v5437
      %v6200 = vpop.permute.xlu0 %6199
      %6203 = vset.pattern.permute.xlu0 0
      %6204 = vperm.xlu0 %6203, %v5438
      %v6205 = vpop.permute.xlu0 %6204
      %6208 = vset.pattern.permute.xlu0 0
      %6209 = vperm.xlu0 %6208, %v5439
      %v6210 = vpop.permute.xlu0 %6209
      %v6212 = vadd.f32 %v6194, %v6200
      %v6213 = vadd.f32 %v6195, %v6205
      %v6214 = vadd.f32 %v6196, %v6210
      %v6215 = vlog2.pop %v6212
      %v6216 = vmul.f32 %v6215, 0.6931472
      %v6217 = vlog2.pop %v6213
      %v6218 = vmul.f32 %v6217, 0.6931472
      %v6219 = vlog2.pop %v6214
      %v6220 = vmul.f32 %v6219, 0.6931472
      %6222 = vset.pattern.permute.xlu0 0
      %6223 = vperm.xlu0 %6222, %v5426
      %v6224 = vpop.permute.xlu0 %6223
      %6227 = vset.pattern.permute.xlu0 0
      %6228 = vperm.xlu0 %6227, %v5427
      %v6229 = vpop.permute.xlu0 %6228
      %6232 = vset.pattern.permute.xlu0 0
      %6233 = vperm.xlu0 %6232, %v5428
      %v6234 = vpop.permute.xlu0 %6233
      %v6236 = vmul.f32 %v6224, %v5826
      %v6237 = vmul.f32 %v6229, %v5831
      %v6238 = vmul.f32 %v6234, %v5836
      %6240 = vset.pattern.permute.xlu0 0
      %6241 = vperm.xlu0 %6240, %v5433
      %v6242 = vpop.permute.xlu0 %6241
      %6245 = vset.pattern.permute.xlu0 0
      %6246 = vperm.xlu0 %6245, %v5434
      %v6247 = vpop.permute.xlu0 %6246
      %6250 = vset.pattern.permute.xlu0 0
      %6251 = vperm.xlu0 %6250, %v5435
      %v6252 = vpop.permute.xlu0 %6251
      %v6254 = vmul.f32 %v6242, %v6145
      %v6255 = vmul.f32 %v6247, %v6150
      %v6256 = vmul.f32 %v6252, %v6155
      %v6257 = vadd.f32 %v6236, %v6254
      %v6258 = vadd.f32 %v6237, %v6255
      %v6259 = vadd.f32 %v6238, %v6256
      %6261 = vset.pattern.permute.xlu0 0
      %6262 = vperm.xlu0 %6261, %v5440
      %v6263 = vpop.permute.xlu0 %6262
      %6266 = vset.pattern.permute.xlu0 0
      %6267 = vperm.xlu0 %6266, %v5441
      %v6268 = vpop.permute.xlu0 %6267
      %6271 = vset.pattern.permute.xlu0 0
      %6272 = vperm.xlu0 %6271, %v5442
      %v6273 = vpop.permute.xlu0 %6272
      %v6275 = vadd.f32 %v6257, %v6263
      %v6276 = vadd.f32 %v6258, %v6268
      %v6277 = vadd.f32 %v6259, %v6273
      %v6278 = vlog2.pop %v6275
      %v6279 = vmul.f32 %v6278, 0.6931472
      %v6280 = vlog2.pop %v6276
      %v6281 = vmul.f32 %v6280, 0.6931472
      %v6282 = vlog2.pop %v6277
      %v6283 = vmul.f32 %v6282, 0.6931472
      %v6284 = vmul.f32 %v5445, %v6216
      %v6285 = vmul.f32 %v5446, %v6218
      %v6286 = vmul.f32 %v5447, %v6220
      %v6287 = vmul.f32 %v5450, %v6216
      %v6288 = vmul.f32 %v5451, %v6218
      %v6289 = vmul.f32 %v5452, %v6220
      %v6290 = vmul.f32 %v5455, %v6216
      %v6291 = vmul.f32 %v5456, %v6218
      %v6292 = vmul.f32 %v5457, %v6220
      %v6293 = vmul.f32 %v5460, %v6216
      %v6294 = vmul.f32 %v5461, %v6218
      %v6295 = vmul.f32 %v5462, %v6220
      %v6296 = vsel %vm5585, %v6284, 0.0
      %6297 = vadd.xlane.f32.xlu0 %v6296
      %v6298 = vpop.xlane.xlu0 %6297
      %v6299 = vsel %vm5585, %v6285, 0.0
      %6300 = vadd.xlane.f32.xlu0 %v6299
      %v6301 = vpop.xlane.xlu0 %6300
      %vm6302 = vcmask 338944
      %v6303 = vsel %vm6302, %v6286, 0.0
      %6304 = vadd.xlane.f32.xlu0 %v6303
      %v6305 = vpop.xlane.xlu0 %6304
      %v6306 = vsel %vm5585, %v6287, 0.0
      %6307 = vadd.xlane.f32.xlu0 %v6306
      %v6308 = vpop.xlane.xlu0 %6307
      %v6309 = vsel %vm5585, %v6288, 0.0
      %6310 = vadd.xlane.f32.xlu0 %v6309
      %v6311 = vpop.xlane.xlu0 %6310
      %v6312 = vsel %vm6302, %v6289, 0.0
      %6313 = vadd.xlane.f32.xlu0 %v6312
      %v6314 = vpop.xlane.xlu0 %6313
      %v6315 = vsel %vm5585, %v6290, 0.0
      %6316 = vadd.xlane.f32.xlu0 %v6315
      %v6317 = vpop.xlane.xlu0 %6316
      %v6318 = vsel %vm5585, %v6291, 0.0
      %6319 = vadd.xlane.f32.xlu0 %v6318
      %v6320 = vpop.xlane.xlu0 %6319
      %v6321 = vsel %vm6302, %v6292, 0.0
      %6322 = vadd.xlane.f32.xlu0 %v6321
      %v6323 = vpop.xlane.xlu0 %6322
      %v6324 = vsel %vm5585, %v6293, 0.0
      %6325 = vadd.xlane.f32.xlu0 %v6324
      %v6326 = vpop.xlane.xlu0 %6325
      %v6327 = vsel %vm5585, %v6294, 0.0
      %6328 = vadd.xlane.f32.xlu0 %v6327
      %v6329 = vpop.xlane.xlu0 %6328
      %v6330 = vsel %vm6302, %v6295, 0.0
      %6331 = vadd.xlane.f32.xlu0 %v6330
      %v6332 = vpop.xlane.xlu0 %6331
      %v6345 = vlaneseq
      %v6346 = vand.u32 %v6345, 127
      %v6347 = vlaneseq
      %v6348 = vshrl.u32 %v6347, 7
      %v6349 = vsub.s32 %v6346, %v6348
      %v6350 = vrot.slane %v6298, %v6349
      %v6351 = vadd.s32 %v6346, 4294967288
      %v6352 = vlaneseq
      %v6353 = vshrl.u32 %v6352, 7
      %v6354 = vsub.s32 %v6351, %v6353
      %v6355 = vrot.slane %v6301, %v6354
      %vm6356 = vcmask 130112
      %v6357 = vsel %vm6356, %v6355, %v6350
      %v6358 = vadd.s32 %v6346, 4294967280
      %v6359 = vlaneseq
      %v6360 = vshrl.u32 %v6359, 7
      %v6361 = vsub.s32 %v6358, %v6360
      %v6362 = vrot.slane %v6305, %v6361
      %vm6363 = vcmask 195712
      %v6364 = vsel %vm6363, %v6362, %v6357
      %v6365 = vlaneseq
      %v6366 = vshrl.u32 %v6365, 7
      %v6367 = vsub.s32 %v6346, %v6366
      %v6368 = vrot.slane %v6308, %v6367
      %v6369 = vlaneseq
      %v6370 = vshrl.u32 %v6369, 7
      %v6371 = vsub.s32 %v6351, %v6370
      %v6372 = vrot.slane %v6311, %v6371
      %v6373 = vsel %vm6356, %v6372, %v6368
      %v6374 = vlaneseq
      %v6375 = vshrl.u32 %v6374, 7
      %v6376 = vsub.s32 %v6358, %v6375
      %v6377 = vrot.slane %v6314, %v6376
      %v6378 = vsel %vm6363, %v6377, %v6373
      %v6379 = vlaneseq
      %v6380 = vshrl.u32 %v6379, 7
      %v6381 = vsub.s32 %v6346, %v6380
      %v6382 = vrot.slane %v6317, %v6381
      %v6383 = vlaneseq
      %v6384 = vshrl.u32 %v6383, 7
      %v6385 = vsub.s32 %v6351, %v6384
      %v6386 = vrot.slane %v6320, %v6385
      %v6387 = vsel %vm6356, %v6386, %v6382
      %v6388 = vlaneseq
      %v6389 = vshrl.u32 %v6388, 7
      %v6390 = vsub.s32 %v6358, %v6389
      %v6391 = vrot.slane %v6323, %v6390
      %v6392 = vsel %vm6363, %v6391, %v6387
      %v6393 = vlaneseq
      %v6394 = vshrl.u32 %v6393, 7
      %v6395 = vsub.s32 %v6346, %v6394
      %v6396 = vrot.slane %v6326, %v6395
      %v6397 = vlaneseq
      %v6398 = vshrl.u32 %v6397, 7
      %v6399 = vsub.s32 %v6351, %v6398
      %v6400 = vrot.slane %v6329, %v6399
      %v6401 = vsel %vm6356, %v6400, %v6396
      %v6402 = vlaneseq
      %v6403 = vshrl.u32 %v6402, 7
      %v6404 = vsub.s32 %v6358, %v6403
      %v6405 = vrot.slane %v6332, %v6404
      %v6406 = vsel %vm6363, %v6405, %v6401
      %vm6407 = vcmask 1041409
      %v6408 = vsel %vm6407, %v6378, %v6364
      %vm6409 = vcmask 1042434
      %v6410 = vsel %vm6409, %v6392, %v6408
      %vm6411 = vcmask 1043459
      %v6412 = vsel %vm6411, %v6406, %v6410
      %vm6414 = vcmask 158720
      %v6415 = vsel %vm6414, %v6412, 0.0
      %6416 = vadd.xlane.f32.xlu0 %v6415
      %v6417 = vpop.xlane.xlu0 %6416
      %v6421 = vrot.slane %v6279, 4
      %v6422 = vrot.slane %v6281, 4
      %v6423 = vsel %vm1309, %v6421, %v6422
      %v6424 = vrot.slane %v6283, 4
      %v6425 = vsel %vm1309, %v6422, %v6424
      %v6429 = vmul.f32 %v5447, %v6421
      %v6430 = vmul.f32 %v5448, %v6423
      %v6431 = vmul.f32 %v5449, %v6425
      %v6432 = vmul.f32 %v5452, %v6421
      %v6433 = vmul.f32 %v5453, %v6423
      %v6434 = vmul.f32 %v5454, %v6425
      %v6435 = vmul.f32 %v5457, %v6421
      %v6436 = vmul.f32 %v5458, %v6423
      %v6437 = vmul.f32 %v5459, %v6425
      %v6438 = vmul.f32 %v5462, %v6421
      %v6439 = vmul.f32 %v5463, %v6423
      %v6440 = vmul.f32 %v5464, %v6425
      %vm6441 = vcmask 343044
      %v6442 = vsel %vm6441, %v6429, 0.0
      %6443 = vadd.xlane.f32.xlu0 %v6442
      %v6444 = vpop.xlane.xlu0 %6443
      %v6445 = vsel %vm5585, %v6430, 0.0
      %6446 = vadd.xlane.f32.xlu0 %v6445
      %v6447 = vpop.xlane.xlu0 %6446
      %v6448 = vsel %vm5585, %v6431, 0.0
      %6449 = vadd.xlane.f32.xlu0 %v6448
      %v6450 = vpop.xlane.xlu0 %6449
      %v6451 = vsel %vm6441, %v6432, 0.0
      %6452 = vadd.xlane.f32.xlu0 %v6451
      %v6453 = vpop.xlane.xlu0 %6452
      %v6454 = vsel %vm5585, %v6433, 0.0
      %6455 = vadd.xlane.f32.xlu0 %v6454
      %v6456 = vpop.xlane.xlu0 %6455
      %v6457 = vsel %vm5585, %v6434, 0.0
      %6458 = vadd.xlane.f32.xlu0 %v6457
      %v6459 = vpop.xlane.xlu0 %6458
      %v6460 = vsel %vm6441, %v6435, 0.0
      %6461 = vadd.xlane.f32.xlu0 %v6460
      %v6462 = vpop.xlane.xlu0 %6461
      %v6463 = vsel %vm5585, %v6436, 0.0
      %6464 = vadd.xlane.f32.xlu0 %v6463
      %v6465 = vpop.xlane.xlu0 %6464
      %v6466 = vsel %vm5585, %v6437, 0.0
      %6467 = vadd.xlane.f32.xlu0 %v6466
      %v6468 = vpop.xlane.xlu0 %6467
      %v6469 = vsel %vm6441, %v6438, 0.0
      %6470 = vadd.xlane.f32.xlu0 %v6469
      %v6471 = vpop.xlane.xlu0 %6470
      %v6472 = vsel %vm5585, %v6439, 0.0
      %6473 = vadd.xlane.f32.xlu0 %v6472
      %v6474 = vpop.xlane.xlu0 %6473
      %v6475 = vsel %vm5585, %v6440, 0.0
      %6476 = vadd.xlane.f32.xlu0 %v6475
      %v6477 = vpop.xlane.xlu0 %6476
      %v6490 = vadd.s32 %v6346, 4
      %v6491 = vlaneseq
      %v6492 = vshrl.u32 %v6491, 7
      %v6493 = vsub.s32 %v6490, %v6492
      %v6494 = vrot.slane %v6444, %v6493
      %v6495 = vadd.s32 %v6346, 4294967292
      %v6496 = vlaneseq
      %v6497 = vshrl.u32 %v6496, 7
      %v6498 = vsub.s32 %v6495, %v6497
      %v6499 = vrot.slane %v6447, %v6498
      %vm6500 = vcmask 97312
      %v6501 = vsel %vm6500, %v6499, %v6494
      %v6502 = vadd.s32 %v6346, 4294967284
      %v6503 = vlaneseq
      %v6504 = vshrl.u32 %v6503, 7
      %v6505 = vsub.s32 %v6502, %v6504
      %v6506 = vrot.slane %v6450, %v6505
      %vm6507 = vcmask 162912
      %v6508 = vsel %vm6507, %v6506, %v6501
      %v6509 = vlaneseq
      %v6510 = vshrl.u32 %v6509, 7
      %v6511 = vsub.s32 %v6490, %v6510
      %v6512 = vrot.slane %v6453, %v6511
      %v6513 = vlaneseq
      %v6514 = vshrl.u32 %v6513, 7
      %v6515 = vsub.s32 %v6495, %v6514
      %v6516 = vrot.slane %v6456, %v6515
      %v6517 = vsel %vm6500, %v6516, %v6512
      %v6518 = vlaneseq
      %v6519 = vshrl.u32 %v6518, 7
      %v6520 = vsub.s32 %v6502, %v6519
      %v6521 = vrot.slane %v6459, %v6520
      %v6522 = vsel %vm6507, %v6521, %v6517
      %v6523 = vlaneseq
      %v6524 = vshrl.u32 %v6523, 7
      %v6525 = vsub.s32 %v6490, %v6524
      %v6526 = vrot.slane %v6462, %v6525
      %v6527 = vlaneseq
      %v6528 = vshrl.u32 %v6527, 7
      %v6529 = vsub.s32 %v6495, %v6528
      %v6530 = vrot.slane %v6465, %v6529
      %v6531 = vsel %vm6500, %v6530, %v6526
      %v6532 = vlaneseq
      %v6533 = vshrl.u32 %v6532, 7
      %v6534 = vsub.s32 %v6502, %v6533
      %v6535 = vrot.slane %v6468, %v6534
      %v6536 = vsel %vm6507, %v6535, %v6531
      %v6537 = vlaneseq
      %v6538 = vshrl.u32 %v6537, 7
      %v6539 = vsub.s32 %v6490, %v6538
      %v6540 = vrot.slane %v6471, %v6539
      %v6541 = vlaneseq
      %v6542 = vshrl.u32 %v6541, 7
      %v6543 = vsub.s32 %v6495, %v6542
      %v6544 = vrot.slane %v6474, %v6543
      %v6545 = vsel %vm6500, %v6544, %v6540
      %v6546 = vlaneseq
      %v6547 = vshrl.u32 %v6546, 7
      %v6548 = vsub.s32 %v6502, %v6547
      %v6549 = vrot.slane %v6477, %v6548
      %v6550 = vsel %vm6507, %v6549, %v6545
      %v6551 = vsel %vm6407, %v6522, %v6508
      %v6552 = vsel %vm6409, %v6536, %v6551
      %v6553 = vsel %vm6411, %v6550, %v6552
      %v6555 = vsel %vm6414, %v6553, 0.0
      %6556 = vadd.xlane.f32.xlu0 %v6555
      %v6557 = vpop.xlane.xlu0 %6556
      %v6558 = vadd.f32 %v6417, %v6557
      %v6559 = vld [vmem:[%s356] sm:$0xf]
      %v6560 = vadd.f32 %v6559, %v6558
      %vm6561 = vcmask 3072
      %6562 = vst.msk [vmem:[%s356] sm:$0xf] %vm6561, %v6560
      %p6563 = scmp.lt.s32.totalorder %s24, 1
      %s6564 = scalar_select %p6563, %s24, 1
      %s6565 = smul.addr %s6564, 4
      %s6566 = scalar_lea.vmem %s9, %s6565
      // Predicated region
      $region61: #{forward.1} parent=55 // pred_check
        %p6567 = pneg %p246
      $region62: #{forward.1} parent=55 // pred_check_branch
        %6569 = sbr.rel (%p6567) target = $region64
      $region63: #{forward.1} parent=55 // pred_region
        _
      $region64: #{forward.1} parent=55 // pred_fallthru
        _
    $region56: #{forward.1} parent=5 // pred_fallthru
      _
    %p6570 = scmp.le.s32.totalorder 2, %s15
    // Predicated region
    $region65: #{forward.1} parent=5 // pred_check
      %p6571 = pneg %p6570
    $region66: #{forward.1} parent=5 // pred_check_branch
      %6573 = sbr.rel (%p6571) target = $region68
    $region67: #{forward.1} parent=5 // pred_region
      %s6574 = ssub.s32 %s15, 2
      // Predicated region
      $region69: #{forward.1} parent=67 // pred_check
        %p6575 = pneg %p252
      $region70: #{forward.1} parent=67 // pred_check_branch
        %6577 = sbr.rel (%p6575) target = $region72
      $region71: #{forward.1} parent=67 // pred_region
        %p6578 = scmp.lt.s32.totalorder %s26, 1
        %s6579 = scalar_select %p6578, %s26, 1
        %s6580 = smul.addr %s6579, 4
        %s6581 = scalar_lea.vmem %s9, %s6580
      $region72: #{forward.1} parent=67 // pred_fallthru
        _
    $region68: #{forward.1} parent=5 // pred_fallthru
      _
  $region6: #{forward.1} parent=0 // loop_footer
    %s19 = sadd.s32 1, %s15
  $region7: #{forward.1} parent=0 // loop_footer_branch
    %14 = sbr.rel target = $region3
  $region8: #{forward.1} parent=0 // loop_exit
    _

</llo_original>
